<compile_context>
chip_gen: v7x
topology: tpu7x:2x2x1
jax: 0.10.0
libtpu: 0.0.40
codegen_flags: <defaults>
</compile_context>

<pallas_src>
import functools

import numpy as np
import jax
import jax.numpy as jnp
from jax.experimental import pallas as pl
from jax.experimental.pallas import tpu as pltpu

# Geometry is pinned by the module's fc = Linear(7*7*32, n): input is 1x28x28.
H = W = 28
NUM_LANES = 128
P1_ROWS = 4 * 56          # 4 pool offsets x (7x8 column-padded pooled-1 grid)
L2_ROWS = 80              # parity-packed, zero-framed layer-2 input (needs >= 74)
M2 = 56                   # 7x8 (column-padded) pooled-2 rows per image
K2 = 9 * NUM_LANES        # K-concat over the 9 (dy, dx) tap shifts


# ----------------------------- Pallas kernels --------------------------------

def _convnet_conv_kernel(p1_ref, w1_ref, s1_ref, w2_ref, s2_ref, o_ref,
                         l2_ref, lhs2_ref, *, imb):
    """Fused: [Conv1(1->16,5x5,p=2)+BN+ReLU+Pool] -> [Conv2(16->32)+BN+ReLU+Pool].

    One grid step processes `imb` images (unrolled).  Lane packing:
      layer-1 patches / weights: lane = parity*32 + tap   (4 parities x 25 taps)
      layer-1 output / layer-2 input: lane = parity*16 + channel (4 x 16 = 64 used)
      layer-2 output: lane = channel (32 used of 128)

    p1_ref:  (imb, 224, 128) bf16   layer-1 im2col patches (parity/tap packed)
    w1_ref:  (128, 128)      bf16   layer-1 weights, BN scale folded, per-parity
    s1_ref:  (1, 128)        f32    folded conv1 bias + BN shift (parity packed)
    w2_ref:  (4, 1152, 128)  bf16   layer-2 K-concat weights, one per pool offset
    s2_ref:  (1, 128)        f32    folded conv2 bias + BN shift
    o_ref:   (imb, 56, 128)  bf16   pooled layer-2 output (7x8 frame, 32 real ch)
    l2_ref:  (80, 128)       bf16   scratch: zero-framed, parity-packed layer-2 input
    lhs2_ref:(56, 1152)      bf16   scratch: K-concatenated layer-2 matmul lhs
    """
    # Zero the layer-2 frame once per step; only rows [9, 65) are ever
    # overwritten per image, the rest is the conv2 zero padding + guard rows.
    l2_ref[...] = jnp.zeros(l2_ref.shape, jnp.bfloat16)

    s1 = s1_ref[...]
    s2 = s2_ref[...]
    w1 = w1_ref[...]
    # Kill-mask for the padded 8th column of the 7x8 pooled-1 grid: those rows
    # land exactly on the conv2 left-padding rows of l2 and must stay zero.
    keep = (jax.lax.broadcasted_iota(jnp.int32, (M2, NUM_LANES), 0) % 8) < 7

    for img in range(imb):
        # ---- layer 1: one MXU matmul, all 4 parities packed along the lanes
        z1 = jnp.dot(p1_ref[img], w1, preferred_element_type=jnp.float32)  # (224,128)
        # 2x2 max-pool = max over the 4 pool-offset row groups (8-aligned slices)
        zp = jnp.maximum(jnp.maximum(z1[0:56], z1[56:112]),
                         jnp.maximum(z1[112:168], z1[168:224]))            # (56,128)
        a1 = jnp.maximum(zp + s1, 0.0)                                     # BN shift + ReLU
        a1 = jnp.where(keep, a1, 0.0).astype(jnp.bfloat16)
        # One contiguous store drops the pooled-1 activations into the
        # zero-framed layer-2 input (rows 9..64); padded column -> frame zeros.
        l2_ref[pl.ds(9, M2), :] = a1

        # ---- layer 2: K-concat the 9 shifted views, then 4 matmuls sharing lhs
        for k in range(9):
            dy, dx = divmod(k, 3)
            lhs2_ref[:, k * NUM_LANES:(k + 1) * NUM_LANES] = \
                l2_ref[pl.ds(dy * 8 + dx, M2), :]
        lhs = lhs2_ref[...]                                                # (56,1152)
        pooled = None
        for o in range(4):                                                 # pool offsets
            z2 = jnp.dot(lhs, w2_ref[o], preferred_element_type=jnp.float32)
            pooled = z2 if pooled is None else jnp.maximum(pooled, z2)     # max-pool
        a2 = jnp.maximum(pooled + s2, 0.0).astype(jnp.bfloat16)            # BN + ReLU
        o_ref[img] = a2                                                    # lane-dense store


def _fc_kernel(x_ref, w_ref, b_ref, o_ref):
    """Linear: (B, 7168) bf16 @ (7168, 128) bf16 -> f32, + bias (1, 128)."""
    o_ref[...] = jnp.dot(x_ref[...], w_ref[...],
                         preferred_element_type=jnp.float32) + b_ref[...]


# ----------------------------- XLA prologue -----------------------------------

def _build_layer1_patches(x_img):
    """x_img: (Bp, 28, 28) f32 -> (Bp, 224, 128) bf16 layer-1 im2col patches.

    Row  = pool_offset*56 + u*8 + v   (pooled-1 position (2u+pi, 2v+pj))
    Lane = parity*32 + tap            (parity = (pi, pj), tap = ky*5+kx, 25 of 32)
    """
    Bp = x_img.shape[0]
    xpad = jnp.pad(x_img, ((0, 0), (2, 2), (2, 2)))                 # (Bp, 32, 32)
    taps = jnp.stack([xpad[:, ky:ky + 28, kx:kx + 28]
                      for ky in range(5) for kx in range(5)], axis=1)  # (Bp,25,28,28)
    t = taps.reshape(Bp, 25, 7, 2, 2, 7, 2, 2)     # (b, tap, u, pi, a, v, pj, bb)
    t = jnp.transpose(t, (0, 4, 7, 2, 5, 3, 6, 1))  # (b, a, bb, u, v, pi, pj, tap)
    t = jnp.pad(t, ((0, 0),) * 4 + ((0, 1),) + ((0, 0),) * 2 + ((0, 7),))
    return t.reshape(Bp, P1_ROWS, NUM_LANES).astype(jnp.bfloat16)


def _pick_imb(batch, max_imb=8):
    for cand in range(min(max_imb, batch), 0, -1):
        if batch % cand == 0:
            return cand
    return 1


# ----------------------------- forward pass -----------------------------------

def convnet_forward(x_nchw, fp, num_classes=10):
    """x_nchw: (B, 1, 28, 28) f32 (PyTorch layout). Returns (B, num_classes) f32."""
    B = x_nchw.shape[0]
    assert x_nchw.shape[1:] == (1, H, W), "ConvNet is pinned to 1x28x28 by its fc layer"
    imb = _pick_imb(B)
    Bp = ((B + imb - 1) // imb) * imb
    x = x_nchw[:, 0].astype(jnp.float32)
    if Bp != B:
        x = jnp.pad(x, ((0, Bp - B), (0, 0), (0, 0)))
    p1 = _build_layer1_patches(x)                                   # (Bp, 224, 128) bf16

    conv_cost = pl.CostEstimate(
        flops=Bp * (2 * P1_ROWS * NUM_LANES * NUM_LANES
                    + 4 * 2 * M2 * K2 * NUM_LANES),
        transcendentals=0,
        bytes_accessed=int(p1.size * 2 + fp["w1"].size * 2 + fp["w2"].size * 2
                           + fp["s1"].size * 4 + fp["s2"].size * 4
                           + Bp * M2 * NUM_LANES * 2),
    )
    y2 = pl.pallas_call(
        functools.partial(_convnet_conv_kernel, imb=imb),
        out_shape=jax.ShapeDtypeStruct((Bp, M2, NUM_LANES), jnp.bfloat16),
        grid=(Bp // imb,),
        in_specs=[
            pl.BlockSpec((imb, P1_ROWS, NUM_LANES), lambda g: (g, 0, 0)),
            pl.BlockSpec((NUM_LANES, NUM_LANES), lambda g: (0, 0)),   # resident weights
            pl.BlockSpec((1, NUM_LANES), lambda g: (0, 0)),
            pl.BlockSpec((4, K2, NUM_LANES), lambda g: (0, 0, 0)),
            pl.BlockSpec((1, NUM_LANES), lambda g: (0, 0)),
        ],
        out_specs=pl.BlockSpec((imb, M2, NUM_LANES), lambda g: (g, 0, 0)),
        scratch_shapes=[
            pltpu.VMEM((L2_ROWS, NUM_LANES), jnp.bfloat16),   # layer-2 input frame
            pltpu.VMEM((M2, K2), jnp.bfloat16),               # K-concat lhs
        ],
        compiler_params=pltpu.CompilerParams(
            # Batch grid axis: independent -> sharded across TCs where available.
            dimension_semantics=("parallel",),
            vmem_limit_bytes=32 * 1024 * 1024,   # ~3.6 MB used; safe on v5e/v6e/v7x
        ),
        cost_estimate=conv_cost,
    )(p1, fp["w1"], fp["s1"], fp["w2"], fp["s2"])

    flat = y2.reshape(Bp, M2 * NUM_LANES)       # layout-compatible flatten (K = 7168)
    fc_cost = pl.CostEstimate(
        flops=2 * Bp * M2 * NUM_LANES * NUM_LANES,
        transcendentals=0,
        bytes_accessed=int(flat.size * 2 + fp["wfc"].size * 2
                           + fp["bfc"].size * 4 + Bp * NUM_LANES * 4),
    )
    logits = pl.pallas_call(
        _fc_kernel,
        out_shape=jax.ShapeDtypeStruct((Bp, NUM_LANES), jnp.float32),
        grid=(1,),
        in_specs=[
            pl.BlockSpec((Bp, M2 * NUM_LANES), lambda i: (0, 0)),
            pl.BlockSpec((M2 * NUM_LANES, NUM_LANES), lambda i: (0, 0)),
            pl.BlockSpec((1, NUM_LANES), lambda i: (0, 0)),
        ],
        out_specs=pl.BlockSpec((Bp, NUM_LANES), lambda i: (0, 0)),
        compiler_params=pltpu.CompilerParams(
            dimension_semantics=("arbitrary",),
            vmem_limit_bytes=32 * 1024 * 1024,
        ),
        cost_estimate=fc_cost,
    )(flat, fp["wfc"], fp["bfc"])
    return logits[:B, :num_classes]


# ----------------------------- parameter folding ------------------------------

def prepare_params(p, eps=1e-5, num_classes=10):
    """One-time host-side prep (numpy): fold BN scale into conv weights, pack
    parities/taps/channels into the kernel lane layouts, permute the FC weight."""
    # layer 1: (16,1,5,5) -> (128,128): rows = parity*32+tap, cols = parity*16+ch
    s1 = np.asarray(p["bn1_gamma"]) / np.sqrt(np.asarray(p["bn1_var"]) + eps)
    w1 = np.transpose(np.asarray(p["w1"])[:, 0], (1, 2, 0)) * s1            # (5,5,16)
    w1 = w1.reshape(25, 16)
    sh1 = np.asarray(p["bn1_beta"]) + (np.asarray(p["b1"]) - np.asarray(p["bn1_mean"])) * s1
    w1_packed = np.zeros((NUM_LANES, NUM_LANES), np.float32)
    sh1_packed = np.zeros((1, NUM_LANES), np.float32)
    for s in range(4):
        w1_packed[s * 32:s * 32 + 25, s * 16:s * 16 + 16] = w1
        sh1_packed[0, s * 16:s * 16 + 16] = sh1

    # layer 2: (32,16,5,5) -> (4 pool offsets, 9*128, 128) K-concat weights.
    s2 = np.asarray(p["bn2_gamma"]) / np.sqrt(np.asarray(p["bn2_var"]) + eps)
    w2 = np.transpose(np.asarray(p["w2"]), (2, 3, 1, 0)) * s2               # (5,5,16,32)
    sh2 = np.asarray(p["bn2_beta"]) + (np.asarray(p["b2"]) - np.asarray(p["bn2_mean"])) * s2
    w2cat = np.zeros((4, K2, NUM_LANES), np.float32)
    for a in range(2):
        for b in range(2):
            off = 2 * a + b
            for dy in range(3):
                for pr in range(2):
                    ky = 2 * dy + pr - a
                    if not 0 <= ky <= 4:
                        continue
                    for dx in range(3):
                        for q in range(2):
                            kx = 2 * dx + q - b
                            if not 0 <= kx <= 4:
                                continue
                            k0 = (dy * 3 + dx) * NUM_LANES + (2 * pr + q) * 16
                            w2cat[off, k0:k0 + 16, :32] = w2[ky, kx]
    sh2_packed = np.zeros((1, NUM_LANES), np.float32)
    sh2_packed[0, :32] = sh2

    # fc: torch flattens (B,32,7,7) as k = c*49 + i*7 + j; our flatten is
    # (i, j-in-8-wide-frame, 128-padded channel)-major -> permute + zero-pad once.
    wfc = np.asarray(p["wfc"]).reshape(num_classes, 32, 7, 7)
    wfc_packed = np.zeros((M2 * NUM_LANES, NUM_LANES), np.float32)
    for i in range(7):
        for j in range(7):
            r0 = (i * 8 + j) * NUM_LANES
            wfc_packed[r0:r0 + 32, :num_classes] = wfc[:, :, i, j].T
    bfc_packed = np.zeros((1, NUM_LANES), np.float32)
    bfc_packed[0, :num_classes] = np.asarray(p["bfc"])

    return {
        "w1": jnp.asarray(w1_packed, jnp.bfloat16),
        "s1": jnp.asarray(sh1_packed, jnp.float32),
        "w2": jnp.asarray(w2cat, jnp.bfloat16),
        "s2": jnp.asarray(sh2_packed, jnp.float32),
        "wfc": jnp.asarray(wfc_packed, jnp.bfloat16),
        "bfc": jnp.asarray(bfc_packed, jnp.float32),
    }


# ----------------------------- reference & init -------------------------------

def reference_forward(x, p, eps=1e-5):
    """Pure-JAX f32 reference matching the PyTorch module (inference-mode BN)."""
    def layer(y, w, b, gamma, beta, mean, var):
        y = jax.lax.conv_general_dilated(
            y, w, (1, 1), ((2, 2), (2, 2)),
            dimension_numbers=("NCHW", "OIHW", "NCHW"),
            precision=jax.lax.Precision.HIGHEST)
        y = y + b[None, :, None, None]
        y = (gamma[None, :, None, None] * (y - mean[None, :, None, None])
             / jnp.sqrt(var[None, :, None, None] + eps) + beta[None, :, None, None])
        y = jnp.maximum(y, 0.0)
        bb, c, h, w_ = y.shape
        return y.reshape(bb, c, h // 2, 2, w_ // 2, 2).max(axis=(3, 5))

    y = layer(x, p["w1"], p["b1"], p["bn1_gamma"], p["bn1_beta"],
              p["bn1_mean"], p["bn1_var"])
    y = layer(y, p["w2"], p["b2"], p["bn2_gamma"], p["bn2_beta"],
              p["bn2_mean"], p["bn2_var"])
    y = y.reshape(y.shape[0], -1)
    return jnp.dot(y, p["wfc"].T, precision=jax.lax.Precision.HIGHEST) + p["bfc"]


def init_params(key, num_classes=10):
    ks = jax.random.split(key, 10)
    p = {}
    p["w1"] = 0.1 * jax.random.normal(ks[0], (16, 1, 5, 5), jnp.float32)
    p["b1"] = 0.1 * jax.random.normal(ks[1], (16,), jnp.float32)
    p["bn1_gamma"] = 1.0 + 0.1 * jax.random.normal(ks[2], (16,), jnp.float32)
    p["bn1_beta"] = 0.1 * jax.random.normal(ks[3], (16,), jnp.float32)
    p["bn1_mean"] = 0.1 * jax.random.normal(ks[4], (16,), jnp.float32)
    p["bn1_var"] = 1.0 + 0.1 * jax.random.uniform(ks[5], (16,), jnp.float32)
    p["w2"] = 0.05 * jax.random.normal(ks[6], (32, 16, 5, 5), jnp.float32)
    p["b2"] = 0.1 * jax.random.normal(ks[7], (32,), jnp.float32)
    p["bn2_gamma"] = jnp.ones((32,), jnp.float32)
    p["bn2_beta"] = jnp.zeros((32,), jnp.float32)
    p["bn2_mean"] = jnp.zeros((32,), jnp.float32)
    p["bn2_var"] = jnp.ones((32,), jnp.float32)
    p["wfc"] = 0.02 * jax.random.normal(ks[8], (num_classes, 7 * 7 * 32), jnp.float32)
    p["bfc"] = 0.02 * jax.random.normal(ks[9], (num_classes,), jnp.float32)
    return p


if __name__ == "__main__":
    key = jax.random.PRNGKey(0)
    kx, kp = jax.random.split(key)
    # The fc layer expects 7*7*32 features, which pins the input to 1x28x28.
    x = jax.random.normal(kx, (2, 1, 28, 28), jnp.float32)   # NCHW like PyTorch
    params = init_params(kp)
    fused = prepare_params(params)
    out = jax.jit(convnet_forward)(x, fused)
    out = jax.block_until_ready(out)
    assert out.shape == (2, 10) and out.dtype == jnp.float32
    ref = reference_forward(x, params)
    err = float(jnp.max(jnp.abs(out - ref)))
    assert err < 5e-2, f"max |pallas - reference| = {err}"
    print("KERNEL_OK")
</pallas_src>

<mosaic_0001>
module attributes {stable_mosaic.version = 11 : i64} {
  func.func @_convnet_conv_kernel(%arg0: i32, %arg1: memref<2x224x128xbf16, #tpu.memory_space<vmem>>, %arg2: memref<128x128xbf16, #tpu.memory_space<vmem>>, %arg3: memref<1x128xf32, #tpu.memory_space<vmem>>, %arg4: memref<4x1152x128xbf16, #tpu.memory_space<vmem>>, %arg5: memref<1x128xf32, #tpu.memory_space<vmem>>, %arg6: memref<2x56x128xbf16, #tpu.memory_space<vmem>>, %arg7: memref<80x128xbf16, #tpu.memory_space<vmem>>, %arg8: memref<56x1152xbf16, #tpu.memory_space<vmem>>) attributes {dimension_semantics = [#tpu.dimension_semantics<parallel>], iteration_bounds = array<i64: 1>, scalar_prefetch = 0 : i64, scratch_operands = 2 : i64, tpu.core_type = #tpu.core_type<tc>, window_params = [{transform_indices = @transform_0, window_bounds = array<i64: 2, 224, 128>}, {pipeline_mode = #tpu.pipeline_mode<synchronous>, transform_indices = @transform_1, window_bounds = array<i64: 128, 128>}, {pipeline_mode = #tpu.pipeline_mode<synchronous>, transform_indices = @transform_2, window_bounds = array<i64: 1, 128>}, {pipeline_mode = #tpu.pipeline_mode<synchronous>, transform_indices = @transform_3, window_bounds = array<i64: 4, 1152, 128>}, {pipeline_mode = #tpu.pipeline_mode<synchronous>, transform_indices = @transform_4, window_bounds = array<i64: 1, 128>}, {transform_indices = @transform_5, window_bounds = array<i64: 2, 56, 128>}]} {
    %cst = arith.constant 0.000000e+00 : bf16
    %0 = vector.broadcast %cst : bf16 to vector<80x128xbf16>
    %c0 = arith.constant 0 : index
    %c0_0 = arith.constant 0 : index
    %1 = vector.load %arg7[%c0, %c0_0] : memref<80x128xbf16, #tpu.memory_space<vmem>>, vector<80x128xbf16>
    tpu.vector_store %arg7[%c0, %c0_0], %0 {strides = array<i32>} : memref<80x128xbf16, #tpu.memory_space<vmem>>, vector<80x128xbf16>,
    %c0_1 = arith.constant 0 : index
    %c0_2 = arith.constant 0 : index
    %2 = vector.load %arg3[%c0_1, %c0_2] : memref<1x128xf32, #tpu.memory_space<vmem>>, vector<1x128xf32>
    %c0_3 = arith.constant 0 : index
    %c0_4 = arith.constant 0 : index
    %3 = vector.load %arg5[%c0_3, %c0_4] : memref<1x128xf32, #tpu.memory_space<vmem>>, vector<1x128xf32>
    %c0_5 = arith.constant 0 : index
    %c0_6 = arith.constant 0 : index
    %4 = vector.load %arg2[%c0_5, %c0_6] : memref<128x128xbf16, #tpu.memory_space<vmem>>, vector<128x128xbf16>
    %5 = tpu.iota {dimensions = array<i32: 0>} : vector<56x128xi32>
    %c8_i32 = arith.constant 8 : i32
    %c0_i32 = arith.constant 0 : i32
    %6 = arith.cmpi eq, %c8_i32, %c0_i32 : i32
    %c1_i32 = arith.constant 1 : i32
    %7 = arith.select %6, %c1_i32, %c8_i32 : i32
    %8 = vector.broadcast %7 : i32 to vector<56x128xi32>
    %9 = arith.remsi %5, %8 : vector<56x128xi32>
    %c0_i32_7 = arith.constant 0 : i32
    %10 = vector.broadcast %c0_i32_7 : i32 to vector<56x128xi32>
    %11 = arith.cmpi ne, %9, %10 : vector<56x128xi32>
    %c0_i32_8 = arith.constant 0 : i32
    %12 = vector.broadcast %c0_i32_8 : i32 to vector<56x128xi32>
    %13 = arith.cmpi slt, %9, %12 : vector<56x128xi32>
    %c0_i32_9 = arith.constant 0 : i32
    %14 = arith.cmpi slt, %7, %c0_i32_9 : i32
    %15 = vector.broadcast %14 : i1 to vector<56x128xi1>
    %16 = vector.broadcast %15 : vector<56x128xi1> to vector<56x128xi1>
    %17 = arith.xori %13, %16 : vector<56x128xi1>
    %18 = arith.andi %17, %11 : vector<56x128xi1>
    %19 = vector.broadcast %7 : i32 to vector<56x128xi32>
    %20 = arith.addi %9, %19 : vector<56x128xi32>
    %21 = arith.select %18, %20, %9 : vector<56x128xi1>, vector<56x128xi32>
    %c7_i32 = arith.constant 7 : i32
    %22 = vector.broadcast %c7_i32 : i32 to vector<56x128xi32>
    %23 = arith.cmpi slt, %21, %22 : vector<56x128xi32>
    %c0_10 = arith.constant 0 : index
    %c0_11 = arith.constant 0 : index
    %c0_12 = arith.constant 0 : index
    %24 = vector.load %arg1[%c0_10, %c0_11, %c0_12] : memref<2x224x128xbf16, #tpu.memory_space<vmem>>, vector<1x224x128xbf16>
    %25 = vector.shape_cast %24 : vector<1x224x128xbf16> to vector<224x128xbf16>
    %cst_13 = arith.constant dense<0.000000e+00> : vector<224x128xf32>
    %26 = tpu.matmul %25, %4, %cst_13 {dimension_numbers = #tpu.dot_dimension_numbers<[1], [0], [0], [1], [0, 0, 1, 1], [], []>} : vector<224x128xbf16>, vector<128x128xbf16>, vector<224x128xf32> -> vector<224x128xf32>
    %27 = vector.extract_strided_slice %26 {offsets = [0, 0], sizes = [56, 128], strides = [1, 1]} : vector<224x128xf32> to vector<56x128xf32>
    %28 = vector.extract_strided_slice %26 {offsets = [56, 0], sizes = [56, 128], strides = [1, 1]} : vector<224x128xf32> to vector<56x128xf32>
    %29 = arith.maximumf %27, %28 : vector<56x128xf32>
    %30 = vector.extract_strided_slice %26 {offsets = [112, 0], sizes = [56, 128], strides = [1, 1]} : vector<224x128xf32> to vector<56x128xf32>
    %31 = vector.extract_strided_slice %26 {offsets = [168, 0], sizes = [56, 128], strides = [1, 1]} : vector<224x128xf32> to vector<56x128xf32>
    %32 = arith.maximumf %30, %31 : vector<56x128xf32>
    %33 = arith.maximumf %29, %32 : vector<56x128xf32>
    %34 = vector.broadcast %2 : vector<1x128xf32> to vector<56x128xf32>
    %35 = arith.addf %33, %34 : vector<56x128xf32>
    %cst_14 = arith.constant 0.000000e+00 : f32
    %36 = vector.broadcast %cst_14 : f32 to vector<56x128xf32>
    %37 = arith.maximumf %35, %36 : vector<56x128xf32>
    %cst_15 = arith.constant 0.000000e+00 : f32
    %38 = vector.broadcast %cst_15 : f32 to vector<56x128xf32>
    %39 = arith.select %23, %37, %38 : vector<56x128xi1>, vector<56x128xf32>
    %40 = arith.truncf %39 : vector<56x128xf32> to vector<56x128xbf16>
    %c9 = arith.constant 9 : index
    %c0_16 = arith.constant 0 : index
    %41 = vector.load %arg7[%c9, %c0_16] : memref<80x128xbf16, #tpu.memory_space<vmem>>, vector<56x128xbf16>
    tpu.vector_store %arg7[%c9, %c0_16], %40 {strides = array<i32>} : memref<80x128xbf16, #tpu.memory_space<vmem>>, vector<56x128xbf16>,
    %c0_17 = arith.constant 0 : index
    %c0_18 = arith.constant 0 : index
    %42 = vector.load %arg7[%c0_17, %c0_18] : memref<80x128xbf16, #tpu.memory_space<vmem>>, vector<56x128xbf16>
    %c0_19 = arith.constant 0 : index
    %c0_20 = arith.constant 0 : index
    %43 = vector.load %arg8[%c0_19, %c0_20] : memref<56x1152xbf16, #tpu.memory_space<vmem>>, vector<56x128xbf16>
    tpu.vector_store %arg8[%c0_19, %c0_20], %42 {strides = array<i32>} : memref<56x1152xbf16, #tpu.memory_space<vmem>>, vector<56x128xbf16>,
    %c1 = arith.constant 1 : index
    %c0_21 = arith.constant 0 : index
    %44 = vector.load %arg7[%c1, %c0_21] : memref<80x128xbf16, #tpu.memory_space<vmem>>, vector<56x128xbf16>
    %c0_22 = arith.constant 0 : index
    %c128 = arith.constant 128 : index
    %45 = vector.load %arg8[%c0_22, %c128] : memref<56x1152xbf16, #tpu.memory_space<vmem>>, vector<56x128xbf16>
    tpu.vector_store %arg8[%c0_22, %c128], %44 {strides = array<i32>} : memref<56x1152xbf16, #tpu.memory_space<vmem>>, vector<56x128xbf16>,
    %c2 = arith.constant 2 : index
    %c0_23 = arith.constant 0 : index
    %46 = vector.load %arg7[%c2, %c0_23] : memref<80x128xbf16, #tpu.memory_space<vmem>>, vector<56x128xbf16>
    %c0_24 = arith.constant 0 : index
    %c256 = arith.constant 256 : index
    %47 = vector.load %arg8[%c0_24, %c256] : memref<56x1152xbf16, #tpu.memory_space<vmem>>, vector<56x128xbf16>
    tpu.vector_store %arg8[%c0_24, %c256], %46 {strides = array<i32>} : memref<56x1152xbf16, #tpu.memory_space<vmem>>, vector<56x128xbf16>,
    %c8 = arith.constant 8 : index
    %c0_25 = arith.constant 0 : index
    %48 = vector.load %arg7[%c8, %c0_25] : memref<80x128xbf16, #tpu.memory_space<vmem>>, vector<56x128xbf16>
    %c0_26 = arith.constant 0 : index
    %c384 = arith.constant 384 : index
    %49 = vector.load %arg8[%c0_26, %c384] : memref<56x1152xbf16, #tpu.memory_space<vmem>>, vector<56x128xbf16>
    tpu.vector_store %arg8[%c0_26, %c384], %48 {strides = array<i32>} : memref<56x1152xbf16, #tpu.memory_space<vmem>>, vector<56x128xbf16>,
    %c9_27 = arith.constant 9 : index
    %c0_28 = arith.constant 0 : index
    %50 = vector.load %arg7[%c9_27, %c0_28] : memref<80x128xbf16, #tpu.memory_space<vmem>>, vector<56x128xbf16>
    %c0_29 = arith.constant 0 : index
    %c512 = arith.constant 512 : index
    %51 = vector.load %arg8[%c0_29, %c512] : memref<56x1152xbf16, #tpu.memory_space<vmem>>, vector<56x128xbf16>
    tpu.vector_store %arg8[%c0_29, %c512], %50 {strides = array<i32>} : memref<56x1152xbf16, #tpu.memory_space<vmem>>, vector<56x128xbf16>,
    %c10 = arith.constant 10 : index
    %c0_30 = arith.constant 0 : index
    %52 = vector.load %arg7[%c10, %c0_30] : memref<80x128xbf16, #tpu.memory_space<vmem>>, vector<56x128xbf16>
    %c0_31 = arith.constant 0 : index
    %c640 = arith.constant 640 : index
    %53 = vector.load %arg8[%c0_31, %c640] : memref<56x1152xbf16, #tpu.memory_space<vmem>>, vector<56x128xbf16>
    tpu.vector_store %arg8[%c0_31, %c640], %52 {strides = array<i32>} : memref<56x1152xbf16, #tpu.memory_space<vmem>>, vector<56x128xbf16>,
    %c16 = arith.constant 16 : index
    %c0_32 = arith.constant 0 : index
    %54 = vector.load %arg7[%c16, %c0_32] : memref<80x128xbf16, #tpu.memory_space<vmem>>, vector<56x128xbf16>
    %c0_33 = arith.constant 0 : index
    %c768 = arith.constant 768 : index
    %55 = vector.load %arg8[%c0_33, %c768] : memref<56x1152xbf16, #tpu.memory_space<vmem>>, vector<56x128xbf16>
    tpu.vector_store %arg8[%c0_33, %c768], %54 {strides = array<i32>} : memref<56x1152xbf16, #tpu.memory_space<vmem>>, vector<56x128xbf16>,
    %c17 = arith.constant 17 : index
    %c0_34 = arith.constant 0 : index
    %56 = vector.load %arg7[%c17, %c0_34] : memref<80x128xbf16, #tpu.memory_space<vmem>>, vector<56x128xbf16>
    %c0_35 = arith.constant 0 : index
    %c896 = arith.constant 896 : index
    %57 = vector.load %arg8[%c0_35, %c896] : memref<56x1152xbf16, #tpu.memory_space<vmem>>, vector<56x128xbf16>
    tpu.vector_store %arg8[%c0_35, %c896], %56 {strides = array<i32>} : memref<56x1152xbf16, #tpu.memory_space<vmem>>, vector<56x128xbf16>,
    %c18 = arith.constant 18 : index
    %c0_36 = arith.constant 0 : index
    %58 = vector.load %arg7[%c18, %c0_36] : memref<80x128xbf16, #tpu.memory_space<vmem>>, vector<56x128xbf16>
    %c0_37 = arith.constant 0 : index
    %c1024 = arith.constant 1024 : index
    %59 = vector.load %arg8[%c0_37, %c1024] : memref<56x1152xbf16, #tpu.memory_space<vmem>>, vector<56x128xbf16>
    tpu.vector_store %arg8[%c0_37, %c1024], %58 {strides = array<i32>} : memref<56x1152xbf16, #tpu.memory_space<vmem>>, vector<56x128xbf16>,
    %c0_38 = arith.constant 0 : index
    %c0_39 = arith.constant 0 : index
    %60 = vector.load %arg8[%c0_38, %c0_39] : memref<56x1152xbf16, #tpu.memory_space<vmem>>, vector<56x1152xbf16>
    %c0_40 = arith.constant 0 : index
    %c0_41 = arith.constant 0 : index
    %c0_42 = arith.constant 0 : index
    %61 = vector.load %arg4[%c0_40, %c0_41, %c0_42] : memref<4x1152x128xbf16, #tpu.memory_space<vmem>>, vector<1x1152x128xbf16>
    %62 = vector.shape_cast %61 : vector<1x1152x128xbf16> to vector<1152x128xbf16>
    %cst_43 = arith.constant dense<0.000000e+00> : vector<56x128xf32>
    %63 = tpu.matmul %60, %62, %cst_43 {dimension_numbers = #tpu.dot_dimension_numbers<[1], [0], [0], [1], [0, 0, 1, 1], [], []>} : vector<56x1152xbf16>, vector<1152x128xbf16>, vector<56x128xf32> -> vector<56x128xf32>
    %c1_44 = arith.constant 1 : index
    %c0_45 = arith.constant 0 : index
    %c0_46 = arith.constant 0 : index
    %64 = vector.load %arg4[%c1_44, %c0_45, %c0_46] : memref<4x1152x128xbf16, #tpu.memory_space<vmem>>, vector<1x1152x128xbf16>
    %65 = vector.shape_cast %64 : vector<1x1152x128xbf16> to vector<1152x128xbf16>
    %cst_47 = arith.constant dense<0.000000e+00> : vector<56x128xf32>
    %66 = tpu.matmul %60, %65, %cst_47 {dimension_numbers = #tpu.dot_dimension_numbers<[1], [0], [0], [1], [0, 0, 1, 1], [], []>} : vector<56x1152xbf16>, vector<1152x128xbf16>, vector<56x128xf32> -> vector<56x128xf32>
    %67 = arith.maximumf %63, %66 : vector<56x128xf32>
    %c2_48 = arith.constant 2 : index
    %c0_49 = arith.constant 0 : index
    %c0_50 = arith.constant 0 : index
    %68 = vector.load %arg4[%c2_48, %c0_49, %c0_50] : memref<4x1152x128xbf16, #tpu.memory_space<vmem>>, vector<1x1152x128xbf16>
    %69 = vector.shape_cast %68 : vector<1x1152x128xbf16> to vector<1152x128xbf16>
    %cst_51 = arith.constant dense<0.000000e+00> : vector<56x128xf32>
    %70 = tpu.matmul %60, %69, %cst_51 {dimension_numbers = #tpu.dot_dimension_numbers<[1], [0], [0], [1], [0, 0, 1, 1], [], []>} : vector<56x1152xbf16>, vector<1152x128xbf16>, vector<56x128xf32> -> vector<56x128xf32>
    %71 = arith.maximumf %67, %70 : vector<56x128xf32>
    %c3 = arith.constant 3 : index
    %c0_52 = arith.constant 0 : index
    %c0_53 = arith.constant 0 : index
    %72 = vector.load %arg4[%c3, %c0_52, %c0_53] : memref<4x1152x128xbf16, #tpu.memory_space<vmem>>, vector<1x1152x128xbf16>
    %73 = vector.shape_cast %72 : vector<1x1152x128xbf16> to vector<1152x128xbf16>
    %cst_54 = arith.constant dense<0.000000e+00> : vector<56x128xf32>
    %74 = tpu.matmul %60, %73, %cst_54 {dimension_numbers = #tpu.dot_dimension_numbers<[1], [0], [0], [1], [0, 0, 1, 1], [], []>} : vector<56x1152xbf16>, vector<1152x128xbf16>, vector<56x128xf32> -> vector<56x128xf32>
    %75 = arith.maximumf %71, %74 : vector<56x128xf32>
    %76 = vector.broadcast %3 : vector<1x128xf32> to vector<56x128xf32>
    %77 = arith.addf %75, %76 : vector<56x128xf32>
    %cst_55 = arith.constant 0.000000e+00 : f32
    %78 = vector.broadcast %cst_55 : f32 to vector<56x128xf32>
    %79 = arith.maximumf %77, %78 : vector<56x128xf32>
    %80 = arith.truncf %79 : vector<56x128xf32> to vector<56x128xbf16>
    %c0_56 = arith.constant 0 : index
    %c0_57 = arith.constant 0 : index
    %c0_58 = arith.constant 0 : index
    %81 = vector.load %arg6[%c0_56, %c0_57, %c0_58] : memref<2x56x128xbf16, #tpu.memory_space<vmem>>, vector<1x56x128xbf16>
    %82 = vector.shape_cast %81 : vector<1x56x128xbf16> to vector<56x128xbf16>
    %83 = vector.shape_cast %80 : vector<56x128xbf16> to vector<1x56x128xbf16>
    tpu.vector_store %arg6[%c0_56, %c0_57, %c0_58], %83 {strides = array<i32>} : memref<2x56x128xbf16, #tpu.memory_space<vmem>>, vector<1x56x128xbf16>,
    %c1_59 = arith.constant 1 : index
    %c0_60 = arith.constant 0 : index
    %c0_61 = arith.constant 0 : index
    %84 = vector.load %arg1[%c1_59, %c0_60, %c0_61] : memref<2x224x128xbf16, #tpu.memory_space<vmem>>, vector<1x224x128xbf16>
    %85 = vector.shape_cast %84 : vector<1x224x128xbf16> to vector<224x128xbf16>
    %cst_62 = arith.constant dense<0.000000e+00> : vector<224x128xf32>
    %86 = tpu.matmul %85, %4, %cst_62 {dimension_numbers = #tpu.dot_dimension_numbers<[1], [0], [0], [1], [0, 0, 1, 1], [], []>} : vector<224x128xbf16>, vector<128x128xbf16>, vector<224x128xf32> -> vector<224x128xf32>
    %87 = vector.extract_strided_slice %86 {offsets = [0, 0], sizes = [56, 128], strides = [1, 1]} : vector<224x128xf32> to vector<56x128xf32>
    %88 = vector.extract_strided_slice %86 {offsets = [56, 0], sizes = [56, 128], strides = [1, 1]} : vector<224x128xf32> to vector<56x128xf32>
    %89 = arith.maximumf %87, %88 : vector<56x128xf32>
    %90 = vector.extract_strided_slice %86 {offsets = [112, 0], sizes = [56, 128], strides = [1, 1]} : vector<224x128xf32> to vector<56x128xf32>
    %91 = vector.extract_strided_slice %86 {offsets = [168, 0], sizes = [56, 128], strides = [1, 1]} : vector<224x128xf32> to vector<56x128xf32>
    %92 = arith.maximumf %90, %91 : vector<56x128xf32>
    %93 = arith.maximumf %89, %92 : vector<56x128xf32>
    %94 = vector.broadcast %2 : vector<1x128xf32> to vector<56x128xf32>
    %95 = arith.addf %93, %94 : vector<56x128xf32>
    %cst_63 = arith.constant 0.000000e+00 : f32
    %96 = vector.broadcast %cst_63 : f32 to vector<56x128xf32>
    %97 = arith.maximumf %95, %96 : vector<56x128xf32>
    %cst_64 = arith.constant 0.000000e+00 : f32
    %98 = vector.broadcast %cst_64 : f32 to vector<56x128xf32>
    %99 = arith.select %23, %97, %98 : vector<56x128xi1>, vector<56x128xf32>
    %100 = arith.truncf %99 : vector<56x128xf32> to vector<56x128xbf16>
    %c9_65 = arith.constant 9 : index
    %c0_66 = arith.constant 0 : index
    %101 = vector.load %arg7[%c9_65, %c0_66] : memref<80x128xbf16, #tpu.memory_space<vmem>>, vector<56x128xbf16>
    tpu.vector_store %arg7[%c9_65, %c0_66], %100 {strides = array<i32>} : memref<80x128xbf16, #tpu.memory_space<vmem>>, vector<56x128xbf16>,
    %c0_67 = arith.constant 0 : index
    %c0_68 = arith.constant 0 : index
    %102 = vector.load %arg7[%c0_67, %c0_68] : memref<80x128xbf16, #tpu.memory_space<vmem>>, vector<56x128xbf16>
    %c0_69 = arith.constant 0 : index
    %c0_70 = arith.constant 0 : index
    %103 = vector.load %arg8[%c0_69, %c0_70] : memref<56x1152xbf16, #tpu.memory_space<vmem>>, vector<56x128xbf16>
    tpu.vector_store %arg8[%c0_69, %c0_70], %102 {strides = array<i32>} : memref<56x1152xbf16, #tpu.memory_space<vmem>>, vector<56x128xbf16>,
    %c1_71 = arith.constant 1 : index
    %c0_72 = arith.constant 0 : index
    %104 = vector.load %arg7[%c1_71, %c0_72] : memref<80x128xbf16, #tpu.memory_space<vmem>>, vector<56x128xbf16>
    %c0_73 = arith.constant 0 : index
    %c128_74 = arith.constant 128 : index
    %105 = vector.load %arg8[%c0_73, %c128_74] : memref<56x1152xbf16, #tpu.memory_space<vmem>>, vector<56x128xbf16>
    tpu.vector_store %arg8[%c0_73, %c128_74], %104 {strides = array<i32>} : memref<56x1152xbf16, #tpu.memory_space<vmem>>, vector<56x128xbf16>,
    %c2_75 = arith.constant 2 : index
    %c0_76 = arith.constant 0 : index
    %106 = vector.load %arg7[%c2_75, %c0_76] : memref<80x128xbf16, #tpu.memory_space<vmem>>, vector<56x128xbf16>
    %c0_77 = arith.constant 0 : index
    %c256_78 = arith.constant 256 : index
    %107 = vector.load %arg8[%c0_77, %c256_78] : memref<56x1152xbf16, #tpu.memory_space<vmem>>, vector<56x128xbf16>
    tpu.vector_store %arg8[%c0_77, %c256_78], %106 {strides = array<i32>} : memref<56x1152xbf16, #tpu.memory_space<vmem>>, vector<56x128xbf16>,
    %c8_79 = arith.constant 8 : index
    %c0_80 = arith.constant 0 : index
    %108 = vector.load %arg7[%c8_79, %c0_80] : memref<80x128xbf16, #tpu.memory_space<vmem>>, vector<56x128xbf16>
    %c0_81 = arith.constant 0 : index
    %c384_82 = arith.constant 384 : index
    %109 = vector.load %arg8[%c0_81, %c384_82] : memref<56x1152xbf16, #tpu.memory_space<vmem>>, vector<56x128xbf16>
    tpu.vector_store %arg8[%c0_81, %c384_82], %108 {strides = array<i32>} : memref<56x1152xbf16, #tpu.memory_space<vmem>>, vector<56x128xbf16>,
    %c9_83 = arith.constant 9 : index
    %c0_84 = arith.constant 0 : index
    %110 = vector.load %arg7[%c9_83, %c0_84] : memref<80x128xbf16, #tpu.memory_space<vmem>>, vector<56x128xbf16>
    %c0_85 = arith.constant 0 : index
    %c512_86 = arith.constant 512 : index
    %111 = vector.load %arg8[%c0_85, %c512_86] : memref<56x1152xbf16, #tpu.memory_space<vmem>>, vector<56x128xbf16>
    tpu.vector_store %arg8[%c0_85, %c512_86], %110 {strides = array<i32>} : memref<56x1152xbf16, #tpu.memory_space<vmem>>, vector<56x128xbf16>,
    %c10_87 = arith.constant 10 : index
    %c0_88 = arith.constant 0 : index
    %112 = vector.load %arg7[%c10_87, %c0_88] : memref<80x128xbf16, #tpu.memory_space<vmem>>, vector<56x128xbf16>
    %c0_89 = arith.constant 0 : index
    %c640_90 = arith.constant 640 : index
    %113 = vector.load %arg8[%c0_89, %c640_90] : memref<56x1152xbf16, #tpu.memory_space<vmem>>, vector<56x128xbf16>
    tpu.vector_store %arg8[%c0_89, %c640_90], %112 {strides = array<i32>} : memref<56x1152xbf16, #tpu.memory_space<vmem>>, vector<56x128xbf16>,
    %c16_91 = arith.constant 16 : index
    %c0_92 = arith.constant 0 : index
    %114 = vector.load %arg7[%c16_91, %c0_92] : memref<80x128xbf16, #tpu.memory_space<vmem>>, vector<56x128xbf16>
    %c0_93 = arith.constant 0 : index
    %c768_94 = arith.constant 768 : index
    %115 = vector.load %arg8[%c0_93, %c768_94] : memref<56x1152xbf16, #tpu.memory_space<vmem>>, vector<56x128xbf16>
    tpu.vector_store %arg8[%c0_93, %c768_94], %114 {strides = array<i32>} : memref<56x1152xbf16, #tpu.memory_space<vmem>>, vector<56x128xbf16>,
    %c17_95 = arith.constant 17 : index
    %c0_96 = arith.constant 0 : index
    %116 = vector.load %arg7[%c17_95, %c0_96] : memref<80x128xbf16, #tpu.memory_space<vmem>>, vector<56x128xbf16>
    %c0_97 = arith.constant 0 : index
    %c896_98 = arith.constant 896 : index
    %117 = vector.load %arg8[%c0_97, %c896_98] : memref<56x1152xbf16, #tpu.memory_space<vmem>>, vector<56x128xbf16>
    tpu.vector_store %arg8[%c0_97, %c896_98], %116 {strides = array<i32>} : memref<56x1152xbf16, #tpu.memory_space<vmem>>, vector<56x128xbf16>,
    %c18_99 = arith.constant 18 : index
    %c0_100 = arith.constant 0 : index
    %118 = vector.load %arg7[%c18_99, %c0_100] : memref<80x128xbf16, #tpu.memory_space<vmem>>, vector<56x128xbf16>
    %c0_101 = arith.constant 0 : index
    %c1024_102 = arith.constant 1024 : index
    %119 = vector.load %arg8[%c0_101, %c1024_102] : memref<56x1152xbf16, #tpu.memory_space<vmem>>, vector<56x128xbf16>
    tpu.vector_store %arg8[%c0_101, %c1024_102], %118 {strides = array<i32>} : memref<56x1152xbf16, #tpu.memory_space<vmem>>, vector<56x128xbf16>,
    %c0_103 = arith.constant 0 : index
    %c0_104 = arith.constant 0 : index
    %120 = vector.load %arg8[%c0_103, %c0_104] : memref<56x1152xbf16, #tpu.memory_space<vmem>>, vector<56x1152xbf16>
    %c0_105 = arith.constant 0 : index
    %c0_106 = arith.constant 0 : index
    %c0_107 = arith.constant 0 : index
    %121 = vector.load %arg4[%c0_105, %c0_106, %c0_107] : memref<4x1152x128xbf16, #tpu.memory_space<vmem>>, vector<1x1152x128xbf16>
    %122 = vector.shape_cast %121 : vector<1x1152x128xbf16> to vector<1152x128xbf16>
    %cst_108 = arith.constant dense<0.000000e+00> : vector<56x128xf32>
    %123 = tpu.matmul %120, %122, %cst_108 {dimension_numbers = #tpu.dot_dimension_numbers<[1], [0], [0], [1], [0, 0, 1, 1], [], []>} : vector<56x1152xbf16>, vector<1152x128xbf16>, vector<56x128xf32> -> vector<56x128xf32>
    %c1_109 = arith.constant 1 : index
    %c0_110 = arith.constant 0 : index
    %c0_111 = arith.constant 0 : index
    %124 = vector.load %arg4[%c1_109, %c0_110, %c0_111] : memref<4x1152x128xbf16, #tpu.memory_space<vmem>>, vector<1x1152x128xbf16>
    %125 = vector.shape_cast %124 : vector<1x1152x128xbf16> to vector<1152x128xbf16>
    %cst_112 = arith.constant dense<0.000000e+00> : vector<56x128xf32>
    %126 = tpu.matmul %120, %125, %cst_112 {dimension_numbers = #tpu.dot_dimension_numbers<[1], [0], [0], [1], [0, 0, 1, 1], [], []>} : vector<56x1152xbf16>, vector<1152x128xbf16>, vector<56x128xf32> -> vector<56x128xf32>
    %127 = arith.maximumf %123, %126 : vector<56x128xf32>
    %c2_113 = arith.constant 2 : index
    %c0_114 = arith.constant 0 : index
    %c0_115 = arith.constant 0 : index
    %128 = vector.load %arg4[%c2_113, %c0_114, %c0_115] : memref<4x1152x128xbf16, #tpu.memory_space<vmem>>, vector<1x1152x128xbf16>
    %129 = vector.shape_cast %128 : vector<1x1152x128xbf16> to vector<1152x128xbf16>
    %cst_116 = arith.constant dense<0.000000e+00> : vector<56x128xf32>
    %130 = tpu.matmul %120, %129, %cst_116 {dimension_numbers = #tpu.dot_dimension_numbers<[1], [0], [0], [1], [0, 0, 1, 1], [], []>} : vector<56x1152xbf16>, vector<1152x128xbf16>, vector<56x128xf32> -> vector<56x128xf32>
    %131 = arith.maximumf %127, %130 : vector<56x128xf32>
    %c3_117 = arith.constant 3 : index
    %c0_118 = arith.constant 0 : index
    %c0_119 = arith.constant 0 : index
    %132 = vector.load %arg4[%c3_117, %c0_118, %c0_119] : memref<4x1152x128xbf16, #tpu.memory_space<vmem>>, vector<1x1152x128xbf16>
    %133 = vector.shape_cast %132 : vector<1x1152x128xbf16> to vector<1152x128xbf16>
    %cst_120 = arith.constant dense<0.000000e+00> : vector<56x128xf32>
    %134 = tpu.matmul %120, %133, %cst_120 {dimension_numbers = #tpu.dot_dimension_numbers<[1], [0], [0], [1], [0, 0, 1, 1], [], []>} : vector<56x1152xbf16>, vector<1152x128xbf16>, vector<56x128xf32> -> vector<56x128xf32>
    %135 = arith.maximumf %131, %134 : vector<56x128xf32>
    %136 = vector.broadcast %3 : vector<1x128xf32> to vector<56x128xf32>
    %137 = arith.addf %135, %136 : vector<56x128xf32>
    %cst_121 = arith.constant 0.000000e+00 : f32
    %138 = vector.broadcast %cst_121 : f32 to vector<56x128xf32>
    %139 = arith.maximumf %137, %138 : vector<56x128xf32>
    %140 = arith.truncf %139 : vector<56x128xf32> to vector<56x128xbf16>
    %c1_122 = arith.constant 1 : index
    %c0_123 = arith.constant 0 : index
    %c0_124 = arith.constant 0 : index
    %141 = vector.load %arg6[%c1_122, %c0_123, %c0_124] : memref<2x56x128xbf16, #tpu.memory_space<vmem>>, vector<1x56x128xbf16>
    %142 = vector.shape_cast %141 : vector<1x56x128xbf16> to vector<56x128xbf16>
    %143 = vector.shape_cast %140 : vector<56x128xbf16> to vector<1x56x128xbf16>
    tpu.vector_store %arg6[%c1_122, %c0_123, %c0_124], %143 {strides = array<i32>} : memref<2x56x128xbf16, #tpu.memory_space<vmem>>, vector<1x56x128xbf16>,
    return
  }
  func.func @transform_0(%arg0: i32) -> (i32, i32, i32) {
    %c0_i32 = arith.constant 0 : i32
    %c0_i32_0 = arith.constant 0 : i32
    %c0_i32_1 = arith.constant 0 : i32
    return %arg0, %c0_i32, %c0_i32_0 : i32, i32, i32
  }
  func.func @transform_1(%arg0: i32) -> (i32, i32) {
    %c0_i32 = arith.constant 0 : i32
    %c0_i32_0 = arith.constant 0 : i32
    %c0_i32_1 = arith.constant 0 : i32
    return %c0_i32, %c0_i32_0 : i32, i32
  }
  func.func @transform_2(%arg0: i32) -> (i32, i32) {
    %c0_i32 = arith.constant 0 : i32
    %c0_i32_0 = arith.constant 0 : i32
    %c0_i32_1 = arith.constant 0 : i32
    return %c0_i32, %c0_i32_0 : i32, i32
  }
  func.func @transform_3(%arg0: i32) -> (i32, i32, i32) {
    %c0_i32 = arith.constant 0 : i32
    %c0_i32_0 = arith.constant 0 : i32
    %c0_i32_1 = arith.constant 0 : i32
    %c0_i32_2 = arith.constant 0 : i32
    return %c0_i32, %c0_i32_0, %c0_i32_1 : i32, i32, i32
  }
  func.func @transform_4(%arg0: i32) -> (i32, i32) {
    %c0_i32 = arith.constant 0 : i32
    %c0_i32_0 = arith.constant 0 : i32
    %c0_i32_1 = arith.constant 0 : i32
    return %c0_i32, %c0_i32_0 : i32, i32
  }
  func.func @transform_5(%arg0: i32) -> (i32, i32, i32) {
    %c0_i32 = arith.constant 0 : i32
    %c0_i32_0 = arith.constant 0 : i32
    %c0_i32_1 = arith.constant 0 : i32
    return %arg0, %c0_i32, %c0_i32_0 : i32, i32, i32
  }
}

module attributes {stable_mosaic.version = 11 : i64} {
  func.func @_fc_kernel(%arg0: i32, %arg1: memref<2x7168xbf16, #tpu.memory_space<vmem>>, %arg2: memref<7168x128xbf16, #tpu.memory_space<vmem>>, %arg3: memref<1x128xf32, #tpu.memory_space<vmem>>, %arg4: memref<2x128xf32, #tpu.memory_space<vmem>>) attributes {dimension_semantics = [#tpu.dimension_semantics<arbitrary>], iteration_bounds = array<i64: 1>, scalar_prefetch = 0 : i64, scratch_operands = 0 : i64, tpu.core_type = #tpu.core_type<tc>, window_params = [{pipeline_mode = #tpu.pipeline_mode<synchronous>, transform_indices = @transform_0, window_bounds = array<i64: 2, 7168>}, {pipeline_mode = #tpu.pipeline_mode<synchronous>, transform_indices = @transform_1, window_bounds = array<i64: 7168, 128>}, {pipeline_mode = #tpu.pipeline_mode<synchronous>, transform_indices = @transform_2, window_bounds = array<i64: 1, 128>}, {pipeline_mode = #tpu.pipeline_mode<synchronous>, transform_indices = @transform_3, window_bounds = array<i64: 2, 128>}]} {
    %c0 = arith.constant 0 : index
    %c0_0 = arith.constant 0 : index
    %0 = vector.load %arg1[%c0, %c0_0] : memref<2x7168xbf16, #tpu.memory_space<vmem>>, vector<2x7168xbf16>
    %c0_1 = arith.constant 0 : index
    %c0_2 = arith.constant 0 : index
    %1 = vector.load %arg2[%c0_1, %c0_2] : memref<7168x128xbf16, #tpu.memory_space<vmem>>, vector<7168x128xbf16>
    %cst = arith.constant dense<0.000000e+00> : vector<2x128xf32>
    %2 = tpu.matmul %0, %1, %cst {dimension_numbers = #tpu.dot_dimension_numbers<[1], [0], [0], [1], [0, 0, 1, 1], [], []>} : vector<2x7168xbf16>, vector<7168x128xbf16>, vector<2x128xf32> -> vector<2x128xf32>
    %c0_3 = arith.constant 0 : index
    %c0_4 = arith.constant 0 : index
    %3 = vector.load %arg3[%c0_3, %c0_4] : memref<1x128xf32, #tpu.memory_space<vmem>>, vector<1x128xf32>
    %4 = vector.broadcast %3 : vector<1x128xf32> to vector<2x128xf32>
    %5 = arith.addf %2, %4 : vector<2x128xf32>
    %c0_5 = arith.constant 0 : index
    %c0_6 = arith.constant 0 : index
    %6 = vector.load %arg4[%c0_5, %c0_6] : memref<2x128xf32, #tpu.memory_space<vmem>>, vector<2x128xf32>
    tpu.vector_store %arg4[%c0_5, %c0_6], %5 {strides = array<i32>} : memref<2x128xf32, #tpu.memory_space<vmem>>, vector<2x128xf32>,
    return
  }
  func.func @transform_0(%arg0: i32) -> (i32, i32) {
    %c0_i32 = arith.constant 0 : i32
    %c0_i32_0 = arith.constant 0 : i32
    %c0_i32_1 = arith.constant 0 : i32
    return %c0_i32, %c0_i32_0 : i32, i32
  }
  func.func @transform_1(%arg0: i32) -> (i32, i32) {
    %c0_i32 = arith.constant 0 : i32
    %c0_i32_0 = arith.constant 0 : i32
    %c0_i32_1 = arith.constant 0 : i32
    return %c0_i32, %c0_i32_0 : i32, i32
  }
  func.func @transform_2(%arg0: i32) -> (i32, i32) {
    %c0_i32 = arith.constant 0 : i32
    %c0_i32_0 = arith.constant 0 : i32
    %c0_i32_1 = arith.constant 0 : i32
    return %c0_i32, %c0_i32_0 : i32, i32
  }
  func.func @transform_3(%arg0: i32) -> (i32, i32) {
    %c0_i32 = arith.constant 0 : i32
    %c0_i32_0 = arith.constant 0 : i32
    %c0_i32_1 = arith.constant 0 : i32
    return %c0_i32, %c0_i32_0 : i32, i32
  }
}

</mosaic_0001>

<llo_original>
// kernel: convnet_forward.3
$region0: #{convnet_forward.3}
  #allocation0 [shape = 'u32[]', space=smem, size = 0x4, offset = 0x4, fixed_abs, tag = 'smem constant byte address 0x4 - core index']
  #allocation1 [shape = 'u32[144,128]{1,0:T(1,128)}', space=vmem, size = 0x12000, scoped, tag = 'internal scratch']
  %s0 = inlined_call_operand.vmem [shape: bf16[2,7168], index: 0, kind: input, shape index: {}]
  %s1 = inlined_call_operand.vmem [shape: bf16[7168,128], index: 1, kind: input, shape index: {}]
  %s2 = inlined_call_operand.vmem [shape: f32[1,128], index: 2, kind: input, shape index: {}]
  %s3 = inlined_call_operand.hbm [shape: f32[2,128], index: 3, kind: output, shape index: {}]
  %s4 = sld [smem:[#allocation0]]
  $region22: #{convnet_forward.3} parent=0
    _
  %s6 = ssub.s32 1, %s4
  %s7 = scalar_select 0, %s6, %s4
  $region1: #{convnet_forward.3} parent=0
    #allocation2 [shape = 'u8[1024]{0}', space=vmem, size = 0x400, scoped, tag = 'output window, operand 0, single buffered']
    #allocation3 [shape = 's32[1]{0}', space=sflag, size = 0x4, scoped, tag = 'scoped memory for convnet_forward.3']
    %8 = vsyncpa [#allocation3], 0
    // Predicated region
    $region2: #{convnet_forward.3} parent=1 // pred_check
      _
    $region3: #{convnet_forward.3} parent=1 // pred_check_branch
      %10 = sbr.rel (0) target = $region5
    $region4: #{convnet_forward.3} parent=1 // pred_region
      _
    $region5: #{convnet_forward.3} parent=1 // pred_fallthru
      _
    // Predicated region
    $region6: #{convnet_forward.3} parent=1 // pred_check
      _
    $region7: #{convnet_forward.3} parent=1 // pred_check_branch
      %12 = sbr.rel (0) target = $region9
    $region8: #{convnet_forward.3} parent=1 // pred_region
      _
    $region9: #{convnet_forward.3} parent=1 // pred_fallthru
      _
    // Predicated region
    $region10: #{convnet_forward.3} parent=1 // pred_check
      _
    $region11: #{convnet_forward.3} parent=1 // pred_check_branch
      %14 = sbr.rel (0) target = $region13
    $region12: #{convnet_forward.3} parent=1 // pred_region
      _
    $region13: #{convnet_forward.3} parent=1 // pred_fallthru
      _
    %v16 = vld [vmem:[%s0] sm:$0xff]
    %v17 = vld [vmem:[%s0 + $0x8] sm:$0xff]
    %v18 = vld [vmem:[%s0 + $0x10] sm:$0xff]
    %v19 = vld [vmem:[%s0 + $0x18] sm:$0xff]
    %v20 = vld [vmem:[%s0 + $0x20] sm:$0xff]
    %v21 = vld [vmem:[%s0 + $0x28] sm:$0xff]
    %v22 = vld [vmem:[%s0 + $0x30] sm:$0xff]
    %v23 = vld [vmem:[%s1] sm:$0xf]
    %v24 = vld [vmem:[%s1 + $0x4] sm:$0xf]
    %v25 = vld [vmem:[%s1 + $0x8] sm:$0xf]
    %v26 = vld [vmem:[%s1 + $0xc] sm:$0xf]
    %v27 = vld [vmem:[%s1 + $0x10] sm:$0xf]
    %v28 = vld [vmem:[%s1 + $0x14] sm:$0xf]
    %v29 = vld [vmem:[%s1 + $0x18] sm:$0xf]
    %v30 = vld [vmem:[%s1 + $0x1c] sm:$0xf]
    %v31 = vld [vmem:[%s1 + $0x20] sm:$0xf]
    %v32 = vld [vmem:[%s1 + $0x24] sm:$0xf]
    %v33 = vld [vmem:[%s1 + $0x28] sm:$0xf]
    %v34 = vld [vmem:[%s1 + $0x2c] sm:$0xf]
    %v35 = vld [vmem:[%s1 + $0x30] sm:$0xf]
    %v36 = vld [vmem:[%s1 + $0x34] sm:$0xf]
    %v37 = vld [vmem:[%s1 + $0x38] sm:$0xf]
    %v38 = vld [vmem:[%s1 + $0x3c] sm:$0xf]
    %v39 = vld [vmem:[%s1 + $0x40] sm:$0xf]
    %v40 = vld [vmem:[%s1 + $0x44] sm:$0xf]
    %v41 = vld [vmem:[%s1 + $0x48] sm:$0xf]
    %v42 = vld [vmem:[%s1 + $0x4c] sm:$0xf]
    %v43 = vld [vmem:[%s1 + $0x50] sm:$0xf]
    %v44 = vld [vmem:[%s1 + $0x54] sm:$0xf]
    %v45 = vld [vmem:[%s1 + $0x58] sm:$0xf]
    %v46 = vld [vmem:[%s1 + $0x5c] sm:$0xf]
    %v47 = vld [vmem:[%s1 + $0x60] sm:$0xf]
    %v48 = vld [vmem:[%s1 + $0x64] sm:$0xf]
    %v49 = vld [vmem:[%s1 + $0x68] sm:$0xf]
    %v50 = vld [vmem:[%s1 + $0x6c] sm:$0xf]
    %v51 = vld [vmem:[%s1 + $0x70] sm:$0xf]
    %v52 = vld [vmem:[%s1 + $0x74] sm:$0xf]
    %v53 = vld [vmem:[%s1 + $0x78] sm:$0xf]
    %v54 = vld [vmem:[%s1 + $0x7c] sm:$0xf]
    %v55 = vld [vmem:[%s1 + $0x80] sm:$0xf]
    %v56 = vld [vmem:[%s1 + $0x84] sm:$0xf]
    %v57 = vld [vmem:[%s1 + $0x88] sm:$0xf]
    %v58 = vld [vmem:[%s1 + $0x8c] sm:$0xf]
    %v59 = vld [vmem:[%s1 + $0x90] sm:$0xf]
    %v60 = vld [vmem:[%s1 + $0x94] sm:$0xf]
    %v61 = vld [vmem:[%s1 + $0x98] sm:$0xf]
    %v62 = vld [vmem:[%s1 + $0x9c] sm:$0xf]
    %v63 = vld [vmem:[%s1 + $0xa0] sm:$0xf]
    %v64 = vld [vmem:[%s1 + $0xa4] sm:$0xf]
    %v65 = vld [vmem:[%s1 + $0xa8] sm:$0xf]
    %v66 = vld [vmem:[%s1 + $0xac] sm:$0xf]
    %v67 = vld [vmem:[%s1 + $0xb0] sm:$0xf]
    %v68 = vld [vmem:[%s1 + $0xb4] sm:$0xf]
    %v69 = vld [vmem:[%s1 + $0xb8] sm:$0xf]
    %v70 = vld [vmem:[%s1 + $0xbc] sm:$0xf]
    %v71 = vld [vmem:[%s1 + $0xc0] sm:$0xf]
    %v72 = vld [vmem:[%s1 + $0xc4] sm:$0xf]
    %v73 = vld [vmem:[%s1 + $0xc8] sm:$0xf]
    %v74 = vld [vmem:[%s1 + $0xcc] sm:$0xf]
    %v75 = vld [vmem:[%s1 + $0xd0] sm:$0xf]
    %v76 = vld [vmem:[%s1 + $0xd4] sm:$0xf]
    %v77 = vld [vmem:[%s1 + $0xd8] sm:$0xf]
    %v78 = vld [vmem:[%s1 + $0xdc] sm:$0xf]
    %v79 = vld [vmem:[%s1 + $0xe0] sm:$0xf]
    %v80 = vld [vmem:[%s1 + $0xe4] sm:$0xf]
    %v81 = vld [vmem:[%s1 + $0xe8] sm:$0xf]
    %v82 = vld [vmem:[%s1 + $0xec] sm:$0xf]
    %v83 = vld [vmem:[%s1 + $0xf0] sm:$0xf]
    %v84 = vld [vmem:[%s1 + $0xf4] sm:$0xf]
    %v85 = vld [vmem:[%s1 + $0xf8] sm:$0xf]
    %v86 = vld [vmem:[%s1 + $0xfc] sm:$0xf]
    %v87 = vld [vmem:[%s1 + $0x100] sm:$0xf]
    %v88 = vld [vmem:[%s1 + $0x104] sm:$0xf]
    %v89 = vld [vmem:[%s1 + $0x108] sm:$0xf]
    %v90 = vld [vmem:[%s1 + $0x10c] sm:$0xf]
    %v91 = vld [vmem:[%s1 + $0x110] sm:$0xf]
    %v92 = vld [vmem:[%s1 + $0x114] sm:$0xf]
    %v93 = vld [vmem:[%s1 + $0x118] sm:$0xf]
    %v94 = vld [vmem:[%s1 + $0x11c] sm:$0xf]
    %v95 = vld [vmem:[%s1 + $0x120] sm:$0xf]
    %v96 = vld [vmem:[%s1 + $0x124] sm:$0xf]
    %v97 = vld [vmem:[%s1 + $0x128] sm:$0xf]
    %v98 = vld [vmem:[%s1 + $0x12c] sm:$0xf]
    %v99 = vld [vmem:[%s1 + $0x130] sm:$0xf]
    %v100 = vld [vmem:[%s1 + $0x134] sm:$0xf]
    %v101 = vld [vmem:[%s1 + $0x138] sm:$0xf]
    %v102 = vld [vmem:[%s1 + $0x13c] sm:$0xf]
    %v103 = vld [vmem:[%s1 + $0x140] sm:$0xf]
    %v104 = vld [vmem:[%s1 + $0x144] sm:$0xf]
    %v105 = vld [vmem:[%s1 + $0x148] sm:$0xf]
    %v106 = vld [vmem:[%s1 + $0x14c] sm:$0xf]
    %v107 = vld [vmem:[%s1 + $0x150] sm:$0xf]
    %v108 = vld [vmem:[%s1 + $0x154] sm:$0xf]
    %v109 = vld [vmem:[%s1 + $0x158] sm:$0xf]
    %v110 = vld [vmem:[%s1 + $0x15c] sm:$0xf]
    %v111 = vld [vmem:[%s1 + $0x160] sm:$0xf]
    %v112 = vld [vmem:[%s1 + $0x164] sm:$0xf]
    %v113 = vld [vmem:[%s1 + $0x168] sm:$0xf]
    %v114 = vld [vmem:[%s1 + $0x16c] sm:$0xf]
    %v115 = vld [vmem:[%s1 + $0x170] sm:$0xf]
    %v116 = vld [vmem:[%s1 + $0x174] sm:$0xf]
    %v117 = vld [vmem:[%s1 + $0x178] sm:$0xf]
    %v118 = vld [vmem:[%s1 + $0x17c] sm:$0xf]
    %v119 = vld [vmem:[%s1 + $0x180] sm:$0xf]
    %v120 = vld [vmem:[%s1 + $0x184] sm:$0xf]
    %v121 = vld [vmem:[%s1 + $0x188] sm:$0xf]
    %v122 = vld [vmem:[%s1 + $0x18c] sm:$0xf]
    %v123 = vld [vmem:[%s1 + $0x190] sm:$0xf]
    %v124 = vld [vmem:[%s1 + $0x194] sm:$0xf]
    %v125 = vld [vmem:[%s1 + $0x198] sm:$0xf]
    %v126 = vld [vmem:[%s1 + $0x19c] sm:$0xf]
    %v127 = vld [vmem:[%s1 + $0x1a0] sm:$0xf]
    %v128 = vld [vmem:[%s1 + $0x1a4] sm:$0xf]
    %v129 = vld [vmem:[%s1 + $0x1a8] sm:$0xf]
    %v130 = vld [vmem:[%s1 + $0x1ac] sm:$0xf]
    %v131 = vld [vmem:[%s1 + $0x1b0] sm:$0xf]
    %v132 = vld [vmem:[%s1 + $0x1b4] sm:$0xf]
    %v133 = vld [vmem:[%s1 + $0x1b8] sm:$0xf]
    %v134 = vld [vmem:[%s1 + $0x1bc] sm:$0xf]
    %v135 = vld [vmem:[%s1 + $0x1c0] sm:$0xf]
    %v136 = vld [vmem:[%s1 + $0x1c4] sm:$0xf]
    %v137 = vld [vmem:[%s1 + $0x1c8] sm:$0xf]
    %v138 = vld [vmem:[%s1 + $0x1cc] sm:$0xf]
    %v139 = vld [vmem:[%s1 + $0x1d0] sm:$0xf]
    %v140 = vld [vmem:[%s1 + $0x1d4] sm:$0xf]
    %v141 = vld [vmem:[%s1 + $0x1d8] sm:$0xf]
    %v142 = vld [vmem:[%s1 + $0x1dc] sm:$0xf]
    %v143 = vld [vmem:[%s1 + $0x1e0] sm:$0xf]
    %v144 = vld [vmem:[%s1 + $0x1e4] sm:$0xf]
    %v145 = vld [vmem:[%s1 + $0x1e8] sm:$0xf]
    %v146 = vld [vmem:[%s1 + $0x1ec] sm:$0xf]
    %v147 = vld [vmem:[%s1 + $0x1f0] sm:$0xf]
    %v148 = vld [vmem:[%s1 + $0x1f4] sm:$0xf]
    %v149 = vld [vmem:[%s1 + $0x1f8] sm:$0xf]
    %v150 = vld [vmem:[%s1 + $0x1fc] sm:$0xf]
    %v151 = vld [vmem:[%s1 + $0x200] sm:$0xf]
    %v152 = vld [vmem:[%s1 + $0x204] sm:$0xf]
    %v153 = vld [vmem:[%s1 + $0x208] sm:$0xf]
    %v154 = vld [vmem:[%s1 + $0x20c] sm:$0xf]
    %v155 = vld [vmem:[%s1 + $0x210] sm:$0xf]
    %v156 = vld [vmem:[%s1 + $0x214] sm:$0xf]
    %v157 = vld [vmem:[%s1 + $0x218] sm:$0xf]
    %v158 = vld [vmem:[%s1 + $0x21c] sm:$0xf]
    %v159 = vld [vmem:[%s1 + $0x220] sm:$0xf]
    %v160 = vld [vmem:[%s1 + $0x224] sm:$0xf]
    %v161 = vld [vmem:[%s1 + $0x228] sm:$0xf]
    %v162 = vld [vmem:[%s1 + $0x22c] sm:$0xf]
    %v163 = vld [vmem:[%s1 + $0x230] sm:$0xf]
    %v164 = vld [vmem:[%s1 + $0x234] sm:$0xf]
    %v165 = vld [vmem:[%s1 + $0x238] sm:$0xf]
    %v166 = vld [vmem:[%s1 + $0x23c] sm:$0xf]
    %v167 = vld [vmem:[%s1 + $0x240] sm:$0xf]
    %v168 = vld [vmem:[%s1 + $0x244] sm:$0xf]
    %v169 = vld [vmem:[%s1 + $0x248] sm:$0xf]
    %v170 = vld [vmem:[%s1 + $0x24c] sm:$0xf]
    %v171 = vld [vmem:[%s1 + $0x250] sm:$0xf]
    %v172 = vld [vmem:[%s1 + $0x254] sm:$0xf]
    %v173 = vld [vmem:[%s1 + $0x258] sm:$0xf]
    %v174 = vld [vmem:[%s1 + $0x25c] sm:$0xf]
    %v175 = vld [vmem:[%s1 + $0x260] sm:$0xf]
    %v176 = vld [vmem:[%s1 + $0x264] sm:$0xf]
    %v177 = vld [vmem:[%s1 + $0x268] sm:$0xf]
    %v178 = vld [vmem:[%s1 + $0x26c] sm:$0xf]
    %v179 = vld [vmem:[%s1 + $0x270] sm:$0xf]
    %v180 = vld [vmem:[%s1 + $0x274] sm:$0xf]
    %v181 = vld [vmem:[%s1 + $0x278] sm:$0xf]
    %v182 = vld [vmem:[%s1 + $0x27c] sm:$0xf]
    %v183 = vld [vmem:[%s1 + $0x280] sm:$0xf]
    %v184 = vld [vmem:[%s1 + $0x284] sm:$0xf]
    %v185 = vld [vmem:[%s1 + $0x288] sm:$0xf]
    %v186 = vld [vmem:[%s1 + $0x28c] sm:$0xf]
    %v187 = vld [vmem:[%s1 + $0x290] sm:$0xf]
    %v188 = vld [vmem:[%s1 + $0x294] sm:$0xf]
    %v189 = vld [vmem:[%s1 + $0x298] sm:$0xf]
    %v190 = vld [vmem:[%s1 + $0x29c] sm:$0xf]
    %v191 = vld [vmem:[%s1 + $0x2a0] sm:$0xf]
    %v192 = vld [vmem:[%s1 + $0x2a4] sm:$0xf]
    %v193 = vld [vmem:[%s1 + $0x2a8] sm:$0xf]
    %v194 = vld [vmem:[%s1 + $0x2ac] sm:$0xf]
    %v195 = vld [vmem:[%s1 + $0x2b0] sm:$0xf]
    %v196 = vld [vmem:[%s1 + $0x2b4] sm:$0xf]
    %v197 = vld [vmem:[%s1 + $0x2b8] sm:$0xf]
    %v198 = vld [vmem:[%s1 + $0x2bc] sm:$0xf]
    %v199 = vld [vmem:[%s1 + $0x2c0] sm:$0xf]
    %v200 = vld [vmem:[%s1 + $0x2c4] sm:$0xf]
    %v201 = vld [vmem:[%s1 + $0x2c8] sm:$0xf]
    %v202 = vld [vmem:[%s1 + $0x2cc] sm:$0xf]
    %v203 = vld [vmem:[%s1 + $0x2d0] sm:$0xf]
    %v204 = vld [vmem:[%s1 + $0x2d4] sm:$0xf]
    %v205 = vld [vmem:[%s1 + $0x2d8] sm:$0xf]
    %v206 = vld [vmem:[%s1 + $0x2dc] sm:$0xf]
    %v207 = vld [vmem:[%s1 + $0x2e0] sm:$0xf]
    %v208 = vld [vmem:[%s1 + $0x2e4] sm:$0xf]
    %v209 = vld [vmem:[%s1 + $0x2e8] sm:$0xf]
    %v210 = vld [vmem:[%s1 + $0x2ec] sm:$0xf]
    %v211 = vld [vmem:[%s1 + $0x2f0] sm:$0xf]
    %v212 = vld [vmem:[%s1 + $0x2f4] sm:$0xf]
    %v213 = vld [vmem:[%s1 + $0x2f8] sm:$0xf]
    %v214 = vld [vmem:[%s1 + $0x2fc] sm:$0xf]
    %v215 = vld [vmem:[%s1 + $0x300] sm:$0xf]
    %v216 = vld [vmem:[%s1 + $0x304] sm:$0xf]
    %v217 = vld [vmem:[%s1 + $0x308] sm:$0xf]
    %v218 = vld [vmem:[%s1 + $0x30c] sm:$0xf]
    %v219 = vld [vmem:[%s1 + $0x310] sm:$0xf]
    %v220 = vld [vmem:[%s1 + $0x314] sm:$0xf]
    %v221 = vld [vmem:[%s1 + $0x318] sm:$0xf]
    %v222 = vld [vmem:[%s1 + $0x31c] sm:$0xf]
    %v223 = vld [vmem:[%s1 + $0x320] sm:$0xf]
    %v224 = vld [vmem:[%s1 + $0x324] sm:$0xf]
    %v225 = vld [vmem:[%s1 + $0x328] sm:$0xf]
    %v226 = vld [vmem:[%s1 + $0x32c] sm:$0xf]
    %v227 = vld [vmem:[%s1 + $0x330] sm:$0xf]
    %v228 = vld [vmem:[%s1 + $0x334] sm:$0xf]
    %v229 = vld [vmem:[%s1 + $0x338] sm:$0xf]
    %v230 = vld [vmem:[%s1 + $0x33c] sm:$0xf]
    %v231 = vld [vmem:[%s1 + $0x340] sm:$0xf]
    %v232 = vld [vmem:[%s1 + $0x344] sm:$0xf]
    %v233 = vld [vmem:[%s1 + $0x348] sm:$0xf]
    %v234 = vld [vmem:[%s1 + $0x34c] sm:$0xf]
    %v235 = vld [vmem:[%s1 + $0x350] sm:$0xf]
    %v236 = vld [vmem:[%s1 + $0x354] sm:$0xf]
    %v237 = vld [vmem:[%s1 + $0x358] sm:$0xf]
    %v238 = vld [vmem:[%s1 + $0x35c] sm:$0xf]
    %v239 = vld [vmem:[%s1 + $0x360] sm:$0xf]
    %v240 = vld [vmem:[%s1 + $0x364] sm:$0xf]
    %v241 = vld [vmem:[%s1 + $0x368] sm:$0xf]
    %v242 = vld [vmem:[%s1 + $0x36c] sm:$0xf]
    %v243 = vld [vmem:[%s1 + $0x370] sm:$0xf]
    %v244 = vld [vmem:[%s1 + $0x374] sm:$0xf]
    %v245 = vld [vmem:[%s1 + $0x378] sm:$0xf]
    %v246 = vld [vmem:[%s1 + $0x37c] sm:$0xf]
    %v247 = vld [vmem:[%s1 + $0x380] sm:$0xf]
    %v248 = vld [vmem:[%s1 + $0x384] sm:$0xf]
    %v249 = vld [vmem:[%s1 + $0x388] sm:$0xf]
    %v250 = vld [vmem:[%s1 + $0x38c] sm:$0xf]
    %v251 = vld [vmem:[%s1 + $0x390] sm:$0xf]
    %v252 = vld [vmem:[%s1 + $0x394] sm:$0xf]
    %v253 = vld [vmem:[%s1 + $0x398] sm:$0xf]
    %v254 = vld [vmem:[%s1 + $0x39c] sm:$0xf]
    %v255 = vld [vmem:[%s1 + $0x3a0] sm:$0xf]
    %v256 = vld [vmem:[%s1 + $0x3a4] sm:$0xf]
    %v257 = vld [vmem:[%s1 + $0x3a8] sm:$0xf]
    %v258 = vld [vmem:[%s1 + $0x3ac] sm:$0xf]
    %v259 = vld [vmem:[%s1 + $0x3b0] sm:$0xf]
    %v260 = vld [vmem:[%s1 + $0x3b4] sm:$0xf]
    %v261 = vld [vmem:[%s1 + $0x3b8] sm:$0xf]
    %v262 = vld [vmem:[%s1 + $0x3bc] sm:$0xf]
    %v263 = vld [vmem:[%s1 + $0x3c0] sm:$0xf]
    %v264 = vld [vmem:[%s1 + $0x3c4] sm:$0xf]
    %v265 = vld [vmem:[%s1 + $0x3c8] sm:$0xf]
    %v266 = vld [vmem:[%s1 + $0x3cc] sm:$0xf]
    %v267 = vld [vmem:[%s1 + $0x3d0] sm:$0xf]
    %v268 = vld [vmem:[%s1 + $0x3d4] sm:$0xf]
    %v269 = vld [vmem:[%s1 + $0x3d8] sm:$0xf]
    %v270 = vld [vmem:[%s1 + $0x3dc] sm:$0xf]
    %v271 = vld [vmem:[%s1 + $0x3e0] sm:$0xf]
    %v272 = vld [vmem:[%s1 + $0x3e4] sm:$0xf]
    %v273 = vld [vmem:[%s1 + $0x3e8] sm:$0xf]
    %v274 = vld [vmem:[%s1 + $0x3ec] sm:$0xf]
    %v275 = vld [vmem:[%s1 + $0x3f0] sm:$0xf]
    %v276 = vld [vmem:[%s1 + $0x3f4] sm:$0xf]
    %v277 = vld [vmem:[%s1 + $0x3f8] sm:$0xf]
    %v278 = vld [vmem:[%s1 + $0x3fc] sm:$0xf]
    %v279 = vld [vmem:[%s1 + $0x400] sm:$0xf]
    %v280 = vld [vmem:[%s1 + $0x404] sm:$0xf]
    %v281 = vld [vmem:[%s1 + $0x408] sm:$0xf]
    %v282 = vld [vmem:[%s1 + $0x40c] sm:$0xf]
    %v283 = vld [vmem:[%s1 + $0x410] sm:$0xf]
    %v284 = vld [vmem:[%s1 + $0x414] sm:$0xf]
    %v285 = vld [vmem:[%s1 + $0x418] sm:$0xf]
    %v286 = vld [vmem:[%s1 + $0x41c] sm:$0xf]
    %v287 = vld [vmem:[%s1 + $0x420] sm:$0xf]
    %v288 = vld [vmem:[%s1 + $0x424] sm:$0xf]
    %v289 = vld [vmem:[%s1 + $0x428] sm:$0xf]
    %v290 = vld [vmem:[%s1 + $0x42c] sm:$0xf]
    %v291 = vld [vmem:[%s1 + $0x430] sm:$0xf]
    %v292 = vld [vmem:[%s1 + $0x434] sm:$0xf]
    %v293 = vld [vmem:[%s1 + $0x438] sm:$0xf]
    %v294 = vld [vmem:[%s1 + $0x43c] sm:$0xf]
    %v295 = vld [vmem:[%s1 + $0x440] sm:$0xf]
    %v296 = vld [vmem:[%s1 + $0x444] sm:$0xf]
    %v297 = vld [vmem:[%s1 + $0x448] sm:$0xf]
    %v298 = vld [vmem:[%s1 + $0x44c] sm:$0xf]
    %v299 = vld [vmem:[%s1 + $0x450] sm:$0xf]
    %v300 = vld [vmem:[%s1 + $0x454] sm:$0xf]
    %v301 = vld [vmem:[%s1 + $0x458] sm:$0xf]
    %v302 = vld [vmem:[%s1 + $0x45c] sm:$0xf]
    %v303 = vld [vmem:[%s1 + $0x460] sm:$0xf]
    %v304 = vld [vmem:[%s1 + $0x464] sm:$0xf]
    %v305 = vld [vmem:[%s1 + $0x468] sm:$0xf]
    %v306 = vld [vmem:[%s1 + $0x46c] sm:$0xf]
    %v307 = vld [vmem:[%s1 + $0x470] sm:$0xf]
    %v308 = vld [vmem:[%s1 + $0x474] sm:$0xf]
    %v309 = vld [vmem:[%s1 + $0x478] sm:$0xf]
    %v310 = vld [vmem:[%s1 + $0x47c] sm:$0xf]
    %v311 = vld [vmem:[%s1 + $0x480] sm:$0xf]
    %v312 = vld [vmem:[%s1 + $0x484] sm:$0xf]
    %v313 = vld [vmem:[%s1 + $0x488] sm:$0xf]
    %v314 = vld [vmem:[%s1 + $0x48c] sm:$0xf]
    %v315 = vld [vmem:[%s1 + $0x490] sm:$0xf]
    %v316 = vld [vmem:[%s1 + $0x494] sm:$0xf]
    %v317 = vld [vmem:[%s1 + $0x498] sm:$0xf]
    %v318 = vld [vmem:[%s1 + $0x49c] sm:$0xf]
    %v319 = vld [vmem:[%s1 + $0x4a0] sm:$0xf]
    %v320 = vld [vmem:[%s1 + $0x4a4] sm:$0xf]
    %v321 = vld [vmem:[%s1 + $0x4a8] sm:$0xf]
    %v322 = vld [vmem:[%s1 + $0x4ac] sm:$0xf]
    %v323 = vld [vmem:[%s1 + $0x4b0] sm:$0xf]
    %v324 = vld [vmem:[%s1 + $0x4b4] sm:$0xf]
    %v325 = vld [vmem:[%s1 + $0x4b8] sm:$0xf]
    %v326 = vld [vmem:[%s1 + $0x4bc] sm:$0xf]
    %v327 = vld [vmem:[%s1 + $0x4c0] sm:$0xf]
    %v328 = vld [vmem:[%s1 + $0x4c4] sm:$0xf]
    %v329 = vld [vmem:[%s1 + $0x4c8] sm:$0xf]
    %v330 = vld [vmem:[%s1 + $0x4cc] sm:$0xf]
    %v331 = vld [vmem:[%s1 + $0x4d0] sm:$0xf]
    %v332 = vld [vmem:[%s1 + $0x4d4] sm:$0xf]
    %v333 = vld [vmem:[%s1 + $0x4d8] sm:$0xf]
    %v334 = vld [vmem:[%s1 + $0x4dc] sm:$0xf]
    %v335 = vld [vmem:[%s1 + $0x4e0] sm:$0xf]
    %v336 = vld [vmem:[%s1 + $0x4e4] sm:$0xf]
    %v337 = vld [vmem:[%s1 + $0x4e8] sm:$0xf]
    %v338 = vld [vmem:[%s1 + $0x4ec] sm:$0xf]
    %v339 = vld [vmem:[%s1 + $0x4f0] sm:$0xf]
    %v340 = vld [vmem:[%s1 + $0x4f4] sm:$0xf]
    %v341 = vld [vmem:[%s1 + $0x4f8] sm:$0xf]
    %v342 = vld [vmem:[%s1 + $0x4fc] sm:$0xf]
    %v343 = vld [vmem:[%s1 + $0x500] sm:$0xf]
    %v344 = vld [vmem:[%s1 + $0x504] sm:$0xf]
    %v345 = vld [vmem:[%s1 + $0x508] sm:$0xf]
    %v346 = vld [vmem:[%s1 + $0x50c] sm:$0xf]
    %v347 = vld [vmem:[%s1 + $0x510] sm:$0xf]
    %v348 = vld [vmem:[%s1 + $0x514] sm:$0xf]
    %v349 = vld [vmem:[%s1 + $0x518] sm:$0xf]
    %v350 = vld [vmem:[%s1 + $0x51c] sm:$0xf]
    %v351 = vld [vmem:[%s1 + $0x520] sm:$0xf]
    %v352 = vld [vmem:[%s1 + $0x524] sm:$0xf]
    %v353 = vld [vmem:[%s1 + $0x528] sm:$0xf]
    %v354 = vld [vmem:[%s1 + $0x52c] sm:$0xf]
    %v355 = vld [vmem:[%s1 + $0x530] sm:$0xf]
    %v356 = vld [vmem:[%s1 + $0x534] sm:$0xf]
    %v357 = vld [vmem:[%s1 + $0x538] sm:$0xf]
    %v358 = vld [vmem:[%s1 + $0x53c] sm:$0xf]
    %v359 = vld [vmem:[%s1 + $0x540] sm:$0xf]
    %v360 = vld [vmem:[%s1 + $0x544] sm:$0xf]
    %v361 = vld [vmem:[%s1 + $0x548] sm:$0xf]
    %v362 = vld [vmem:[%s1 + $0x54c] sm:$0xf]
    %v363 = vld [vmem:[%s1 + $0x550] sm:$0xf]
    %v364 = vld [vmem:[%s1 + $0x554] sm:$0xf]
    %v365 = vld [vmem:[%s1 + $0x558] sm:$0xf]
    %v366 = vld [vmem:[%s1 + $0x55c] sm:$0xf]
    %v367 = vld [vmem:[%s1 + $0x560] sm:$0xf]
    %v368 = vld [vmem:[%s1 + $0x564] sm:$0xf]
    %v369 = vld [vmem:[%s1 + $0x568] sm:$0xf]
    %v370 = vld [vmem:[%s1 + $0x56c] sm:$0xf]
    %v371 = vld [vmem:[%s1 + $0x570] sm:$0xf]
    %v372 = vld [vmem:[%s1 + $0x574] sm:$0xf]
    %v373 = vld [vmem:[%s1 + $0x578] sm:$0xf]
    %v374 = vld [vmem:[%s1 + $0x57c] sm:$0xf]
    %v375 = vld [vmem:[%s1 + $0x580] sm:$0xf]
    %v376 = vld [vmem:[%s1 + $0x584] sm:$0xf]
    %v377 = vld [vmem:[%s1 + $0x588] sm:$0xf]
    %v378 = vld [vmem:[%s1 + $0x58c] sm:$0xf]
    %v379 = vld [vmem:[%s1 + $0x590] sm:$0xf]
    %v380 = vld [vmem:[%s1 + $0x594] sm:$0xf]
    %v381 = vld [vmem:[%s1 + $0x598] sm:$0xf]
    %v382 = vld [vmem:[%s1 + $0x59c] sm:$0xf]
    %v383 = vld [vmem:[%s1 + $0x5a0] sm:$0xf]
    %v384 = vld [vmem:[%s1 + $0x5a4] sm:$0xf]
    %v385 = vld [vmem:[%s1 + $0x5a8] sm:$0xf]
    %v386 = vld [vmem:[%s1 + $0x5ac] sm:$0xf]
    %v387 = vld [vmem:[%s1 + $0x5b0] sm:$0xf]
    %v388 = vld [vmem:[%s1 + $0x5b4] sm:$0xf]
    %v389 = vld [vmem:[%s1 + $0x5b8] sm:$0xf]
    %v390 = vld [vmem:[%s1 + $0x5bc] sm:$0xf]
    %v391 = vld [vmem:[%s1 + $0x5c0] sm:$0xf]
    %v392 = vld [vmem:[%s1 + $0x5c4] sm:$0xf]
    %v393 = vld [vmem:[%s1 + $0x5c8] sm:$0xf]
    %v394 = vld [vmem:[%s1 + $0x5cc] sm:$0xf]
    %v395 = vld [vmem:[%s1 + $0x5d0] sm:$0xf]
    %v396 = vld [vmem:[%s1 + $0x5d4] sm:$0xf]
    %v397 = vld [vmem:[%s1 + $0x5d8] sm:$0xf]
    %v398 = vld [vmem:[%s1 + $0x5dc] sm:$0xf]
    %v399 = vld [vmem:[%s1 + $0x5e0] sm:$0xf]
    %v400 = vld [vmem:[%s1 + $0x5e4] sm:$0xf]
    %v401 = vld [vmem:[%s1 + $0x5e8] sm:$0xf]
    %v402 = vld [vmem:[%s1 + $0x5ec] sm:$0xf]
    %v403 = vld [vmem:[%s1 + $0x5f0] sm:$0xf]
    %v404 = vld [vmem:[%s1 + $0x5f4] sm:$0xf]
    %v405 = vld [vmem:[%s1 + $0x5f8] sm:$0xf]
    %v406 = vld [vmem:[%s1 + $0x5fc] sm:$0xf]
    %v407 = vld [vmem:[%s1 + $0x600] sm:$0xf]
    %v408 = vld [vmem:[%s1 + $0x604] sm:$0xf]
    %v409 = vld [vmem:[%s1 + $0x608] sm:$0xf]
    %v410 = vld [vmem:[%s1 + $0x60c] sm:$0xf]
    %v411 = vld [vmem:[%s1 + $0x610] sm:$0xf]
    %v412 = vld [vmem:[%s1 + $0x614] sm:$0xf]
    %v413 = vld [vmem:[%s1 + $0x618] sm:$0xf]
    %v414 = vld [vmem:[%s1 + $0x61c] sm:$0xf]
    %v415 = vld [vmem:[%s1 + $0x620] sm:$0xf]
    %v416 = vld [vmem:[%s1 + $0x624] sm:$0xf]
    %v417 = vld [vmem:[%s1 + $0x628] sm:$0xf]
    %v418 = vld [vmem:[%s1 + $0x62c] sm:$0xf]
    %v419 = vld [vmem:[%s1 + $0x630] sm:$0xf]
    %v420 = vld [vmem:[%s1 + $0x634] sm:$0xf]
    %v421 = vld [vmem:[%s1 + $0x638] sm:$0xf]
    %v422 = vld [vmem:[%s1 + $0x63c] sm:$0xf]
    %v423 = vld [vmem:[%s1 + $0x640] sm:$0xf]
    %v424 = vld [vmem:[%s1 + $0x644] sm:$0xf]
    %v425 = vld [vmem:[%s1 + $0x648] sm:$0xf]
    %v426 = vld [vmem:[%s1 + $0x64c] sm:$0xf]
    %v427 = vld [vmem:[%s1 + $0x650] sm:$0xf]
    %v428 = vld [vmem:[%s1 + $0x654] sm:$0xf]
    %v429 = vld [vmem:[%s1 + $0x658] sm:$0xf]
    %v430 = vld [vmem:[%s1 + $0x65c] sm:$0xf]
    %v431 = vld [vmem:[%s1 + $0x660] sm:$0xf]
    %v432 = vld [vmem:[%s1 + $0x664] sm:$0xf]
    %v433 = vld [vmem:[%s1 + $0x668] sm:$0xf]
    %v434 = vld [vmem:[%s1 + $0x66c] sm:$0xf]
    %v435 = vld [vmem:[%s1 + $0x670] sm:$0xf]
    %v436 = vld [vmem:[%s1 + $0x674] sm:$0xf]
    %v437 = vld [vmem:[%s1 + $0x678] sm:$0xf]
    %v438 = vld [vmem:[%s1 + $0x67c] sm:$0xf]
    %v439 = vld [vmem:[%s1 + $0x680] sm:$0xf]
    %v440 = vld [vmem:[%s1 + $0x684] sm:$0xf]
    %v441 = vld [vmem:[%s1 + $0x688] sm:$0xf]
    %v442 = vld [vmem:[%s1 + $0x68c] sm:$0xf]
    %v443 = vld [vmem:[%s1 + $0x690] sm:$0xf]
    %v444 = vld [vmem:[%s1 + $0x694] sm:$0xf]
    %v445 = vld [vmem:[%s1 + $0x698] sm:$0xf]
    %v446 = vld [vmem:[%s1 + $0x69c] sm:$0xf]
    %v447 = vld [vmem:[%s1 + $0x6a0] sm:$0xf]
    %v448 = vld [vmem:[%s1 + $0x6a4] sm:$0xf]
    %v449 = vld [vmem:[%s1 + $0x6a8] sm:$0xf]
    %v450 = vld [vmem:[%s1 + $0x6ac] sm:$0xf]
    %v451 = vld [vmem:[%s1 + $0x6b0] sm:$0xf]
    %v452 = vld [vmem:[%s1 + $0x6b4] sm:$0xf]
    %v453 = vld [vmem:[%s1 + $0x6b8] sm:$0xf]
    %v454 = vld [vmem:[%s1 + $0x6bc] sm:$0xf]
    %v455 = vld [vmem:[%s1 + $0x6c0] sm:$0xf]
    %v456 = vld [vmem:[%s1 + $0x6c4] sm:$0xf]
    %v457 = vld [vmem:[%s1 + $0x6c8] sm:$0xf]
    %v458 = vld [vmem:[%s1 + $0x6cc] sm:$0xf]
    %v459 = vld [vmem:[%s1 + $0x6d0] sm:$0xf]
    %v460 = vld [vmem:[%s1 + $0x6d4] sm:$0xf]
    %v461 = vld [vmem:[%s1 + $0x6d8] sm:$0xf]
    %v462 = vld [vmem:[%s1 + $0x6dc] sm:$0xf]
    %v463 = vld [vmem:[%s1 + $0x6e0] sm:$0xf]
    %v464 = vld [vmem:[%s1 + $0x6e4] sm:$0xf]
    %v465 = vld [vmem:[%s1 + $0x6e8] sm:$0xf]
    %v466 = vld [vmem:[%s1 + $0x6ec] sm:$0xf]
    %v467 = vld [vmem:[%s1 + $0x6f0] sm:$0xf]
    %v468 = vld [vmem:[%s1 + $0x6f4] sm:$0xf]
    %v469 = vld [vmem:[%s1 + $0x6f8] sm:$0xf]
    %v470 = vld [vmem:[%s1 + $0x6fc] sm:$0xf]
    %v471 = vld [vmem:[%s1 + $0x700] sm:$0xf]
    %v472 = vld [vmem:[%s1 + $0x704] sm:$0xf]
    %v473 = vld [vmem:[%s1 + $0x708] sm:$0xf]
    %v474 = vld [vmem:[%s1 + $0x70c] sm:$0xf]
    %v475 = vld [vmem:[%s1 + $0x710] sm:$0xf]
    %v476 = vld [vmem:[%s1 + $0x714] sm:$0xf]
    %v477 = vld [vmem:[%s1 + $0x718] sm:$0xf]
    %v478 = vld [vmem:[%s1 + $0x71c] sm:$0xf]
    %v479 = vld [vmem:[%s1 + $0x720] sm:$0xf]
    %v480 = vld [vmem:[%s1 + $0x724] sm:$0xf]
    %v481 = vld [vmem:[%s1 + $0x728] sm:$0xf]
    %v482 = vld [vmem:[%s1 + $0x72c] sm:$0xf]
    %v483 = vld [vmem:[%s1 + $0x730] sm:$0xf]
    %v484 = vld [vmem:[%s1 + $0x734] sm:$0xf]
    %v485 = vld [vmem:[%s1 + $0x738] sm:$0xf]
    %v486 = vld [vmem:[%s1 + $0x73c] sm:$0xf]
    %v487 = vld [vmem:[%s1 + $0x740] sm:$0xf]
    %v488 = vld [vmem:[%s1 + $0x744] sm:$0xf]
    %v489 = vld [vmem:[%s1 + $0x748] sm:$0xf]
    %v490 = vld [vmem:[%s1 + $0x74c] sm:$0xf]
    %v491 = vld [vmem:[%s1 + $0x750] sm:$0xf]
    %v492 = vld [vmem:[%s1 + $0x754] sm:$0xf]
    %v493 = vld [vmem:[%s1 + $0x758] sm:$0xf]
    %v494 = vld [vmem:[%s1 + $0x75c] sm:$0xf]
    %v495 = vld [vmem:[%s1 + $0x760] sm:$0xf]
    %v496 = vld [vmem:[%s1 + $0x764] sm:$0xf]
    %v497 = vld [vmem:[%s1 + $0x768] sm:$0xf]
    %v498 = vld [vmem:[%s1 + $0x76c] sm:$0xf]
    %v499 = vld [vmem:[%s1 + $0x770] sm:$0xf]
    %v500 = vld [vmem:[%s1 + $0x774] sm:$0xf]
    %v501 = vld [vmem:[%s1 + $0x778] sm:$0xf]
    %v502 = vld [vmem:[%s1 + $0x77c] sm:$0xf]
    %v503 = vld [vmem:[%s1 + $0x780] sm:$0xf]
    %v504 = vld [vmem:[%s1 + $0x784] sm:$0xf]
    %v505 = vld [vmem:[%s1 + $0x788] sm:$0xf]
    %v506 = vld [vmem:[%s1 + $0x78c] sm:$0xf]
    %v507 = vld [vmem:[%s1 + $0x790] sm:$0xf]
    %v508 = vld [vmem:[%s1 + $0x794] sm:$0xf]
    %v509 = vld [vmem:[%s1 + $0x798] sm:$0xf]
    %v510 = vld [vmem:[%s1 + $0x79c] sm:$0xf]
    %v511 = vld [vmem:[%s1 + $0x7a0] sm:$0xf]
    %v512 = vld [vmem:[%s1 + $0x7a4] sm:$0xf]
    %v513 = vld [vmem:[%s1 + $0x7a8] sm:$0xf]
    %v514 = vld [vmem:[%s1 + $0x7ac] sm:$0xf]
    %v515 = vld [vmem:[%s1 + $0x7b0] sm:$0xf]
    %v516 = vld [vmem:[%s1 + $0x7b4] sm:$0xf]
    %v517 = vld [vmem:[%s1 + $0x7b8] sm:$0xf]
    %v518 = vld [vmem:[%s1 + $0x7bc] sm:$0xf]
    %v519 = vld [vmem:[%s1 + $0x7c0] sm:$0xf]
    %v520 = vld [vmem:[%s1 + $0x7c4] sm:$0xf]
    %v521 = vld [vmem:[%s1 + $0x7c8] sm:$0xf]
    %v522 = vld [vmem:[%s1 + $0x7cc] sm:$0xf]
    %v523 = vld [vmem:[%s1 + $0x7d0] sm:$0xf]
    %v524 = vld [vmem:[%s1 + $0x7d4] sm:$0xf]
    %v525 = vld [vmem:[%s1 + $0x7d8] sm:$0xf]
    %v526 = vld [vmem:[%s1 + $0x7dc] sm:$0xf]
    %v527 = vld [vmem:[%s1 + $0x7e0] sm:$0xf]
    %v528 = vld [vmem:[%s1 + $0x7e4] sm:$0xf]
    %v529 = vld [vmem:[%s1 + $0x7e8] sm:$0xf]
    %v530 = vld [vmem:[%s1 + $0x7ec] sm:$0xf]
    %v531 = vld [vmem:[%s1 + $0x7f0] sm:$0xf]
    %v532 = vld [vmem:[%s1 + $0x7f4] sm:$0xf]
    %v533 = vld [vmem:[%s1 + $0x7f8] sm:$0xf]
    %v534 = vld [vmem:[%s1 + $0x7fc] sm:$0xf]
    %v535 = vld [vmem:[%s1 + $0x800] sm:$0xf]
    %v536 = vld [vmem:[%s1 + $0x804] sm:$0xf]
    %v537 = vld [vmem:[%s1 + $0x808] sm:$0xf]
    %v538 = vld [vmem:[%s1 + $0x80c] sm:$0xf]
    %v539 = vld [vmem:[%s1 + $0x810] sm:$0xf]
    %v540 = vld [vmem:[%s1 + $0x814] sm:$0xf]
    %v541 = vld [vmem:[%s1 + $0x818] sm:$0xf]
    %v542 = vld [vmem:[%s1 + $0x81c] sm:$0xf]
    %v543 = vld [vmem:[%s1 + $0x820] sm:$0xf]
    %v544 = vld [vmem:[%s1 + $0x824] sm:$0xf]
    %v545 = vld [vmem:[%s1 + $0x828] sm:$0xf]
    %v546 = vld [vmem:[%s1 + $0x82c] sm:$0xf]
    %v547 = vld [vmem:[%s1 + $0x830] sm:$0xf]
    %v548 = vld [vmem:[%s1 + $0x834] sm:$0xf]
    %v549 = vld [vmem:[%s1 + $0x838] sm:$0xf]
    %v550 = vld [vmem:[%s1 + $0x83c] sm:$0xf]
    %v551 = vld [vmem:[%s1 + $0x840] sm:$0xf]
    %v552 = vld [vmem:[%s1 + $0x844] sm:$0xf]
    %v553 = vld [vmem:[%s1 + $0x848] sm:$0xf]
    %v554 = vld [vmem:[%s1 + $0x84c] sm:$0xf]
    %v555 = vld [vmem:[%s1 + $0x850] sm:$0xf]
    %v556 = vld [vmem:[%s1 + $0x854] sm:$0xf]
    %v557 = vld [vmem:[%s1 + $0x858] sm:$0xf]
    %v558 = vld [vmem:[%s1 + $0x85c] sm:$0xf]
    %v559 = vld [vmem:[%s1 + $0x860] sm:$0xf]
    %v560 = vld [vmem:[%s1 + $0x864] sm:$0xf]
    %v561 = vld [vmem:[%s1 + $0x868] sm:$0xf]
    %v562 = vld [vmem:[%s1 + $0x86c] sm:$0xf]
    %v563 = vld [vmem:[%s1 + $0x870] sm:$0xf]
    %v564 = vld [vmem:[%s1 + $0x874] sm:$0xf]
    %v565 = vld [vmem:[%s1 + $0x878] sm:$0xf]
    %v566 = vld [vmem:[%s1 + $0x87c] sm:$0xf]
    %v567 = vld [vmem:[%s1 + $0x880] sm:$0xf]
    %v568 = vld [vmem:[%s1 + $0x884] sm:$0xf]
    %v569 = vld [vmem:[%s1 + $0x888] sm:$0xf]
    %v570 = vld [vmem:[%s1 + $0x88c] sm:$0xf]
    %v571 = vld [vmem:[%s1 + $0x890] sm:$0xf]
    %v572 = vld [vmem:[%s1 + $0x894] sm:$0xf]
    %v573 = vld [vmem:[%s1 + $0x898] sm:$0xf]
    %v574 = vld [vmem:[%s1 + $0x89c] sm:$0xf]
    %v575 = vld [vmem:[%s1 + $0x8a0] sm:$0xf]
    %v576 = vld [vmem:[%s1 + $0x8a4] sm:$0xf]
    %v577 = vld [vmem:[%s1 + $0x8a8] sm:$0xf]
    %v578 = vld [vmem:[%s1 + $0x8ac] sm:$0xf]
    %v579 = vld [vmem:[%s1 + $0x8b0] sm:$0xf]
    %v580 = vld [vmem:[%s1 + $0x8b4] sm:$0xf]
    %v581 = vld [vmem:[%s1 + $0x8b8] sm:$0xf]
    %v582 = vld [vmem:[%s1 + $0x8bc] sm:$0xf]
    %v583 = vld [vmem:[%s1 + $0x8c0] sm:$0xf]
    %v584 = vld [vmem:[%s1 + $0x8c4] sm:$0xf]
    %v585 = vld [vmem:[%s1 + $0x8c8] sm:$0xf]
    %v586 = vld [vmem:[%s1 + $0x8cc] sm:$0xf]
    %v587 = vld [vmem:[%s1 + $0x8d0] sm:$0xf]
    %v588 = vld [vmem:[%s1 + $0x8d4] sm:$0xf]
    %v589 = vld [vmem:[%s1 + $0x8d8] sm:$0xf]
    %v590 = vld [vmem:[%s1 + $0x8dc] sm:$0xf]
    %v591 = vld [vmem:[%s1 + $0x8e0] sm:$0xf]
    %v592 = vld [vmem:[%s1 + $0x8e4] sm:$0xf]
    %v593 = vld [vmem:[%s1 + $0x8e8] sm:$0xf]
    %v594 = vld [vmem:[%s1 + $0x8ec] sm:$0xf]
    %v595 = vld [vmem:[%s1 + $0x8f0] sm:$0xf]
    %v596 = vld [vmem:[%s1 + $0x8f4] sm:$0xf]
    %v597 = vld [vmem:[%s1 + $0x8f8] sm:$0xf]
    %v598 = vld [vmem:[%s1 + $0x8fc] sm:$0xf]
    %v599 = vld [vmem:[%s1 + $0x900] sm:$0xf]
    %v600 = vld [vmem:[%s1 + $0x904] sm:$0xf]
    %v601 = vld [vmem:[%s1 + $0x908] sm:$0xf]
    %v602 = vld [vmem:[%s1 + $0x90c] sm:$0xf]
    %v603 = vld [vmem:[%s1 + $0x910] sm:$0xf]
    %v604 = vld [vmem:[%s1 + $0x914] sm:$0xf]
    %v605 = vld [vmem:[%s1 + $0x918] sm:$0xf]
    %v606 = vld [vmem:[%s1 + $0x91c] sm:$0xf]
    %v607 = vld [vmem:[%s1 + $0x920] sm:$0xf]
    %v608 = vld [vmem:[%s1 + $0x924] sm:$0xf]
    %v609 = vld [vmem:[%s1 + $0x928] sm:$0xf]
    %v610 = vld [vmem:[%s1 + $0x92c] sm:$0xf]
    %v611 = vld [vmem:[%s1 + $0x930] sm:$0xf]
    %v612 = vld [vmem:[%s1 + $0x934] sm:$0xf]
    %v613 = vld [vmem:[%s1 + $0x938] sm:$0xf]
    %v614 = vld [vmem:[%s1 + $0x93c] sm:$0xf]
    %v615 = vld [vmem:[%s1 + $0x940] sm:$0xf]
    %v616 = vld [vmem:[%s1 + $0x944] sm:$0xf]
    %v617 = vld [vmem:[%s1 + $0x948] sm:$0xf]
    %v618 = vld [vmem:[%s1 + $0x94c] sm:$0xf]
    %v619 = vld [vmem:[%s1 + $0x950] sm:$0xf]
    %v620 = vld [vmem:[%s1 + $0x954] sm:$0xf]
    %v621 = vld [vmem:[%s1 + $0x958] sm:$0xf]
    %v622 = vld [vmem:[%s1 + $0x95c] sm:$0xf]
    %v623 = vld [vmem:[%s1 + $0x960] sm:$0xf]
    %v624 = vld [vmem:[%s1 + $0x964] sm:$0xf]
    %v625 = vld [vmem:[%s1 + $0x968] sm:$0xf]
    %v626 = vld [vmem:[%s1 + $0x96c] sm:$0xf]
    %v627 = vld [vmem:[%s1 + $0x970] sm:$0xf]
    %v628 = vld [vmem:[%s1 + $0x974] sm:$0xf]
    %v629 = vld [vmem:[%s1 + $0x978] sm:$0xf]
    %v630 = vld [vmem:[%s1 + $0x97c] sm:$0xf]
    %v631 = vld [vmem:[%s1 + $0x980] sm:$0xf]
    %v632 = vld [vmem:[%s1 + $0x984] sm:$0xf]
    %v633 = vld [vmem:[%s1 + $0x988] sm:$0xf]
    %v634 = vld [vmem:[%s1 + $0x98c] sm:$0xf]
    %v635 = vld [vmem:[%s1 + $0x990] sm:$0xf]
    %v636 = vld [vmem:[%s1 + $0x994] sm:$0xf]
    %v637 = vld [vmem:[%s1 + $0x998] sm:$0xf]
    %v638 = vld [vmem:[%s1 + $0x99c] sm:$0xf]
    %v639 = vld [vmem:[%s1 + $0x9a0] sm:$0xf]
    %v640 = vld [vmem:[%s1 + $0x9a4] sm:$0xf]
    %v641 = vld [vmem:[%s1 + $0x9a8] sm:$0xf]
    %v642 = vld [vmem:[%s1 + $0x9ac] sm:$0xf]
    %v643 = vld [vmem:[%s1 + $0x9b0] sm:$0xf]
    %v644 = vld [vmem:[%s1 + $0x9b4] sm:$0xf]
    %v645 = vld [vmem:[%s1 + $0x9b8] sm:$0xf]
    %v646 = vld [vmem:[%s1 + $0x9bc] sm:$0xf]
    %v647 = vld [vmem:[%s1 + $0x9c0] sm:$0xf]
    %v648 = vld [vmem:[%s1 + $0x9c4] sm:$0xf]
    %v649 = vld [vmem:[%s1 + $0x9c8] sm:$0xf]
    %v650 = vld [vmem:[%s1 + $0x9cc] sm:$0xf]
    %v651 = vld [vmem:[%s1 + $0x9d0] sm:$0xf]
    %v652 = vld [vmem:[%s1 + $0x9d4] sm:$0xf]
    %v653 = vld [vmem:[%s1 + $0x9d8] sm:$0xf]
    %v654 = vld [vmem:[%s1 + $0x9dc] sm:$0xf]
    %v655 = vld [vmem:[%s1 + $0x9e0] sm:$0xf]
    %v656 = vld [vmem:[%s1 + $0x9e4] sm:$0xf]
    %v657 = vld [vmem:[%s1 + $0x9e8] sm:$0xf]
    %v658 = vld [vmem:[%s1 + $0x9ec] sm:$0xf]
    %v659 = vld [vmem:[%s1 + $0x9f0] sm:$0xf]
    %v660 = vld [vmem:[%s1 + $0x9f4] sm:$0xf]
    %v661 = vld [vmem:[%s1 + $0x9f8] sm:$0xf]
    %v662 = vld [vmem:[%s1 + $0x9fc] sm:$0xf]
    %v663 = vld [vmem:[%s1 + $0xa00] sm:$0xf]
    %v664 = vld [vmem:[%s1 + $0xa04] sm:$0xf]
    %v665 = vld [vmem:[%s1 + $0xa08] sm:$0xf]
    %v666 = vld [vmem:[%s1 + $0xa0c] sm:$0xf]
    %v667 = vld [vmem:[%s1 + $0xa10] sm:$0xf]
    %v668 = vld [vmem:[%s1 + $0xa14] sm:$0xf]
    %v669 = vld [vmem:[%s1 + $0xa18] sm:$0xf]
    %v670 = vld [vmem:[%s1 + $0xa1c] sm:$0xf]
    %v671 = vld [vmem:[%s1 + $0xa20] sm:$0xf]
    %v672 = vld [vmem:[%s1 + $0xa24] sm:$0xf]
    %v673 = vld [vmem:[%s1 + $0xa28] sm:$0xf]
    %v674 = vld [vmem:[%s1 + $0xa2c] sm:$0xf]
    %v675 = vld [vmem:[%s1 + $0xa30] sm:$0xf]
    %v676 = vld [vmem:[%s1 + $0xa34] sm:$0xf]
    %v677 = vld [vmem:[%s1 + $0xa38] sm:$0xf]
    %v678 = vld [vmem:[%s1 + $0xa3c] sm:$0xf]
    %v679 = vld [vmem:[%s1 + $0xa40] sm:$0xf]
    %v680 = vld [vmem:[%s1 + $0xa44] sm:$0xf]
    %v681 = vld [vmem:[%s1 + $0xa48] sm:$0xf]
    %v682 = vld [vmem:[%s1 + $0xa4c] sm:$0xf]
    %v683 = vld [vmem:[%s1 + $0xa50] sm:$0xf]
    %v684 = vld [vmem:[%s1 + $0xa54] sm:$0xf]
    %v685 = vld [vmem:[%s1 + $0xa58] sm:$0xf]
    %v686 = vld [vmem:[%s1 + $0xa5c] sm:$0xf]
    %v687 = vld [vmem:[%s1 + $0xa60] sm:$0xf]
    %v688 = vld [vmem:[%s1 + $0xa64] sm:$0xf]
    %v689 = vld [vmem:[%s1 + $0xa68] sm:$0xf]
    %v690 = vld [vmem:[%s1 + $0xa6c] sm:$0xf]
    %v691 = vld [vmem:[%s1 + $0xa70] sm:$0xf]
    %v692 = vld [vmem:[%s1 + $0xa74] sm:$0xf]
    %v693 = vld [vmem:[%s1 + $0xa78] sm:$0xf]
    %v694 = vld [vmem:[%s1 + $0xa7c] sm:$0xf]
    %v695 = vld [vmem:[%s1 + $0xa80] sm:$0xf]
    %v696 = vld [vmem:[%s1 + $0xa84] sm:$0xf]
    %v697 = vld [vmem:[%s1 + $0xa88] sm:$0xf]
    %v698 = vld [vmem:[%s1 + $0xa8c] sm:$0xf]
    %v699 = vld [vmem:[%s1 + $0xa90] sm:$0xf]
    %v700 = vld [vmem:[%s1 + $0xa94] sm:$0xf]
    %v701 = vld [vmem:[%s1 + $0xa98] sm:$0xf]
    %v702 = vld [vmem:[%s1 + $0xa9c] sm:$0xf]
    %v703 = vld [vmem:[%s1 + $0xaa0] sm:$0xf]
    %v704 = vld [vmem:[%s1 + $0xaa4] sm:$0xf]
    %v705 = vld [vmem:[%s1 + $0xaa8] sm:$0xf]
    %v706 = vld [vmem:[%s1 + $0xaac] sm:$0xf]
    %v707 = vld [vmem:[%s1 + $0xab0] sm:$0xf]
    %v708 = vld [vmem:[%s1 + $0xab4] sm:$0xf]
    %v709 = vld [vmem:[%s1 + $0xab8] sm:$0xf]
    %v710 = vld [vmem:[%s1 + $0xabc] sm:$0xf]
    %v711 = vld [vmem:[%s1 + $0xac0] sm:$0xf]
    %v712 = vld [vmem:[%s1 + $0xac4] sm:$0xf]
    %v713 = vld [vmem:[%s1 + $0xac8] sm:$0xf]
    %v714 = vld [vmem:[%s1 + $0xacc] sm:$0xf]
    %v715 = vld [vmem:[%s1 + $0xad0] sm:$0xf]
    %v716 = vld [vmem:[%s1 + $0xad4] sm:$0xf]
    %v717 = vld [vmem:[%s1 + $0xad8] sm:$0xf]
    %v718 = vld [vmem:[%s1 + $0xadc] sm:$0xf]
    %v719 = vld [vmem:[%s1 + $0xae0] sm:$0xf]
    %v720 = vld [vmem:[%s1 + $0xae4] sm:$0xf]
    %v721 = vld [vmem:[%s1 + $0xae8] sm:$0xf]
    %v722 = vld [vmem:[%s1 + $0xaec] sm:$0xf]
    %v723 = vld [vmem:[%s1 + $0xaf0] sm:$0xf]
    %v724 = vld [vmem:[%s1 + $0xaf4] sm:$0xf]
    %v725 = vld [vmem:[%s1 + $0xaf8] sm:$0xf]
    %v726 = vld [vmem:[%s1 + $0xafc] sm:$0xf]
    %v727 = vld [vmem:[%s1 + $0xb00] sm:$0xf]
    %v728 = vld [vmem:[%s1 + $0xb04] sm:$0xf]
    %v729 = vld [vmem:[%s1 + $0xb08] sm:$0xf]
    %v730 = vld [vmem:[%s1 + $0xb0c] sm:$0xf]
    %v731 = vld [vmem:[%s1 + $0xb10] sm:$0xf]
    %v732 = vld [vmem:[%s1 + $0xb14] sm:$0xf]
    %v733 = vld [vmem:[%s1 + $0xb18] sm:$0xf]
    %v734 = vld [vmem:[%s1 + $0xb1c] sm:$0xf]
    %v735 = vld [vmem:[%s1 + $0xb20] sm:$0xf]
    %v736 = vld [vmem:[%s1 + $0xb24] sm:$0xf]
    %v737 = vld [vmem:[%s1 + $0xb28] sm:$0xf]
    %v738 = vld [vmem:[%s1 + $0xb2c] sm:$0xf]
    %v739 = vld [vmem:[%s1 + $0xb30] sm:$0xf]
    %v740 = vld [vmem:[%s1 + $0xb34] sm:$0xf]
    %v741 = vld [vmem:[%s1 + $0xb38] sm:$0xf]
    %v742 = vld [vmem:[%s1 + $0xb3c] sm:$0xf]
    %v743 = vld [vmem:[%s1 + $0xb40] sm:$0xf]
    %v744 = vld [vmem:[%s1 + $0xb44] sm:$0xf]
    %v745 = vld [vmem:[%s1 + $0xb48] sm:$0xf]
    %v746 = vld [vmem:[%s1 + $0xb4c] sm:$0xf]
    %v747 = vld [vmem:[%s1 + $0xb50] sm:$0xf]
    %v748 = vld [vmem:[%s1 + $0xb54] sm:$0xf]
    %v749 = vld [vmem:[%s1 + $0xb58] sm:$0xf]
    %v750 = vld [vmem:[%s1 + $0xb5c] sm:$0xf]
    %v751 = vld [vmem:[%s1 + $0xb60] sm:$0xf]
    %v752 = vld [vmem:[%s1 + $0xb64] sm:$0xf]
    %v753 = vld [vmem:[%s1 + $0xb68] sm:$0xf]
    %v754 = vld [vmem:[%s1 + $0xb6c] sm:$0xf]
    %v755 = vld [vmem:[%s1 + $0xb70] sm:$0xf]
    %v756 = vld [vmem:[%s1 + $0xb74] sm:$0xf]
    %v757 = vld [vmem:[%s1 + $0xb78] sm:$0xf]
    %v758 = vld [vmem:[%s1 + $0xb7c] sm:$0xf]
    %v759 = vld [vmem:[%s1 + $0xb80] sm:$0xf]
    %v760 = vld [vmem:[%s1 + $0xb84] sm:$0xf]
    %v761 = vld [vmem:[%s1 + $0xb88] sm:$0xf]
    %v762 = vld [vmem:[%s1 + $0xb8c] sm:$0xf]
    %v763 = vld [vmem:[%s1 + $0xb90] sm:$0xf]
    %v764 = vld [vmem:[%s1 + $0xb94] sm:$0xf]
    %v765 = vld [vmem:[%s1 + $0xb98] sm:$0xf]
    %v766 = vld [vmem:[%s1 + $0xb9c] sm:$0xf]
    %v767 = vld [vmem:[%s1 + $0xba0] sm:$0xf]
    %v768 = vld [vmem:[%s1 + $0xba4] sm:$0xf]
    %v769 = vld [vmem:[%s1 + $0xba8] sm:$0xf]
    %v770 = vld [vmem:[%s1 + $0xbac] sm:$0xf]
    %v771 = vld [vmem:[%s1 + $0xbb0] sm:$0xf]
    %v772 = vld [vmem:[%s1 + $0xbb4] sm:$0xf]
    %v773 = vld [vmem:[%s1 + $0xbb8] sm:$0xf]
    %v774 = vld [vmem:[%s1 + $0xbbc] sm:$0xf]
    %v775 = vld [vmem:[%s1 + $0xbc0] sm:$0xf]
    %v776 = vld [vmem:[%s1 + $0xbc4] sm:$0xf]
    %v777 = vld [vmem:[%s1 + $0xbc8] sm:$0xf]
    %v778 = vld [vmem:[%s1 + $0xbcc] sm:$0xf]
    %v779 = vld [vmem:[%s1 + $0xbd0] sm:$0xf]
    %v780 = vld [vmem:[%s1 + $0xbd4] sm:$0xf]
    %v781 = vld [vmem:[%s1 + $0xbd8] sm:$0xf]
    %v782 = vld [vmem:[%s1 + $0xbdc] sm:$0xf]
    %v783 = vld [vmem:[%s1 + $0xbe0] sm:$0xf]
    %v784 = vld [vmem:[%s1 + $0xbe4] sm:$0xf]
    %v785 = vld [vmem:[%s1 + $0xbe8] sm:$0xf]
    %v786 = vld [vmem:[%s1 + $0xbec] sm:$0xf]
    %v787 = vld [vmem:[%s1 + $0xbf0] sm:$0xf]
    %v788 = vld [vmem:[%s1 + $0xbf4] sm:$0xf]
    %v789 = vld [vmem:[%s1 + $0xbf8] sm:$0xf]
    %v790 = vld [vmem:[%s1 + $0xbfc] sm:$0xf]
    %v791 = vld [vmem:[%s1 + $0xc00] sm:$0xf]
    %v792 = vld [vmem:[%s1 + $0xc04] sm:$0xf]
    %v793 = vld [vmem:[%s1 + $0xc08] sm:$0xf]
    %v794 = vld [vmem:[%s1 + $0xc0c] sm:$0xf]
    %v795 = vld [vmem:[%s1 + $0xc10] sm:$0xf]
    %v796 = vld [vmem:[%s1 + $0xc14] sm:$0xf]
    %v797 = vld [vmem:[%s1 + $0xc18] sm:$0xf]
    %v798 = vld [vmem:[%s1 + $0xc1c] sm:$0xf]
    %v799 = vld [vmem:[%s1 + $0xc20] sm:$0xf]
    %v800 = vld [vmem:[%s1 + $0xc24] sm:$0xf]
    %v801 = vld [vmem:[%s1 + $0xc28] sm:$0xf]
    %v802 = vld [vmem:[%s1 + $0xc2c] sm:$0xf]
    %v803 = vld [vmem:[%s1 + $0xc30] sm:$0xf]
    %v804 = vld [vmem:[%s1 + $0xc34] sm:$0xf]
    %v805 = vld [vmem:[%s1 + $0xc38] sm:$0xf]
    %v806 = vld [vmem:[%s1 + $0xc3c] sm:$0xf]
    %v807 = vld [vmem:[%s1 + $0xc40] sm:$0xf]
    %v808 = vld [vmem:[%s1 + $0xc44] sm:$0xf]
    %v809 = vld [vmem:[%s1 + $0xc48] sm:$0xf]
    %v810 = vld [vmem:[%s1 + $0xc4c] sm:$0xf]
    %v811 = vld [vmem:[%s1 + $0xc50] sm:$0xf]
    %v812 = vld [vmem:[%s1 + $0xc54] sm:$0xf]
    %v813 = vld [vmem:[%s1 + $0xc58] sm:$0xf]
    %v814 = vld [vmem:[%s1 + $0xc5c] sm:$0xf]
    %v815 = vld [vmem:[%s1 + $0xc60] sm:$0xf]
    %v816 = vld [vmem:[%s1 + $0xc64] sm:$0xf]
    %v817 = vld [vmem:[%s1 + $0xc68] sm:$0xf]
    %v818 = vld [vmem:[%s1 + $0xc6c] sm:$0xf]
    %v819 = vld [vmem:[%s1 + $0xc70] sm:$0xf]
    %v820 = vld [vmem:[%s1 + $0xc74] sm:$0xf]
    %v821 = vld [vmem:[%s1 + $0xc78] sm:$0xf]
    %v822 = vld [vmem:[%s1 + $0xc7c] sm:$0xf]
    %v823 = vld [vmem:[%s1 + $0xc80] sm:$0xf]
    %v824 = vld [vmem:[%s1 + $0xc84] sm:$0xf]
    %v825 = vld [vmem:[%s1 + $0xc88] sm:$0xf]
    %v826 = vld [vmem:[%s1 + $0xc8c] sm:$0xf]
    %v827 = vld [vmem:[%s1 + $0xc90] sm:$0xf]
    %v828 = vld [vmem:[%s1 + $0xc94] sm:$0xf]
    %v829 = vld [vmem:[%s1 + $0xc98] sm:$0xf]
    %v830 = vld [vmem:[%s1 + $0xc9c] sm:$0xf]
    %v831 = vld [vmem:[%s1 + $0xca0] sm:$0xf]
    %v832 = vld [vmem:[%s1 + $0xca4] sm:$0xf]
    %v833 = vld [vmem:[%s1 + $0xca8] sm:$0xf]
    %v834 = vld [vmem:[%s1 + $0xcac] sm:$0xf]
    %v835 = vld [vmem:[%s1 + $0xcb0] sm:$0xf]
    %v836 = vld [vmem:[%s1 + $0xcb4] sm:$0xf]
    %v837 = vld [vmem:[%s1 + $0xcb8] sm:$0xf]
    %v838 = vld [vmem:[%s1 + $0xcbc] sm:$0xf]
    %v839 = vld [vmem:[%s1 + $0xcc0] sm:$0xf]
    %v840 = vld [vmem:[%s1 + $0xcc4] sm:$0xf]
    %v841 = vld [vmem:[%s1 + $0xcc8] sm:$0xf]
    %v842 = vld [vmem:[%s1 + $0xccc] sm:$0xf]
    %v843 = vld [vmem:[%s1 + $0xcd0] sm:$0xf]
    %v844 = vld [vmem:[%s1 + $0xcd4] sm:$0xf]
    %v845 = vld [vmem:[%s1 + $0xcd8] sm:$0xf]
    %v846 = vld [vmem:[%s1 + $0xcdc] sm:$0xf]
    %v847 = vld [vmem:[%s1 + $0xce0] sm:$0xf]
    %v848 = vld [vmem:[%s1 + $0xce4] sm:$0xf]
    %v849 = vld [vmem:[%s1 + $0xce8] sm:$0xf]
    %v850 = vld [vmem:[%s1 + $0xcec] sm:$0xf]
    %v851 = vld [vmem:[%s1 + $0xcf0] sm:$0xf]
    %v852 = vld [vmem:[%s1 + $0xcf4] sm:$0xf]
    %v853 = vld [vmem:[%s1 + $0xcf8] sm:$0xf]
    %v854 = vld [vmem:[%s1 + $0xcfc] sm:$0xf]
    %v855 = vld [vmem:[%s1 + $0xd00] sm:$0xf]
    %v856 = vld [vmem:[%s1 + $0xd04] sm:$0xf]
    %v857 = vld [vmem:[%s1 + $0xd08] sm:$0xf]
    %v858 = vld [vmem:[%s1 + $0xd0c] sm:$0xf]
    %v859 = vld [vmem:[%s1 + $0xd10] sm:$0xf]
    %v860 = vld [vmem:[%s1 + $0xd14] sm:$0xf]
    %v861 = vld [vmem:[%s1 + $0xd18] sm:$0xf]
    %v862 = vld [vmem:[%s1 + $0xd1c] sm:$0xf]
    %v863 = vld [vmem:[%s1 + $0xd20] sm:$0xf]
    %v864 = vld [vmem:[%s1 + $0xd24] sm:$0xf]
    %v865 = vld [vmem:[%s1 + $0xd28] sm:$0xf]
    %v866 = vld [vmem:[%s1 + $0xd2c] sm:$0xf]
    %v867 = vld [vmem:[%s1 + $0xd30] sm:$0xf]
    %v868 = vld [vmem:[%s1 + $0xd34] sm:$0xf]
    %v869 = vld [vmem:[%s1 + $0xd38] sm:$0xf]
    %v870 = vld [vmem:[%s1 + $0xd3c] sm:$0xf]
    %v871 = vld [vmem:[%s1 + $0xd40] sm:$0xf]
    %v872 = vld [vmem:[%s1 + $0xd44] sm:$0xf]
    %v873 = vld [vmem:[%s1 + $0xd48] sm:$0xf]
    %v874 = vld [vmem:[%s1 + $0xd4c] sm:$0xf]
    %v875 = vld [vmem:[%s1 + $0xd50] sm:$0xf]
    %v876 = vld [vmem:[%s1 + $0xd54] sm:$0xf]
    %v877 = vld [vmem:[%s1 + $0xd58] sm:$0xf]
    %v878 = vld [vmem:[%s1 + $0xd5c] sm:$0xf]
    %v879 = vld [vmem:[%s1 + $0xd60] sm:$0xf]
    %v880 = vld [vmem:[%s1 + $0xd64] sm:$0xf]
    %v881 = vld [vmem:[%s1 + $0xd68] sm:$0xf]
    %v882 = vld [vmem:[%s1 + $0xd6c] sm:$0xf]
    %v883 = vld [vmem:[%s1 + $0xd70] sm:$0xf]
    %v884 = vld [vmem:[%s1 + $0xd74] sm:$0xf]
    %v885 = vld [vmem:[%s1 + $0xd78] sm:$0xf]
    %v886 = vld [vmem:[%s1 + $0xd7c] sm:$0xf]
    %v887 = vld [vmem:[%s1 + $0xd80] sm:$0xf]
    %v888 = vld [vmem:[%s1 + $0xd84] sm:$0xf]
    %v889 = vld [vmem:[%s1 + $0xd88] sm:$0xf]
    %v890 = vld [vmem:[%s1 + $0xd8c] sm:$0xf]
    %v891 = vld [vmem:[%s1 + $0xd90] sm:$0xf]
    %v892 = vld [vmem:[%s1 + $0xd94] sm:$0xf]
    %v893 = vld [vmem:[%s1 + $0xd98] sm:$0xf]
    %v894 = vld [vmem:[%s1 + $0xd9c] sm:$0xf]
    %v895 = vld [vmem:[%s1 + $0xda0] sm:$0xf]
    %v896 = vld [vmem:[%s1 + $0xda4] sm:$0xf]
    %v897 = vld [vmem:[%s1 + $0xda8] sm:$0xf]
    %v898 = vld [vmem:[%s1 + $0xdac] sm:$0xf]
    %v899 = vld [vmem:[%s1 + $0xdb0] sm:$0xf]
    %v900 = vld [vmem:[%s1 + $0xdb4] sm:$0xf]
    %v901 = vld [vmem:[%s1 + $0xdb8] sm:$0xf]
    %v902 = vld [vmem:[%s1 + $0xdbc] sm:$0xf]
    %v903 = vld [vmem:[%s1 + $0xdc0] sm:$0xf]
    %v904 = vld [vmem:[%s1 + $0xdc4] sm:$0xf]
    %v905 = vld [vmem:[%s1 + $0xdc8] sm:$0xf]
    %v906 = vld [vmem:[%s1 + $0xdcc] sm:$0xf]
    %v907 = vld [vmem:[%s1 + $0xdd0] sm:$0xf]
    %v908 = vld [vmem:[%s1 + $0xdd4] sm:$0xf]
    %v909 = vld [vmem:[%s1 + $0xdd8] sm:$0xf]
    %v910 = vld [vmem:[%s1 + $0xddc] sm:$0xf]
    %v911 = vld [vmem:[%s1 + $0xde0] sm:$0xf]
    %v912 = vld [vmem:[%s1 + $0xde4] sm:$0xf]
    %v913 = vld [vmem:[%s1 + $0xde8] sm:$0xf]
    %v914 = vld [vmem:[%s1 + $0xdec] sm:$0xf]
    %v915 = vld [vmem:[%s1 + $0xdf0] sm:$0xf]
    %v916 = vld [vmem:[%s1 + $0xdf4] sm:$0xf]
    %v917 = vld [vmem:[%s1 + $0xdf8] sm:$0xf]
    %v918 = vld [vmem:[%s1 + $0xdfc] sm:$0xf]
    %v919 = vld [vmem:[%s2] sm:$0x1]
    %v921 = vlaneseq
    %v922 = vshrl.u32 %v921, 7
    %v923 = vsub.s32 0, %v922
    %v924 = vrot.slane %v919, %v923
    %v933 = vcombine.high %v16, %v16
    %v935 = vunpack.c.l.s4 1966171168
    %v936 = vunpack.c.0.s8 %v935
    %v937 = vlaneseq
    %v938 = vshrl.u32 %v937, 7
    %v939 = vsub.s32 %v936, %v938
    %v940 = vrot.slane %v16, %v939
    %v942 = vunpack.c.l.s4 1966171168
    %v943 = vunpack.c.0.s8 %v942
    %v944 = vlaneseq
    %v945 = vshrl.u32 %v944, 7
    %v946 = vsub.s32 %v943, %v945
    %v947 = vrot.slane %v933, %v946
    %v948 = vcombine.high %v940, %v940
    %v949 = vcombine.high %v947, %v947
    %v951 = vunpack.c.l.s4 1966171168
    %v952 = vunpack.c.0.s8 %v951
    %v953 = vlaneseq
    %v954 = vshrl.u32 %v953, 7
    %v955 = vsub.s32 %v952, %v954
    %v956 = vrot.slane %v940, %v955
    %v958 = vunpack.c.l.s4 1966171168
    %v959 = vunpack.c.0.s8 %v958
    %v960 = vlaneseq
    %v961 = vshrl.u32 %v960, 7
    %v962 = vsub.s32 %v959, %v961
    %v963 = vrot.slane %v947, %v962
    %v965 = vunpack.c.l.s4 1966171168
    %v966 = vunpack.c.0.s8 %v965
    %v967 = vlaneseq
    %v968 = vshrl.u32 %v967, 7
    %v969 = vsub.s32 %v966, %v968
    %v970 = vrot.slane %v948, %v969
    %v972 = vunpack.c.l.s4 1966171168
    %v973 = vunpack.c.0.s8 %v972
    %v974 = vlaneseq
    %v975 = vshrl.u32 %v974, 7
    %v976 = vsub.s32 %v973, %v975
    %v977 = vrot.slane %v949, %v976
    %v978 = vcombine.high %v956, %v956
    %v979 = vcombine.high %v963, %v963
    %v980 = vcombine.high %v970, %v970
    %v981 = vcombine.high %v977, %v977
    %v982 = vcombine.high %v17, %v17
    %v984 = vunpack.c.l.s4 1966171168
    %v985 = vunpack.c.0.s8 %v984
    %v986 = vlaneseq
    %v987 = vshrl.u32 %v986, 7
    %v988 = vsub.s32 %v985, %v987
    %v989 = vrot.slane %v17, %v988
    %v991 = vunpack.c.l.s4 1966171168
    %v992 = vunpack.c.0.s8 %v991
    %v993 = vlaneseq
    %v994 = vshrl.u32 %v993, 7
    %v995 = vsub.s32 %v992, %v994
    %v996 = vrot.slane %v982, %v995
    %v997 = vcombine.high %v989, %v989
    %v998 = vcombine.high %v996, %v996
    %v1000 = vunpack.c.l.s4 1966171168
    %v1001 = vunpack.c.0.s8 %v1000
    %v1002 = vlaneseq
    %v1003 = vshrl.u32 %v1002, 7
    %v1004 = vsub.s32 %v1001, %v1003
    %v1005 = vrot.slane %v989, %v1004
    %v1007 = vunpack.c.l.s4 1966171168
    %v1008 = vunpack.c.0.s8 %v1007
    %v1009 = vlaneseq
    %v1010 = vshrl.u32 %v1009, 7
    %v1011 = vsub.s32 %v1008, %v1010
    %v1012 = vrot.slane %v996, %v1011
    %v1014 = vunpack.c.l.s4 1966171168
    %v1015 = vunpack.c.0.s8 %v1014
    %v1016 = vlaneseq
    %v1017 = vshrl.u32 %v1016, 7
    %v1018 = vsub.s32 %v1015, %v1017
    %v1019 = vrot.slane %v997, %v1018
    %v1021 = vunpack.c.l.s4 1966171168
    %v1022 = vunpack.c.0.s8 %v1021
    %v1023 = vlaneseq
    %v1024 = vshrl.u32 %v1023, 7
    %v1025 = vsub.s32 %v1022, %v1024
    %v1026 = vrot.slane %v998, %v1025
    %v1027 = vcombine.high %v1005, %v1005
    %v1028 = vcombine.high %v1012, %v1012
    %v1029 = vcombine.high %v1019, %v1019
    %v1030 = vcombine.high %v1026, %v1026
    %v1031 = vcombine.high %v18, %v18
    %v1033 = vunpack.c.l.s4 1966171168
    %v1034 = vunpack.c.0.s8 %v1033
    %v1035 = vlaneseq
    %v1036 = vshrl.u32 %v1035, 7
    %v1037 = vsub.s32 %v1034, %v1036
    %v1038 = vrot.slane %v18, %v1037
    %v1040 = vunpack.c.l.s4 1966171168
    %v1041 = vunpack.c.0.s8 %v1040
    %v1042 = vlaneseq
    %v1043 = vshrl.u32 %v1042, 7
    %v1044 = vsub.s32 %v1041, %v1043
    %v1045 = vrot.slane %v1031, %v1044
    %v1046 = vcombine.high %v1038, %v1038
    %v1047 = vcombine.high %v1045, %v1045
    %v1049 = vunpack.c.l.s4 1966171168
    %v1050 = vunpack.c.0.s8 %v1049
    %v1051 = vlaneseq
    %v1052 = vshrl.u32 %v1051, 7
    %v1053 = vsub.s32 %v1050, %v1052
    %v1054 = vrot.slane %v1038, %v1053
    %v1056 = vunpack.c.l.s4 1966171168
    %v1057 = vunpack.c.0.s8 %v1056
    %v1058 = vlaneseq
    %v1059 = vshrl.u32 %v1058, 7
    %v1060 = vsub.s32 %v1057, %v1059
    %v1061 = vrot.slane %v1045, %v1060
    %v1063 = vunpack.c.l.s4 1966171168
    %v1064 = vunpack.c.0.s8 %v1063
    %v1065 = vlaneseq
    %v1066 = vshrl.u32 %v1065, 7
    %v1067 = vsub.s32 %v1064, %v1066
    %v1068 = vrot.slane %v1046, %v1067
    %v1070 = vunpack.c.l.s4 1966171168
    %v1071 = vunpack.c.0.s8 %v1070
    %v1072 = vlaneseq
    %v1073 = vshrl.u32 %v1072, 7
    %v1074 = vsub.s32 %v1071, %v1073
    %v1075 = vrot.slane %v1047, %v1074
    %v1076 = vcombine.high %v1054, %v1054
    %v1077 = vcombine.high %v1061, %v1061
    %v1078 = vcombine.high %v1068, %v1068
    %v1079 = vcombine.high %v1075, %v1075
    %v1080 = vcombine.high %v19, %v19
    %v1082 = vunpack.c.l.s4 1966171168
    %v1083 = vunpack.c.0.s8 %v1082
    %v1084 = vlaneseq
    %v1085 = vshrl.u32 %v1084, 7
    %v1086 = vsub.s32 %v1083, %v1085
    %v1087 = vrot.slane %v19, %v1086
    %v1089 = vunpack.c.l.s4 1966171168
    %v1090 = vunpack.c.0.s8 %v1089
    %v1091 = vlaneseq
    %v1092 = vshrl.u32 %v1091, 7
    %v1093 = vsub.s32 %v1090, %v1092
    %v1094 = vrot.slane %v1080, %v1093
    %v1095 = vcombine.high %v1087, %v1087
    %v1096 = vcombine.high %v1094, %v1094
    %v1098 = vunpack.c.l.s4 1966171168
    %v1099 = vunpack.c.0.s8 %v1098
    %v1100 = vlaneseq
    %v1101 = vshrl.u32 %v1100, 7
    %v1102 = vsub.s32 %v1099, %v1101
    %v1103 = vrot.slane %v1087, %v1102
    %v1105 = vunpack.c.l.s4 1966171168
    %v1106 = vunpack.c.0.s8 %v1105
    %v1107 = vlaneseq
    %v1108 = vshrl.u32 %v1107, 7
    %v1109 = vsub.s32 %v1106, %v1108
    %v1110 = vrot.slane %v1094, %v1109
    %v1112 = vunpack.c.l.s4 1966171168
    %v1113 = vunpack.c.0.s8 %v1112
    %v1114 = vlaneseq
    %v1115 = vshrl.u32 %v1114, 7
    %v1116 = vsub.s32 %v1113, %v1115
    %v1117 = vrot.slane %v1095, %v1116
    %v1119 = vunpack.c.l.s4 1966171168
    %v1120 = vunpack.c.0.s8 %v1119
    %v1121 = vlaneseq
    %v1122 = vshrl.u32 %v1121, 7
    %v1123 = vsub.s32 %v1120, %v1122
    %v1124 = vrot.slane %v1096, %v1123
    %v1125 = vcombine.high %v1103, %v1103
    %v1126 = vcombine.high %v1110, %v1110
    %v1127 = vcombine.high %v1117, %v1117
    %v1128 = vcombine.high %v1124, %v1124
    %v1129 = vcombine.high %v20, %v20
    %v1131 = vunpack.c.l.s4 1966171168
    %v1132 = vunpack.c.0.s8 %v1131
    %v1133 = vlaneseq
    %v1134 = vshrl.u32 %v1133, 7
    %v1135 = vsub.s32 %v1132, %v1134
    %v1136 = vrot.slane %v20, %v1135
    %v1138 = vunpack.c.l.s4 1966171168
    %v1139 = vunpack.c.0.s8 %v1138
    %v1140 = vlaneseq
    %v1141 = vshrl.u32 %v1140, 7
    %v1142 = vsub.s32 %v1139, %v1141
    %v1143 = vrot.slane %v1129, %v1142
    %v1144 = vcombine.high %v1136, %v1136
    %v1145 = vcombine.high %v1143, %v1143
    %v1147 = vunpack.c.l.s4 1966171168
    %v1148 = vunpack.c.0.s8 %v1147
    %v1149 = vlaneseq
    %v1150 = vshrl.u32 %v1149, 7
    %v1151 = vsub.s32 %v1148, %v1150
    %v1152 = vrot.slane %v1136, %v1151
    %v1154 = vunpack.c.l.s4 1966171168
    %v1155 = vunpack.c.0.s8 %v1154
    %v1156 = vlaneseq
    %v1157 = vshrl.u32 %v1156, 7
    %v1158 = vsub.s32 %v1155, %v1157
    %v1159 = vrot.slane %v1143, %v1158
    %v1161 = vunpack.c.l.s4 1966171168
    %v1162 = vunpack.c.0.s8 %v1161
    %v1163 = vlaneseq
    %v1164 = vshrl.u32 %v1163, 7
    %v1165 = vsub.s32 %v1162, %v1164
    %v1166 = vrot.slane %v1144, %v1165
    %v1168 = vunpack.c.l.s4 1966171168
    %v1169 = vunpack.c.0.s8 %v1168
    %v1170 = vlaneseq
    %v1171 = vshrl.u32 %v1170, 7
    %v1172 = vsub.s32 %v1169, %v1171
    %v1173 = vrot.slane %v1145, %v1172
    %v1174 = vcombine.high %v1152, %v1152
    %v1175 = vcombine.high %v1159, %v1159
    %v1176 = vcombine.high %v1166, %v1166
    %v1177 = vcombine.high %v1173, %v1173
    %v1178 = vcombine.high %v21, %v21
    %v1180 = vunpack.c.l.s4 1966171168
    %v1181 = vunpack.c.0.s8 %v1180
    %v1182 = vlaneseq
    %v1183 = vshrl.u32 %v1182, 7
    %v1184 = vsub.s32 %v1181, %v1183
    %v1185 = vrot.slane %v21, %v1184
    %v1187 = vunpack.c.l.s4 1966171168
    %v1188 = vunpack.c.0.s8 %v1187
    %v1189 = vlaneseq
    %v1190 = vshrl.u32 %v1189, 7
    %v1191 = vsub.s32 %v1188, %v1190
    %v1192 = vrot.slane %v1178, %v1191
    %v1193 = vcombine.high %v1185, %v1185
    %v1194 = vcombine.high %v1192, %v1192
    %v1196 = vunpack.c.l.s4 1966171168
    %v1197 = vunpack.c.0.s8 %v1196
    %v1198 = vlaneseq
    %v1199 = vshrl.u32 %v1198, 7
    %v1200 = vsub.s32 %v1197, %v1199
    %v1201 = vrot.slane %v1185, %v1200
    %v1203 = vunpack.c.l.s4 1966171168
    %v1204 = vunpack.c.0.s8 %v1203
    %v1205 = vlaneseq
    %v1206 = vshrl.u32 %v1205, 7
    %v1207 = vsub.s32 %v1204, %v1206
    %v1208 = vrot.slane %v1192, %v1207
    %v1210 = vunpack.c.l.s4 1966171168
    %v1211 = vunpack.c.0.s8 %v1210
    %v1212 = vlaneseq
    %v1213 = vshrl.u32 %v1212, 7
    %v1214 = vsub.s32 %v1211, %v1213
    %v1215 = vrot.slane %v1193, %v1214
    %v1217 = vunpack.c.l.s4 1966171168
    %v1218 = vunpack.c.0.s8 %v1217
    %v1219 = vlaneseq
    %v1220 = vshrl.u32 %v1219, 7
    %v1221 = vsub.s32 %v1218, %v1220
    %v1222 = vrot.slane %v1194, %v1221
    %v1223 = vcombine.high %v1201, %v1201
    %v1224 = vcombine.high %v1208, %v1208
    %v1225 = vcombine.high %v1215, %v1215
    %v1226 = vcombine.high %v1222, %v1222
    %v1227 = vcombine.high %v22, %v22
    %v1229 = vunpack.c.l.s4 1966171168
    %v1230 = vunpack.c.0.s8 %v1229
    %v1231 = vlaneseq
    %v1232 = vshrl.u32 %v1231, 7
    %v1233 = vsub.s32 %v1230, %v1232
    %v1234 = vrot.slane %v22, %v1233
    %v1236 = vunpack.c.l.s4 1966171168
    %v1237 = vunpack.c.0.s8 %v1236
    %v1238 = vlaneseq
    %v1239 = vshrl.u32 %v1238, 7
    %v1240 = vsub.s32 %v1237, %v1239
    %v1241 = vrot.slane %v1227, %v1240
    %v1242 = vcombine.high %v1234, %v1234
    %v1243 = vcombine.high %v1241, %v1241
    %v1245 = vunpack.c.l.s4 1966171168
    %v1246 = vunpack.c.0.s8 %v1245
    %v1247 = vlaneseq
    %v1248 = vshrl.u32 %v1247, 7
    %v1249 = vsub.s32 %v1246, %v1248
    %v1250 = vrot.slane %v1234, %v1249
    %v1252 = vunpack.c.l.s4 1966171168
    %v1253 = vunpack.c.0.s8 %v1252
    %v1254 = vlaneseq
    %v1255 = vshrl.u32 %v1254, 7
    %v1256 = vsub.s32 %v1253, %v1255
    %v1257 = vrot.slane %v1241, %v1256
    %v1259 = vunpack.c.l.s4 1966171168
    %v1260 = vunpack.c.0.s8 %v1259
    %v1261 = vlaneseq
    %v1262 = vshrl.u32 %v1261, 7
    %v1263 = vsub.s32 %v1260, %v1262
    %v1264 = vrot.slane %v1242, %v1263
    %v1266 = vunpack.c.l.s4 1966171168
    %v1267 = vunpack.c.0.s8 %v1266
    %v1268 = vlaneseq
    %v1269 = vshrl.u32 %v1268, 7
    %v1270 = vsub.s32 %v1267, %v1269
    %v1271 = vrot.slane %v1243, %v1270
    %v1272 = vcombine.high %v1250, %v1250
    %v1273 = vcombine.high %v1257, %v1257
    %v1274 = vcombine.high %v1264, %v1264
    %v1275 = vcombine.high %v1271, %v1271
    %v2228 = vunpack.c.l.b16 %v23
    %v2229 = vunpack.c.l.b16 %v24
    %v2230 = vunpack.c.l.b16 %v25
    %v2231 = vunpack.c.l.b16 %v26
    %v2232 = vunpack.c.l.b16 %v27
    %v2233 = vunpack.c.l.b16 %v28
    %v2234 = vunpack.c.l.b16 %v29
    %v2235 = vunpack.c.l.b16 %v30
    %v2236 = vunpack.c.l.b16 %v31
    %v2237 = vunpack.c.l.b16 %v32
    %v2238 = vunpack.c.l.b16 %v33
    %v2239 = vunpack.c.l.b16 %v34
    %v2240 = vunpack.c.l.b16 %v35
    %v2241 = vunpack.c.l.b16 %v36
    %v2242 = vunpack.c.l.b16 %v37
    %v2243 = vunpack.c.l.b16 %v38
    %v2244 = vunpack.c.l.b16 %v39
    %v2245 = vunpack.c.l.b16 %v40
    %v2246 = vunpack.c.l.b16 %v41
    %v2247 = vunpack.c.l.b16 %v42
    %v2248 = vunpack.c.l.b16 %v43
    %v2249 = vunpack.c.l.b16 %v44
    %v2250 = vunpack.c.l.b16 %v45
    %v2251 = vunpack.c.l.b16 %v46
    %v2252 = vunpack.c.l.b16 %v47
    %v2253 = vunpack.c.l.b16 %v48
    %v2254 = vunpack.c.l.b16 %v49
    %v2255 = vunpack.c.l.b16 %v50
    %v2256 = vunpack.c.l.b16 %v51
    %v2257 = vunpack.c.l.b16 %v52
    %v2258 = vunpack.c.l.b16 %v53
    %v2259 = vunpack.c.l.b16 %v54
    %v2260 = vunpack.c.l.b16 %v55
    %v2261 = vunpack.c.l.b16 %v56
    %v2262 = vunpack.c.l.b16 %v57
    %v2263 = vunpack.c.l.b16 %v58
    %v2264 = vunpack.c.l.b16 %v59
    %v2265 = vunpack.c.l.b16 %v60
    %v2266 = vunpack.c.l.b16 %v61
    %v2267 = vunpack.c.l.b16 %v62
    %v2268 = vunpack.c.l.b16 %v63
    %v2269 = vunpack.c.l.b16 %v64
    %v2270 = vunpack.c.l.b16 %v65
    %v2271 = vunpack.c.l.b16 %v66
    %v2272 = vunpack.c.l.b16 %v67
    %v2273 = vunpack.c.l.b16 %v68
    %v2274 = vunpack.c.l.b16 %v69
    %v2275 = vunpack.c.l.b16 %v70
    %v2276 = vunpack.c.l.b16 %v71
    %v2277 = vunpack.c.l.b16 %v72
    %v2278 = vunpack.c.l.b16 %v73
    %v2279 = vunpack.c.l.b16 %v74
    %v2280 = vunpack.c.l.b16 %v75
    %v2281 = vunpack.c.l.b16 %v76
    %v2282 = vunpack.c.l.b16 %v77
    %v2283 = vunpack.c.l.b16 %v78
    %v2284 = vunpack.c.l.b16 %v79
    %v2285 = vunpack.c.l.b16 %v80
    %v2286 = vunpack.c.l.b16 %v81
    %v2287 = vunpack.c.l.b16 %v82
    %v2288 = vunpack.c.l.b16 %v83
    %v2289 = vunpack.c.l.b16 %v84
    %v2290 = vunpack.c.l.b16 %v85
    %v2291 = vunpack.c.l.b16 %v86
    %v2292 = vunpack.c.l.b16 %v87
    %v2293 = vunpack.c.l.b16 %v88
    %v2294 = vunpack.c.l.b16 %v89
    %v2295 = vunpack.c.l.b16 %v90
    %v2296 = vunpack.c.l.b16 %v91
    %v2297 = vunpack.c.l.b16 %v92
    %v2298 = vunpack.c.l.b16 %v93
    %v2299 = vunpack.c.l.b16 %v94
    %v2300 = vunpack.c.l.b16 %v95
    %v2301 = vunpack.c.l.b16 %v96
    %v2302 = vunpack.c.l.b16 %v97
    %v2303 = vunpack.c.l.b16 %v98
    %v2304 = vunpack.c.l.b16 %v99
    %v2305 = vunpack.c.l.b16 %v100
    %v2306 = vunpack.c.l.b16 %v101
    %v2307 = vunpack.c.l.b16 %v102
    %v2308 = vunpack.c.l.b16 %v103
    %v2309 = vunpack.c.l.b16 %v104
    %v2310 = vunpack.c.l.b16 %v105
    %v2311 = vunpack.c.l.b16 %v106
    %v2312 = vunpack.c.l.b16 %v107
    %v2313 = vunpack.c.l.b16 %v108
    %v2314 = vunpack.c.l.b16 %v109
    %v2315 = vunpack.c.l.b16 %v110
    %v2316 = vunpack.c.l.b16 %v111
    %v2317 = vunpack.c.l.b16 %v112
    %v2318 = vunpack.c.l.b16 %v113
    %v2319 = vunpack.c.l.b16 %v114
    %v2320 = vunpack.c.l.b16 %v115
    %v2321 = vunpack.c.l.b16 %v116
    %v2322 = vunpack.c.l.b16 %v117
    %v2323 = vunpack.c.l.b16 %v118
    %v2324 = vunpack.c.l.b16 %v119
    %v2325 = vunpack.c.l.b16 %v120
    %v2326 = vunpack.c.l.b16 %v121
    %v2327 = vunpack.c.l.b16 %v122
    %v2328 = vunpack.c.l.b16 %v123
    %v2329 = vunpack.c.l.b16 %v124
    %v2330 = vunpack.c.l.b16 %v125
    %v2331 = vunpack.c.l.b16 %v126
    %v2332 = vunpack.c.l.b16 %v127
    %v2333 = vunpack.c.l.b16 %v128
    %v2334 = vunpack.c.l.b16 %v129
    %v2335 = vunpack.c.l.b16 %v130
    %v2336 = vunpack.c.l.b16 %v131
    %v2337 = vunpack.c.l.b16 %v132
    %v2338 = vunpack.c.l.b16 %v133
    %v2339 = vunpack.c.l.b16 %v134
    %v2340 = vunpack.c.l.b16 %v135
    %v2341 = vunpack.c.l.b16 %v136
    %v2342 = vunpack.c.l.b16 %v137
    %v2343 = vunpack.c.l.b16 %v138
    %v2344 = vunpack.c.l.b16 %v139
    %v2345 = vunpack.c.l.b16 %v140
    %v2346 = vunpack.c.l.b16 %v141
    %v2347 = vunpack.c.l.b16 %v142
    %v2348 = vunpack.c.l.b16 %v143
    %v2349 = vunpack.c.l.b16 %v144
    %v2350 = vunpack.c.l.b16 %v145
    %v2351 = vunpack.c.l.b16 %v146
    %v2352 = vunpack.c.l.b16 %v147
    %v2353 = vunpack.c.l.b16 %v148
    %v2354 = vunpack.c.l.b16 %v149
    %v2355 = vunpack.c.l.b16 %v150
    %v2356 = vunpack.c.l.b16 %v151
    %v2357 = vunpack.c.l.b16 %v152
    %v2358 = vunpack.c.l.b16 %v153
    %v2359 = vunpack.c.l.b16 %v154
    %v2360 = vunpack.c.l.b16 %v155
    %v2361 = vunpack.c.l.b16 %v156
    %v2362 = vunpack.c.l.b16 %v157
    %v2363 = vunpack.c.l.b16 %v158
    %v2364 = vunpack.c.l.b16 %v159
    %v2365 = vunpack.c.l.b16 %v160
    %v2366 = vunpack.c.l.b16 %v161
    %v2367 = vunpack.c.l.b16 %v162
    %v2368 = vunpack.c.l.b16 %v163
    %v2369 = vunpack.c.l.b16 %v164
    %v2370 = vunpack.c.l.b16 %v165
    %v2371 = vunpack.c.l.b16 %v166
    %v2372 = vunpack.c.l.b16 %v167
    %v2373 = vunpack.c.l.b16 %v168
    %v2374 = vunpack.c.l.b16 %v169
    %v2375 = vunpack.c.l.b16 %v170
    %v2376 = vunpack.c.l.b16 %v171
    %v2377 = vunpack.c.l.b16 %v172
    %v2378 = vunpack.c.l.b16 %v173
    %v2379 = vunpack.c.l.b16 %v174
    %v2380 = vunpack.c.l.b16 %v175
    %v2381 = vunpack.c.l.b16 %v176
    %v2382 = vunpack.c.l.b16 %v177
    %v2383 = vunpack.c.l.b16 %v178
    %v2384 = vunpack.c.l.b16 %v179
    %v2385 = vunpack.c.l.b16 %v180
    %v2386 = vunpack.c.l.b16 %v181
    %v2387 = vunpack.c.l.b16 %v182
    %v2388 = vunpack.c.l.b16 %v183
    %v2389 = vunpack.c.l.b16 %v184
    %v2390 = vunpack.c.l.b16 %v185
    %v2391 = vunpack.c.l.b16 %v186
    %v2392 = vunpack.c.l.b16 %v187
    %v2393 = vunpack.c.l.b16 %v188
    %v2394 = vunpack.c.l.b16 %v189
    %v2395 = vunpack.c.l.b16 %v190
    %v2396 = vunpack.c.l.b16 %v191
    %v2397 = vunpack.c.l.b16 %v192
    %v2398 = vunpack.c.l.b16 %v193
    %v2399 = vunpack.c.l.b16 %v194
    %v2400 = vunpack.c.l.b16 %v195
    %v2401 = vunpack.c.l.b16 %v196
    %v2402 = vunpack.c.l.b16 %v197
    %v2403 = vunpack.c.l.b16 %v198
    %v2404 = vunpack.c.l.b16 %v199
    %v2405 = vunpack.c.l.b16 %v200
    %v2406 = vunpack.c.l.b16 %v201
    %v2407 = vunpack.c.l.b16 %v202
    %v2408 = vunpack.c.l.b16 %v203
    %v2409 = vunpack.c.l.b16 %v204
    %v2410 = vunpack.c.l.b16 %v205
    %v2411 = vunpack.c.l.b16 %v206
    %v2412 = vunpack.c.l.b16 %v207
    %v2413 = vunpack.c.l.b16 %v208
    %v2414 = vunpack.c.l.b16 %v209
    %v2415 = vunpack.c.l.b16 %v210
    %v2416 = vunpack.c.l.b16 %v211
    %v2417 = vunpack.c.l.b16 %v212
    %v2418 = vunpack.c.l.b16 %v213
    %v2419 = vunpack.c.l.b16 %v214
    %v2420 = vunpack.c.l.b16 %v215
    %v2421 = vunpack.c.l.b16 %v216
    %v2422 = vunpack.c.l.b16 %v217
    %v2423 = vunpack.c.l.b16 %v218
    %v2424 = vunpack.c.l.b16 %v219
    %v2425 = vunpack.c.l.b16 %v220
    %v2426 = vunpack.c.l.b16 %v221
    %v2427 = vunpack.c.l.b16 %v222
    %v2428 = vunpack.c.l.b16 %v223
    %v2429 = vunpack.c.l.b16 %v224
    %v2430 = vunpack.c.l.b16 %v225
    %v2431 = vunpack.c.l.b16 %v226
    %v2432 = vunpack.c.l.b16 %v227
    %v2433 = vunpack.c.l.b16 %v228
    %v2434 = vunpack.c.l.b16 %v229
    %v2435 = vunpack.c.l.b16 %v230
    %v2436 = vunpack.c.l.b16 %v231
    %v2437 = vunpack.c.l.b16 %v232
    %v2438 = vunpack.c.l.b16 %v233
    %v2439 = vunpack.c.l.b16 %v234
    %v2440 = vunpack.c.l.b16 %v235
    %v2441 = vunpack.c.l.b16 %v236
    %v2442 = vunpack.c.l.b16 %v237
    %v2443 = vunpack.c.l.b16 %v238
    %v2444 = vunpack.c.l.b16 %v239
    %v2445 = vunpack.c.l.b16 %v240
    %v2446 = vunpack.c.l.b16 %v241
    %v2447 = vunpack.c.l.b16 %v242
    %v2448 = vunpack.c.l.b16 %v243
    %v2449 = vunpack.c.l.b16 %v244
    %v2450 = vunpack.c.l.b16 %v245
    %v2451 = vunpack.c.l.b16 %v246
    %v2452 = vunpack.c.l.b16 %v247
    %v2453 = vunpack.c.l.b16 %v248
    %v2454 = vunpack.c.l.b16 %v249
    %v2455 = vunpack.c.l.b16 %v250
    %v2456 = vunpack.c.l.b16 %v251
    %v2457 = vunpack.c.l.b16 %v252
    %v2458 = vunpack.c.l.b16 %v253
    %v2459 = vunpack.c.l.b16 %v254
    %v2460 = vunpack.c.l.b16 %v255
    %v2461 = vunpack.c.l.b16 %v256
    %v2462 = vunpack.c.l.b16 %v257
    %v2463 = vunpack.c.l.b16 %v258
    %v2464 = vunpack.c.l.b16 %v259
    %v2465 = vunpack.c.l.b16 %v260
    %v2466 = vunpack.c.l.b16 %v261
    %v2467 = vunpack.c.l.b16 %v262
    %v2468 = vunpack.c.l.b16 %v263
    %v2469 = vunpack.c.l.b16 %v264
    %v2470 = vunpack.c.l.b16 %v265
    %v2471 = vunpack.c.l.b16 %v266
    %v2472 = vunpack.c.l.b16 %v267
    %v2473 = vunpack.c.l.b16 %v268
    %v2474 = vunpack.c.l.b16 %v269
    %v2475 = vunpack.c.l.b16 %v270
    %v2476 = vunpack.c.l.b16 %v271
    %v2477 = vunpack.c.l.b16 %v272
    %v2478 = vunpack.c.l.b16 %v273
    %v2479 = vunpack.c.l.b16 %v274
    %v2480 = vunpack.c.l.b16 %v275
    %v2481 = vunpack.c.l.b16 %v276
    %v2482 = vunpack.c.l.b16 %v277
    %v2483 = vunpack.c.l.b16 %v278
    %v2484 = vunpack.c.l.b16 %v279
    %v2485 = vunpack.c.l.b16 %v280
    %v2486 = vunpack.c.l.b16 %v281
    %v2487 = vunpack.c.l.b16 %v282
    %v2488 = vunpack.c.l.b16 %v283
    %v2489 = vunpack.c.l.b16 %v284
    %v2490 = vunpack.c.l.b16 %v285
    %v2491 = vunpack.c.l.b16 %v286
    %v2492 = vunpack.c.l.b16 %v287
    %v2493 = vunpack.c.l.b16 %v288
    %v2494 = vunpack.c.l.b16 %v289
    %v2495 = vunpack.c.l.b16 %v290
    %v2496 = vunpack.c.l.b16 %v291
    %v2497 = vunpack.c.l.b16 %v292
    %v2498 = vunpack.c.l.b16 %v293
    %v2499 = vunpack.c.l.b16 %v294
    %v2500 = vunpack.c.l.b16 %v295
    %v2501 = vunpack.c.l.b16 %v296
    %v2502 = vunpack.c.l.b16 %v297
    %v2503 = vunpack.c.l.b16 %v298
    %v2504 = vunpack.c.l.b16 %v299
    %v2505 = vunpack.c.l.b16 %v300
    %v2506 = vunpack.c.l.b16 %v301
    %v2507 = vunpack.c.l.b16 %v302
    %v2508 = vunpack.c.l.b16 %v303
    %v2509 = vunpack.c.l.b16 %v304
    %v2510 = vunpack.c.l.b16 %v305
    %v2511 = vunpack.c.l.b16 %v306
    %v2512 = vunpack.c.l.b16 %v307
    %v2513 = vunpack.c.l.b16 %v308
    %v2514 = vunpack.c.l.b16 %v309
    %v2515 = vunpack.c.l.b16 %v310
    %v2516 = vunpack.c.l.b16 %v311
    %v2517 = vunpack.c.l.b16 %v312
    %v2518 = vunpack.c.l.b16 %v313
    %v2519 = vunpack.c.l.b16 %v314
    %v2520 = vunpack.c.l.b16 %v315
    %v2521 = vunpack.c.l.b16 %v316
    %v2522 = vunpack.c.l.b16 %v317
    %v2523 = vunpack.c.l.b16 %v318
    %v2524 = vunpack.c.l.b16 %v319
    %v2525 = vunpack.c.l.b16 %v320
    %v2526 = vunpack.c.l.b16 %v321
    %v2527 = vunpack.c.l.b16 %v322
    %v2528 = vunpack.c.l.b16 %v323
    %v2529 = vunpack.c.l.b16 %v324
    %v2530 = vunpack.c.l.b16 %v325
    %v2531 = vunpack.c.l.b16 %v326
    %v2532 = vunpack.c.l.b16 %v327
    %v2533 = vunpack.c.l.b16 %v328
    %v2534 = vunpack.c.l.b16 %v329
    %v2535 = vunpack.c.l.b16 %v330
    %v2536 = vunpack.c.l.b16 %v331
    %v2537 = vunpack.c.l.b16 %v332
    %v2538 = vunpack.c.l.b16 %v333
    %v2539 = vunpack.c.l.b16 %v334
    %v2540 = vunpack.c.l.b16 %v335
    %v2541 = vunpack.c.l.b16 %v336
    %v2542 = vunpack.c.l.b16 %v337
    %v2543 = vunpack.c.l.b16 %v338
    %v2544 = vunpack.c.l.b16 %v339
    %v2545 = vunpack.c.l.b16 %v340
    %v2546 = vunpack.c.l.b16 %v341
    %v2547 = vunpack.c.l.b16 %v342
    %v2548 = vunpack.c.l.b16 %v343
    %v2549 = vunpack.c.l.b16 %v344
    %v2550 = vunpack.c.l.b16 %v345
    %v2551 = vunpack.c.l.b16 %v346
    %v2552 = vunpack.c.l.b16 %v347
    %v2553 = vunpack.c.l.b16 %v348
    %v2554 = vunpack.c.l.b16 %v349
    %v2555 = vunpack.c.l.b16 %v350
    %v2556 = vunpack.c.l.b16 %v351
    %v2557 = vunpack.c.l.b16 %v352
    %v2558 = vunpack.c.l.b16 %v353
    %v2559 = vunpack.c.l.b16 %v354
    %v2560 = vunpack.c.l.b16 %v355
    %v2561 = vunpack.c.l.b16 %v356
    %v2562 = vunpack.c.l.b16 %v357
    %v2563 = vunpack.c.l.b16 %v358
    %v2564 = vunpack.c.l.b16 %v359
    %v2565 = vunpack.c.l.b16 %v360
    %v2566 = vunpack.c.l.b16 %v361
    %v2567 = vunpack.c.l.b16 %v362
    %v2568 = vunpack.c.l.b16 %v363
    %v2569 = vunpack.c.l.b16 %v364
    %v2570 = vunpack.c.l.b16 %v365
    %v2571 = vunpack.c.l.b16 %v366
    %v2572 = vunpack.c.l.b16 %v367
    %v2573 = vunpack.c.l.b16 %v368
    %v2574 = vunpack.c.l.b16 %v369
    %v2575 = vunpack.c.l.b16 %v370
    %v2576 = vunpack.c.l.b16 %v371
    %v2577 = vunpack.c.l.b16 %v372
    %v2578 = vunpack.c.l.b16 %v373
    %v2579 = vunpack.c.l.b16 %v374
    %v2580 = vunpack.c.l.b16 %v375
    %v2581 = vunpack.c.l.b16 %v376
    %v2582 = vunpack.c.l.b16 %v377
    %v2583 = vunpack.c.l.b16 %v378
    %v2584 = vunpack.c.l.b16 %v379
    %v2585 = vunpack.c.l.b16 %v380
    %v2586 = vunpack.c.l.b16 %v381
    %v2587 = vunpack.c.l.b16 %v382
    %v2588 = vunpack.c.l.b16 %v383
    %v2589 = vunpack.c.l.b16 %v384
    %v2590 = vunpack.c.l.b16 %v385
    %v2591 = vunpack.c.l.b16 %v386
    %v2592 = vunpack.c.l.b16 %v387
    %v2593 = vunpack.c.l.b16 %v388
    %v2594 = vunpack.c.l.b16 %v389
    %v2595 = vunpack.c.l.b16 %v390
    %v2596 = vunpack.c.l.b16 %v391
    %v2597 = vunpack.c.l.b16 %v392
    %v2598 = vunpack.c.l.b16 %v393
    %v2599 = vunpack.c.l.b16 %v394
    %v2600 = vunpack.c.l.b16 %v395
    %v2601 = vunpack.c.l.b16 %v396
    %v2602 = vunpack.c.l.b16 %v397
    %v2603 = vunpack.c.l.b16 %v398
    %v2604 = vunpack.c.l.b16 %v399
    %v2605 = vunpack.c.l.b16 %v400
    %v2606 = vunpack.c.l.b16 %v401
    %v2607 = vunpack.c.l.b16 %v402
    %v2608 = vunpack.c.l.b16 %v403
    %v2609 = vunpack.c.l.b16 %v404
    %v2610 = vunpack.c.l.b16 %v405
    %v2611 = vunpack.c.l.b16 %v406
    %v2612 = vunpack.c.l.b16 %v407
    %v2613 = vunpack.c.l.b16 %v408
    %v2614 = vunpack.c.l.b16 %v409
    %v2615 = vunpack.c.l.b16 %v410
    %v2616 = vunpack.c.l.b16 %v411
    %v2617 = vunpack.c.l.b16 %v412
    %v2618 = vunpack.c.l.b16 %v413
    %v2619 = vunpack.c.l.b16 %v414
    %v2620 = vunpack.c.l.b16 %v415
    %v2621 = vunpack.c.l.b16 %v416
    %v2622 = vunpack.c.l.b16 %v417
    %v2623 = vunpack.c.l.b16 %v418
    %v2624 = vunpack.c.l.b16 %v419
    %v2625 = vunpack.c.l.b16 %v420
    %v2626 = vunpack.c.l.b16 %v421
    %v2627 = vunpack.c.l.b16 %v422
    %v2628 = vunpack.c.l.b16 %v423
    %v2629 = vunpack.c.l.b16 %v424
    %v2630 = vunpack.c.l.b16 %v425
    %v2631 = vunpack.c.l.b16 %v426
    %v2632 = vunpack.c.l.b16 %v427
    %v2633 = vunpack.c.l.b16 %v428
    %v2634 = vunpack.c.l.b16 %v429
    %v2635 = vunpack.c.l.b16 %v430
    %v2636 = vunpack.c.l.b16 %v431
    %v2637 = vunpack.c.l.b16 %v432
    %v2638 = vunpack.c.l.b16 %v433
    %v2639 = vunpack.c.l.b16 %v434
    %v2640 = vunpack.c.l.b16 %v435
    %v2641 = vunpack.c.l.b16 %v436
    %v2642 = vunpack.c.l.b16 %v437
    %v2643 = vunpack.c.l.b16 %v438
    %v2644 = vunpack.c.l.b16 %v439
    %v2645 = vunpack.c.l.b16 %v440
    %v2646 = vunpack.c.l.b16 %v441
    %v2647 = vunpack.c.l.b16 %v442
    %v2648 = vunpack.c.l.b16 %v443
    %v2649 = vunpack.c.l.b16 %v444
    %v2650 = vunpack.c.l.b16 %v445
    %v2651 = vunpack.c.l.b16 %v446
    %v2652 = vunpack.c.l.b16 %v447
    %v2653 = vunpack.c.l.b16 %v448
    %v2654 = vunpack.c.l.b16 %v449
    %v2655 = vunpack.c.l.b16 %v450
    %v2656 = vunpack.c.l.b16 %v451
    %v2657 = vunpack.c.l.b16 %v452
    %v2658 = vunpack.c.l.b16 %v453
    %v2659 = vunpack.c.l.b16 %v454
    %v2660 = vunpack.c.l.b16 %v455
    %v2661 = vunpack.c.l.b16 %v456
    %v2662 = vunpack.c.l.b16 %v457
    %v2663 = vunpack.c.l.b16 %v458
    %v2664 = vunpack.c.l.b16 %v459
    %v2665 = vunpack.c.l.b16 %v460
    %v2666 = vunpack.c.l.b16 %v461
    %v2667 = vunpack.c.l.b16 %v462
    %v2668 = vunpack.c.l.b16 %v463
    %v2669 = vunpack.c.l.b16 %v464
    %v2670 = vunpack.c.l.b16 %v465
    %v2671 = vunpack.c.l.b16 %v466
    %v2672 = vunpack.c.l.b16 %v467
    %v2673 = vunpack.c.l.b16 %v468
    %v2674 = vunpack.c.l.b16 %v469
    %v2675 = vunpack.c.l.b16 %v470
    %v2676 = vunpack.c.l.b16 %v471
    %v2677 = vunpack.c.l.b16 %v472
    %v2678 = vunpack.c.l.b16 %v473
    %v2679 = vunpack.c.l.b16 %v474
    %v2680 = vunpack.c.l.b16 %v475
    %v2681 = vunpack.c.l.b16 %v476
    %v2682 = vunpack.c.l.b16 %v477
    %v2683 = vunpack.c.l.b16 %v478
    %v2684 = vunpack.c.l.b16 %v479
    %v2685 = vunpack.c.l.b16 %v480
    %v2686 = vunpack.c.l.b16 %v481
    %v2687 = vunpack.c.l.b16 %v482
    %v2688 = vunpack.c.l.b16 %v483
    %v2689 = vunpack.c.l.b16 %v484
    %v2690 = vunpack.c.l.b16 %v485
    %v2691 = vunpack.c.l.b16 %v486
    %v2692 = vunpack.c.l.b16 %v487
    %v2693 = vunpack.c.l.b16 %v488
    %v2694 = vunpack.c.l.b16 %v489
    %v2695 = vunpack.c.l.b16 %v490
    %v2696 = vunpack.c.l.b16 %v491
    %v2697 = vunpack.c.l.b16 %v492
    %v2698 = vunpack.c.l.b16 %v493
    %v2699 = vunpack.c.l.b16 %v494
    %v2700 = vunpack.c.l.b16 %v495
    %v2701 = vunpack.c.l.b16 %v496
    %v2702 = vunpack.c.l.b16 %v497
    %v2703 = vunpack.c.l.b16 %v498
    %v2704 = vunpack.c.l.b16 %v499
    %v2705 = vunpack.c.l.b16 %v500
    %v2706 = vunpack.c.l.b16 %v501
    %v2707 = vunpack.c.l.b16 %v502
    %v2708 = vunpack.c.l.b16 %v503
    %v2709 = vunpack.c.l.b16 %v504
    %v2710 = vunpack.c.l.b16 %v505
    %v2711 = vunpack.c.l.b16 %v506
    %v2712 = vunpack.c.l.b16 %v507
    %v2713 = vunpack.c.l.b16 %v508
    %v2714 = vunpack.c.l.b16 %v509
    %v2715 = vunpack.c.l.b16 %v510
    %v2716 = vunpack.c.l.b16 %v511
    %v2717 = vunpack.c.l.b16 %v512
    %v2718 = vunpack.c.l.b16 %v513
    %v2719 = vunpack.c.l.b16 %v514
    %v2720 = vunpack.c.l.b16 %v515
    %v2721 = vunpack.c.l.b16 %v516
    %v2722 = vunpack.c.l.b16 %v517
    %v2723 = vunpack.c.l.b16 %v518
    %v2724 = vunpack.c.l.b16 %v519
    %v2725 = vunpack.c.l.b16 %v520
    %v2726 = vunpack.c.l.b16 %v521
    %v2727 = vunpack.c.l.b16 %v522
    %v2728 = vunpack.c.l.b16 %v523
    %v2729 = vunpack.c.l.b16 %v524
    %v2730 = vunpack.c.l.b16 %v525
    %v2731 = vunpack.c.l.b16 %v526
    %v2732 = vunpack.c.l.b16 %v527
    %v2733 = vunpack.c.l.b16 %v528
    %v2734 = vunpack.c.l.b16 %v529
    %v2735 = vunpack.c.l.b16 %v530
    %v2736 = vunpack.c.l.b16 %v531
    %v2737 = vunpack.c.l.b16 %v532
    %v2738 = vunpack.c.l.b16 %v533
    %v2739 = vunpack.c.l.b16 %v534
    %v2740 = vunpack.c.l.b16 %v535
    %v2741 = vunpack.c.l.b16 %v536
    %v2742 = vunpack.c.l.b16 %v537
    %v2743 = vunpack.c.l.b16 %v538
    %v2744 = vunpack.c.l.b16 %v539
    %v2745 = vunpack.c.l.b16 %v540
    %v2746 = vunpack.c.l.b16 %v541
    %v2747 = vunpack.c.l.b16 %v542
    %v2748 = vunpack.c.l.b16 %v543
    %v2749 = vunpack.c.l.b16 %v544
    %v2750 = vunpack.c.l.b16 %v545
    %v2751 = vunpack.c.l.b16 %v546
    %v2752 = vunpack.c.l.b16 %v547
    %v2753 = vunpack.c.l.b16 %v548
    %v2754 = vunpack.c.l.b16 %v549
    %v2755 = vunpack.c.l.b16 %v550
    %v2756 = vunpack.c.l.b16 %v551
    %v2757 = vunpack.c.l.b16 %v552
    %v2758 = vunpack.c.l.b16 %v553
    %v2759 = vunpack.c.l.b16 %v554
    %v2760 = vunpack.c.l.b16 %v555
    %v2761 = vunpack.c.l.b16 %v556
    %v2762 = vunpack.c.l.b16 %v557
    %v2763 = vunpack.c.l.b16 %v558
    %v2764 = vunpack.c.l.b16 %v559
    %v2765 = vunpack.c.l.b16 %v560
    %v2766 = vunpack.c.l.b16 %v561
    %v2767 = vunpack.c.l.b16 %v562
    %v2768 = vunpack.c.l.b16 %v563
    %v2769 = vunpack.c.l.b16 %v564
    %v2770 = vunpack.c.l.b16 %v565
    %v2771 = vunpack.c.l.b16 %v566
    %v2772 = vunpack.c.l.b16 %v567
    %v2773 = vunpack.c.l.b16 %v568
    %v2774 = vunpack.c.l.b16 %v569
    %v2775 = vunpack.c.l.b16 %v570
    %v2776 = vunpack.c.l.b16 %v571
    %v2777 = vunpack.c.l.b16 %v572
    %v2778 = vunpack.c.l.b16 %v573
    %v2779 = vunpack.c.l.b16 %v574
    %v2780 = vunpack.c.l.b16 %v575
    %v2781 = vunpack.c.l.b16 %v576
    %v2782 = vunpack.c.l.b16 %v577
    %v2783 = vunpack.c.l.b16 %v578
    %v2784 = vunpack.c.l.b16 %v579
    %v2785 = vunpack.c.l.b16 %v580
    %v2786 = vunpack.c.l.b16 %v581
    %v2787 = vunpack.c.l.b16 %v582
    %v2788 = vunpack.c.l.b16 %v583
    %v2789 = vunpack.c.l.b16 %v584
    %v2790 = vunpack.c.l.b16 %v585
    %v2791 = vunpack.c.l.b16 %v586
    %v2792 = vunpack.c.l.b16 %v587
    %v2793 = vunpack.c.l.b16 %v588
    %v2794 = vunpack.c.l.b16 %v589
    %v2795 = vunpack.c.l.b16 %v590
    %v2796 = vunpack.c.l.b16 %v591
    %v2797 = vunpack.c.l.b16 %v592
    %v2798 = vunpack.c.l.b16 %v593
    %v2799 = vunpack.c.l.b16 %v594
    %v2800 = vunpack.c.l.b16 %v595
    %v2801 = vunpack.c.l.b16 %v596
    %v2802 = vunpack.c.l.b16 %v597
    %v2803 = vunpack.c.l.b16 %v598
    %v2804 = vunpack.c.l.b16 %v599
    %v2805 = vunpack.c.l.b16 %v600
    %v2806 = vunpack.c.l.b16 %v601
    %v2807 = vunpack.c.l.b16 %v602
    %v2808 = vunpack.c.l.b16 %v603
    %v2809 = vunpack.c.l.b16 %v604
    %v2810 = vunpack.c.l.b16 %v605
    %v2811 = vunpack.c.l.b16 %v606
    %v2812 = vunpack.c.l.b16 %v607
    %v2813 = vunpack.c.l.b16 %v608
    %v2814 = vunpack.c.l.b16 %v609
    %v2815 = vunpack.c.l.b16 %v610
    %v2816 = vunpack.c.l.b16 %v611
    %v2817 = vunpack.c.l.b16 %v612
    %v2818 = vunpack.c.l.b16 %v613
    %v2819 = vunpack.c.l.b16 %v614
    %v2820 = vunpack.c.l.b16 %v615
    %v2821 = vunpack.c.l.b16 %v616
    %v2822 = vunpack.c.l.b16 %v617
    %v2823 = vunpack.c.l.b16 %v618
    %v2824 = vunpack.c.l.b16 %v619
    %v2825 = vunpack.c.l.b16 %v620
    %v2826 = vunpack.c.l.b16 %v621
    %v2827 = vunpack.c.l.b16 %v622
    %v2828 = vunpack.c.l.b16 %v623
    %v2829 = vunpack.c.l.b16 %v624
    %v2830 = vunpack.c.l.b16 %v625
    %v2831 = vunpack.c.l.b16 %v626
    %v2832 = vunpack.c.l.b16 %v627
    %v2833 = vunpack.c.l.b16 %v628
    %v2834 = vunpack.c.l.b16 %v629
    %v2835 = vunpack.c.l.b16 %v630
    %v2836 = vunpack.c.l.b16 %v631
    %v2837 = vunpack.c.l.b16 %v632
    %v2838 = vunpack.c.l.b16 %v633
    %v2839 = vunpack.c.l.b16 %v634
    %v2840 = vunpack.c.l.b16 %v635
    %v2841 = vunpack.c.l.b16 %v636
    %v2842 = vunpack.c.l.b16 %v637
    %v2843 = vunpack.c.l.b16 %v638
    %v2844 = vunpack.c.l.b16 %v639
    %v2845 = vunpack.c.l.b16 %v640
    %v2846 = vunpack.c.l.b16 %v641
    %v2847 = vunpack.c.l.b16 %v642
    %v2848 = vunpack.c.l.b16 %v643
    %v2849 = vunpack.c.l.b16 %v644
    %v2850 = vunpack.c.l.b16 %v645
    %v2851 = vunpack.c.l.b16 %v646
    %v2852 = vunpack.c.l.b16 %v647
    %v2853 = vunpack.c.l.b16 %v648
    %v2854 = vunpack.c.l.b16 %v649
    %v2855 = vunpack.c.l.b16 %v650
    %v2856 = vunpack.c.l.b16 %v651
    %v2857 = vunpack.c.l.b16 %v652
    %v2858 = vunpack.c.l.b16 %v653
    %v2859 = vunpack.c.l.b16 %v654
    %v2860 = vunpack.c.l.b16 %v655
    %v2861 = vunpack.c.l.b16 %v656
    %v2862 = vunpack.c.l.b16 %v657
    %v2863 = vunpack.c.l.b16 %v658
    %v2864 = vunpack.c.l.b16 %v659
    %v2865 = vunpack.c.l.b16 %v660
    %v2866 = vunpack.c.l.b16 %v661
    %v2867 = vunpack.c.l.b16 %v662
    %v2868 = vunpack.c.l.b16 %v663
    %v2869 = vunpack.c.l.b16 %v664
    %v2870 = vunpack.c.l.b16 %v665
    %v2871 = vunpack.c.l.b16 %v666
    %v2872 = vunpack.c.l.b16 %v667
    %v2873 = vunpack.c.l.b16 %v668
    %v2874 = vunpack.c.l.b16 %v669
    %v2875 = vunpack.c.l.b16 %v670
    %v2876 = vunpack.c.l.b16 %v671
    %v2877 = vunpack.c.l.b16 %v672
    %v2878 = vunpack.c.l.b16 %v673
    %v2879 = vunpack.c.l.b16 %v674
    %v2880 = vunpack.c.l.b16 %v675
    %v2881 = vunpack.c.l.b16 %v676
    %v2882 = vunpack.c.l.b16 %v677
    %v2883 = vunpack.c.l.b16 %v678
    %v2884 = vunpack.c.l.b16 %v679
    %v2885 = vunpack.c.l.b16 %v680
    %v2886 = vunpack.c.l.b16 %v681
    %v2887 = vunpack.c.l.b16 %v682
    %v2888 = vunpack.c.l.b16 %v683
    %v2889 = vunpack.c.l.b16 %v684
    %v2890 = vunpack.c.l.b16 %v685
    %v2891 = vunpack.c.l.b16 %v686
    %v2892 = vunpack.c.l.b16 %v687
    %v2893 = vunpack.c.l.b16 %v688
    %v2894 = vunpack.c.l.b16 %v689
    %v2895 = vunpack.c.l.b16 %v690
    %v2896 = vunpack.c.l.b16 %v691
    %v2897 = vunpack.c.l.b16 %v692
    %v2898 = vunpack.c.l.b16 %v693
    %v2899 = vunpack.c.l.b16 %v694
    %v2900 = vunpack.c.l.b16 %v695
    %v2901 = vunpack.c.l.b16 %v696
    %v2902 = vunpack.c.l.b16 %v697
    %v2903 = vunpack.c.l.b16 %v698
    %v2904 = vunpack.c.l.b16 %v699
    %v2905 = vunpack.c.l.b16 %v700
    %v2906 = vunpack.c.l.b16 %v701
    %v2907 = vunpack.c.l.b16 %v702
    %v2908 = vunpack.c.l.b16 %v703
    %v2909 = vunpack.c.l.b16 %v704
    %v2910 = vunpack.c.l.b16 %v705
    %v2911 = vunpack.c.l.b16 %v706
    %v2912 = vunpack.c.l.b16 %v707
    %v2913 = vunpack.c.l.b16 %v708
    %v2914 = vunpack.c.l.b16 %v709
    %v2915 = vunpack.c.l.b16 %v710
    %v2916 = vunpack.c.l.b16 %v711
    %v2917 = vunpack.c.l.b16 %v712
    %v2918 = vunpack.c.l.b16 %v713
    %v2919 = vunpack.c.l.b16 %v714
    %v2920 = vunpack.c.l.b16 %v715
    %v2921 = vunpack.c.l.b16 %v716
    %v2922 = vunpack.c.l.b16 %v717
    %v2923 = vunpack.c.l.b16 %v718
    %v2924 = vunpack.c.l.b16 %v719
    %v2925 = vunpack.c.l.b16 %v720
    %v2926 = vunpack.c.l.b16 %v721
    %v2927 = vunpack.c.l.b16 %v722
    %v2928 = vunpack.c.l.b16 %v723
    %v2929 = vunpack.c.l.b16 %v724
    %v2930 = vunpack.c.l.b16 %v725
    %v2931 = vunpack.c.l.b16 %v726
    %v2932 = vunpack.c.l.b16 %v727
    %v2933 = vunpack.c.l.b16 %v728
    %v2934 = vunpack.c.l.b16 %v729
    %v2935 = vunpack.c.l.b16 %v730
    %v2936 = vunpack.c.l.b16 %v731
    %v2937 = vunpack.c.l.b16 %v732
    %v2938 = vunpack.c.l.b16 %v733
    %v2939 = vunpack.c.l.b16 %v734
    %v2940 = vunpack.c.l.b16 %v735
    %v2941 = vunpack.c.l.b16 %v736
    %v2942 = vunpack.c.l.b16 %v737
    %v2943 = vunpack.c.l.b16 %v738
    %v2944 = vunpack.c.l.b16 %v739
    %v2945 = vunpack.c.l.b16 %v740
    %v2946 = vunpack.c.l.b16 %v741
    %v2947 = vunpack.c.l.b16 %v742
    %v2948 = vunpack.c.l.b16 %v743
    %v2949 = vunpack.c.l.b16 %v744
    %v2950 = vunpack.c.l.b16 %v745
    %v2951 = vunpack.c.l.b16 %v746
    %v2952 = vunpack.c.l.b16 %v747
    %v2953 = vunpack.c.l.b16 %v748
    %v2954 = vunpack.c.l.b16 %v749
    %v2955 = vunpack.c.l.b16 %v750
    %v2956 = vunpack.c.l.b16 %v751
    %v2957 = vunpack.c.l.b16 %v752
    %v2958 = vunpack.c.l.b16 %v753
    %v2959 = vunpack.c.l.b16 %v754
    %v2960 = vunpack.c.l.b16 %v755
    %v2961 = vunpack.c.l.b16 %v756
    %v2962 = vunpack.c.l.b16 %v757
    %v2963 = vunpack.c.l.b16 %v758
    %v2964 = vunpack.c.l.b16 %v759
    %v2965 = vunpack.c.l.b16 %v760
    %v2966 = vunpack.c.l.b16 %v761
    %v2967 = vunpack.c.l.b16 %v762
    %v2968 = vunpack.c.l.b16 %v763
    %v2969 = vunpack.c.l.b16 %v764
    %v2970 = vunpack.c.l.b16 %v765
    %v2971 = vunpack.c.l.b16 %v766
    %v2972 = vunpack.c.l.b16 %v767
    %v2973 = vunpack.c.l.b16 %v768
    %v2974 = vunpack.c.l.b16 %v769
    %v2975 = vunpack.c.l.b16 %v770
    %v2976 = vunpack.c.l.b16 %v771
    %v2977 = vunpack.c.l.b16 %v772
    %v2978 = vunpack.c.l.b16 %v773
    %v2979 = vunpack.c.l.b16 %v774
    %v2980 = vunpack.c.l.b16 %v775
    %v2981 = vunpack.c.l.b16 %v776
    %v2982 = vunpack.c.l.b16 %v777
    %v2983 = vunpack.c.l.b16 %v778
    %v2984 = vunpack.c.l.b16 %v779
    %v2985 = vunpack.c.l.b16 %v780
    %v2986 = vunpack.c.l.b16 %v781
    %v2987 = vunpack.c.l.b16 %v782
    %v2988 = vunpack.c.l.b16 %v783
    %v2989 = vunpack.c.l.b16 %v784
    %v2990 = vunpack.c.l.b16 %v785
    %v2991 = vunpack.c.l.b16 %v786
    %v2992 = vunpack.c.l.b16 %v787
    %v2993 = vunpack.c.l.b16 %v788
    %v2994 = vunpack.c.l.b16 %v789
    %v2995 = vunpack.c.l.b16 %v790
    %v2996 = vunpack.c.l.b16 %v791
    %v2997 = vunpack.c.l.b16 %v792
    %v2998 = vunpack.c.l.b16 %v793
    %v2999 = vunpack.c.l.b16 %v794
    %v3000 = vunpack.c.l.b16 %v795
    %v3001 = vunpack.c.l.b16 %v796
    %v3002 = vunpack.c.l.b16 %v797
    %v3003 = vunpack.c.l.b16 %v798
    %v3004 = vunpack.c.l.b16 %v799
    %v3005 = vunpack.c.l.b16 %v800
    %v3006 = vunpack.c.l.b16 %v801
    %v3007 = vunpack.c.l.b16 %v802
    %v3008 = vunpack.c.l.b16 %v803
    %v3009 = vunpack.c.l.b16 %v804
    %v3010 = vunpack.c.l.b16 %v805
    %v3011 = vunpack.c.l.b16 %v806
    %v3012 = vunpack.c.l.b16 %v807
    %v3013 = vunpack.c.l.b16 %v808
    %v3014 = vunpack.c.l.b16 %v809
    %v3015 = vunpack.c.l.b16 %v810
    %v3016 = vunpack.c.l.b16 %v811
    %v3017 = vunpack.c.l.b16 %v812
    %v3018 = vunpack.c.l.b16 %v813
    %v3019 = vunpack.c.l.b16 %v814
    %v3020 = vunpack.c.l.b16 %v815
    %v3021 = vunpack.c.l.b16 %v816
    %v3022 = vunpack.c.l.b16 %v817
    %v3023 = vunpack.c.l.b16 %v818
    %v3024 = vunpack.c.l.b16 %v819
    %v3025 = vunpack.c.l.b16 %v820
    %v3026 = vunpack.c.l.b16 %v821
    %v3027 = vunpack.c.l.b16 %v822
    %v3028 = vunpack.c.l.b16 %v823
    %v3029 = vunpack.c.l.b16 %v824
    %v3030 = vunpack.c.l.b16 %v825
    %v3031 = vunpack.c.l.b16 %v826
    %v3032 = vunpack.c.l.b16 %v827
    %v3033 = vunpack.c.l.b16 %v828
    %v3034 = vunpack.c.l.b16 %v829
    %v3035 = vunpack.c.l.b16 %v830
    %v3036 = vunpack.c.l.b16 %v831
    %v3037 = vunpack.c.l.b16 %v832
    %v3038 = vunpack.c.l.b16 %v833
    %v3039 = vunpack.c.l.b16 %v834
    %v3040 = vunpack.c.l.b16 %v835
    %v3041 = vunpack.c.l.b16 %v836
    %v3042 = vunpack.c.l.b16 %v837
    %v3043 = vunpack.c.l.b16 %v838
    %v3044 = vunpack.c.l.b16 %v839
    %v3045 = vunpack.c.l.b16 %v840
    %v3046 = vunpack.c.l.b16 %v841
    %v3047 = vunpack.c.l.b16 %v842
    %v3048 = vunpack.c.l.b16 %v843
    %v3049 = vunpack.c.l.b16 %v844
    %v3050 = vunpack.c.l.b16 %v845
    %v3051 = vunpack.c.l.b16 %v846
    %v3052 = vunpack.c.l.b16 %v847
    %v3053 = vunpack.c.l.b16 %v848
    %v3054 = vunpack.c.l.b16 %v849
    %v3055 = vunpack.c.l.b16 %v850
    %v3056 = vunpack.c.l.b16 %v851
    %v3057 = vunpack.c.l.b16 %v852
    %v3058 = vunpack.c.l.b16 %v853
    %v3059 = vunpack.c.l.b16 %v854
    %v3060 = vunpack.c.l.b16 %v855
    %v3061 = vunpack.c.l.b16 %v856
    %v3062 = vunpack.c.l.b16 %v857
    %v3063 = vunpack.c.l.b16 %v858
    %v3064 = vunpack.c.l.b16 %v859
    %v3065 = vunpack.c.l.b16 %v860
    %v3066 = vunpack.c.l.b16 %v861
    %v3067 = vunpack.c.l.b16 %v862
    %v3068 = vunpack.c.l.b16 %v863
    %v3069 = vunpack.c.l.b16 %v864
    %v3070 = vunpack.c.l.b16 %v865
    %v3071 = vunpack.c.l.b16 %v866
    %v3072 = vunpack.c.l.b16 %v867
    %v3073 = vunpack.c.l.b16 %v868
    %v3074 = vunpack.c.l.b16 %v869
    %v3075 = vunpack.c.l.b16 %v870
    %v3076 = vunpack.c.l.b16 %v871
    %v3077 = vunpack.c.l.b16 %v872
    %v3078 = vunpack.c.l.b16 %v873
    %v3079 = vunpack.c.l.b16 %v874
    %v3080 = vunpack.c.l.b16 %v875
    %v3081 = vunpack.c.l.b16 %v876
    %v3082 = vunpack.c.l.b16 %v877
    %v3083 = vunpack.c.l.b16 %v878
    %v3084 = vunpack.c.l.b16 %v879
    %v3085 = vunpack.c.l.b16 %v880
    %v3086 = vunpack.c.l.b16 %v881
    %v3087 = vunpack.c.l.b16 %v882
    %v3088 = vunpack.c.l.b16 %v883
    %v3089 = vunpack.c.l.b16 %v884
    %v3090 = vunpack.c.l.b16 %v885
    %v3091 = vunpack.c.l.b16 %v886
    %v3092 = vunpack.c.l.b16 %v887
    %v3093 = vunpack.c.l.b16 %v888
    %v3094 = vunpack.c.l.b16 %v889
    %v3095 = vunpack.c.l.b16 %v890
    %v3096 = vunpack.c.l.b16 %v891
    %v3097 = vunpack.c.l.b16 %v892
    %v3098 = vunpack.c.l.b16 %v893
    %v3099 = vunpack.c.l.b16 %v894
    %v3100 = vunpack.c.l.b16 %v895
    %v3101 = vunpack.c.l.b16 %v896
    %v3102 = vunpack.c.l.b16 %v897
    %v3103 = vunpack.c.l.b16 %v898
    %v3104 = vunpack.c.l.b16 %v899
    %v3105 = vunpack.c.l.b16 %v900
    %v3106 = vunpack.c.l.b16 %v901
    %v3107 = vunpack.c.l.b16 %v902
    %v3108 = vunpack.c.l.b16 %v903
    %v3109 = vunpack.c.l.b16 %v904
    %v3110 = vunpack.c.l.b16 %v905
    %v3111 = vunpack.c.l.b16 %v906
    %v3112 = vunpack.c.l.b16 %v907
    %v3113 = vunpack.c.l.b16 %v908
    %v3114 = vunpack.c.l.b16 %v909
    %v3115 = vunpack.c.l.b16 %v910
    %v3116 = vunpack.c.l.b16 %v911
    %v3117 = vunpack.c.l.b16 %v912
    %v3118 = vunpack.c.l.b16 %v913
    %v3119 = vunpack.c.l.b16 %v914
    %v3120 = vunpack.c.l.b16 %v915
    %v3121 = vunpack.c.l.b16 %v916
    %v3122 = vunpack.c.l.b16 %v917
    %v3123 = vunpack.c.l.b16 %v918
    %v3124 = vpack.c.b16 %v2229, %v2228
    %v3125 = vpack.c.b16 %v2231, %v2230
    %v3126 = vpack.c.b16 %v2233, %v2232
    %v3127 = vpack.c.b16 %v2235, %v2234
    %v3128 = vpack.c.b16 %v2237, %v2236
    %v3129 = vpack.c.b16 %v2239, %v2238
    %v3130 = vpack.c.b16 %v2241, %v2240
    %v3131 = vpack.c.b16 %v2243, %v2242
    %v3132 = vpack.c.b16 %v2245, %v2244
    %v3133 = vpack.c.b16 %v2247, %v2246
    %v3134 = vpack.c.b16 %v2249, %v2248
    %v3135 = vpack.c.b16 %v2251, %v2250
    %v3136 = vpack.c.b16 %v2253, %v2252
    %v3137 = vpack.c.b16 %v2255, %v2254
    %v3138 = vpack.c.b16 %v2257, %v2256
    %v3139 = vpack.c.b16 %v2259, %v2258
    %v3140 = vpack.c.b16 %v2261, %v2260
    %v3141 = vpack.c.b16 %v2263, %v2262
    %v3142 = vpack.c.b16 %v2265, %v2264
    %v3143 = vpack.c.b16 %v2267, %v2266
    %v3144 = vpack.c.b16 %v2269, %v2268
    %v3145 = vpack.c.b16 %v2271, %v2270
    %v3146 = vpack.c.b16 %v2273, %v2272
    %v3147 = vpack.c.b16 %v2275, %v2274
    %v3148 = vpack.c.b16 %v2277, %v2276
    %v3149 = vpack.c.b16 %v2279, %v2278
    %v3150 = vpack.c.b16 %v2281, %v2280
    %v3151 = vpack.c.b16 %v2283, %v2282
    %v3152 = vpack.c.b16 %v2285, %v2284
    %v3153 = vpack.c.b16 %v2287, %v2286
    %v3154 = vpack.c.b16 %v2289, %v2288
    %v3155 = vpack.c.b16 %v2291, %v2290
    %v3156 = vpack.c.b16 %v2293, %v2292
    %v3157 = vpack.c.b16 %v2295, %v2294
    %v3158 = vpack.c.b16 %v2297, %v2296
    %v3159 = vpack.c.b16 %v2299, %v2298
    %v3160 = vpack.c.b16 %v2301, %v2300
    %v3161 = vpack.c.b16 %v2303, %v2302
    %v3162 = vpack.c.b16 %v2305, %v2304
    %v3163 = vpack.c.b16 %v2307, %v2306
    %v3164 = vpack.c.b16 %v2309, %v2308
    %v3165 = vpack.c.b16 %v2311, %v2310
    %v3166 = vpack.c.b16 %v2313, %v2312
    %v3167 = vpack.c.b16 %v2315, %v2314
    %v3168 = vpack.c.b16 %v2317, %v2316
    %v3169 = vpack.c.b16 %v2319, %v2318
    %v3170 = vpack.c.b16 %v2321, %v2320
    %v3171 = vpack.c.b16 %v2323, %v2322
    %v3172 = vpack.c.b16 %v2325, %v2324
    %v3173 = vpack.c.b16 %v2327, %v2326
    %v3174 = vpack.c.b16 %v2329, %v2328
    %v3175 = vpack.c.b16 %v2331, %v2330
    %v3176 = vpack.c.b16 %v2333, %v2332
    %v3177 = vpack.c.b16 %v2335, %v2334
    %v3178 = vpack.c.b16 %v2337, %v2336
    %v3179 = vpack.c.b16 %v2339, %v2338
    %v3180 = vpack.c.b16 %v2341, %v2340
    %v3181 = vpack.c.b16 %v2343, %v2342
    %v3182 = vpack.c.b16 %v2345, %v2344
    %v3183 = vpack.c.b16 %v2347, %v2346
    %v3184 = vpack.c.b16 %v2349, %v2348
    %v3185 = vpack.c.b16 %v2351, %v2350
    %v3186 = vpack.c.b16 %v2353, %v2352
    %v3187 = vpack.c.b16 %v2355, %v2354
    %v3188 = vpack.c.b16 %v2357, %v2356
    %v3189 = vpack.c.b16 %v2359, %v2358
    %v3190 = vpack.c.b16 %v2361, %v2360
    %v3191 = vpack.c.b16 %v2363, %v2362
    %v3192 = vpack.c.b16 %v2365, %v2364
    %v3193 = vpack.c.b16 %v2367, %v2366
    %v3194 = vpack.c.b16 %v2369, %v2368
    %v3195 = vpack.c.b16 %v2371, %v2370
    %v3196 = vpack.c.b16 %v2373, %v2372
    %v3197 = vpack.c.b16 %v2375, %v2374
    %v3198 = vpack.c.b16 %v2377, %v2376
    %v3199 = vpack.c.b16 %v2379, %v2378
    %v3200 = vpack.c.b16 %v2381, %v2380
    %v3201 = vpack.c.b16 %v2383, %v2382
    %v3202 = vpack.c.b16 %v2385, %v2384
    %v3203 = vpack.c.b16 %v2387, %v2386
    %v3204 = vpack.c.b16 %v2389, %v2388
    %v3205 = vpack.c.b16 %v2391, %v2390
    %v3206 = vpack.c.b16 %v2393, %v2392
    %v3207 = vpack.c.b16 %v2395, %v2394
    %v3208 = vpack.c.b16 %v2397, %v2396
    %v3209 = vpack.c.b16 %v2399, %v2398
    %v3210 = vpack.c.b16 %v2401, %v2400
    %v3211 = vpack.c.b16 %v2403, %v2402
    %v3212 = vpack.c.b16 %v2405, %v2404
    %v3213 = vpack.c.b16 %v2407, %v2406
    %v3214 = vpack.c.b16 %v2409, %v2408
    %v3215 = vpack.c.b16 %v2411, %v2410
    %v3216 = vpack.c.b16 %v2413, %v2412
    %v3217 = vpack.c.b16 %v2415, %v2414
    %v3218 = vpack.c.b16 %v2417, %v2416
    %v3219 = vpack.c.b16 %v2419, %v2418
    %v3220 = vpack.c.b16 %v2421, %v2420
    %v3221 = vpack.c.b16 %v2423, %v2422
    %v3222 = vpack.c.b16 %v2425, %v2424
    %v3223 = vpack.c.b16 %v2427, %v2426
    %v3224 = vpack.c.b16 %v2429, %v2428
    %v3225 = vpack.c.b16 %v2431, %v2430
    %v3226 = vpack.c.b16 %v2433, %v2432
    %v3227 = vpack.c.b16 %v2435, %v2434
    %v3228 = vpack.c.b16 %v2437, %v2436
    %v3229 = vpack.c.b16 %v2439, %v2438
    %v3230 = vpack.c.b16 %v2441, %v2440
    %v3231 = vpack.c.b16 %v2443, %v2442
    %v3232 = vpack.c.b16 %v2445, %v2444
    %v3233 = vpack.c.b16 %v2447, %v2446
    %v3234 = vpack.c.b16 %v2449, %v2448
    %v3235 = vpack.c.b16 %v2451, %v2450
    %v3236 = vpack.c.b16 %v2453, %v2452
    %v3237 = vpack.c.b16 %v2455, %v2454
    %v3238 = vpack.c.b16 %v2457, %v2456
    %v3239 = vpack.c.b16 %v2459, %v2458
    %v3240 = vpack.c.b16 %v2461, %v2460
    %v3241 = vpack.c.b16 %v2463, %v2462
    %v3242 = vpack.c.b16 %v2465, %v2464
    %v3243 = vpack.c.b16 %v2467, %v2466
    %v3244 = vpack.c.b16 %v2469, %v2468
    %v3245 = vpack.c.b16 %v2471, %v2470
    %v3246 = vpack.c.b16 %v2473, %v2472
    %v3247 = vpack.c.b16 %v2475, %v2474
    %v3248 = vpack.c.b16 %v2477, %v2476
    %v3249 = vpack.c.b16 %v2479, %v2478
    %v3250 = vpack.c.b16 %v2481, %v2480
    %v3251 = vpack.c.b16 %v2483, %v2482
    %v3252 = vpack.c.b16 %v2485, %v2484
    %v3253 = vpack.c.b16 %v2487, %v2486
    %v3254 = vpack.c.b16 %v2489, %v2488
    %v3255 = vpack.c.b16 %v2491, %v2490
    %v3256 = vpack.c.b16 %v2493, %v2492
    %v3257 = vpack.c.b16 %v2495, %v2494
    %v3258 = vpack.c.b16 %v2497, %v2496
    %v3259 = vpack.c.b16 %v2499, %v2498
    %v3260 = vpack.c.b16 %v2501, %v2500
    %v3261 = vpack.c.b16 %v2503, %v2502
    %v3262 = vpack.c.b16 %v2505, %v2504
    %v3263 = vpack.c.b16 %v2507, %v2506
    %v3264 = vpack.c.b16 %v2509, %v2508
    %v3265 = vpack.c.b16 %v2511, %v2510
    %v3266 = vpack.c.b16 %v2513, %v2512
    %v3267 = vpack.c.b16 %v2515, %v2514
    %v3268 = vpack.c.b16 %v2517, %v2516
    %v3269 = vpack.c.b16 %v2519, %v2518
    %v3270 = vpack.c.b16 %v2521, %v2520
    %v3271 = vpack.c.b16 %v2523, %v2522
    %v3272 = vpack.c.b16 %v2525, %v2524
    %v3273 = vpack.c.b16 %v2527, %v2526
    %v3274 = vpack.c.b16 %v2529, %v2528
    %v3275 = vpack.c.b16 %v2531, %v2530
    %v3276 = vpack.c.b16 %v2533, %v2532
    %v3277 = vpack.c.b16 %v2535, %v2534
    %v3278 = vpack.c.b16 %v2537, %v2536
    %v3279 = vpack.c.b16 %v2539, %v2538
    %v3280 = vpack.c.b16 %v2541, %v2540
    %v3281 = vpack.c.b16 %v2543, %v2542
    %v3282 = vpack.c.b16 %v2545, %v2544
    %v3283 = vpack.c.b16 %v2547, %v2546
    %v3284 = vpack.c.b16 %v2549, %v2548
    %v3285 = vpack.c.b16 %v2551, %v2550
    %v3286 = vpack.c.b16 %v2553, %v2552
    %v3287 = vpack.c.b16 %v2555, %v2554
    %v3288 = vpack.c.b16 %v2557, %v2556
    %v3289 = vpack.c.b16 %v2559, %v2558
    %v3290 = vpack.c.b16 %v2561, %v2560
    %v3291 = vpack.c.b16 %v2563, %v2562
    %v3292 = vpack.c.b16 %v2565, %v2564
    %v3293 = vpack.c.b16 %v2567, %v2566
    %v3294 = vpack.c.b16 %v2569, %v2568
    %v3295 = vpack.c.b16 %v2571, %v2570
    %v3296 = vpack.c.b16 %v2573, %v2572
    %v3297 = vpack.c.b16 %v2575, %v2574
    %v3298 = vpack.c.b16 %v2577, %v2576
    %v3299 = vpack.c.b16 %v2579, %v2578
    %v3300 = vpack.c.b16 %v2581, %v2580
    %v3301 = vpack.c.b16 %v2583, %v2582
    %v3302 = vpack.c.b16 %v2585, %v2584
    %v3303 = vpack.c.b16 %v2587, %v2586
    %v3304 = vpack.c.b16 %v2589, %v2588
    %v3305 = vpack.c.b16 %v2591, %v2590
    %v3306 = vpack.c.b16 %v2593, %v2592
    %v3307 = vpack.c.b16 %v2595, %v2594
    %v3308 = vpack.c.b16 %v2597, %v2596
    %v3309 = vpack.c.b16 %v2599, %v2598
    %v3310 = vpack.c.b16 %v2601, %v2600
    %v3311 = vpack.c.b16 %v2603, %v2602
    %v3312 = vpack.c.b16 %v2605, %v2604
    %v3313 = vpack.c.b16 %v2607, %v2606
    %v3314 = vpack.c.b16 %v2609, %v2608
    %v3315 = vpack.c.b16 %v2611, %v2610
    %v3316 = vpack.c.b16 %v2613, %v2612
    %v3317 = vpack.c.b16 %v2615, %v2614
    %v3318 = vpack.c.b16 %v2617, %v2616
    %v3319 = vpack.c.b16 %v2619, %v2618
    %v3320 = vpack.c.b16 %v2621, %v2620
    %v3321 = vpack.c.b16 %v2623, %v2622
    %v3322 = vpack.c.b16 %v2625, %v2624
    %v3323 = vpack.c.b16 %v2627, %v2626
    %v3324 = vpack.c.b16 %v2629, %v2628
    %v3325 = vpack.c.b16 %v2631, %v2630
    %v3326 = vpack.c.b16 %v2633, %v2632
    %v3327 = vpack.c.b16 %v2635, %v2634
    %v3328 = vpack.c.b16 %v2637, %v2636
    %v3329 = vpack.c.b16 %v2639, %v2638
    %v3330 = vpack.c.b16 %v2641, %v2640
    %v3331 = vpack.c.b16 %v2643, %v2642
    %v3332 = vpack.c.b16 %v2645, %v2644
    %v3333 = vpack.c.b16 %v2647, %v2646
    %v3334 = vpack.c.b16 %v2649, %v2648
    %v3335 = vpack.c.b16 %v2651, %v2650
    %v3336 = vpack.c.b16 %v2653, %v2652
    %v3337 = vpack.c.b16 %v2655, %v2654
    %v3338 = vpack.c.b16 %v2657, %v2656
    %v3339 = vpack.c.b16 %v2659, %v2658
    %v3340 = vpack.c.b16 %v2661, %v2660
    %v3341 = vpack.c.b16 %v2663, %v2662
    %v3342 = vpack.c.b16 %v2665, %v2664
    %v3343 = vpack.c.b16 %v2667, %v2666
    %v3344 = vpack.c.b16 %v2669, %v2668
    %v3345 = vpack.c.b16 %v2671, %v2670
    %v3346 = vpack.c.b16 %v2673, %v2672
    %v3347 = vpack.c.b16 %v2675, %v2674
    %v3348 = vpack.c.b16 %v2677, %v2676
    %v3349 = vpack.c.b16 %v2679, %v2678
    %v3350 = vpack.c.b16 %v2681, %v2680
    %v3351 = vpack.c.b16 %v2683, %v2682
    %v3352 = vpack.c.b16 %v2685, %v2684
    %v3353 = vpack.c.b16 %v2687, %v2686
    %v3354 = vpack.c.b16 %v2689, %v2688
    %v3355 = vpack.c.b16 %v2691, %v2690
    %v3356 = vpack.c.b16 %v2693, %v2692
    %v3357 = vpack.c.b16 %v2695, %v2694
    %v3358 = vpack.c.b16 %v2697, %v2696
    %v3359 = vpack.c.b16 %v2699, %v2698
    %v3360 = vpack.c.b16 %v2701, %v2700
    %v3361 = vpack.c.b16 %v2703, %v2702
    %v3362 = vpack.c.b16 %v2705, %v2704
    %v3363 = vpack.c.b16 %v2707, %v2706
    %v3364 = vpack.c.b16 %v2709, %v2708
    %v3365 = vpack.c.b16 %v2711, %v2710
    %v3366 = vpack.c.b16 %v2713, %v2712
    %v3367 = vpack.c.b16 %v2715, %v2714
    %v3368 = vpack.c.b16 %v2717, %v2716
    %v3369 = vpack.c.b16 %v2719, %v2718
    %v3370 = vpack.c.b16 %v2721, %v2720
    %v3371 = vpack.c.b16 %v2723, %v2722
    %v3372 = vpack.c.b16 %v2725, %v2724
    %v3373 = vpack.c.b16 %v2727, %v2726
    %v3374 = vpack.c.b16 %v2729, %v2728
    %v3375 = vpack.c.b16 %v2731, %v2730
    %v3376 = vpack.c.b16 %v2733, %v2732
    %v3377 = vpack.c.b16 %v2735, %v2734
    %v3378 = vpack.c.b16 %v2737, %v2736
    %v3379 = vpack.c.b16 %v2739, %v2738
    %v3380 = vpack.c.b16 %v2741, %v2740
    %v3381 = vpack.c.b16 %v2743, %v2742
    %v3382 = vpack.c.b16 %v2745, %v2744
    %v3383 = vpack.c.b16 %v2747, %v2746
    %v3384 = vpack.c.b16 %v2749, %v2748
    %v3385 = vpack.c.b16 %v2751, %v2750
    %v3386 = vpack.c.b16 %v2753, %v2752
    %v3387 = vpack.c.b16 %v2755, %v2754
    %v3388 = vpack.c.b16 %v2757, %v2756
    %v3389 = vpack.c.b16 %v2759, %v2758
    %v3390 = vpack.c.b16 %v2761, %v2760
    %v3391 = vpack.c.b16 %v2763, %v2762
    %v3392 = vpack.c.b16 %v2765, %v2764
    %v3393 = vpack.c.b16 %v2767, %v2766
    %v3394 = vpack.c.b16 %v2769, %v2768
    %v3395 = vpack.c.b16 %v2771, %v2770
    %v3396 = vpack.c.b16 %v2773, %v2772
    %v3397 = vpack.c.b16 %v2775, %v2774
    %v3398 = vpack.c.b16 %v2777, %v2776
    %v3399 = vpack.c.b16 %v2779, %v2778
    %v3400 = vpack.c.b16 %v2781, %v2780
    %v3401 = vpack.c.b16 %v2783, %v2782
    %v3402 = vpack.c.b16 %v2785, %v2784
    %v3403 = vpack.c.b16 %v2787, %v2786
    %v3404 = vpack.c.b16 %v2789, %v2788
    %v3405 = vpack.c.b16 %v2791, %v2790
    %v3406 = vpack.c.b16 %v2793, %v2792
    %v3407 = vpack.c.b16 %v2795, %v2794
    %v3408 = vpack.c.b16 %v2797, %v2796
    %v3409 = vpack.c.b16 %v2799, %v2798
    %v3410 = vpack.c.b16 %v2801, %v2800
    %v3411 = vpack.c.b16 %v2803, %v2802
    %v3412 = vpack.c.b16 %v2805, %v2804
    %v3413 = vpack.c.b16 %v2807, %v2806
    %v3414 = vpack.c.b16 %v2809, %v2808
    %v3415 = vpack.c.b16 %v2811, %v2810
    %v3416 = vpack.c.b16 %v2813, %v2812
    %v3417 = vpack.c.b16 %v2815, %v2814
    %v3418 = vpack.c.b16 %v2817, %v2816
    %v3419 = vpack.c.b16 %v2819, %v2818
    %v3420 = vpack.c.b16 %v2821, %v2820
    %v3421 = vpack.c.b16 %v2823, %v2822
    %v3422 = vpack.c.b16 %v2825, %v2824
    %v3423 = vpack.c.b16 %v2827, %v2826
    %v3424 = vpack.c.b16 %v2829, %v2828
    %v3425 = vpack.c.b16 %v2831, %v2830
    %v3426 = vpack.c.b16 %v2833, %v2832
    %v3427 = vpack.c.b16 %v2835, %v2834
    %v3428 = vpack.c.b16 %v2837, %v2836
    %v3429 = vpack.c.b16 %v2839, %v2838
    %v3430 = vpack.c.b16 %v2841, %v2840
    %v3431 = vpack.c.b16 %v2843, %v2842
    %v3432 = vpack.c.b16 %v2845, %v2844
    %v3433 = vpack.c.b16 %v2847, %v2846
    %v3434 = vpack.c.b16 %v2849, %v2848
    %v3435 = vpack.c.b16 %v2851, %v2850
    %v3436 = vpack.c.b16 %v2853, %v2852
    %v3437 = vpack.c.b16 %v2855, %v2854
    %v3438 = vpack.c.b16 %v2857, %v2856
    %v3439 = vpack.c.b16 %v2859, %v2858
    %v3440 = vpack.c.b16 %v2861, %v2860
    %v3441 = vpack.c.b16 %v2863, %v2862
    %v3442 = vpack.c.b16 %v2865, %v2864
    %v3443 = vpack.c.b16 %v2867, %v2866
    %v3444 = vpack.c.b16 %v2869, %v2868
    %v3445 = vpack.c.b16 %v2871, %v2870
    %v3446 = vpack.c.b16 %v2873, %v2872
    %v3447 = vpack.c.b16 %v2875, %v2874
    %v3448 = vpack.c.b16 %v2877, %v2876
    %v3449 = vpack.c.b16 %v2879, %v2878
    %v3450 = vpack.c.b16 %v2881, %v2880
    %v3451 = vpack.c.b16 %v2883, %v2882
    %v3452 = vpack.c.b16 %v2885, %v2884
    %v3453 = vpack.c.b16 %v2887, %v2886
    %v3454 = vpack.c.b16 %v2889, %v2888
    %v3455 = vpack.c.b16 %v2891, %v2890
    %v3456 = vpack.c.b16 %v2893, %v2892
    %v3457 = vpack.c.b16 %v2895, %v2894
    %v3458 = vpack.c.b16 %v2897, %v2896
    %v3459 = vpack.c.b16 %v2899, %v2898
    %v3460 = vpack.c.b16 %v2901, %v2900
    %v3461 = vpack.c.b16 %v2903, %v2902
    %v3462 = vpack.c.b16 %v2905, %v2904
    %v3463 = vpack.c.b16 %v2907, %v2906
    %v3464 = vpack.c.b16 %v2909, %v2908
    %v3465 = vpack.c.b16 %v2911, %v2910
    %v3466 = vpack.c.b16 %v2913, %v2912
    %v3467 = vpack.c.b16 %v2915, %v2914
    %v3468 = vpack.c.b16 %v2917, %v2916
    %v3469 = vpack.c.b16 %v2919, %v2918
    %v3470 = vpack.c.b16 %v2921, %v2920
    %v3471 = vpack.c.b16 %v2923, %v2922
    %v3472 = vpack.c.b16 %v2925, %v2924
    %v3473 = vpack.c.b16 %v2927, %v2926
    %v3474 = vpack.c.b16 %v2929, %v2928
    %v3475 = vpack.c.b16 %v2931, %v2930
    %v3476 = vpack.c.b16 %v2933, %v2932
    %v3477 = vpack.c.b16 %v2935, %v2934
    %v3478 = vpack.c.b16 %v2937, %v2936
    %v3479 = vpack.c.b16 %v2939, %v2938
    %v3480 = vpack.c.b16 %v2941, %v2940
    %v3481 = vpack.c.b16 %v2943, %v2942
    %v3482 = vpack.c.b16 %v2945, %v2944
    %v3483 = vpack.c.b16 %v2947, %v2946
    %v3484 = vpack.c.b16 %v2949, %v2948
    %v3485 = vpack.c.b16 %v2951, %v2950
    %v3486 = vpack.c.b16 %v2953, %v2952
    %v3487 = vpack.c.b16 %v2955, %v2954
    %v3488 = vpack.c.b16 %v2957, %v2956
    %v3489 = vpack.c.b16 %v2959, %v2958
    %v3490 = vpack.c.b16 %v2961, %v2960
    %v3491 = vpack.c.b16 %v2963, %v2962
    %v3492 = vpack.c.b16 %v2965, %v2964
    %v3493 = vpack.c.b16 %v2967, %v2966
    %v3494 = vpack.c.b16 %v2969, %v2968
    %v3495 = vpack.c.b16 %v2971, %v2970
    %v3496 = vpack.c.b16 %v2973, %v2972
    %v3497 = vpack.c.b16 %v2975, %v2974
    %v3498 = vpack.c.b16 %v2977, %v2976
    %v3499 = vpack.c.b16 %v2979, %v2978
    %v3500 = vpack.c.b16 %v2981, %v2980
    %v3501 = vpack.c.b16 %v2983, %v2982
    %v3502 = vpack.c.b16 %v2985, %v2984
    %v3503 = vpack.c.b16 %v2987, %v2986
    %v3504 = vpack.c.b16 %v2989, %v2988
    %v3505 = vpack.c.b16 %v2991, %v2990
    %v3506 = vpack.c.b16 %v2993, %v2992
    %v3507 = vpack.c.b16 %v2995, %v2994
    %v3508 = vpack.c.b16 %v2997, %v2996
    %v3509 = vpack.c.b16 %v2999, %v2998
    %v3510 = vpack.c.b16 %v3001, %v3000
    %v3511 = vpack.c.b16 %v3003, %v3002
    %v3512 = vpack.c.b16 %v3005, %v3004
    %v3513 = vpack.c.b16 %v3007, %v3006
    %v3514 = vpack.c.b16 %v3009, %v3008
    %v3515 = vpack.c.b16 %v3011, %v3010
    %v3516 = vpack.c.b16 %v3013, %v3012
    %v3517 = vpack.c.b16 %v3015, %v3014
    %v3518 = vpack.c.b16 %v3017, %v3016
    %v3519 = vpack.c.b16 %v3019, %v3018
    %v3520 = vpack.c.b16 %v3021, %v3020
    %v3521 = vpack.c.b16 %v3023, %v3022
    %v3522 = vpack.c.b16 %v3025, %v3024
    %v3523 = vpack.c.b16 %v3027, %v3026
    %v3524 = vpack.c.b16 %v3029, %v3028
    %v3525 = vpack.c.b16 %v3031, %v3030
    %v3526 = vpack.c.b16 %v3033, %v3032
    %v3527 = vpack.c.b16 %v3035, %v3034
    %v3528 = vpack.c.b16 %v3037, %v3036
    %v3529 = vpack.c.b16 %v3039, %v3038
    %v3530 = vpack.c.b16 %v3041, %v3040
    %v3531 = vpack.c.b16 %v3043, %v3042
    %v3532 = vpack.c.b16 %v3045, %v3044
    %v3533 = vpack.c.b16 %v3047, %v3046
    %v3534 = vpack.c.b16 %v3049, %v3048
    %v3535 = vpack.c.b16 %v3051, %v3050
    %v3536 = vpack.c.b16 %v3053, %v3052
    %v3537 = vpack.c.b16 %v3055, %v3054
    %v3538 = vpack.c.b16 %v3057, %v3056
    %v3539 = vpack.c.b16 %v3059, %v3058
    %v3540 = vpack.c.b16 %v3061, %v3060
    %v3541 = vpack.c.b16 %v3063, %v3062
    %v3542 = vpack.c.b16 %v3065, %v3064
    %v3543 = vpack.c.b16 %v3067, %v3066
    %v3544 = vpack.c.b16 %v3069, %v3068
    %v3545 = vpack.c.b16 %v3071, %v3070
    %v3546 = vpack.c.b16 %v3073, %v3072
    %v3547 = vpack.c.b16 %v3075, %v3074
    %v3548 = vpack.c.b16 %v3077, %v3076
    %v3549 = vpack.c.b16 %v3079, %v3078
    %v3550 = vpack.c.b16 %v3081, %v3080
    %v3551 = vpack.c.b16 %v3083, %v3082
    %v3552 = vpack.c.b16 %v3085, %v3084
    %v3553 = vpack.c.b16 %v3087, %v3086
    %v3554 = vpack.c.b16 %v3089, %v3088
    %v3555 = vpack.c.b16 %v3091, %v3090
    %v3556 = vpack.c.b16 %v3093, %v3092
    %v3557 = vpack.c.b16 %v3095, %v3094
    %v3558 = vpack.c.b16 %v3097, %v3096
    %v3559 = vpack.c.b16 %v3099, %v3098
    %v3560 = vpack.c.b16 %v3101, %v3100
    %v3561 = vpack.c.b16 %v3103, %v3102
    %v3562 = vpack.c.b16 %v3105, %v3104
    %v3563 = vpack.c.b16 %v3107, %v3106
    %v3564 = vpack.c.b16 %v3109, %v3108
    %v3565 = vpack.c.b16 %v3111, %v3110
    %v3566 = vpack.c.b16 %v3113, %v3112
    %v3567 = vpack.c.b16 %v3115, %v3114
    %v3568 = vpack.c.b16 %v3117, %v3116
    %v3569 = vpack.c.b16 %v3119, %v3118
    %v3570 = vpack.c.b16 %v3121, %v3120
    %v3571 = vpack.c.b16 %v3123, %v3122
    %4020 = vmatprep.subr.bf16.mxu0 0
    %4021 = vmatpush1.bf16.msra.mxu0 %v3124
    %4022 = vmatprep.subr.bf16.mxu0 0
    %4023 = vmatpush1.bf16.msra.mxu0 %v3125
    %4024 = vmatprep.subr.bf16.mxu0 0
    %4025 = vmatpush1.bf16.msra.mxu0 %v3126
    %4026 = vmatprep.subr.bf16.mxu0 0
    %4027 = vmatpush1.bf16.msra.mxu0 %v3127
    %4028 = vmatprep.subr.bf16.mxu0 0
    %4029 = vmatpush1.bf16.msra.mxu0 %v3128
    %4030 = vmatprep.subr.bf16.mxu0 0
    %4031 = vmatpush1.bf16.msra.mxu0 %v3129
    %4032 = vmatprep.subr.bf16.mxu0 0
    %4033 = vmatpush1.bf16.msra.mxu0 %v3130
    %4034 = vmatprep.subr.bf16.mxu0 0
    %4035 = vmatpush1.bf16.msra.mxu0 %v3131
    %4036 = vmatprep.subr.bf16.mxu0 0
    %4037 = vmatpush1.bf16.msra.mxu0 %v3132
    %4038 = vmatprep.subr.bf16.mxu0 0
    %4039 = vmatpush1.bf16.msra.mxu0 %v3133
    %4040 = vmatprep.subr.bf16.mxu0 0
    %4041 = vmatpush1.bf16.msra.mxu0 %v3134
    %4042 = vmatprep.subr.bf16.mxu0 0
    %4043 = vmatpush1.bf16.msra.mxu0 %v3135
    %4044 = vmatprep.subr.bf16.mxu0 0
    %4045 = vmatpush1.bf16.msra.mxu0 %v3136
    %4046 = vmatprep.subr.bf16.mxu0 0
    %4047 = vmatpush1.bf16.msra.mxu0 %v3137
    %4048 = vmatprep.subr.bf16.mxu0 0
    %4049 = vmatpush1.bf16.msra.mxu0 %v3138
    %4050 = vmatprep.subr.bf16.mxu0 0
    %4051 = vmatpush1.bf16.msra.mxu0 %v3139
    %4052 = vmatprep.mubr.bf16.mxu0 %v970
    %4053 = vmatmul.mubr.bf16.gmra.mrb[0].mxu0 %v956
    %v4054 = vpop.f32.mrb[0].mxu0
    %v4055 = vadd.f32 %v924, %v4054
    %v4056 = vpop.f32.mrb[0].mxu0
    %v4057 = vpop.f32.mrb[0].mxu0
    %v4058 = vpop.f32.mrb[0].mxu0
    %4059 = vdwg.mxu0
    %4060 = vmatprep.subr.bf16.mxu0 0
    %4061 = vmatpush1.bf16.msra.mxu0 %v3140
    %4062 = vmatprep.subr.bf16.mxu0 0
    %4063 = vmatpush1.bf16.msra.mxu0 %v3141
    %4064 = vmatprep.subr.bf16.mxu0 0
    %4065 = vmatpush1.bf16.msra.mxu0 %v3142
    %4066 = vmatprep.subr.bf16.mxu0 0
    %4067 = vmatpush1.bf16.msra.mxu0 %v3143
    %4068 = vmatprep.subr.bf16.mxu0 0
    %4069 = vmatpush1.bf16.msra.mxu0 %v3144
    %4070 = vmatprep.subr.bf16.mxu0 0
    %4071 = vmatpush1.bf16.msra.mxu0 %v3145
    %4072 = vmatprep.subr.bf16.mxu0 0
    %4073 = vmatpush1.bf16.msra.mxu0 %v3146
    %4074 = vmatprep.subr.bf16.mxu0 0
    %4075 = vmatpush1.bf16.msra.mxu0 %v3147
    %4076 = vmatprep.subr.bf16.mxu0 0
    %4077 = vmatpush1.bf16.msra.mxu0 %v3148
    %4078 = vmatprep.subr.bf16.mxu0 0
    %4079 = vmatpush1.bf16.msra.mxu0 %v3149
    %4080 = vmatprep.subr.bf16.mxu0 0
    %4081 = vmatpush1.bf16.msra.mxu0 %v3150
    %4082 = vmatprep.subr.bf16.mxu0 0
    %4083 = vmatpush1.bf16.msra.mxu0 %v3151
    %4084 = vmatprep.subr.bf16.mxu0 0
    %4085 = vmatpush1.bf16.msra.mxu0 %v3152
    %4086 = vmatprep.subr.bf16.mxu0 0
    %4087 = vmatpush1.bf16.msra.mxu0 %v3153
    %4088 = vmatprep.subr.bf16.mxu0 0
    %4089 = vmatpush1.bf16.msra.mxu0 %v3154
    %4090 = vmatprep.subr.bf16.mxu0 0
    %4091 = vmatpush1.bf16.msra.mxu0 %v3155
    %4092 = vmatprep.mubr.bf16.mxu0 %v980
    %4093 = vmatmul.mubr.bf16.gmra.mrb[0].mxu0 %v978
    %v4094 = vpop.f32.mrb[0].mxu0
    %v4095 = vadd.f32 %v4055, %v4094
    %v4096 = vpop.f32.mrb[0].mxu0
    %v4097 = vpop.f32.mrb[0].mxu0
    %v4098 = vpop.f32.mrb[0].mxu0
    %4099 = vdwg.mxu0
    %4100 = vmatprep.subr.bf16.mxu0 0
    %4101 = vmatpush1.bf16.msra.mxu0 %v3156
    %4102 = vmatprep.subr.bf16.mxu0 0
    %4103 = vmatpush1.bf16.msra.mxu0 %v3157
    %4104 = vmatprep.subr.bf16.mxu0 0
    %4105 = vmatpush1.bf16.msra.mxu0 %v3158
    %4106 = vmatprep.subr.bf16.mxu0 0
    %4107 = vmatpush1.bf16.msra.mxu0 %v3159
    %4108 = vmatprep.subr.bf16.mxu0 0
    %4109 = vmatpush1.bf16.msra.mxu0 %v3160
    %4110 = vmatprep.subr.bf16.mxu0 0
    %4111 = vmatpush1.bf16.msra.mxu0 %v3161
    %4112 = vmatprep.subr.bf16.mxu0 0
    %4113 = vmatpush1.bf16.msra.mxu0 %v3162
    %4114 = vmatprep.subr.bf16.mxu0 0
    %4115 = vmatpush1.bf16.msra.mxu0 %v3163
    %4116 = vmatprep.subr.bf16.mxu0 0
    %4117 = vmatpush1.bf16.msra.mxu0 %v3164
    %4118 = vmatprep.subr.bf16.mxu0 0
    %4119 = vmatpush1.bf16.msra.mxu0 %v3165
    %4120 = vmatprep.subr.bf16.mxu0 0
    %4121 = vmatpush1.bf16.msra.mxu0 %v3166
    %4122 = vmatprep.subr.bf16.mxu0 0
    %4123 = vmatpush1.bf16.msra.mxu0 %v3167
    %4124 = vmatprep.subr.bf16.mxu0 0
    %4125 = vmatpush1.bf16.msra.mxu0 %v3168
    %4126 = vmatprep.subr.bf16.mxu0 0
    %4127 = vmatpush1.bf16.msra.mxu0 %v3169
    %4128 = vmatprep.subr.bf16.mxu0 0
    %4129 = vmatpush1.bf16.msra.mxu0 %v3170
    %4130 = vmatprep.subr.bf16.mxu0 0
    %4131 = vmatpush1.bf16.msra.mxu0 %v3171
    %4132 = vmatprep.mubr.bf16.mxu0 %v977
    %4133 = vmatmul.mubr.bf16.gmra.mrb[0].mxu0 %v963
    %v4134 = vpop.f32.mrb[0].mxu0
    %v4135 = vadd.f32 %v4095, %v4134
    %v4136 = vpop.f32.mrb[0].mxu0
    %v4137 = vpop.f32.mrb[0].mxu0
    %v4138 = vpop.f32.mrb[0].mxu0
    %4139 = vdwg.mxu0
    %4140 = vmatprep.subr.bf16.mxu0 0
    %4141 = vmatpush1.bf16.msra.mxu0 %v3172
    %4142 = vmatprep.subr.bf16.mxu0 0
    %4143 = vmatpush1.bf16.msra.mxu0 %v3173
    %4144 = vmatprep.subr.bf16.mxu0 0
    %4145 = vmatpush1.bf16.msra.mxu0 %v3174
    %4146 = vmatprep.subr.bf16.mxu0 0
    %4147 = vmatpush1.bf16.msra.mxu0 %v3175
    %4148 = vmatprep.subr.bf16.mxu0 0
    %4149 = vmatpush1.bf16.msra.mxu0 %v3176
    %4150 = vmatprep.subr.bf16.mxu0 0
    %4151 = vmatpush1.bf16.msra.mxu0 %v3177
    %4152 = vmatprep.subr.bf16.mxu0 0
    %4153 = vmatpush1.bf16.msra.mxu0 %v3178
    %4154 = vmatprep.subr.bf16.mxu0 0
    %4155 = vmatpush1.bf16.msra.mxu0 %v3179
    %4156 = vmatprep.subr.bf16.mxu0 0
    %4157 = vmatpush1.bf16.msra.mxu0 %v3180
    %4158 = vmatprep.subr.bf16.mxu0 0
    %4159 = vmatpush1.bf16.msra.mxu0 %v3181
    %4160 = vmatprep.subr.bf16.mxu0 0
    %4161 = vmatpush1.bf16.msra.mxu0 %v3182
    %4162 = vmatprep.subr.bf16.mxu0 0
    %4163 = vmatpush1.bf16.msra.mxu0 %v3183
    %4164 = vmatprep.subr.bf16.mxu0 0
    %4165 = vmatpush1.bf16.msra.mxu0 %v3184
    %4166 = vmatprep.subr.bf16.mxu0 0
    %4167 = vmatpush1.bf16.msra.mxu0 %v3185
    %4168 = vmatprep.subr.bf16.mxu0 0
    %4169 = vmatpush1.bf16.msra.mxu0 %v3186
    %4170 = vmatprep.subr.bf16.mxu0 0
    %4171 = vmatpush1.bf16.msra.mxu0 %v3187
    %4172 = vmatprep.mubr.bf16.mxu0 %v981
    %4173 = vmatmul.mubr.bf16.gmra.mrb[0].mxu0 %v979
    %v4174 = vpop.f32.mrb[0].mxu0
    %v4175 = vadd.f32 %v4135, %v4174
    %v4176 = vpop.f32.mrb[0].mxu0
    %v4177 = vpop.f32.mrb[0].mxu0
    %v4178 = vpop.f32.mrb[0].mxu0
    %4179 = vdwg.mxu0
    %4180 = vmatprep.subr.bf16.mxu0 0
    %4181 = vmatpush1.bf16.msra.mxu0 %v3188
    %4182 = vmatprep.subr.bf16.mxu0 0
    %4183 = vmatpush1.bf16.msra.mxu0 %v3189
    %4184 = vmatprep.subr.bf16.mxu0 0
    %4185 = vmatpush1.bf16.msra.mxu0 %v3190
    %4186 = vmatprep.subr.bf16.mxu0 0
    %4187 = vmatpush1.bf16.msra.mxu0 %v3191
    %4188 = vmatprep.subr.bf16.mxu0 0
    %4189 = vmatpush1.bf16.msra.mxu0 %v3192
    %4190 = vmatprep.subr.bf16.mxu0 0
    %4191 = vmatpush1.bf16.msra.mxu0 %v3193
    %4192 = vmatprep.subr.bf16.mxu0 0
    %4193 = vmatpush1.bf16.msra.mxu0 %v3194
    %4194 = vmatprep.subr.bf16.mxu0 0
    %4195 = vmatpush1.bf16.msra.mxu0 %v3195
    %4196 = vmatprep.subr.bf16.mxu0 0
    %4197 = vmatpush1.bf16.msra.mxu0 %v3196
    %4198 = vmatprep.subr.bf16.mxu0 0
    %4199 = vmatpush1.bf16.msra.mxu0 %v3197
    %4200 = vmatprep.subr.bf16.mxu0 0
    %4201 = vmatpush1.bf16.msra.mxu0 %v3198
    %4202 = vmatprep.subr.bf16.mxu0 0
    %4203 = vmatpush1.bf16.msra.mxu0 %v3199
    %4204 = vmatprep.subr.bf16.mxu0 0
    %4205 = vmatpush1.bf16.msra.mxu0 %v3200
    %4206 = vmatprep.subr.bf16.mxu0 0
    %4207 = vmatpush1.bf16.msra.mxu0 %v3201
    %4208 = vmatprep.subr.bf16.mxu0 0
    %4209 = vmatpush1.bf16.msra.mxu0 %v3202
    %4210 = vmatprep.subr.bf16.mxu0 0
    %4211 = vmatpush1.bf16.msra.mxu0 %v3203
    %4212 = vmatprep.mubr.bf16.mxu0 %v1019
    %4213 = vmatmul.mubr.bf16.gmra.mrb[0].mxu0 %v1005
    %v4214 = vpop.f32.mrb[0].mxu0
    %v4215 = vadd.f32 %v4175, %v4214
    %v4216 = vpop.f32.mrb[0].mxu0
    %v4217 = vpop.f32.mrb[0].mxu0
    %v4218 = vpop.f32.mrb[0].mxu0
    %4219 = vdwg.mxu0
    %4220 = vmatprep.subr.bf16.mxu0 0
    %4221 = vmatpush1.bf16.msra.mxu0 %v3204
    %4222 = vmatprep.subr.bf16.mxu0 0
    %4223 = vmatpush1.bf16.msra.mxu0 %v3205
    %4224 = vmatprep.subr.bf16.mxu0 0
    %4225 = vmatpush1.bf16.msra.mxu0 %v3206
    %4226 = vmatprep.subr.bf16.mxu0 0
    %4227 = vmatpush1.bf16.msra.mxu0 %v3207
    %4228 = vmatprep.subr.bf16.mxu0 0
    %4229 = vmatpush1.bf16.msra.mxu0 %v3208
    %4230 = vmatprep.subr.bf16.mxu0 0
    %4231 = vmatpush1.bf16.msra.mxu0 %v3209
    %4232 = vmatprep.subr.bf16.mxu0 0
    %4233 = vmatpush1.bf16.msra.mxu0 %v3210
    %4234 = vmatprep.subr.bf16.mxu0 0
    %4235 = vmatpush1.bf16.msra.mxu0 %v3211
    %4236 = vmatprep.subr.bf16.mxu0 0
    %4237 = vmatpush1.bf16.msra.mxu0 %v3212
    %4238 = vmatprep.subr.bf16.mxu0 0
    %4239 = vmatpush1.bf16.msra.mxu0 %v3213
    %4240 = vmatprep.subr.bf16.mxu0 0
    %4241 = vmatpush1.bf16.msra.mxu0 %v3214
    %4242 = vmatprep.subr.bf16.mxu0 0
    %4243 = vmatpush1.bf16.msra.mxu0 %v3215
    %4244 = vmatprep.subr.bf16.mxu0 0
    %4245 = vmatpush1.bf16.msra.mxu0 %v3216
    %4246 = vmatprep.subr.bf16.mxu0 0
    %4247 = vmatpush1.bf16.msra.mxu0 %v3217
    %4248 = vmatprep.subr.bf16.mxu0 0
    %4249 = vmatpush1.bf16.msra.mxu0 %v3218
    %4250 = vmatprep.subr.bf16.mxu0 0
    %4251 = vmatpush1.bf16.msra.mxu0 %v3219
    %4252 = vmatprep.mubr.bf16.mxu0 %v1029
    %4253 = vmatmul.mubr.bf16.gmra.mrb[0].mxu0 %v1027
    %v4254 = vpop.f32.mrb[0].mxu0
    %v4255 = vadd.f32 %v4215, %v4254
    %v4256 = vpop.f32.mrb[0].mxu0
    %v4257 = vpop.f32.mrb[0].mxu0
    %v4258 = vpop.f32.mrb[0].mxu0
    %4259 = vdwg.mxu0
    %4260 = vmatprep.subr.bf16.mxu0 0
    %4261 = vmatpush1.bf16.msra.mxu0 %v3220
    %4262 = vmatprep.subr.bf16.mxu0 0
    %4263 = vmatpush1.bf16.msra.mxu0 %v3221
    %4264 = vmatprep.subr.bf16.mxu0 0
    %4265 = vmatpush1.bf16.msra.mxu0 %v3222
    %4266 = vmatprep.subr.bf16.mxu0 0
    %4267 = vmatpush1.bf16.msra.mxu0 %v3223
    %4268 = vmatprep.subr.bf16.mxu0 0
    %4269 = vmatpush1.bf16.msra.mxu0 %v3224
    %4270 = vmatprep.subr.bf16.mxu0 0
    %4271 = vmatpush1.bf16.msra.mxu0 %v3225
    %4272 = vmatprep.subr.bf16.mxu0 0
    %4273 = vmatpush1.bf16.msra.mxu0 %v3226
    %4274 = vmatprep.subr.bf16.mxu0 0
    %4275 = vmatpush1.bf16.msra.mxu0 %v3227
    %4276 = vmatprep.subr.bf16.mxu0 0
    %4277 = vmatpush1.bf16.msra.mxu0 %v3228
    %4278 = vmatprep.subr.bf16.mxu0 0
    %4279 = vmatpush1.bf16.msra.mxu0 %v3229
    %4280 = vmatprep.subr.bf16.mxu0 0
    %4281 = vmatpush1.bf16.msra.mxu0 %v3230
    %4282 = vmatprep.subr.bf16.mxu0 0
    %4283 = vmatpush1.bf16.msra.mxu0 %v3231
    %4284 = vmatprep.subr.bf16.mxu0 0
    %4285 = vmatpush1.bf16.msra.mxu0 %v3232
    %4286 = vmatprep.subr.bf16.mxu0 0
    %4287 = vmatpush1.bf16.msra.mxu0 %v3233
    %4288 = vmatprep.subr.bf16.mxu0 0
    %4289 = vmatpush1.bf16.msra.mxu0 %v3234
    %4290 = vmatprep.subr.bf16.mxu0 0
    %4291 = vmatpush1.bf16.msra.mxu0 %v3235
    %4292 = vmatprep.mubr.bf16.mxu0 %v1026
    %4293 = vmatmul.mubr.bf16.gmra.mrb[0].mxu0 %v1012
    %v4294 = vpop.f32.mrb[0].mxu0
    %v4295 = vadd.f32 %v4255, %v4294
    %v4296 = vpop.f32.mrb[0].mxu0
    %v4297 = vpop.f32.mrb[0].mxu0
    %v4298 = vpop.f32.mrb[0].mxu0
    %4299 = vdwg.mxu0
    %4300 = vmatprep.subr.bf16.mxu0 0
    %4301 = vmatpush1.bf16.msra.mxu0 %v3236
    %4302 = vmatprep.subr.bf16.mxu0 0
    %4303 = vmatpush1.bf16.msra.mxu0 %v3237
    %4304 = vmatprep.subr.bf16.mxu0 0
    %4305 = vmatpush1.bf16.msra.mxu0 %v3238
    %4306 = vmatprep.subr.bf16.mxu0 0
    %4307 = vmatpush1.bf16.msra.mxu0 %v3239
    %4308 = vmatprep.subr.bf16.mxu0 0
    %4309 = vmatpush1.bf16.msra.mxu0 %v3240
    %4310 = vmatprep.subr.bf16.mxu0 0
    %4311 = vmatpush1.bf16.msra.mxu0 %v3241
    %4312 = vmatprep.subr.bf16.mxu0 0
    %4313 = vmatpush1.bf16.msra.mxu0 %v3242
    %4314 = vmatprep.subr.bf16.mxu0 0
    %4315 = vmatpush1.bf16.msra.mxu0 %v3243
    %4316 = vmatprep.subr.bf16.mxu0 0
    %4317 = vmatpush1.bf16.msra.mxu0 %v3244
    %4318 = vmatprep.subr.bf16.mxu0 0
    %4319 = vmatpush1.bf16.msra.mxu0 %v3245
    %4320 = vmatprep.subr.bf16.mxu0 0
    %4321 = vmatpush1.bf16.msra.mxu0 %v3246
    %4322 = vmatprep.subr.bf16.mxu0 0
    %4323 = vmatpush1.bf16.msra.mxu0 %v3247
    %4324 = vmatprep.subr.bf16.mxu0 0
    %4325 = vmatpush1.bf16.msra.mxu0 %v3248
    %4326 = vmatprep.subr.bf16.mxu0 0
    %4327 = vmatpush1.bf16.msra.mxu0 %v3249
    %4328 = vmatprep.subr.bf16.mxu0 0
    %4329 = vmatpush1.bf16.msra.mxu0 %v3250
    %4330 = vmatprep.subr.bf16.mxu0 0
    %4331 = vmatpush1.bf16.msra.mxu0 %v3251
    %4332 = vmatprep.mubr.bf16.mxu0 %v1030
    %4333 = vmatmul.mubr.bf16.gmra.mrb[0].mxu0 %v1028
    %v4334 = vpop.f32.mrb[0].mxu0
    %v4335 = vadd.f32 %v4295, %v4334
    %v4336 = vpop.f32.mrb[0].mxu0
    %v4337 = vpop.f32.mrb[0].mxu0
    %v4338 = vpop.f32.mrb[0].mxu0
    %4339 = vdwg.mxu0
    %4340 = vmatprep.subr.bf16.mxu0 0
    %4341 = vmatpush1.bf16.msra.mxu0 %v3252
    %4342 = vmatprep.subr.bf16.mxu0 0
    %4343 = vmatpush1.bf16.msra.mxu0 %v3253
    %4344 = vmatprep.subr.bf16.mxu0 0
    %4345 = vmatpush1.bf16.msra.mxu0 %v3254
    %4346 = vmatprep.subr.bf16.mxu0 0
    %4347 = vmatpush1.bf16.msra.mxu0 %v3255
    %4348 = vmatprep.subr.bf16.mxu0 0
    %4349 = vmatpush1.bf16.msra.mxu0 %v3256
    %4350 = vmatprep.subr.bf16.mxu0 0
    %4351 = vmatpush1.bf16.msra.mxu0 %v3257
    %4352 = vmatprep.subr.bf16.mxu0 0
    %4353 = vmatpush1.bf16.msra.mxu0 %v3258
    %4354 = vmatprep.subr.bf16.mxu0 0
    %4355 = vmatpush1.bf16.msra.mxu0 %v3259
    %4356 = vmatprep.subr.bf16.mxu0 0
    %4357 = vmatpush1.bf16.msra.mxu0 %v3260
    %4358 = vmatprep.subr.bf16.mxu0 0
    %4359 = vmatpush1.bf16.msra.mxu0 %v3261
    %4360 = vmatprep.subr.bf16.mxu0 0
    %4361 = vmatpush1.bf16.msra.mxu0 %v3262
    %4362 = vmatprep.subr.bf16.mxu0 0
    %4363 = vmatpush1.bf16.msra.mxu0 %v3263
    %4364 = vmatprep.subr.bf16.mxu0 0
    %4365 = vmatpush1.bf16.msra.mxu0 %v3264
    %4366 = vmatprep.subr.bf16.mxu0 0
    %4367 = vmatpush1.bf16.msra.mxu0 %v3265
    %4368 = vmatprep.subr.bf16.mxu0 0
    %4369 = vmatpush1.bf16.msra.mxu0 %v3266
    %4370 = vmatprep.subr.bf16.mxu0 0
    %4371 = vmatpush1.bf16.msra.mxu0 %v3267
    %4372 = vmatprep.mubr.bf16.mxu0 %v1068
    %4373 = vmatmul.mubr.bf16.gmra.mrb[0].mxu0 %v1054
    %v4374 = vpop.f32.mrb[0].mxu0
    %v4375 = vadd.f32 %v4335, %v4374
    %v4376 = vpop.f32.mrb[0].mxu0
    %v4377 = vpop.f32.mrb[0].mxu0
    %v4378 = vpop.f32.mrb[0].mxu0
    %4379 = vdwg.mxu0
    %4380 = vmatprep.subr.bf16.mxu0 0
    %4381 = vmatpush1.bf16.msra.mxu0 %v3268
    %4382 = vmatprep.subr.bf16.mxu0 0
    %4383 = vmatpush1.bf16.msra.mxu0 %v3269
    %4384 = vmatprep.subr.bf16.mxu0 0
    %4385 = vmatpush1.bf16.msra.mxu0 %v3270
    %4386 = vmatprep.subr.bf16.mxu0 0
    %4387 = vmatpush1.bf16.msra.mxu0 %v3271
    %4388 = vmatprep.subr.bf16.mxu0 0
    %4389 = vmatpush1.bf16.msra.mxu0 %v3272
    %4390 = vmatprep.subr.bf16.mxu0 0
    %4391 = vmatpush1.bf16.msra.mxu0 %v3273
    %4392 = vmatprep.subr.bf16.mxu0 0
    %4393 = vmatpush1.bf16.msra.mxu0 %v3274
    %4394 = vmatprep.subr.bf16.mxu0 0
    %4395 = vmatpush1.bf16.msra.mxu0 %v3275
    %4396 = vmatprep.subr.bf16.mxu0 0
    %4397 = vmatpush1.bf16.msra.mxu0 %v3276
    %4398 = vmatprep.subr.bf16.mxu0 0
    %4399 = vmatpush1.bf16.msra.mxu0 %v3277
    %4400 = vmatprep.subr.bf16.mxu0 0
    %4401 = vmatpush1.bf16.msra.mxu0 %v3278
    %4402 = vmatprep.subr.bf16.mxu0 0
    %4403 = vmatpush1.bf16.msra.mxu0 %v3279
    %4404 = vmatprep.subr.bf16.mxu0 0
    %4405 = vmatpush1.bf16.msra.mxu0 %v3280
    %4406 = vmatprep.subr.bf16.mxu0 0
    %4407 = vmatpush1.bf16.msra.mxu0 %v3281
    %4408 = vmatprep.subr.bf16.mxu0 0
    %4409 = vmatpush1.bf16.msra.mxu0 %v3282
    %4410 = vmatprep.subr.bf16.mxu0 0
    %4411 = vmatpush1.bf16.msra.mxu0 %v3283
    %4412 = vmatprep.mubr.bf16.mxu0 %v1078
    %4413 = vmatmul.mubr.bf16.gmra.mrb[0].mxu0 %v1076
    %v4414 = vpop.f32.mrb[0].mxu0
    %v4415 = vadd.f32 %v4375, %v4414
    %v4416 = vpop.f32.mrb[0].mxu0
    %v4417 = vpop.f32.mrb[0].mxu0
    %v4418 = vpop.f32.mrb[0].mxu0
    %4419 = vdwg.mxu0
    %4420 = vmatprep.subr.bf16.mxu0 0
    %4421 = vmatpush1.bf16.msra.mxu0 %v3284
    %4422 = vmatprep.subr.bf16.mxu0 0
    %4423 = vmatpush1.bf16.msra.mxu0 %v3285
    %4424 = vmatprep.subr.bf16.mxu0 0
    %4425 = vmatpush1.bf16.msra.mxu0 %v3286
    %4426 = vmatprep.subr.bf16.mxu0 0
    %4427 = vmatpush1.bf16.msra.mxu0 %v3287
    %4428 = vmatprep.subr.bf16.mxu0 0
    %4429 = vmatpush1.bf16.msra.mxu0 %v3288
    %4430 = vmatprep.subr.bf16.mxu0 0
    %4431 = vmatpush1.bf16.msra.mxu0 %v3289
    %4432 = vmatprep.subr.bf16.mxu0 0
    %4433 = vmatpush1.bf16.msra.mxu0 %v3290
    %4434 = vmatprep.subr.bf16.mxu0 0
    %4435 = vmatpush1.bf16.msra.mxu0 %v3291
    %4436 = vmatprep.subr.bf16.mxu0 0
    %4437 = vmatpush1.bf16.msra.mxu0 %v3292
    %4438 = vmatprep.subr.bf16.mxu0 0
    %4439 = vmatpush1.bf16.msra.mxu0 %v3293
    %4440 = vmatprep.subr.bf16.mxu0 0
    %4441 = vmatpush1.bf16.msra.mxu0 %v3294
    %4442 = vmatprep.subr.bf16.mxu0 0
    %4443 = vmatpush1.bf16.msra.mxu0 %v3295
    %4444 = vmatprep.subr.bf16.mxu0 0
    %4445 = vmatpush1.bf16.msra.mxu0 %v3296
    %4446 = vmatprep.subr.bf16.mxu0 0
    %4447 = vmatpush1.bf16.msra.mxu0 %v3297
    %4448 = vmatprep.subr.bf16.mxu0 0
    %4449 = vmatpush1.bf16.msra.mxu0 %v3298
    %4450 = vmatprep.subr.bf16.mxu0 0
    %4451 = vmatpush1.bf16.msra.mxu0 %v3299
    %4452 = vmatprep.mubr.bf16.mxu0 %v1075
    %4453 = vmatmul.mubr.bf16.gmra.mrb[0].mxu0 %v1061
    %v4454 = vpop.f32.mrb[0].mxu0
    %v4455 = vadd.f32 %v4415, %v4454
    %v4456 = vpop.f32.mrb[0].mxu0
    %v4457 = vpop.f32.mrb[0].mxu0
    %v4458 = vpop.f32.mrb[0].mxu0
    %4459 = vdwg.mxu0
    %4460 = vmatprep.subr.bf16.mxu0 0
    %4461 = vmatpush1.bf16.msra.mxu0 %v3300
    %4462 = vmatprep.subr.bf16.mxu0 0
    %4463 = vmatpush1.bf16.msra.mxu0 %v3301
    %4464 = vmatprep.subr.bf16.mxu0 0
    %4465 = vmatpush1.bf16.msra.mxu0 %v3302
    %4466 = vmatprep.subr.bf16.mxu0 0
    %4467 = vmatpush1.bf16.msra.mxu0 %v3303
    %4468 = vmatprep.subr.bf16.mxu0 0
    %4469 = vmatpush1.bf16.msra.mxu0 %v3304
    %4470 = vmatprep.subr.bf16.mxu0 0
    %4471 = vmatpush1.bf16.msra.mxu0 %v3305
    %4472 = vmatprep.subr.bf16.mxu0 0
    %4473 = vmatpush1.bf16.msra.mxu0 %v3306
    %4474 = vmatprep.subr.bf16.mxu0 0
    %4475 = vmatpush1.bf16.msra.mxu0 %v3307
    %4476 = vmatprep.subr.bf16.mxu0 0
    %4477 = vmatpush1.bf16.msra.mxu0 %v3308
    %4478 = vmatprep.subr.bf16.mxu0 0
    %4479 = vmatpush1.bf16.msra.mxu0 %v3309
    %4480 = vmatprep.subr.bf16.mxu0 0
    %4481 = vmatpush1.bf16.msra.mxu0 %v3310
    %4482 = vmatprep.subr.bf16.mxu0 0
    %4483 = vmatpush1.bf16.msra.mxu0 %v3311
    %4484 = vmatprep.subr.bf16.mxu0 0
    %4485 = vmatpush1.bf16.msra.mxu0 %v3312
    %4486 = vmatprep.subr.bf16.mxu0 0
    %4487 = vmatpush1.bf16.msra.mxu0 %v3313
    %4488 = vmatprep.subr.bf16.mxu0 0
    %4489 = vmatpush1.bf16.msra.mxu0 %v3314
    %4490 = vmatprep.subr.bf16.mxu0 0
    %4491 = vmatpush1.bf16.msra.mxu0 %v3315
    %4492 = vmatprep.mubr.bf16.mxu0 %v1079
    %4493 = vmatmul.mubr.bf16.gmra.mrb[0].mxu0 %v1077
    %v4494 = vpop.f32.mrb[0].mxu0
    %v4495 = vadd.f32 %v4455, %v4494
    %v4496 = vpop.f32.mrb[0].mxu0
    %v4497 = vpop.f32.mrb[0].mxu0
    %v4498 = vpop.f32.mrb[0].mxu0
    %4499 = vdwg.mxu0
    %4500 = vmatprep.subr.bf16.mxu0 0
    %4501 = vmatpush1.bf16.msra.mxu0 %v3316
    %4502 = vmatprep.subr.bf16.mxu0 0
    %4503 = vmatpush1.bf16.msra.mxu0 %v3317
    %4504 = vmatprep.subr.bf16.mxu0 0
    %4505 = vmatpush1.bf16.msra.mxu0 %v3318
    %4506 = vmatprep.subr.bf16.mxu0 0
    %4507 = vmatpush1.bf16.msra.mxu0 %v3319
    %4508 = vmatprep.subr.bf16.mxu0 0
    %4509 = vmatpush1.bf16.msra.mxu0 %v3320
    %4510 = vmatprep.subr.bf16.mxu0 0
    %4511 = vmatpush1.bf16.msra.mxu0 %v3321
    %4512 = vmatprep.subr.bf16.mxu0 0
    %4513 = vmatpush1.bf16.msra.mxu0 %v3322
    %4514 = vmatprep.subr.bf16.mxu0 0
    %4515 = vmatpush1.bf16.msra.mxu0 %v3323
    %4516 = vmatprep.subr.bf16.mxu0 0
    %4517 = vmatpush1.bf16.msra.mxu0 %v3324
    %4518 = vmatprep.subr.bf16.mxu0 0
    %4519 = vmatpush1.bf16.msra.mxu0 %v3325
    %4520 = vmatprep.subr.bf16.mxu0 0
    %4521 = vmatpush1.bf16.msra.mxu0 %v3326
    %4522 = vmatprep.subr.bf16.mxu0 0
    %4523 = vmatpush1.bf16.msra.mxu0 %v3327
    %4524 = vmatprep.subr.bf16.mxu0 0
    %4525 = vmatpush1.bf16.msra.mxu0 %v3328
    %4526 = vmatprep.subr.bf16.mxu0 0
    %4527 = vmatpush1.bf16.msra.mxu0 %v3329
    %4528 = vmatprep.subr.bf16.mxu0 0
    %4529 = vmatpush1.bf16.msra.mxu0 %v3330
    %4530 = vmatprep.subr.bf16.mxu0 0
    %4531 = vmatpush1.bf16.msra.mxu0 %v3331
    %4532 = vmatprep.mubr.bf16.mxu0 %v1117
    %4533 = vmatmul.mubr.bf16.gmra.mrb[0].mxu0 %v1103
    %v4534 = vpop.f32.mrb[0].mxu0
    %v4535 = vadd.f32 %v4495, %v4534
    %v4536 = vpop.f32.mrb[0].mxu0
    %v4537 = vpop.f32.mrb[0].mxu0
    %v4538 = vpop.f32.mrb[0].mxu0
    %4539 = vdwg.mxu0
    %4540 = vmatprep.subr.bf16.mxu0 0
    %4541 = vmatpush1.bf16.msra.mxu0 %v3332
    %4542 = vmatprep.subr.bf16.mxu0 0
    %4543 = vmatpush1.bf16.msra.mxu0 %v3333
    %4544 = vmatprep.subr.bf16.mxu0 0
    %4545 = vmatpush1.bf16.msra.mxu0 %v3334
    %4546 = vmatprep.subr.bf16.mxu0 0
    %4547 = vmatpush1.bf16.msra.mxu0 %v3335
    %4548 = vmatprep.subr.bf16.mxu0 0
    %4549 = vmatpush1.bf16.msra.mxu0 %v3336
    %4550 = vmatprep.subr.bf16.mxu0 0
    %4551 = vmatpush1.bf16.msra.mxu0 %v3337
    %4552 = vmatprep.subr.bf16.mxu0 0
    %4553 = vmatpush1.bf16.msra.mxu0 %v3338
    %4554 = vmatprep.subr.bf16.mxu0 0
    %4555 = vmatpush1.bf16.msra.mxu0 %v3339
    %4556 = vmatprep.subr.bf16.mxu0 0
    %4557 = vmatpush1.bf16.msra.mxu0 %v3340
    %4558 = vmatprep.subr.bf16.mxu0 0
    %4559 = vmatpush1.bf16.msra.mxu0 %v3341
    %4560 = vmatprep.subr.bf16.mxu0 0
    %4561 = vmatpush1.bf16.msra.mxu0 %v3342
    %4562 = vmatprep.subr.bf16.mxu0 0
    %4563 = vmatpush1.bf16.msra.mxu0 %v3343
    %4564 = vmatprep.subr.bf16.mxu0 0
    %4565 = vmatpush1.bf16.msra.mxu0 %v3344
    %4566 = vmatprep.subr.bf16.mxu0 0
    %4567 = vmatpush1.bf16.msra.mxu0 %v3345
    %4568 = vmatprep.subr.bf16.mxu0 0
    %4569 = vmatpush1.bf16.msra.mxu0 %v3346
    %4570 = vmatprep.subr.bf16.mxu0 0
    %4571 = vmatpush1.bf16.msra.mxu0 %v3347
    %4572 = vmatprep.mubr.bf16.mxu0 %v1127
    %4573 = vmatmul.mubr.bf16.gmra.mrb[0].mxu0 %v1125
    %v4574 = vpop.f32.mrb[0].mxu0
    %v4575 = vadd.f32 %v4535, %v4574
    %v4576 = vpop.f32.mrb[0].mxu0
    %v4577 = vpop.f32.mrb[0].mxu0
    %v4578 = vpop.f32.mrb[0].mxu0
    %4579 = vdwg.mxu0
    %4580 = vmatprep.subr.bf16.mxu0 0
    %4581 = vmatpush1.bf16.msra.mxu0 %v3348
    %4582 = vmatprep.subr.bf16.mxu0 0
    %4583 = vmatpush1.bf16.msra.mxu0 %v3349
    %4584 = vmatprep.subr.bf16.mxu0 0
    %4585 = vmatpush1.bf16.msra.mxu0 %v3350
    %4586 = vmatprep.subr.bf16.mxu0 0
    %4587 = vmatpush1.bf16.msra.mxu0 %v3351
    %4588 = vmatprep.subr.bf16.mxu0 0
    %4589 = vmatpush1.bf16.msra.mxu0 %v3352
    %4590 = vmatprep.subr.bf16.mxu0 0
    %4591 = vmatpush1.bf16.msra.mxu0 %v3353
    %4592 = vmatprep.subr.bf16.mxu0 0
    %4593 = vmatpush1.bf16.msra.mxu0 %v3354
    %4594 = vmatprep.subr.bf16.mxu0 0
    %4595 = vmatpush1.bf16.msra.mxu0 %v3355
    %4596 = vmatprep.subr.bf16.mxu0 0
    %4597 = vmatpush1.bf16.msra.mxu0 %v3356
    %4598 = vmatprep.subr.bf16.mxu0 0
    %4599 = vmatpush1.bf16.msra.mxu0 %v3357
    %4600 = vmatprep.subr.bf16.mxu0 0
    %4601 = vmatpush1.bf16.msra.mxu0 %v3358
    %4602 = vmatprep.subr.bf16.mxu0 0
    %4603 = vmatpush1.bf16.msra.mxu0 %v3359
    %4604 = vmatprep.subr.bf16.mxu0 0
    %4605 = vmatpush1.bf16.msra.mxu0 %v3360
    %4606 = vmatprep.subr.bf16.mxu0 0
    %4607 = vmatpush1.bf16.msra.mxu0 %v3361
    %4608 = vmatprep.subr.bf16.mxu0 0
    %4609 = vmatpush1.bf16.msra.mxu0 %v3362
    %4610 = vmatprep.subr.bf16.mxu0 0
    %4611 = vmatpush1.bf16.msra.mxu0 %v3363
    %4612 = vmatprep.mubr.bf16.mxu0 %v1124
    %4613 = vmatmul.mubr.bf16.gmra.mrb[0].mxu0 %v1110
    %v4614 = vpop.f32.mrb[0].mxu0
    %v4615 = vadd.f32 %v4575, %v4614
    %v4616 = vpop.f32.mrb[0].mxu0
    %v4617 = vpop.f32.mrb[0].mxu0
    %v4618 = vpop.f32.mrb[0].mxu0
    %4619 = vdwg.mxu0
    %4620 = vmatprep.subr.bf16.mxu0 0
    %4621 = vmatpush1.bf16.msra.mxu0 %v3364
    %4622 = vmatprep.subr.bf16.mxu0 0
    %4623 = vmatpush1.bf16.msra.mxu0 %v3365
    %4624 = vmatprep.subr.bf16.mxu0 0
    %4625 = vmatpush1.bf16.msra.mxu0 %v3366
    %4626 = vmatprep.subr.bf16.mxu0 0
    %4627 = vmatpush1.bf16.msra.mxu0 %v3367
    %4628 = vmatprep.subr.bf16.mxu0 0
    %4629 = vmatpush1.bf16.msra.mxu0 %v3368
    %4630 = vmatprep.subr.bf16.mxu0 0
    %4631 = vmatpush1.bf16.msra.mxu0 %v3369
    %4632 = vmatprep.subr.bf16.mxu0 0
    %4633 = vmatpush1.bf16.msra.mxu0 %v3370
    %4634 = vmatprep.subr.bf16.mxu0 0
    %4635 = vmatpush1.bf16.msra.mxu0 %v3371
    %4636 = vmatprep.subr.bf16.mxu0 0
    %4637 = vmatpush1.bf16.msra.mxu0 %v3372
    %4638 = vmatprep.subr.bf16.mxu0 0
    %4639 = vmatpush1.bf16.msra.mxu0 %v3373
    %4640 = vmatprep.subr.bf16.mxu0 0
    %4641 = vmatpush1.bf16.msra.mxu0 %v3374
    %4642 = vmatprep.subr.bf16.mxu0 0
    %4643 = vmatpush1.bf16.msra.mxu0 %v3375
    %4644 = vmatprep.subr.bf16.mxu0 0
    %4645 = vmatpush1.bf16.msra.mxu0 %v3376
    %4646 = vmatprep.subr.bf16.mxu0 0
    %4647 = vmatpush1.bf16.msra.mxu0 %v3377
    %4648 = vmatprep.subr.bf16.mxu0 0
    %4649 = vmatpush1.bf16.msra.mxu0 %v3378
    %4650 = vmatprep.subr.bf16.mxu0 0
    %4651 = vmatpush1.bf16.msra.mxu0 %v3379
    %4652 = vmatprep.mubr.bf16.mxu0 %v1128
    %4653 = vmatmul.mubr.bf16.gmra.mrb[0].mxu0 %v1126
    %v4654 = vpop.f32.mrb[0].mxu0
    %v4655 = vadd.f32 %v4615, %v4654
    %v4656 = vpop.f32.mrb[0].mxu0
    %v4657 = vpop.f32.mrb[0].mxu0
    %v4658 = vpop.f32.mrb[0].mxu0
    %4659 = vdwg.mxu0
    %4660 = vmatprep.subr.bf16.mxu0 0
    %4661 = vmatpush1.bf16.msra.mxu0 %v3380
    %4662 = vmatprep.subr.bf16.mxu0 0
    %4663 = vmatpush1.bf16.msra.mxu0 %v3381
    %4664 = vmatprep.subr.bf16.mxu0 0
    %4665 = vmatpush1.bf16.msra.mxu0 %v3382
    %4666 = vmatprep.subr.bf16.mxu0 0
    %4667 = vmatpush1.bf16.msra.mxu0 %v3383
    %4668 = vmatprep.subr.bf16.mxu0 0
    %4669 = vmatpush1.bf16.msra.mxu0 %v3384
    %4670 = vmatprep.subr.bf16.mxu0 0
    %4671 = vmatpush1.bf16.msra.mxu0 %v3385
    %4672 = vmatprep.subr.bf16.mxu0 0
    %4673 = vmatpush1.bf16.msra.mxu0 %v3386
    %4674 = vmatprep.subr.bf16.mxu0 0
    %4675 = vmatpush1.bf16.msra.mxu0 %v3387
    %4676 = vmatprep.subr.bf16.mxu0 0
    %4677 = vmatpush1.bf16.msra.mxu0 %v3388
    %4678 = vmatprep.subr.bf16.mxu0 0
    %4679 = vmatpush1.bf16.msra.mxu0 %v3389
    %4680 = vmatprep.subr.bf16.mxu0 0
    %4681 = vmatpush1.bf16.msra.mxu0 %v3390
    %4682 = vmatprep.subr.bf16.mxu0 0
    %4683 = vmatpush1.bf16.msra.mxu0 %v3391
    %4684 = vmatprep.subr.bf16.mxu0 0
    %4685 = vmatpush1.bf16.msra.mxu0 %v3392
    %4686 = vmatprep.subr.bf16.mxu0 0
    %4687 = vmatpush1.bf16.msra.mxu0 %v3393
    %4688 = vmatprep.subr.bf16.mxu0 0
    %4689 = vmatpush1.bf16.msra.mxu0 %v3394
    %4690 = vmatprep.subr.bf16.mxu0 0
    %4691 = vmatpush1.bf16.msra.mxu0 %v3395
    %4692 = vmatprep.mubr.bf16.mxu0 %v1166
    %4693 = vmatmul.mubr.bf16.gmra.mrb[0].mxu0 %v1152
    %v4694 = vpop.f32.mrb[0].mxu0
    %v4695 = vadd.f32 %v4655, %v4694
    %v4696 = vpop.f32.mrb[0].mxu0
    %v4697 = vpop.f32.mrb[0].mxu0
    %v4698 = vpop.f32.mrb[0].mxu0
    %4699 = vdwg.mxu0
    %4700 = vmatprep.subr.bf16.mxu0 0
    %4701 = vmatpush1.bf16.msra.mxu0 %v3396
    %4702 = vmatprep.subr.bf16.mxu0 0
    %4703 = vmatpush1.bf16.msra.mxu0 %v3397
    %4704 = vmatprep.subr.bf16.mxu0 0
    %4705 = vmatpush1.bf16.msra.mxu0 %v3398
    %4706 = vmatprep.subr.bf16.mxu0 0
    %4707 = vmatpush1.bf16.msra.mxu0 %v3399
    %4708 = vmatprep.subr.bf16.mxu0 0
    %4709 = vmatpush1.bf16.msra.mxu0 %v3400
    %4710 = vmatprep.subr.bf16.mxu0 0
    %4711 = vmatpush1.bf16.msra.mxu0 %v3401
    %4712 = vmatprep.subr.bf16.mxu0 0
    %4713 = vmatpush1.bf16.msra.mxu0 %v3402
    %4714 = vmatprep.subr.bf16.mxu0 0
    %4715 = vmatpush1.bf16.msra.mxu0 %v3403
    %4716 = vmatprep.subr.bf16.mxu0 0
    %4717 = vmatpush1.bf16.msra.mxu0 %v3404
    %4718 = vmatprep.subr.bf16.mxu0 0
    %4719 = vmatpush1.bf16.msra.mxu0 %v3405
    %4720 = vmatprep.subr.bf16.mxu0 0
    %4721 = vmatpush1.bf16.msra.mxu0 %v3406
    %4722 = vmatprep.subr.bf16.mxu0 0
    %4723 = vmatpush1.bf16.msra.mxu0 %v3407
    %4724 = vmatprep.subr.bf16.mxu0 0
    %4725 = vmatpush1.bf16.msra.mxu0 %v3408
    %4726 = vmatprep.subr.bf16.mxu0 0
    %4727 = vmatpush1.bf16.msra.mxu0 %v3409
    %4728 = vmatprep.subr.bf16.mxu0 0
    %4729 = vmatpush1.bf16.msra.mxu0 %v3410
    %4730 = vmatprep.subr.bf16.mxu0 0
    %4731 = vmatpush1.bf16.msra.mxu0 %v3411
    %4732 = vmatprep.mubr.bf16.mxu0 %v1176
    %4733 = vmatmul.mubr.bf16.gmra.mrb[0].mxu0 %v1174
    %v4734 = vpop.f32.mrb[0].mxu0
    %v4735 = vadd.f32 %v4695, %v4734
    %v4736 = vpop.f32.mrb[0].mxu0
    %v4737 = vpop.f32.mrb[0].mxu0
    %v4738 = vpop.f32.mrb[0].mxu0
    %4739 = vdwg.mxu0
    %4740 = vmatprep.subr.bf16.mxu0 0
    %4741 = vmatpush1.bf16.msra.mxu0 %v3412
    %4742 = vmatprep.subr.bf16.mxu0 0
    %4743 = vmatpush1.bf16.msra.mxu0 %v3413
    %4744 = vmatprep.subr.bf16.mxu0 0
    %4745 = vmatpush1.bf16.msra.mxu0 %v3414
    %4746 = vmatprep.subr.bf16.mxu0 0
    %4747 = vmatpush1.bf16.msra.mxu0 %v3415
    %4748 = vmatprep.subr.bf16.mxu0 0
    %4749 = vmatpush1.bf16.msra.mxu0 %v3416
    %4750 = vmatprep.subr.bf16.mxu0 0
    %4751 = vmatpush1.bf16.msra.mxu0 %v3417
    %4752 = vmatprep.subr.bf16.mxu0 0
    %4753 = vmatpush1.bf16.msra.mxu0 %v3418
    %4754 = vmatprep.subr.bf16.mxu0 0
    %4755 = vmatpush1.bf16.msra.mxu0 %v3419
    %4756 = vmatprep.subr.bf16.mxu0 0
    %4757 = vmatpush1.bf16.msra.mxu0 %v3420
    %4758 = vmatprep.subr.bf16.mxu0 0
    %4759 = vmatpush1.bf16.msra.mxu0 %v3421
    %4760 = vmatprep.subr.bf16.mxu0 0
    %4761 = vmatpush1.bf16.msra.mxu0 %v3422
    %4762 = vmatprep.subr.bf16.mxu0 0
    %4763 = vmatpush1.bf16.msra.mxu0 %v3423
    %4764 = vmatprep.subr.bf16.mxu0 0
    %4765 = vmatpush1.bf16.msra.mxu0 %v3424
    %4766 = vmatprep.subr.bf16.mxu0 0
    %4767 = vmatpush1.bf16.msra.mxu0 %v3425
    %4768 = vmatprep.subr.bf16.mxu0 0
    %4769 = vmatpush1.bf16.msra.mxu0 %v3426
    %4770 = vmatprep.subr.bf16.mxu0 0
    %4771 = vmatpush1.bf16.msra.mxu0 %v3427
    %4772 = vmatprep.mubr.bf16.mxu0 %v1173
    %4773 = vmatmul.mubr.bf16.gmra.mrb[0].mxu0 %v1159
    %v4774 = vpop.f32.mrb[0].mxu0
    %v4775 = vadd.f32 %v4735, %v4774
    %v4776 = vpop.f32.mrb[0].mxu0
    %v4777 = vpop.f32.mrb[0].mxu0
    %v4778 = vpop.f32.mrb[0].mxu0
    %4779 = vdwg.mxu0
    %4780 = vmatprep.subr.bf16.mxu0 0
    %4781 = vmatpush1.bf16.msra.mxu0 %v3428
    %4782 = vmatprep.subr.bf16.mxu0 0
    %4783 = vmatpush1.bf16.msra.mxu0 %v3429
    %4784 = vmatprep.subr.bf16.mxu0 0
    %4785 = vmatpush1.bf16.msra.mxu0 %v3430
    %4786 = vmatprep.subr.bf16.mxu0 0
    %4787 = vmatpush1.bf16.msra.mxu0 %v3431
    %4788 = vmatprep.subr.bf16.mxu0 0
    %4789 = vmatpush1.bf16.msra.mxu0 %v3432
    %4790 = vmatprep.subr.bf16.mxu0 0
    %4791 = vmatpush1.bf16.msra.mxu0 %v3433
    %4792 = vmatprep.subr.bf16.mxu0 0
    %4793 = vmatpush1.bf16.msra.mxu0 %v3434
    %4794 = vmatprep.subr.bf16.mxu0 0
    %4795 = vmatpush1.bf16.msra.mxu0 %v3435
    %4796 = vmatprep.subr.bf16.mxu0 0
    %4797 = vmatpush1.bf16.msra.mxu0 %v3436
    %4798 = vmatprep.subr.bf16.mxu0 0
    %4799 = vmatpush1.bf16.msra.mxu0 %v3437
    %4800 = vmatprep.subr.bf16.mxu0 0
    %4801 = vmatpush1.bf16.msra.mxu0 %v3438
    %4802 = vmatprep.subr.bf16.mxu0 0
    %4803 = vmatpush1.bf16.msra.mxu0 %v3439
    %4804 = vmatprep.subr.bf16.mxu0 0
    %4805 = vmatpush1.bf16.msra.mxu0 %v3440
    %4806 = vmatprep.subr.bf16.mxu0 0
    %4807 = vmatpush1.bf16.msra.mxu0 %v3441
    %4808 = vmatprep.subr.bf16.mxu0 0
    %4809 = vmatpush1.bf16.msra.mxu0 %v3442
    %4810 = vmatprep.subr.bf16.mxu0 0
    %4811 = vmatpush1.bf16.msra.mxu0 %v3443
    %4812 = vmatprep.mubr.bf16.mxu0 %v1177
    %4813 = vmatmul.mubr.bf16.gmra.mrb[0].mxu0 %v1175
    %v4814 = vpop.f32.mrb[0].mxu0
    %v4815 = vadd.f32 %v4775, %v4814
    %v4816 = vpop.f32.mrb[0].mxu0
    %v4817 = vpop.f32.mrb[0].mxu0
    %v4818 = vpop.f32.mrb[0].mxu0
    %4819 = vdwg.mxu0
    %4820 = vmatprep.subr.bf16.mxu0 0
    %4821 = vmatpush1.bf16.msra.mxu0 %v3444
    %4822 = vmatprep.subr.bf16.mxu0 0
    %4823 = vmatpush1.bf16.msra.mxu0 %v3445
    %4824 = vmatprep.subr.bf16.mxu0 0
    %4825 = vmatpush1.bf16.msra.mxu0 %v3446
    %4826 = vmatprep.subr.bf16.mxu0 0
    %4827 = vmatpush1.bf16.msra.mxu0 %v3447
    %4828 = vmatprep.subr.bf16.mxu0 0
    %4829 = vmatpush1.bf16.msra.mxu0 %v3448
    %4830 = vmatprep.subr.bf16.mxu0 0
    %4831 = vmatpush1.bf16.msra.mxu0 %v3449
    %4832 = vmatprep.subr.bf16.mxu0 0
    %4833 = vmatpush1.bf16.msra.mxu0 %v3450
    %4834 = vmatprep.subr.bf16.mxu0 0
    %4835 = vmatpush1.bf16.msra.mxu0 %v3451
    %4836 = vmatprep.subr.bf16.mxu0 0
    %4837 = vmatpush1.bf16.msra.mxu0 %v3452
    %4838 = vmatprep.subr.bf16.mxu0 0
    %4839 = vmatpush1.bf16.msra.mxu0 %v3453
    %4840 = vmatprep.subr.bf16.mxu0 0
    %4841 = vmatpush1.bf16.msra.mxu0 %v3454
    %4842 = vmatprep.subr.bf16.mxu0 0
    %4843 = vmatpush1.bf16.msra.mxu0 %v3455
    %4844 = vmatprep.subr.bf16.mxu0 0
    %4845 = vmatpush1.bf16.msra.mxu0 %v3456
    %4846 = vmatprep.subr.bf16.mxu0 0
    %4847 = vmatpush1.bf16.msra.mxu0 %v3457
    %4848 = vmatprep.subr.bf16.mxu0 0
    %4849 = vmatpush1.bf16.msra.mxu0 %v3458
    %4850 = vmatprep.subr.bf16.mxu0 0
    %4851 = vmatpush1.bf16.msra.mxu0 %v3459
    %4852 = vmatprep.mubr.bf16.mxu0 %v1215
    %4853 = vmatmul.mubr.bf16.gmra.mrb[0].mxu0 %v1201
    %v4854 = vpop.f32.mrb[0].mxu0
    %v4855 = vadd.f32 %v4815, %v4854
    %v4856 = vpop.f32.mrb[0].mxu0
    %v4857 = vpop.f32.mrb[0].mxu0
    %v4858 = vpop.f32.mrb[0].mxu0
    %4859 = vdwg.mxu0
    %4860 = vmatprep.subr.bf16.mxu0 0
    %4861 = vmatpush1.bf16.msra.mxu0 %v3460
    %4862 = vmatprep.subr.bf16.mxu0 0
    %4863 = vmatpush1.bf16.msra.mxu0 %v3461
    %4864 = vmatprep.subr.bf16.mxu0 0
    %4865 = vmatpush1.bf16.msra.mxu0 %v3462
    %4866 = vmatprep.subr.bf16.mxu0 0
    %4867 = vmatpush1.bf16.msra.mxu0 %v3463
    %4868 = vmatprep.subr.bf16.mxu0 0
    %4869 = vmatpush1.bf16.msra.mxu0 %v3464
    %4870 = vmatprep.subr.bf16.mxu0 0
    %4871 = vmatpush1.bf16.msra.mxu0 %v3465
    %4872 = vmatprep.subr.bf16.mxu0 0
    %4873 = vmatpush1.bf16.msra.mxu0 %v3466
    %4874 = vmatprep.subr.bf16.mxu0 0
    %4875 = vmatpush1.bf16.msra.mxu0 %v3467
    %4876 = vmatprep.subr.bf16.mxu0 0
    %4877 = vmatpush1.bf16.msra.mxu0 %v3468
    %4878 = vmatprep.subr.bf16.mxu0 0
    %4879 = vmatpush1.bf16.msra.mxu0 %v3469
    %4880 = vmatprep.subr.bf16.mxu0 0
    %4881 = vmatpush1.bf16.msra.mxu0 %v3470
    %4882 = vmatprep.subr.bf16.mxu0 0
    %4883 = vmatpush1.bf16.msra.mxu0 %v3471
    %4884 = vmatprep.subr.bf16.mxu0 0
    %4885 = vmatpush1.bf16.msra.mxu0 %v3472
    %4886 = vmatprep.subr.bf16.mxu0 0
    %4887 = vmatpush1.bf16.msra.mxu0 %v3473
    %4888 = vmatprep.subr.bf16.mxu0 0
    %4889 = vmatpush1.bf16.msra.mxu0 %v3474
    %4890 = vmatprep.subr.bf16.mxu0 0
    %4891 = vmatpush1.bf16.msra.mxu0 %v3475
    %4892 = vmatprep.mubr.bf16.mxu0 %v1225
    %4893 = vmatmul.mubr.bf16.gmra.mrb[0].mxu0 %v1223
    %v4894 = vpop.f32.mrb[0].mxu0
    %v4895 = vadd.f32 %v4855, %v4894
    %v4896 = vpop.f32.mrb[0].mxu0
    %v4897 = vpop.f32.mrb[0].mxu0
    %v4898 = vpop.f32.mrb[0].mxu0
    %4899 = vdwg.mxu0
    %4900 = vmatprep.subr.bf16.mxu0 0
    %4901 = vmatpush1.bf16.msra.mxu0 %v3476
    %4902 = vmatprep.subr.bf16.mxu0 0
    %4903 = vmatpush1.bf16.msra.mxu0 %v3477
    %4904 = vmatprep.subr.bf16.mxu0 0
    %4905 = vmatpush1.bf16.msra.mxu0 %v3478
    %4906 = vmatprep.subr.bf16.mxu0 0
    %4907 = vmatpush1.bf16.msra.mxu0 %v3479
    %4908 = vmatprep.subr.bf16.mxu0 0
    %4909 = vmatpush1.bf16.msra.mxu0 %v3480
    %4910 = vmatprep.subr.bf16.mxu0 0
    %4911 = vmatpush1.bf16.msra.mxu0 %v3481
    %4912 = vmatprep.subr.bf16.mxu0 0
    %4913 = vmatpush1.bf16.msra.mxu0 %v3482
    %4914 = vmatprep.subr.bf16.mxu0 0
    %4915 = vmatpush1.bf16.msra.mxu0 %v3483
    %4916 = vmatprep.subr.bf16.mxu0 0
    %4917 = vmatpush1.bf16.msra.mxu0 %v3484
    %4918 = vmatprep.subr.bf16.mxu0 0
    %4919 = vmatpush1.bf16.msra.mxu0 %v3485
    %4920 = vmatprep.subr.bf16.mxu0 0
    %4921 = vmatpush1.bf16.msra.mxu0 %v3486
    %4922 = vmatprep.subr.bf16.mxu0 0
    %4923 = vmatpush1.bf16.msra.mxu0 %v3487
    %4924 = vmatprep.subr.bf16.mxu0 0
    %4925 = vmatpush1.bf16.msra.mxu0 %v3488
    %4926 = vmatprep.subr.bf16.mxu0 0
    %4927 = vmatpush1.bf16.msra.mxu0 %v3489
    %4928 = vmatprep.subr.bf16.mxu0 0
    %4929 = vmatpush1.bf16.msra.mxu0 %v3490
    %4930 = vmatprep.subr.bf16.mxu0 0
    %4931 = vmatpush1.bf16.msra.mxu0 %v3491
    %4932 = vmatprep.mubr.bf16.mxu0 %v1222
    %4933 = vmatmul.mubr.bf16.gmra.mrb[0].mxu0 %v1208
    %v4934 = vpop.f32.mrb[0].mxu0
    %v4935 = vadd.f32 %v4895, %v4934
    %v4936 = vpop.f32.mrb[0].mxu0
    %v4937 = vpop.f32.mrb[0].mxu0
    %v4938 = vpop.f32.mrb[0].mxu0
    %4939 = vdwg.mxu0
    %4940 = vmatprep.subr.bf16.mxu0 0
    %4941 = vmatpush1.bf16.msra.mxu0 %v3492
    %4942 = vmatprep.subr.bf16.mxu0 0
    %4943 = vmatpush1.bf16.msra.mxu0 %v3493
    %4944 = vmatprep.subr.bf16.mxu0 0
    %4945 = vmatpush1.bf16.msra.mxu0 %v3494
    %4946 = vmatprep.subr.bf16.mxu0 0
    %4947 = vmatpush1.bf16.msra.mxu0 %v3495
    %4948 = vmatprep.subr.bf16.mxu0 0
    %4949 = vmatpush1.bf16.msra.mxu0 %v3496
    %4950 = vmatprep.subr.bf16.mxu0 0
    %4951 = vmatpush1.bf16.msra.mxu0 %v3497
    %4952 = vmatprep.subr.bf16.mxu0 0
    %4953 = vmatpush1.bf16.msra.mxu0 %v3498
    %4954 = vmatprep.subr.bf16.mxu0 0
    %4955 = vmatpush1.bf16.msra.mxu0 %v3499
    %4956 = vmatprep.subr.bf16.mxu0 0
    %4957 = vmatpush1.bf16.msra.mxu0 %v3500
    %4958 = vmatprep.subr.bf16.mxu0 0
    %4959 = vmatpush1.bf16.msra.mxu0 %v3501
    %4960 = vmatprep.subr.bf16.mxu0 0
    %4961 = vmatpush1.bf16.msra.mxu0 %v3502
    %4962 = vmatprep.subr.bf16.mxu0 0
    %4963 = vmatpush1.bf16.msra.mxu0 %v3503
    %4964 = vmatprep.subr.bf16.mxu0 0
    %4965 = vmatpush1.bf16.msra.mxu0 %v3504
    %4966 = vmatprep.subr.bf16.mxu0 0
    %4967 = vmatpush1.bf16.msra.mxu0 %v3505
    %4968 = vmatprep.subr.bf16.mxu0 0
    %4969 = vmatpush1.bf16.msra.mxu0 %v3506
    %4970 = vmatprep.subr.bf16.mxu0 0
    %4971 = vmatpush1.bf16.msra.mxu0 %v3507
    %4972 = vmatprep.mubr.bf16.mxu0 %v1226
    %4973 = vmatmul.mubr.bf16.gmra.mrb[0].mxu0 %v1224
    %v4974 = vpop.f32.mrb[0].mxu0
    %v4975 = vadd.f32 %v4935, %v4974
    %v4976 = vpop.f32.mrb[0].mxu0
    %v4977 = vpop.f32.mrb[0].mxu0
    %v4978 = vpop.f32.mrb[0].mxu0
    %4979 = vdwg.mxu0
    %4980 = vmatprep.subr.bf16.mxu0 0
    %4981 = vmatpush1.bf16.msra.mxu0 %v3508
    %4982 = vmatprep.subr.bf16.mxu0 0
    %4983 = vmatpush1.bf16.msra.mxu0 %v3509
    %4984 = vmatprep.subr.bf16.mxu0 0
    %4985 = vmatpush1.bf16.msra.mxu0 %v3510
    %4986 = vmatprep.subr.bf16.mxu0 0
    %4987 = vmatpush1.bf16.msra.mxu0 %v3511
    %4988 = vmatprep.subr.bf16.mxu0 0
    %4989 = vmatpush1.bf16.msra.mxu0 %v3512
    %4990 = vmatprep.subr.bf16.mxu0 0
    %4991 = vmatpush1.bf16.msra.mxu0 %v3513
    %4992 = vmatprep.subr.bf16.mxu0 0
    %4993 = vmatpush1.bf16.msra.mxu0 %v3514
    %4994 = vmatprep.subr.bf16.mxu0 0
    %4995 = vmatpush1.bf16.msra.mxu0 %v3515
    %4996 = vmatprep.subr.bf16.mxu0 0
    %4997 = vmatpush1.bf16.msra.mxu0 %v3516
    %4998 = vmatprep.subr.bf16.mxu0 0
    %4999 = vmatpush1.bf16.msra.mxu0 %v3517
    %5000 = vmatprep.subr.bf16.mxu0 0
    %5001 = vmatpush1.bf16.msra.mxu0 %v3518
    %5002 = vmatprep.subr.bf16.mxu0 0
    %5003 = vmatpush1.bf16.msra.mxu0 %v3519
    %5004 = vmatprep.subr.bf16.mxu0 0
    %5005 = vmatpush1.bf16.msra.mxu0 %v3520
    %5006 = vmatprep.subr.bf16.mxu0 0
    %5007 = vmatpush1.bf16.msra.mxu0 %v3521
    %5008 = vmatprep.subr.bf16.mxu0 0
    %5009 = vmatpush1.bf16.msra.mxu0 %v3522
    %5010 = vmatprep.subr.bf16.mxu0 0
    %5011 = vmatpush1.bf16.msra.mxu0 %v3523
    %5012 = vmatprep.mubr.bf16.mxu0 %v1264
    %5013 = vmatmul.mubr.bf16.gmra.mrb[0].mxu0 %v1250
    %v5014 = vpop.f32.mrb[0].mxu0
    %v5015 = vadd.f32 %v4975, %v5014
    %v5016 = vpop.f32.mrb[0].mxu0
    %v5017 = vpop.f32.mrb[0].mxu0
    %v5018 = vpop.f32.mrb[0].mxu0
    %5019 = vdwg.mxu0
    %5020 = vmatprep.subr.bf16.mxu0 0
    %5021 = vmatpush1.bf16.msra.mxu0 %v3524
    %5022 = vmatprep.subr.bf16.mxu0 0
    %5023 = vmatpush1.bf16.msra.mxu0 %v3525
    %5024 = vmatprep.subr.bf16.mxu0 0
    %5025 = vmatpush1.bf16.msra.mxu0 %v3526
    %5026 = vmatprep.subr.bf16.mxu0 0
    %5027 = vmatpush1.bf16.msra.mxu0 %v3527
    %5028 = vmatprep.subr.bf16.mxu0 0
    %5029 = vmatpush1.bf16.msra.mxu0 %v3528
    %5030 = vmatprep.subr.bf16.mxu0 0
    %5031 = vmatpush1.bf16.msra.mxu0 %v3529
    %5032 = vmatprep.subr.bf16.mxu0 0
    %5033 = vmatpush1.bf16.msra.mxu0 %v3530
    %5034 = vmatprep.subr.bf16.mxu0 0
    %5035 = vmatpush1.bf16.msra.mxu0 %v3531
    %5036 = vmatprep.subr.bf16.mxu0 0
    %5037 = vmatpush1.bf16.msra.mxu0 %v3532
    %5038 = vmatprep.subr.bf16.mxu0 0
    %5039 = vmatpush1.bf16.msra.mxu0 %v3533
    %5040 = vmatprep.subr.bf16.mxu0 0
    %5041 = vmatpush1.bf16.msra.mxu0 %v3534
    %5042 = vmatprep.subr.bf16.mxu0 0
    %5043 = vmatpush1.bf16.msra.mxu0 %v3535
    %5044 = vmatprep.subr.bf16.mxu0 0
    %5045 = vmatpush1.bf16.msra.mxu0 %v3536
    %5046 = vmatprep.subr.bf16.mxu0 0
    %5047 = vmatpush1.bf16.msra.mxu0 %v3537
    %5048 = vmatprep.subr.bf16.mxu0 0
    %5049 = vmatpush1.bf16.msra.mxu0 %v3538
    %5050 = vmatprep.subr.bf16.mxu0 0
    %5051 = vmatpush1.bf16.msra.mxu0 %v3539
    %5052 = vmatprep.mubr.bf16.mxu0 %v1274
    %5053 = vmatmul.mubr.bf16.gmra.mrb[0].mxu0 %v1272
    %v5054 = vpop.f32.mrb[0].mxu0
    %v5055 = vadd.f32 %v5015, %v5054
    %v5056 = vpop.f32.mrb[0].mxu0
    %v5057 = vpop.f32.mrb[0].mxu0
    %v5058 = vpop.f32.mrb[0].mxu0
    %5059 = vdwg.mxu0
    %5060 = vmatprep.subr.bf16.mxu0 0
    %5061 = vmatpush1.bf16.msra.mxu0 %v3540
    %5062 = vmatprep.subr.bf16.mxu0 0
    %5063 = vmatpush1.bf16.msra.mxu0 %v3541
    %5064 = vmatprep.subr.bf16.mxu0 0
    %5065 = vmatpush1.bf16.msra.mxu0 %v3542
    %5066 = vmatprep.subr.bf16.mxu0 0
    %5067 = vmatpush1.bf16.msra.mxu0 %v3543
    %5068 = vmatprep.subr.bf16.mxu0 0
    %5069 = vmatpush1.bf16.msra.mxu0 %v3544
    %5070 = vmatprep.subr.bf16.mxu0 0
    %5071 = vmatpush1.bf16.msra.mxu0 %v3545
    %5072 = vmatprep.subr.bf16.mxu0 0
    %5073 = vmatpush1.bf16.msra.mxu0 %v3546
    %5074 = vmatprep.subr.bf16.mxu0 0
    %5075 = vmatpush1.bf16.msra.mxu0 %v3547
    %5076 = vmatprep.subr.bf16.mxu0 0
    %5077 = vmatpush1.bf16.msra.mxu0 %v3548
    %5078 = vmatprep.subr.bf16.mxu0 0
    %5079 = vmatpush1.bf16.msra.mxu0 %v3549
    %5080 = vmatprep.subr.bf16.mxu0 0
    %5081 = vmatpush1.bf16.msra.mxu0 %v3550
    %5082 = vmatprep.subr.bf16.mxu0 0
    %5083 = vmatpush1.bf16.msra.mxu0 %v3551
    %5084 = vmatprep.subr.bf16.mxu0 0
    %5085 = vmatpush1.bf16.msra.mxu0 %v3552
    %5086 = vmatprep.subr.bf16.mxu0 0
    %5087 = vmatpush1.bf16.msra.mxu0 %v3553
    %5088 = vmatprep.subr.bf16.mxu0 0
    %5089 = vmatpush1.bf16.msra.mxu0 %v3554
    %5090 = vmatprep.subr.bf16.mxu0 0
    %5091 = vmatpush1.bf16.msra.mxu0 %v3555
    %5092 = vmatprep.mubr.bf16.mxu0 %v1271
    %5093 = vmatmul.mubr.bf16.gmra.mrb[0].mxu0 %v1257
    %v5094 = vpop.f32.mrb[0].mxu0
    %v5095 = vadd.f32 %v5055, %v5094
    %v5096 = vpop.f32.mrb[0].mxu0
    %v5097 = vpop.f32.mrb[0].mxu0
    %v5098 = vpop.f32.mrb[0].mxu0
    %5099 = vdwg.mxu0
    %5100 = vmatprep.subr.bf16.mxu0 0
    %5101 = vmatpush1.bf16.msra.mxu0 %v3556
    %5102 = vmatprep.subr.bf16.mxu0 0
    %5103 = vmatpush1.bf16.msra.mxu0 %v3557
    %5104 = vmatprep.subr.bf16.mxu0 0
    %5105 = vmatpush1.bf16.msra.mxu0 %v3558
    %5106 = vmatprep.subr.bf16.mxu0 0
    %5107 = vmatpush1.bf16.msra.mxu0 %v3559
    %5108 = vmatprep.subr.bf16.mxu0 0
    %5109 = vmatpush1.bf16.msra.mxu0 %v3560
    %5110 = vmatprep.subr.bf16.mxu0 0
    %5111 = vmatpush1.bf16.msra.mxu0 %v3561
    %5112 = vmatprep.subr.bf16.mxu0 0
    %5113 = vmatpush1.bf16.msra.mxu0 %v3562
    %5114 = vmatprep.subr.bf16.mxu0 0
    %5115 = vmatpush1.bf16.msra.mxu0 %v3563
    %5116 = vmatprep.subr.bf16.mxu0 0
    %5117 = vmatpush1.bf16.msra.mxu0 %v3564
    %5118 = vmatprep.subr.bf16.mxu0 0
    %5119 = vmatpush1.bf16.msra.mxu0 %v3565
    %5120 = vmatprep.subr.bf16.mxu0 0
    %5121 = vmatpush1.bf16.msra.mxu0 %v3566
    %5122 = vmatprep.subr.bf16.mxu0 0
    %5123 = vmatpush1.bf16.msra.mxu0 %v3567
    %5124 = vmatprep.subr.bf16.mxu0 0
    %5125 = vmatpush1.bf16.msra.mxu0 %v3568
    %5126 = vmatprep.subr.bf16.mxu0 0
    %5127 = vmatpush1.bf16.msra.mxu0 %v3569
    %5128 = vmatprep.subr.bf16.mxu0 0
    %5129 = vmatpush1.bf16.msra.mxu0 %v3570
    %5130 = vmatprep.subr.bf16.mxu0 0
    %5131 = vmatpush1.bf16.msra.mxu0 %v3571
    %5132 = vmatprep.mubr.bf16.mxu0 %v1275
    %5133 = vmatmul.mubr.bf16.gmra.mrb[0].mxu0 %v1273
    %v5134 = vpop.f32.mrb[0].mxu0
    %v5135 = vadd.f32 %v5095, %v5134
    %v5136 = vpop.f32.mrb[0].mxu0
    %v5137 = vpop.f32.mrb[0].mxu0
    %v5138 = vpop.f32.mrb[0].mxu0
    %5139 = vdwg.mxu0
    %5140 = vst [vmem:[#allocation2] sm:$0x3] %v5135
    // Predicated region
    $region14: #{convnet_forward.3} parent=1 // pred_check
      _
    $region15: #{convnet_forward.3} parent=1 // pred_check_branch
      %5142 = sbr.rel (0) target = $region17
    $region16: #{convnet_forward.3} parent=1 // pred_region
      %s5144 = ssub.s32 32, 32
      %5145 = vsyncadd [#allocation3], %s5144
      %s5147 = sshll.u32 [#allocation2], 4
      %s5148 = int_to_ptr.vmem [resolvable:$true] %s5147
      %5150 = dma.vmem_to_hbm [thread:$0]  %s5148, 32, %s3, [#allocation3]
    $region17: #{convnet_forward.3} parent=1 // pred_fallthru
      _
    // Predicated region
    $region18: #{convnet_forward.3} parent=1 // pred_check
      _
    $region19: #{convnet_forward.3} parent=1 // pred_check_branch
      %5152 = sbr.rel (0) target = $region21
    $region20: #{convnet_forward.3} parent=1 // pred_region
      %5153 = dma.done [#allocation3], 32
    $region21: #{convnet_forward.3} parent=1 // pred_fallthru
      _
    %5154 = vsyncpa [#allocation3], 1

// kernel: convnet_forward.2
$region0: #{convnet_forward.2}
  #allocation0 [shape = 'u32[]', space=smem, size = 0x4, offset = 0x4, fixed_abs, tag = 'smem constant byte address 0x4 - core index']
  #allocation1 [shape = 'u32[144,128]{1,0:T(1,128)}', space=vmem, size = 0x12000, scoped, tag = 'internal scratch']
  #allocation2 [shape = 'bf16[80,128]{1,0:T(16,128)(2,1)}', space=vmem, size = 0x5000, scoped, tag = 'scratch operand']
  #allocation3 [shape = 'bf16[56,1152]{1,0:T(8,128)(2,1)}', space=vmem, size = 0x1f800, scoped, tag = 'scratch operand']
  %s0 = inlined_call_operand.vmem [shape: bf16[2,224,128], index: 0, kind: input, shape index: {}]
  %s1 = inlined_call_operand.vmem [shape: bf16[128,128], index: 1, kind: input, shape index: {}]
  %s2 = inlined_call_operand.vmem [shape: f32[1,128], index: 2, kind: input, shape index: {}]
  %s3 = inlined_call_operand.vmem [shape: bf16[4,1152,128], index: 3, kind: input, shape index: {}]
  %s4 = inlined_call_operand.vmem [shape: f32[1,128], index: 4, kind: input, shape index: {}]
  %s5 = inlined_call_operand.vmem [shape: bf16[2,56,128], index: 5, kind: output, shape index: {}]
  %s6 = sld [smem:[#allocation0]]
  $region30: #{convnet_forward.2} parent=0
    _
  %s8 = ssub.s32 1, %s6
  %s9 = scalar_select 0, %s8, %s6
  // Predicated region
  $region2: #{convnet_forward.2} parent=0 // pred_check
    _
  $region3: #{convnet_forward.2} parent=0 // pred_check_branch
    %11 = sbr.rel (0) target = $region5
  $region4: #{convnet_forward.2} parent=0 // pred_region
    _
  $region5: #{convnet_forward.2} parent=0 // pred_fallthru
    _
  // Predicated region
  $region6: #{convnet_forward.2} parent=0 // pred_check
    _
  $region7: #{convnet_forward.2} parent=0 // pred_check_branch
    %13 = sbr.rel (0) target = $region9
  $region8: #{convnet_forward.2} parent=0 // pred_region
    _
  $region9: #{convnet_forward.2} parent=0 // pred_fallthru
    _
  // Predicated region
  $region10: #{convnet_forward.2} parent=0 // pred_check
    _
  $region11: #{convnet_forward.2} parent=0 // pred_check_branch
    %15 = sbr.rel (0) target = $region13
  $region12: #{convnet_forward.2} parent=0 // pred_region
    _
  $region13: #{convnet_forward.2} parent=0 // pred_fallthru
    _
  // Predicated region
  $region14: #{convnet_forward.2} parent=0 // pred_check
    _
  $region15: #{convnet_forward.2} parent=0 // pred_check_branch
    %17 = sbr.rel (0) target = $region17
  $region16: #{convnet_forward.2} parent=0 // pred_region
    _
  $region17: #{convnet_forward.2} parent=0 // pred_fallthru
    _
  // Predicated region
  $region18: #{convnet_forward.2} parent=0 // pred_check
    _
  $region19: #{convnet_forward.2} parent=0 // pred_check_branch
    %19 = sbr.rel (0) target = $region21
  $region20: #{convnet_forward.2} parent=0 // pred_region
    _
  $region21: #{convnet_forward.2} parent=0 // pred_fallthru
    _
  %21 = vst [vmem:[#allocation2] sm:$0xff] 0
  %22 = vst [vmem:[#allocation2 + $0x8] sm:$0xff] 0
  %23 = vst [vmem:[#allocation2 + $0x10] sm:$0xff] 0
  %24 = vst [vmem:[#allocation2 + $0x18] sm:$0xff] 0
  %25 = vst [vmem:[#allocation2 + $0x20] sm:$0xff] 0
  %v26 = vld [vmem:[%s2] sm:$0x1]
  %v27 = vld [vmem:[%s4] sm:$0x1]
  %v28 = vld [vmem:[%s1] sm:$0xf]
  %v29 = vld [vmem:[%s1 + $0x4] sm:$0xf]
  %v30 = vld [vmem:[%s1 + $0x8] sm:$0xf]
  %v31 = vld [vmem:[%s1 + $0xc] sm:$0xf]
  %v32 = vld [vmem:[%s1 + $0x10] sm:$0xf]
  %v33 = vld [vmem:[%s1 + $0x14] sm:$0xf]
  %v34 = vld [vmem:[%s1 + $0x18] sm:$0xf]
  %v35 = vld [vmem:[%s1 + $0x1c] sm:$0xf]
  %v36 = vld [vmem:[%s1 + $0x20] sm:$0xf]
  %v37 = vld [vmem:[%s1 + $0x24] sm:$0xf]
  %v38 = vld [vmem:[%s1 + $0x28] sm:$0xf]
  %v39 = vld [vmem:[%s1 + $0x2c] sm:$0xf]
  %v40 = vld [vmem:[%s1 + $0x30] sm:$0xf]
  %v41 = vld [vmem:[%s1 + $0x34] sm:$0xf]
  %v42 = vld [vmem:[%s1 + $0x38] sm:$0xf]
  %v43 = vld [vmem:[%s1 + $0x3c] sm:$0xf]
  %v44 = vlaneseq
  %v45 = vshrl.u32 %v44, 7
  %v46 = vadd.s32 %v45, 8
  %v47 = vadd.s32 %v45, 16
  %v48 = vadd.s32 %v45, 24
  %v49 = vadd.s32 %v45, 32
  %v50 = vadd.s32 %v45, 40
  %v51 = vadd.s32 %v45, 48
  %vm52 = vcmp.lt.s32.totalorder %v45, 0
  %v53 = vsub.s32 0, %v45
  %v54 = vsel %vm52, %v53, %v45
  %v55 = vshrl.u32 %v54, 3
  %v56 = vand.u32 %v54, 7
  %v57 = vsub.s32 0, %v56
  %v58 = vsel %vm52, %v57, %v56
  %vm59 = vcmp.lt.s32.totalorder %v46, 0
  %v60 = vsub.s32 0, %v46
  %v61 = vsel %vm59, %v60, %v46
  %v62 = vshrl.u32 %v61, 3
  %v63 = vand.u32 %v61, 7
  %v64 = vsub.s32 0, %v63
  %v65 = vsel %vm59, %v64, %v63
  %vm66 = vcmp.lt.s32.totalorder %v47, 0
  %v67 = vsub.s32 0, %v47
  %v68 = vsel %vm66, %v67, %v47
  %v69 = vshrl.u32 %v68, 3
  %v70 = vand.u32 %v68, 7
  %v71 = vsub.s32 0, %v70
  %v72 = vsel %vm66, %v71, %v70
  %vm73 = vcmp.lt.s32.totalorder %v48, 0
  %v74 = vsub.s32 0, %v48
  %v75 = vsel %vm73, %v74, %v48
  %v76 = vshrl.u32 %v75, 3
  %v77 = vand.u32 %v75, 7
  %v78 = vsub.s32 0, %v77
  %v79 = vsel %vm73, %v78, %v77
  %vm80 = vcmp.lt.s32.totalorder %v49, 0
  %v81 = vsub.s32 0, %v49
  %v82 = vsel %vm80, %v81, %v49
  %v83 = vshrl.u32 %v82, 3
  %v84 = vand.u32 %v82, 7
  %v85 = vsub.s32 0, %v84
  %v86 = vsel %vm80, %v85, %v84
  %vm87 = vcmp.lt.s32.totalorder %v50, 0
  %v88 = vsub.s32 0, %v50
  %v89 = vsel %vm87, %v88, %v50
  %v90 = vshrl.u32 %v89, 3
  %v91 = vand.u32 %v89, 7
  %v92 = vsub.s32 0, %v91
  %v93 = vsel %vm87, %v92, %v91
  %vm94 = vcmp.lt.s32.totalorder %v51, 0
  %v95 = vsub.s32 0, %v51
  %v96 = vsel %vm94, %v95, %v51
  %v97 = vshrl.u32 %v96, 3
  %v98 = vand.u32 %v96, 7
  %v99 = vsub.s32 0, %v98
  %v100 = vsel %vm94, %v99, %v98
  %vm101 = vcmp.ne.s32.totalorder %v58, 0
  %vm102 = vcmp.ne.s32.totalorder %v65, 0
  %vm103 = vcmp.ne.s32.totalorder %v72, 0
  %vm104 = vcmp.ne.s32.totalorder %v79, 0
  %vm105 = vcmp.ne.s32.totalorder %v86, 0
  %vm106 = vcmp.ne.s32.totalorder %v93, 0
  %vm107 = vcmp.ne.s32.totalorder %v100, 0
  %vm108 = vcmp.lt.s32.totalorder %v58, 0
  %vm109 = vcmp.lt.s32.totalorder %v65, 0
  %vm110 = vcmp.lt.s32.totalorder %v72, 0
  %vm111 = vcmp.lt.s32.totalorder %v79, 0
  %vm112 = vcmp.lt.s32.totalorder %v86, 0
  %vm113 = vcmp.lt.s32.totalorder %v93, 0
  %vm114 = vcmp.lt.s32.totalorder %v100, 0
  %vm115 = vmand %vm108, %vm101
  %vm116 = vmand %vm109, %vm102
  %vm117 = vmand %vm110, %vm103
  %vm118 = vmand %vm111, %vm104
  %vm119 = vmand %vm112, %vm105
  %vm120 = vmand %vm113, %vm106
  %vm121 = vmand %vm114, %vm107
  %v122 = vadd.s32 %v58, 8
  %v123 = vadd.s32 %v65, 8
  %v124 = vadd.s32 %v72, 8
  %v125 = vadd.s32 %v79, 8
  %v126 = vadd.s32 %v86, 8
  %v127 = vadd.s32 %v93, 8
  %v128 = vadd.s32 %v100, 8
  %v129 = vsel %vm115, %v122, %v58
  %v130 = vsel %vm116, %v123, %v65
  %v131 = vsel %vm117, %v124, %v72
  %v132 = vsel %vm118, %v125, %v79
  %v133 = vsel %vm119, %v126, %v86
  %v134 = vsel %vm120, %v127, %v93
  %v135 = vsel %vm121, %v128, %v100
  %vm136 = vcmp.lt.s32.totalorder %v129, 7
  %vm137 = vcmp.lt.s32.totalorder %v130, 7
  %vm138 = vcmp.lt.s32.totalorder %v131, 7
  %vm139 = vcmp.lt.s32.totalorder %v132, 7
  %vm140 = vcmp.lt.s32.totalorder %v133, 7
  %vm141 = vcmp.lt.s32.totalorder %v134, 7
  %vm142 = vcmp.lt.s32.totalorder %v135, 7
  %v143 = vld [vmem:[%s0] sm:$0xf]
  %v144 = vld [vmem:[%s0 + $0x4] sm:$0xf]
  %v145 = vld [vmem:[%s0 + $0x8] sm:$0xf]
  %v146 = vld [vmem:[%s0 + $0xc] sm:$0xf]
  %v147 = vld [vmem:[%s0 + $0x10] sm:$0xf]
  %v148 = vld [vmem:[%s0 + $0x14] sm:$0xf]
  %v149 = vld [vmem:[%s0 + $0x18] sm:$0xf]
  %v150 = vld [vmem:[%s0 + $0x1c] sm:$0xf]
  %v151 = vld [vmem:[%s0 + $0x20] sm:$0xf]
  %v152 = vld [vmem:[%s0 + $0x24] sm:$0xf]
  %v153 = vld [vmem:[%s0 + $0x28] sm:$0xf]
  %v154 = vld [vmem:[%s0 + $0x2c] sm:$0xf]
  %v155 = vld [vmem:[%s0 + $0x30] sm:$0xf]
  %v156 = vld [vmem:[%s0 + $0x34] sm:$0xf]
  %v157 = vld [vmem:[%s0 + $0x38] sm:$0xf]
  %v158 = vld [vmem:[%s0 + $0x3c] sm:$0xf]
  %v159 = vld [vmem:[%s0 + $0x40] sm:$0xf]
  %v160 = vld [vmem:[%s0 + $0x44] sm:$0xf]
  %v161 = vld [vmem:[%s0 + $0x48] sm:$0xf]
  %v162 = vld [vmem:[%s0 + $0x4c] sm:$0xf]
  %v163 = vld [vmem:[%s0 + $0x50] sm:$0xf]
  %v164 = vld [vmem:[%s0 + $0x54] sm:$0xf]
  %v165 = vld [vmem:[%s0 + $0x58] sm:$0xf]
  %v166 = vld [vmem:[%s0 + $0x5c] sm:$0xf]
  %v167 = vld [vmem:[%s0 + $0x60] sm:$0xf]
  %v168 = vld [vmem:[%s0 + $0x64] sm:$0xf]
  %v169 = vld [vmem:[%s0 + $0x68] sm:$0xf]
  %v170 = vld [vmem:[%s0 + $0x6c] sm:$0xf]
  %v199 = vunpack.c.l.b16 %v143
  %v200 = vunpack.c.l.b16 %v144
  %v201 = vunpack.c.l.b16 %v145
  %v202 = vunpack.c.l.b16 %v146
  %v203 = vunpack.c.l.b16 %v147
  %v204 = vunpack.c.l.b16 %v148
  %v205 = vunpack.c.l.b16 %v149
  %v206 = vunpack.c.l.b16 %v150
  %v207 = vunpack.c.l.b16 %v151
  %v208 = vunpack.c.l.b16 %v152
  %v209 = vunpack.c.l.b16 %v153
  %v210 = vunpack.c.l.b16 %v154
  %v211 = vunpack.c.l.b16 %v155
  %v212 = vunpack.c.l.b16 %v156
  %v213 = vunpack.c.l.b16 %v157
  %v214 = vunpack.c.l.b16 %v158
  %v215 = vunpack.c.l.b16 %v159
  %v216 = vunpack.c.l.b16 %v160
  %v217 = vunpack.c.l.b16 %v161
  %v218 = vunpack.c.l.b16 %v162
  %v219 = vunpack.c.l.b16 %v163
  %v220 = vunpack.c.l.b16 %v164
  %v221 = vunpack.c.l.b16 %v165
  %v222 = vunpack.c.l.b16 %v166
  %v223 = vunpack.c.l.b16 %v167
  %v224 = vunpack.c.l.b16 %v168
  %v225 = vunpack.c.l.b16 %v169
  %v226 = vunpack.c.l.b16 %v170
  %v227 = vpack.c.b16 %v200, %v199
  %v228 = vpack.c.b16 %v202, %v201
  %v229 = vpack.c.b16 %v204, %v203
  %v230 = vpack.c.b16 %v206, %v205
  %v231 = vpack.c.b16 %v208, %v207
  %v232 = vpack.c.b16 %v210, %v209
  %v233 = vpack.c.b16 %v212, %v211
  %v234 = vpack.c.b16 %v214, %v213
  %v235 = vpack.c.b16 %v216, %v215
  %v236 = vpack.c.b16 %v218, %v217
  %v237 = vpack.c.b16 %v220, %v219
  %v238 = vpack.c.b16 %v222, %v221
  %v239 = vpack.c.b16 %v224, %v223
  %v240 = vpack.c.b16 %v226, %v225
  %v271 = vunpack.c.l.b16 %v28
  %v272 = vunpack.c.l.b16 %v29
  %v273 = vunpack.c.l.b16 %v30
  %v274 = vunpack.c.l.b16 %v31
  %v275 = vunpack.c.l.b16 %v32
  %v276 = vunpack.c.l.b16 %v33
  %v277 = vunpack.c.l.b16 %v34
  %v278 = vunpack.c.l.b16 %v35
  %v279 = vunpack.c.l.b16 %v36
  %v280 = vunpack.c.l.b16 %v37
  %v281 = vunpack.c.l.b16 %v38
  %v282 = vunpack.c.l.b16 %v39
  %v283 = vunpack.c.l.b16 %v40
  %v284 = vunpack.c.l.b16 %v41
  %v285 = vunpack.c.l.b16 %v42
  %v286 = vunpack.c.l.b16 %v43
  %v287 = vpack.c.b16 %v272, %v271
  %v288 = vpack.c.b16 %v274, %v273
  %v289 = vpack.c.b16 %v276, %v275
  %v290 = vpack.c.b16 %v278, %v277
  %v291 = vpack.c.b16 %v280, %v279
  %v292 = vpack.c.b16 %v282, %v281
  %v293 = vpack.c.b16 %v284, %v283
  %v294 = vpack.c.b16 %v286, %v285
  %303 = vmatprep.subr.bf16.mxu0 0
  %304 = vmatpush1.bf16.msra.mxu0 %v287
  %305 = vmatprep.subr.bf16.mxu0 0
  %306 = vmatpush1.bf16.msra.mxu0 %v288
  %307 = vmatprep.subr.bf16.mxu0 0
  %308 = vmatpush1.bf16.msra.mxu0 %v289
  %309 = vmatprep.subr.bf16.mxu0 0
  %310 = vmatpush1.bf16.msra.mxu0 %v290
  %311 = vmatprep.subr.bf16.mxu0 0
  %312 = vmatpush1.bf16.msra.mxu0 %v291
  %313 = vmatprep.subr.bf16.mxu0 0
  %314 = vmatpush1.bf16.msra.mxu0 %v292
  %315 = vmatprep.subr.bf16.mxu0 0
  %316 = vmatpush1.bf16.msra.mxu0 %v293
  %317 = vmatprep.subr.bf16.mxu0 0
  %318 = vmatpush1.bf16.msra.mxu0 %v294
  %319 = vmatprep.subr.bf16.mxu0 0
  %320 = vmatpush1.bf16.msra.mxu0 0
  %321 = vmatprep.subr.bf16.mxu0 0
  %322 = vmatpush1.bf16.msra.mxu0 0
  %323 = vmatprep.subr.bf16.mxu0 0
  %324 = vmatpush1.bf16.msra.mxu0 0
  %325 = vmatprep.subr.bf16.mxu0 0
  %326 = vmatpush1.bf16.msra.mxu0 0
  %327 = vmatprep.subr.bf16.mxu0 0
  %328 = vmatpush1.bf16.msra.mxu0 0
  %329 = vmatprep.subr.bf16.mxu0 0
  %330 = vmatpush1.bf16.msra.mxu0 0
  %331 = vmatprep.subr.bf16.mxu0 0
  %332 = vmatpush1.bf16.msra.mxu0 0
  %333 = vmatprep.subr.bf16.mxu0 0
  %334 = vmatpush1.bf16.msra.mxu0 0
  %335 = vmatprep.mubr.bf16.mxu0 0
  %336 = vmatmul.mubr.bf16.gmra.mrb[0].mxu0 %v227
  %v337 = vpop.f32.mrb[0].mxu0
  %v338 = vadd.f32 0.0, %v337
  %v339 = vpop.f32.mrb[0].mxu0
  %v340 = vpop.f32.mrb[0].mxu0
  %v341 = vadd.f32 0.0, %v340
  %v342 = vpop.f32.mrb[0].mxu0
  %343 = vmatprep.mubr.bf16.mxu0 0
  %344 = vmatmul.mubr.bf16.gmra.mrb[0].mxu0 %v228
  %v345 = vpop.f32.mrb[0].mxu0
  %v346 = vadd.f32 0.0, %v345
  %v347 = vpop.f32.mrb[0].mxu0
  %v348 = vpop.f32.mrb[0].mxu0
  %v349 = vadd.f32 0.0, %v348
  %v350 = vpop.f32.mrb[0].mxu0
  %351 = vmatprep.mubr.bf16.mxu0 0
  %352 = vmatmul.mubr.bf16.gmra.mrb[0].mxu0 %v229
  %v353 = vpop.f32.mrb[0].mxu0
  %v354 = vadd.f32 0.0, %v353
  %v355 = vpop.f32.mrb[0].mxu0
  %v356 = vpop.f32.mrb[0].mxu0
  %v357 = vadd.f32 0.0, %v356
  %v358 = vpop.f32.mrb[0].mxu0
  %359 = vmatprep.mubr.bf16.mxu0 0
  %360 = vmatmul.mubr.bf16.gmra.mrb[0].mxu0 %v230
  %v361 = vpop.f32.mrb[0].mxu0
  %v362 = vadd.f32 0.0, %v361
  %v363 = vpop.f32.mrb[0].mxu0
  %v364 = vpop.f32.mrb[0].mxu0
  %v365 = vadd.f32 0.0, %v364
  %v366 = vpop.f32.mrb[0].mxu0
  %367 = vmatprep.mubr.bf16.mxu0 0
  %368 = vmatmul.mubr.bf16.gmra.mrb[0].mxu0 %v231
  %v369 = vpop.f32.mrb[0].mxu0
  %v370 = vadd.f32 0.0, %v369
  %v371 = vpop.f32.mrb[0].mxu0
  %v372 = vpop.f32.mrb[0].mxu0
  %v373 = vadd.f32 0.0, %v372
  %v374 = vpop.f32.mrb[0].mxu0
  %375 = vmatprep.mubr.bf16.mxu0 0
  %376 = vmatmul.mubr.bf16.gmra.mrb[0].mxu0 %v232
  %v377 = vpop.f32.mrb[0].mxu0
  %v378 = vadd.f32 0.0, %v377
  %v379 = vpop.f32.mrb[0].mxu0
  %v380 = vpop.f32.mrb[0].mxu0
  %v381 = vadd.f32 0.0, %v380
  %v382 = vpop.f32.mrb[0].mxu0
  %383 = vmatprep.mubr.bf16.mxu0 0
  %384 = vmatmul.mubr.bf16.gmra.mrb[0].mxu0 %v233
  %v385 = vpop.f32.mrb[0].mxu0
  %v386 = vadd.f32 0.0, %v385
  %v387 = vpop.f32.mrb[0].mxu0
  %v388 = vpop.f32.mrb[0].mxu0
  %v389 = vadd.f32 0.0, %v388
  %v390 = vpop.f32.mrb[0].mxu0
  %391 = vmatprep.mubr.bf16.mxu0 0
  %392 = vmatmul.mubr.bf16.gmra.mrb[0].mxu0 %v234
  %v393 = vpop.f32.mrb[0].mxu0
  %v394 = vadd.f32 0.0, %v393
  %v395 = vpop.f32.mrb[0].mxu0
  %v396 = vpop.f32.mrb[0].mxu0
  %v397 = vadd.f32 0.0, %v396
  %v398 = vpop.f32.mrb[0].mxu0
  %399 = vmatprep.mubr.bf16.mxu0 0
  %400 = vmatmul.mubr.bf16.gmra.mrb[0].mxu0 %v235
  %v401 = vpop.f32.mrb[0].mxu0
  %v402 = vadd.f32 0.0, %v401
  %v403 = vpop.f32.mrb[0].mxu0
  %v404 = vpop.f32.mrb[0].mxu0
  %v405 = vadd.f32 0.0, %v404
  %v406 = vpop.f32.mrb[0].mxu0
  %407 = vmatprep.mubr.bf16.mxu0 0
  %408 = vmatmul.mubr.bf16.gmra.mrb[0].mxu0 %v236
  %v409 = vpop.f32.mrb[0].mxu0
  %v410 = vadd.f32 0.0, %v409
  %v411 = vpop.f32.mrb[0].mxu0
  %v412 = vpop.f32.mrb[0].mxu0
  %v413 = vadd.f32 0.0, %v412
  %v414 = vpop.f32.mrb[0].mxu0
  %415 = vmatprep.mubr.bf16.mxu0 0
  %416 = vmatmul.mubr.bf16.gmra.mrb[0].mxu0 %v237
  %v417 = vpop.f32.mrb[0].mxu0
  %v418 = vadd.f32 0.0, %v417
  %v419 = vpop.f32.mrb[0].mxu0
  %v420 = vpop.f32.mrb[0].mxu0
  %v421 = vadd.f32 0.0, %v420
  %v422 = vpop.f32.mrb[0].mxu0
  %423 = vmatprep.mubr.bf16.mxu0 0
  %424 = vmatmul.mubr.bf16.gmra.mrb[0].mxu0 %v238
  %v425 = vpop.f32.mrb[0].mxu0
  %v426 = vadd.f32 0.0, %v425
  %v427 = vpop.f32.mrb[0].mxu0
  %v428 = vpop.f32.mrb[0].mxu0
  %v429 = vadd.f32 0.0, %v428
  %v430 = vpop.f32.mrb[0].mxu0
  %431 = vmatprep.mubr.bf16.mxu0 0
  %432 = vmatmul.mubr.bf16.gmra.mrb[0].mxu0 %v239
  %v433 = vpop.f32.mrb[0].mxu0
  %v434 = vadd.f32 0.0, %v433
  %v435 = vpop.f32.mrb[0].mxu0
  %v436 = vpop.f32.mrb[0].mxu0
  %v437 = vadd.f32 0.0, %v436
  %v438 = vpop.f32.mrb[0].mxu0
  %439 = vmatprep.mubr.bf16.mxu0 0
  %440 = vmatmul.mubr.bf16.gmra.mrb[0].mxu0 %v240
  %v441 = vpop.f32.mrb[0].mxu0
  %v442 = vadd.f32 0.0, %v441
  %v443 = vpop.f32.mrb[0].mxu0
  %v444 = vpop.f32.mrb[0].mxu0
  %v445 = vadd.f32 0.0, %v444
  %v446 = vpop.f32.mrb[0].mxu0
  %447 = vdwg.mxu0
  %v448 = vmax.f32 %v338, %v365
  %v449 = vmax.f32 %v341, %v370
  %v450 = vmax.f32 %v346, %v373
  %v451 = vmax.f32 %v349, %v378
  %v452 = vmax.f32 %v354, %v381
  %v453 = vmax.f32 %v357, %v386
  %v454 = vmax.f32 %v362, %v389
  %v455 = vmax.f32 %v394, %v421
  %v456 = vmax.f32 %v397, %v426
  %v457 = vmax.f32 %v402, %v429
  %v458 = vmax.f32 %v405, %v434
  %v459 = vmax.f32 %v410, %v437
  %v460 = vmax.f32 %v413, %v442
  %v461 = vmax.f32 %v418, %v445
  %v462 = vmax.f32 %v448, %v455
  %v463 = vmax.f32 %v449, %v456
  %v464 = vmax.f32 %v450, %v457
  %v465 = vmax.f32 %v451, %v458
  %v466 = vmax.f32 %v452, %v459
  %v467 = vmax.f32 %v453, %v460
  %v468 = vmax.f32 %v454, %v461
  %v470 = vlaneseq
  %v471 = vshrl.u32 %v470, 7
  %v472 = vsub.s32 0, %v471
  %v473 = vrot.slane %v26, %v472
  %v475 = vadd.f32 %v462, %v473
  %v476 = vadd.f32 %v463, %v473
  %v477 = vadd.f32 %v464, %v473
  %v478 = vadd.f32 %v465, %v473
  %v479 = vadd.f32 %v466, %v473
  %v480 = vadd.f32 %v467, %v473
  %v481 = vadd.f32 %v468, %v473
  %v482 = vmax.f32 %v475, 0.0
  %v483 = vmax.f32 %v476, 0.0
  %v484 = vmax.f32 %v477, 0.0
  %v485 = vmax.f32 %v478, 0.0
  %v486 = vmax.f32 %v479, 0.0
  %v487 = vmax.f32 %v480, 0.0
  %v488 = vmax.f32 %v481, 0.0
  %v489 = vsel %vm136, %v482, 0.0
  %v490 = vsel %vm137, %v483, 0.0
  %v491 = vsel %vm138, %v484, 0.0
  %v492 = vsel %vm139, %v485, 0.0
  %v493 = vsel %vm140, %v486, 0.0
  %v494 = vsel %vm141, %v487, 0.0
  %v495 = vsel %vm142, %v488, 0.0
  %v496 = vpack.c.bf16 %v490, %v489
  %v497 = vpack.c.bf16 %v492, %v491
  %v498 = vpack.c.bf16 %v494, %v493
  %v499 = vpack.c.bf16 %v495, %v495
  %vm500 = vsmask.f32 4352
  %v502 = vshrl.u32 %v496, 16
  %v504 = vrot.slane %v502, 3
  %v505 = vshll.u32 %v496, 16
  %v507 = vrot.slane %v505, 4
  %v508 = vor.u32 %v504, %v507
  %v510 = vshrl.u32 %v497, 16
  %v512 = vrot.slane %v510, 3
  %v513 = vshll.u32 %v497, 16
  %v515 = vrot.slane %v513, 4
  %v516 = vor.u32 %v512, %v515
  %v517 = vsel %vm500, %v508, %v516
  %v519 = vshrl.u32 %v498, 16
  %v521 = vrot.slane %v519, 3
  %v522 = vshll.u32 %v498, 16
  %v524 = vrot.slane %v522, 4
  %v525 = vor.u32 %v521, %v524
  %v526 = vsel %vm500, %v516, %v525
  %v528 = vshrl.u32 %v499, 16
  %v530 = vrot.slane %v528, 3
  %v531 = vshll.u32 %v499, 16
  %v533 = vrot.slane %v531, 4
  %v534 = vor.u32 %v530, %v533
  %v535 = vsel %vm500, %v525, %v534
  %vm541 = vcmask 1047556
  %vm542 = vsmask.f32 7954
  %vm543 = vmand %vm541, %vm542
  %v544 = vld [vmem:[#allocation2] sm:$0xf0]
  %v545 = vsel %vm543, %v508, %v544
  %546 = vst [vmem:[#allocation2] sm:$0xf0] %v545
  %547 = vst [vmem:[#allocation2 + $0x8] sm:$0xff] %v517
  %548 = vst [vmem:[#allocation2 + $0x10] sm:$0xff] %v526
  %549 = vst [vmem:[#allocation2 + $0x18] sm:$0xff] %v535
  %vm550 = vcmask 1040384
  %vm551 = vsmask.f32 256
  %vm552 = vmand %vm550, %vm551
  %v553 = vld [vmem:[#allocation2 + $0x20] sm:$0x1]
  %v554 = vsel %vm552, %v530, %v553
  %555 = vst [vmem:[#allocation2 + $0x20] sm:$0x1] %v554
  %v556 = vld [vmem:[#allocation2] sm:$0xff]
  %v557 = vld [vmem:[#allocation2 + $0x8] sm:$0xff]
  %v558 = vld [vmem:[#allocation2 + $0x10] sm:$0xff]
  %v559 = vld [vmem:[#allocation2 + $0x18] sm:$0xf]
  %v564 = vunpack.c.l.b16 %v556
  %v565 = vunpack.c.h.b16 %v556
  %v566 = vunpack.c.l.b16 %v557
  %v567 = vunpack.c.h.b16 %v557
  %v568 = vunpack.c.l.b16 %v558
  %v569 = vunpack.c.h.b16 %v558
  %v570 = vunpack.c.l.b16 %v559
  %v571 = vpack.c.b16 %v564, %v564
  %v572 = vpack.c.b16 %v565, %v565
  %v573 = vpack.c.b16 %v566, %v566
  %v574 = vpack.c.b16 %v567, %v567
  %v575 = vpack.c.b16 %v568, %v568
  %v576 = vpack.c.b16 %v569, %v569
  %v577 = vpack.c.b16 %v570, %v570
  %585 = vst [vmem:[#allocation3] sm:$0xf] %v571
  %586 = vst [vmem:[#allocation3 + $0x24] sm:$0xf] %v572
  %587 = vst [vmem:[#allocation3 + $0x48] sm:$0xf] %v573
  %588 = vst [vmem:[#allocation3 + $0x6c] sm:$0xf] %v574
  %589 = vst [vmem:[#allocation3 + $0x90] sm:$0xf] %v575
  %590 = vst [vmem:[#allocation3 + $0xb4] sm:$0xf] %v576
  %591 = vst [vmem:[#allocation3 + $0xd8] sm:$0xf] %v577
  %v592 = vld [vmem:[#allocation2] sm:$0xff]
  %v593 = vld [vmem:[#allocation2 + $0x8] sm:$0xff]
  %v594 = vld [vmem:[#allocation2 + $0x10] sm:$0xff]
  %v595 = vld [vmem:[#allocation2 + $0x18] sm:$0x1f]
  %v600 = vunpack.c.l.b16 %v592
  %v601 = vunpack.c.h.b16 %v592
  %v602 = vunpack.c.l.b16 %v593
  %v603 = vunpack.c.h.b16 %v593
  %v604 = vunpack.c.l.b16 %v594
  %v605 = vunpack.c.h.b16 %v594
  %v606 = vunpack.c.l.b16 %v595
  %v607 = vunpack.c.h.b16 %v595
  %v608 = vpack.c.b16 %v600, %v600
  %v609 = vpack.c.b16 %v601, %v601
  %v610 = vpack.c.b16 %v602, %v602
  %v611 = vpack.c.b16 %v603, %v603
  %v612 = vpack.c.b16 %v604, %v604
  %v613 = vpack.c.b16 %v605, %v605
  %v614 = vpack.c.b16 %v606, %v606
  %v615 = vpack.c.b16 %v607, %v607
  %vm616 = vsmask.f32 3328
  %vm617 = vsmask.f32 7440
  %vm618 = vmor %vm616, %vm617
  %v620 = vshrl.u32 %v608, 16
  %v622 = vrot.slane %v620, 4
  %v623 = vshll.u32 %v608, 16
  %v625 = vrot.slane %v623, 5
  %v626 = vor.u32 %v622, %v625
  %v627 = vrot.slane %v626, 4
  %v629 = vshll.u32 %v609, 16
  %v631 = vrot.slane %v629, 5
  %v632 = vsel %vm618, %v627, %v631
  %v633 = vshrl.u32 %v609, 16
  %v635 = vrot.slane %v633, 4
  %v636 = vor.u32 %v635, %v631
  %v637 = vrot.slane %v636, 4
  %v639 = vshll.u32 %v610, 16
  %v641 = vrot.slane %v639, 5
  %v642 = vsel %vm618, %v637, %v641
  %v643 = vshrl.u32 %v610, 16
  %v645 = vrot.slane %v643, 4
  %v646 = vor.u32 %v645, %v641
  %v647 = vrot.slane %v646, 4
  %v649 = vshll.u32 %v611, 16
  %v651 = vrot.slane %v649, 5
  %v652 = vsel %vm618, %v647, %v651
  %v653 = vshrl.u32 %v611, 16
  %v655 = vrot.slane %v653, 4
  %v656 = vor.u32 %v655, %v651
  %v657 = vrot.slane %v656, 4
  %v659 = vshll.u32 %v612, 16
  %v661 = vrot.slane %v659, 5
  %v662 = vsel %vm618, %v657, %v661
  %v663 = vshrl.u32 %v612, 16
  %v665 = vrot.slane %v663, 4
  %v666 = vor.u32 %v665, %v661
  %v667 = vrot.slane %v666, 4
  %v669 = vshll.u32 %v613, 16
  %v671 = vrot.slane %v669, 5
  %v672 = vsel %vm618, %v667, %v671
  %v673 = vshrl.u32 %v613, 16
  %v675 = vrot.slane %v673, 4
  %v676 = vor.u32 %v675, %v671
  %v677 = vrot.slane %v676, 4
  %v679 = vshll.u32 %v614, 16
  %v681 = vrot.slane %v679, 5
  %v682 = vsel %vm618, %v677, %v681
  %v683 = vshrl.u32 %v614, 16
  %v685 = vrot.slane %v683, 4
  %v686 = vor.u32 %v685, %v681
  %v687 = vrot.slane %v686, 4
  %v689 = vshll.u32 %v615, 16
  %v691 = vrot.slane %v689, 5
  %v692 = vsel %vm618, %v687, %v691
  %700 = vst [vmem:[#allocation3 + $0x4] sm:$0xf] %v632
  %701 = vst [vmem:[#allocation3 + $0x28] sm:$0xf] %v642
  %702 = vst [vmem:[#allocation3 + $0x4c] sm:$0xf] %v652
  %703 = vst [vmem:[#allocation3 + $0x70] sm:$0xf] %v662
  %704 = vst [vmem:[#allocation3 + $0x94] sm:$0xf] %v672
  %705 = vst [vmem:[#allocation3 + $0xb8] sm:$0xf] %v682
  %706 = vst [vmem:[#allocation3 + $0xdc] sm:$0xf] %v692
  %v707 = vld [vmem:[#allocation2] sm:$0xfe]
  %v708 = vld [vmem:[#allocation2 + $0x8] sm:$0xff]
  %v709 = vld [vmem:[#allocation2 + $0x10] sm:$0xff]
  %v710 = vld [vmem:[#allocation2 + $0x18] sm:$0x1f]
  %v715 = vunpack.c.l.b16 %v707
  %v716 = vunpack.c.h.b16 %v707
  %v717 = vunpack.c.l.b16 %v708
  %v718 = vunpack.c.h.b16 %v708
  %v719 = vunpack.c.l.b16 %v709
  %v720 = vunpack.c.h.b16 %v709
  %v721 = vunpack.c.l.b16 %v710
  %v722 = vunpack.c.h.b16 %v710
  %v723 = vpack.c.b16 %v715, %v715
  %v724 = vpack.c.b16 %v716, %v716
  %v725 = vpack.c.b16 %v717, %v717
  %v726 = vpack.c.b16 %v718, %v718
  %v727 = vpack.c.b16 %v719, %v719
  %v728 = vpack.c.b16 %v720, %v720
  %v729 = vpack.c.b16 %v721, %v721
  %v730 = vpack.c.b16 %v722, %v722
  %vm731 = vcmask 1042432
  %vm732 = vcmask 1046532
  %vm733 = vmor %vm731, %vm732
  %v734 = vrot.slane %v723, 5
  %v735 = vrot.slane %v734, 4
  %v736 = vrot.slane %v724, 5
  %v737 = vsel %vm733, %v735, %v736
  %v738 = vrot.slane %v736, 4
  %v739 = vrot.slane %v725, 5
  %v740 = vsel %vm733, %v738, %v739
  %v741 = vrot.slane %v739, 4
  %v742 = vrot.slane %v726, 5
  %v743 = vsel %vm733, %v741, %v742
  %v744 = vrot.slane %v742, 4
  %v745 = vrot.slane %v727, 5
  %v746 = vsel %vm733, %v744, %v745
  %v747 = vrot.slane %v745, 4
  %v748 = vrot.slane %v728, 5
  %v749 = vsel %vm733, %v747, %v748
  %v750 = vrot.slane %v748, 4
  %v751 = vrot.slane %v729, 5
  %v752 = vsel %vm733, %v750, %v751
  %v753 = vrot.slane %v751, 4
  %v754 = vrot.slane %v730, 5
  %v755 = vsel %vm733, %v753, %v754
  %763 = vst [vmem:[#allocation3 + $0x8] sm:$0xf] %v737
  %764 = vst [vmem:[#allocation3 + $0x2c] sm:$0xf] %v740
  %765 = vst [vmem:[#allocation3 + $0x50] sm:$0xf] %v743
  %766 = vst [vmem:[#allocation3 + $0x74] sm:$0xf] %v746
  %767 = vst [vmem:[#allocation3 + $0x98] sm:$0xf] %v749
  %768 = vst [vmem:[#allocation3 + $0xbc] sm:$0xf] %v752
  %769 = vst [vmem:[#allocation3 + $0xe0] sm:$0xf] %v755
  %v770 = vld [vmem:[#allocation2] sm:$0xf0]
  %v771 = vld [vmem:[#allocation2 + $0x8] sm:$0xff]
  %v772 = vld [vmem:[#allocation2 + $0x10] sm:$0xff]
  %v773 = vld [vmem:[#allocation2 + $0x18] sm:$0xff]
  %v778 = vunpack.c.h.b16 %v770
  %v779 = vunpack.c.l.b16 %v771
  %v780 = vunpack.c.h.b16 %v771
  %v781 = vunpack.c.l.b16 %v772
  %v782 = vunpack.c.h.b16 %v772
  %v783 = vunpack.c.l.b16 %v773
  %v784 = vunpack.c.h.b16 %v773
  %v785 = vpack.c.b16 %v778, %v778
  %v786 = vpack.c.b16 %v779, %v779
  %v787 = vpack.c.b16 %v780, %v780
  %v788 = vpack.c.b16 %v781, %v781
  %v789 = vpack.c.b16 %v782, %v782
  %v790 = vpack.c.b16 %v783, %v783
  %v791 = vpack.c.b16 %v784, %v784
  %799 = vst [vmem:[#allocation3 + $0xc] sm:$0xf] %v785
  %800 = vst [vmem:[#allocation3 + $0x30] sm:$0xf] %v786
  %801 = vst [vmem:[#allocation3 + $0x54] sm:$0xf] %v787
  %802 = vst [vmem:[#allocation3 + $0x78] sm:$0xf] %v788
  %803 = vst [vmem:[#allocation3 + $0x9c] sm:$0xf] %v789
  %804 = vst [vmem:[#allocation3 + $0xc0] sm:$0xf] %v790
  %805 = vst [vmem:[#allocation3 + $0xe4] sm:$0xf] %v791
  %v806 = vld [vmem:[#allocation2] sm:$0xf0]
  %v807 = vld [vmem:[#allocation2 + $0x8] sm:$0xff]
  %v808 = vld [vmem:[#allocation2 + $0x10] sm:$0xff]
  %v809 = vld [vmem:[#allocation2 + $0x18] sm:$0xff]
  %v810 = vld [vmem:[#allocation2 + $0x20] sm:$0x1]
  %v816 = vunpack.c.h.b16 %v806
  %v817 = vunpack.c.l.b16 %v807
  %v818 = vunpack.c.h.b16 %v807
  %v819 = vunpack.c.l.b16 %v808
  %v820 = vunpack.c.h.b16 %v808
  %v821 = vunpack.c.l.b16 %v809
  %v822 = vunpack.c.h.b16 %v809
  %v823 = vunpack.c.l.b16 %v810
  %v824 = vpack.c.b16 %v816, %v816
  %v825 = vpack.c.b16 %v817, %v817
  %v826 = vpack.c.b16 %v818, %v818
  %v827 = vpack.c.b16 %v819, %v819
  %v828 = vpack.c.b16 %v820, %v820
  %v829 = vpack.c.b16 %v821, %v821
  %v830 = vpack.c.b16 %v822, %v822
  %v831 = vpack.c.b16 %v823, %v823
  %v833 = vshrl.u32 %v824, 16
  %v835 = vrot.slane %v833, 4
  %v836 = vshll.u32 %v824, 16
  %v838 = vrot.slane %v836, 5
  %v839 = vor.u32 %v835, %v838
  %v840 = vrot.slane %v839, 4
  %v842 = vshll.u32 %v825, 16
  %v844 = vrot.slane %v842, 5
  %v845 = vsel %vm618, %v840, %v844
  %v846 = vshrl.u32 %v825, 16
  %v848 = vrot.slane %v846, 4
  %v849 = vor.u32 %v848, %v844
  %v850 = vrot.slane %v849, 4
  %v852 = vshll.u32 %v826, 16
  %v854 = vrot.slane %v852, 5
  %v855 = vsel %vm618, %v850, %v854
  %v856 = vshrl.u32 %v826, 16
  %v858 = vrot.slane %v856, 4
  %v859 = vor.u32 %v858, %v854
  %v860 = vrot.slane %v859, 4
  %v862 = vshll.u32 %v827, 16
  %v864 = vrot.slane %v862, 5
  %v865 = vsel %vm618, %v860, %v864
  %v866 = vshrl.u32 %v827, 16
  %v868 = vrot.slane %v866, 4
  %v869 = vor.u32 %v868, %v864
  %v870 = vrot.slane %v869, 4
  %v872 = vshll.u32 %v828, 16
  %v874 = vrot.slane %v872, 5
  %v875 = vsel %vm618, %v870, %v874
  %v876 = vshrl.u32 %v828, 16
  %v878 = vrot.slane %v876, 4
  %v879 = vor.u32 %v878, %v874
  %v880 = vrot.slane %v879, 4
  %v882 = vshll.u32 %v829, 16
  %v884 = vrot.slane %v882, 5
  %v885 = vsel %vm618, %v880, %v884
  %v886 = vshrl.u32 %v829, 16
  %v888 = vrot.slane %v886, 4
  %v889 = vor.u32 %v888, %v884
  %v890 = vrot.slane %v889, 4
  %v892 = vshll.u32 %v830, 16
  %v894 = vrot.slane %v892, 5
  %v895 = vsel %vm618, %v890, %v894
  %v896 = vshrl.u32 %v830, 16
  %v898 = vrot.slane %v896, 4
  %v899 = vor.u32 %v898, %v894
  %v900 = vrot.slane %v899, 4
  %v902 = vshll.u32 %v831, 16
  %v904 = vrot.slane %v902, 5
  %v905 = vsel %vm618, %v900, %v904
  %913 = vst [vmem:[#allocation3 + $0x10] sm:$0xf] %v845
  %914 = vst [vmem:[#allocation3 + $0x34] sm:$0xf] %v855
  %915 = vst [vmem:[#allocation3 + $0x58] sm:$0xf] %v865
  %916 = vst [vmem:[#allocation3 + $0x7c] sm:$0xf] %v875
  %917 = vst [vmem:[#allocation3 + $0xa0] sm:$0xf] %v885
  %918 = vst [vmem:[#allocation3 + $0xc4] sm:$0xf] %v895
  %919 = vst [vmem:[#allocation3 + $0xe8] sm:$0xf] %v905
  %v920 = vld [vmem:[#allocation2] sm:$0xe0]
  %v921 = vld [vmem:[#allocation2 + $0x8] sm:$0xff]
  %v922 = vld [vmem:[#allocation2 + $0x10] sm:$0xff]
  %v923 = vld [vmem:[#allocation2 + $0x18] sm:$0xff]
  %v924 = vld [vmem:[#allocation2 + $0x20] sm:$0x1]
  %v930 = vunpack.c.h.b16 %v920
  %v931 = vunpack.c.l.b16 %v921
  %v932 = vunpack.c.h.b16 %v921
  %v933 = vunpack.c.l.b16 %v922
  %v934 = vunpack.c.h.b16 %v922
  %v935 = vunpack.c.l.b16 %v923
  %v936 = vunpack.c.h.b16 %v923
  %v937 = vunpack.c.l.b16 %v924
  %v938 = vpack.c.b16 %v930, %v930
  %v939 = vpack.c.b16 %v931, %v931
  %v940 = vpack.c.b16 %v932, %v932
  %v941 = vpack.c.b16 %v933, %v933
  %v942 = vpack.c.b16 %v934, %v934
  %v943 = vpack.c.b16 %v935, %v935
  %v944 = vpack.c.b16 %v936, %v936
  %v945 = vpack.c.b16 %v937, %v937
  %v946 = vrot.slane %v938, 5
  %v947 = vrot.slane %v946, 4
  %v948 = vrot.slane %v939, 5
  %v949 = vsel %vm733, %v947, %v948
  %v950 = vrot.slane %v948, 4
  %v951 = vrot.slane %v940, 5
  %v952 = vsel %vm733, %v950, %v951
  %v953 = vrot.slane %v951, 4
  %v954 = vrot.slane %v941, 5
  %v955 = vsel %vm733, %v953, %v954
  %v956 = vrot.slane %v954, 4
  %v957 = vrot.slane %v942, 5
  %v958 = vsel %vm733, %v956, %v957
  %v959 = vrot.slane %v957, 4
  %v960 = vrot.slane %v943, 5
  %v961 = vsel %vm733, %v959, %v960
  %v962 = vrot.slane %v960, 4
  %v963 = vrot.slane %v944, 5
  %v964 = vsel %vm733, %v962, %v963
  %v965 = vrot.slane %v963, 4
  %v966 = vrot.slane %v945, 5
  %v967 = vsel %vm733, %v965, %v966
  %975 = vst [vmem:[#allocation3 + $0x14] sm:$0xf] %v949
  %976 = vst [vmem:[#allocation3 + $0x38] sm:$0xf] %v952
  %977 = vst [vmem:[#allocation3 + $0x5c] sm:$0xf] %v955
  %978 = vst [vmem:[#allocation3 + $0x80] sm:$0xf] %v958
  %979 = vst [vmem:[#allocation3 + $0xa4] sm:$0xf] %v961
  %980 = vst [vmem:[#allocation3 + $0xc8] sm:$0xf] %v964
  %981 = vst [vmem:[#allocation3 + $0xec] sm:$0xf] %v967
  %v982 = vld [vmem:[#allocation2 + $0x8] sm:$0xff]
  %v983 = vld [vmem:[#allocation2 + $0x10] sm:$0xff]
  %v984 = vld [vmem:[#allocation2 + $0x18] sm:$0xff]
  %v985 = vld [vmem:[#allocation2 + $0x20] sm:$0xf]
  %v990 = vunpack.c.l.b16 %v982
  %v991 = vunpack.c.h.b16 %v982
  %v992 = vunpack.c.l.b16 %v983
  %v993 = vunpack.c.h.b16 %v983
  %v994 = vunpack.c.l.b16 %v984
  %v995 = vunpack.c.h.b16 %v984
  %v996 = vunpack.c.l.b16 %v985
  %v997 = vpack.c.b16 %v990, %v990
  %v998 = vpack.c.b16 %v991, %v991
  %v999 = vpack.c.b16 %v992, %v992
  %v1000 = vpack.c.b16 %v993, %v993
  %v1001 = vpack.c.b16 %v994, %v994
  %v1002 = vpack.c.b16 %v995, %v995
  %v1003 = vpack.c.b16 %v996, %v996
  %1011 = vst [vmem:[#allocation3 + $0x18] sm:$0xf] %v997
  %1012 = vst [vmem:[#allocation3 + $0x3c] sm:$0xf] %v998
  %1013 = vst [vmem:[#allocation3 + $0x60] sm:$0xf] %v999
  %1014 = vst [vmem:[#allocation3 + $0x84] sm:$0xf] %v1000
  %1015 = vst [vmem:[#allocation3 + $0xa8] sm:$0xf] %v1001
  %1016 = vst [vmem:[#allocation3 + $0xcc] sm:$0xf] %v1002
  %1017 = vst [vmem:[#allocation3 + $0xf0] sm:$0xf] %v1003
  %v1018 = vld [vmem:[#allocation2 + $0x8] sm:$0xff]
  %v1019 = vld [vmem:[#allocation2 + $0x10] sm:$0xff]
  %v1020 = vld [vmem:[#allocation2 + $0x18] sm:$0xff]
  %v1021 = vld [vmem:[#allocation2 + $0x20] sm:$0x1f]
  %v1026 = vunpack.c.l.b16 %v1018
  %v1027 = vunpack.c.h.b16 %v1018
  %v1028 = vunpack.c.l.b16 %v1019
  %v1029 = vunpack.c.h.b16 %v1019
  %v1030 = vunpack.c.l.b16 %v1020
  %v1031 = vunpack.c.h.b16 %v1020
  %v1032 = vunpack.c.l.b16 %v1021
  %v1033 = vunpack.c.h.b16 %v1021
  %v1034 = vpack.c.b16 %v1026, %v1026
  %v1035 = vpack.c.b16 %v1027, %v1027
  %v1036 = vpack.c.b16 %v1028, %v1028
  %v1037 = vpack.c.b16 %v1029, %v1029
  %v1038 = vpack.c.b16 %v1030, %v1030
  %v1039 = vpack.c.b16 %v1031, %v1031
  %v1040 = vpack.c.b16 %v1032, %v1032
  %v1041 = vpack.c.b16 %v1033, %v1033
  %v1043 = vshrl.u32 %v1034, 16
  %v1045 = vrot.slane %v1043, 4
  %v1046 = vshll.u32 %v1034, 16
  %v1048 = vrot.slane %v1046, 5
  %v1049 = vor.u32 %v1045, %v1048
  %v1050 = vrot.slane %v1049, 4
  %v1052 = vshll.u32 %v1035, 16
  %v1054 = vrot.slane %v1052, 5
  %v1055 = vsel %vm618, %v1050, %v1054
  %v1056 = vshrl.u32 %v1035, 16
  %v1058 = vrot.slane %v1056, 4
  %v1059 = vor.u32 %v1058, %v1054
  %v1060 = vrot.slane %v1059, 4
  %v1062 = vshll.u32 %v1036, 16
  %v1064 = vrot.slane %v1062, 5
  %v1065 = vsel %vm618, %v1060, %v1064
  %v1066 = vshrl.u32 %v1036, 16
  %v1068 = vrot.slane %v1066, 4
  %v1069 = vor.u32 %v1068, %v1064
  %v1070 = vrot.slane %v1069, 4
  %v1072 = vshll.u32 %v1037, 16
  %v1074 = vrot.slane %v1072, 5
  %v1075 = vsel %vm618, %v1070, %v1074
  %v1076 = vshrl.u32 %v1037, 16
  %v1078 = vrot.slane %v1076, 4
  %v1079 = vor.u32 %v1078, %v1074
  %v1080 = vrot.slane %v1079, 4
  %v1082 = vshll.u32 %v1038, 16
  %v1084 = vrot.slane %v1082, 5
  %v1085 = vsel %vm618, %v1080, %v1084
  %v1086 = vshrl.u32 %v1038, 16
  %v1088 = vrot.slane %v1086, 4
  %v1089 = vor.u32 %v1088, %v1084
  %v1090 = vrot.slane %v1089, 4
  %v1092 = vshll.u32 %v1039, 16
  %v1094 = vrot.slane %v1092, 5
  %v1095 = vsel %vm618, %v1090, %v1094
  %v1096 = vshrl.u32 %v1039, 16
  %v1098 = vrot.slane %v1096, 4
  %v1099 = vor.u32 %v1098, %v1094
  %v1100 = vrot.slane %v1099, 4
  %v1102 = vshll.u32 %v1040, 16
  %v1104 = vrot.slane %v1102, 5
  %v1105 = vsel %vm618, %v1100, %v1104
  %v1106 = vshrl.u32 %v1040, 16
  %v1108 = vrot.slane %v1106, 4
  %v1109 = vor.u32 %v1108, %v1104
  %v1110 = vrot.slane %v1109, 4
  %v1112 = vshll.u32 %v1041, 16
  %v1114 = vrot.slane %v1112, 5
  %v1115 = vsel %vm618, %v1110, %v1114
  %1123 = vst [vmem:[#allocation3 + $0x1c] sm:$0xf] %v1055
  %1124 = vst [vmem:[#allocation3 + $0x40] sm:$0xf] %v1065
  %1125 = vst [vmem:[#allocation3 + $0x64] sm:$0xf] %v1075
  %1126 = vst [vmem:[#allocation3 + $0x88] sm:$0xf] %v1085
  %1127 = vst [vmem:[#allocation3 + $0xac] sm:$0xf] %v1095
  %1128 = vst [vmem:[#allocation3 + $0xd0] sm:$0xf] %v1105
  %1129 = vst [vmem:[#allocation3 + $0xf4] sm:$0xf] %v1115
  %v1130 = vld [vmem:[#allocation2 + $0x8] sm:$0xfe]
  %v1131 = vld [vmem:[#allocation2 + $0x10] sm:$0xff]
  %v1132 = vld [vmem:[#allocation2 + $0x18] sm:$0xff]
  %v1133 = vld [vmem:[#allocation2 + $0x20] sm:$0x1f]
  %v1138 = vunpack.c.l.b16 %v1130
  %v1139 = vunpack.c.h.b16 %v1130
  %v1140 = vunpack.c.l.b16 %v1131
  %v1141 = vunpack.c.h.b16 %v1131
  %v1142 = vunpack.c.l.b16 %v1132
  %v1143 = vunpack.c.h.b16 %v1132
  %v1144 = vunpack.c.l.b16 %v1133
  %v1145 = vunpack.c.h.b16 %v1133
  %v1146 = vpack.c.b16 %v1138, %v1138
  %v1147 = vpack.c.b16 %v1139, %v1139
  %v1148 = vpack.c.b16 %v1140, %v1140
  %v1149 = vpack.c.b16 %v1141, %v1141
  %v1150 = vpack.c.b16 %v1142, %v1142
  %v1151 = vpack.c.b16 %v1143, %v1143
  %v1152 = vpack.c.b16 %v1144, %v1144
  %v1153 = vpack.c.b16 %v1145, %v1145
  %v1154 = vrot.slane %v1146, 5
  %v1155 = vrot.slane %v1154, 4
  %v1156 = vrot.slane %v1147, 5
  %v1157 = vsel %vm733, %v1155, %v1156
  %v1158 = vrot.slane %v1156, 4
  %v1159 = vrot.slane %v1148, 5
  %v1160 = vsel %vm733, %v1158, %v1159
  %v1161 = vrot.slane %v1159, 4
  %v1162 = vrot.slane %v1149, 5
  %v1163 = vsel %vm733, %v1161, %v1162
  %v1164 = vrot.slane %v1162, 4
  %v1165 = vrot.slane %v1150, 5
  %v1166 = vsel %vm733, %v1164, %v1165
  %v1167 = vrot.slane %v1165, 4
  %v1168 = vrot.slane %v1151, 5
  %v1169 = vsel %vm733, %v1167, %v1168
  %v1170 = vrot.slane %v1168, 4
  %v1171 = vrot.slane %v1152, 5
  %v1172 = vsel %vm733, %v1170, %v1171
  %v1173 = vrot.slane %v1171, 4
  %v1174 = vrot.slane %v1153, 5
  %v1175 = vsel %vm733, %v1173, %v1174
  %1183 = vst [vmem:[#allocation3 + $0x20] sm:$0xf] %v1157
  %1184 = vst [vmem:[#allocation3 + $0x44] sm:$0xf] %v1160
  %1185 = vst [vmem:[#allocation3 + $0x68] sm:$0xf] %v1163
  %1186 = vst [vmem:[#allocation3 + $0x8c] sm:$0xf] %v1166
  %1187 = vst [vmem:[#allocation3 + $0xb0] sm:$0xf] %v1169
  %1188 = vst [vmem:[#allocation3 + $0xd4] sm:$0xf] %v1172
  %1189 = vst [vmem:[#allocation3 + $0xf8] sm:$0xf] %v1175
  %v1190 = vld [vmem:[#allocation3] sm:$0xff]
  %v1191 = vld [vmem:[#allocation3 + $0x8] sm:$0xff]
  %v1192 = vld [vmem:[#allocation3 + $0x10] sm:$0xff]
  %v1193 = vld [vmem:[#allocation3 + $0x18] sm:$0xff]
  %v1194 = vld [vmem:[#allocation3 + $0x20] sm:$0xf]
  %v1195 = vld [vmem:[#allocation3 + $0x24] sm:$0xff]
  %v1196 = vld [vmem:[#allocation3 + $0x2c] sm:$0xff]
  %v1197 = vld [vmem:[#allocation3 + $0x34] sm:$0xff]
  %v1198 = vld [vmem:[#allocation3 + $0x3c] sm:$0xff]
  %v1199 = vld [vmem:[#allocation3 + $0x44] sm:$0xf]
  %v1200 = vld [vmem:[#allocation3 + $0x48] sm:$0xff]
  %v1201 = vld [vmem:[#allocation3 + $0x50] sm:$0xff]
  %v1202 = vld [vmem:[#allocation3 + $0x58] sm:$0xff]
  %v1203 = vld [vmem:[#allocation3 + $0x60] sm:$0xff]
  %v1204 = vld [vmem:[#allocation3 + $0x68] sm:$0xf]
  %v1205 = vld [vmem:[#allocation3 + $0x6c] sm:$0xff]
  %v1206 = vld [vmem:[#allocation3 + $0x74] sm:$0xff]
  %v1207 = vld [vmem:[#allocation3 + $0x7c] sm:$0xff]
  %v1208 = vld [vmem:[#allocation3 + $0x84] sm:$0xff]
  %v1209 = vld [vmem:[#allocation3 + $0x8c] sm:$0xf]
  %v1210 = vld [vmem:[#allocation3 + $0x90] sm:$0xff]
  %v1211 = vld [vmem:[#allocation3 + $0x98] sm:$0xff]
  %v1212 = vld [vmem:[#allocation3 + $0xa0] sm:$0xff]
  %v1213 = vld [vmem:[#allocation3 + $0xa8] sm:$0xff]
  %v1214 = vld [vmem:[#allocation3 + $0xb0] sm:$0xf]
  %v1215 = vld [vmem:[#allocation3 + $0xb4] sm:$0xff]
  %v1216 = vld [vmem:[#allocation3 + $0xbc] sm:$0xff]
  %v1217 = vld [vmem:[#allocation3 + $0xc4] sm:$0xff]
  %v1218 = vld [vmem:[#allocation3 + $0xcc] sm:$0xff]
  %v1219 = vld [vmem:[#allocation3 + $0xd4] sm:$0xf]
  %v1220 = vld [vmem:[#allocation3 + $0xd8] sm:$0xff]
  %v1221 = vld [vmem:[#allocation3 + $0xe0] sm:$0xff]
  %v1222 = vld [vmem:[#allocation3 + $0xe8] sm:$0xff]
  %v1223 = vld [vmem:[#allocation3 + $0xf0] sm:$0xff]
  %v1224 = vld [vmem:[#allocation3 + $0xf8] sm:$0xf]
  %v1225 = vld [vmem:[%s3] sm:$0xf]
  %v1226 = vld [vmem:[%s3 + $0x4] sm:$0xf]
  %v1227 = vld [vmem:[%s3 + $0x8] sm:$0xf]
  %v1228 = vld [vmem:[%s3 + $0xc] sm:$0xf]
  %v1229 = vld [vmem:[%s3 + $0x10] sm:$0xf]
  %v1230 = vld [vmem:[%s3 + $0x14] sm:$0xf]
  %v1231 = vld [vmem:[%s3 + $0x18] sm:$0xf]
  %v1232 = vld [vmem:[%s3 + $0x1c] sm:$0xf]
  %v1233 = vld [vmem:[%s3 + $0x20] sm:$0xf]
  %v1234 = vld [vmem:[%s3 + $0x24] sm:$0xf]
  %v1235 = vld [vmem:[%s3 + $0x28] sm:$0xf]
  %v1236 = vld [vmem:[%s3 + $0x2c] sm:$0xf]
  %v1237 = vld [vmem:[%s3 + $0x30] sm:$0xf]
  %v1238 = vld [vmem:[%s3 + $0x34] sm:$0xf]
  %v1239 = vld [vmem:[%s3 + $0x38] sm:$0xf]
  %v1240 = vld [vmem:[%s3 + $0x3c] sm:$0xf]
  %v1241 = vld [vmem:[%s3 + $0x40] sm:$0xf]
  %v1242 = vld [vmem:[%s3 + $0x44] sm:$0xf]
  %v1243 = vld [vmem:[%s3 + $0x48] sm:$0xf]
  %v1244 = vld [vmem:[%s3 + $0x4c] sm:$0xf]
  %v1245 = vld [vmem:[%s3 + $0x50] sm:$0xf]
  %v1246 = vld [vmem:[%s3 + $0x54] sm:$0xf]
  %v1247 = vld [vmem:[%s3 + $0x58] sm:$0xf]
  %v1248 = vld [vmem:[%s3 + $0x5c] sm:$0xf]
  %v1249 = vld [vmem:[%s3 + $0x60] sm:$0xf]
  %v1250 = vld [vmem:[%s3 + $0x64] sm:$0xf]
  %v1251 = vld [vmem:[%s3 + $0x68] sm:$0xf]
  %v1252 = vld [vmem:[%s3 + $0x6c] sm:$0xf]
  %v1253 = vld [vmem:[%s3 + $0x70] sm:$0xf]
  %v1254 = vld [vmem:[%s3 + $0x74] sm:$0xf]
  %v1255 = vld [vmem:[%s3 + $0x78] sm:$0xf]
  %v1256 = vld [vmem:[%s3 + $0x7c] sm:$0xf]
  %v1257 = vld [vmem:[%s3 + $0x80] sm:$0xf]
  %v1258 = vld [vmem:[%s3 + $0x84] sm:$0xf]
  %v1259 = vld [vmem:[%s3 + $0x88] sm:$0xf]
  %v1260 = vld [vmem:[%s3 + $0x8c] sm:$0xf]
  %v1261 = vld [vmem:[%s3 + $0x90] sm:$0xf]
  %v1262 = vld [vmem:[%s3 + $0x94] sm:$0xf]
  %v1263 = vld [vmem:[%s3 + $0x98] sm:$0xf]
  %v1264 = vld [vmem:[%s3 + $0x9c] sm:$0xf]
  %v1265 = vld [vmem:[%s3 + $0xa0] sm:$0xf]
  %v1266 = vld [vmem:[%s3 + $0xa4] sm:$0xf]
  %v1267 = vld [vmem:[%s3 + $0xa8] sm:$0xf]
  %v1268 = vld [vmem:[%s3 + $0xac] sm:$0xf]
  %v1269 = vld [vmem:[%s3 + $0xb0] sm:$0xf]
  %v1270 = vld [vmem:[%s3 + $0xb4] sm:$0xf]
  %v1271 = vld [vmem:[%s3 + $0xb8] sm:$0xf]
  %v1272 = vld [vmem:[%s3 + $0xbc] sm:$0xf]
  %v1273 = vld [vmem:[%s3 + $0xc0] sm:$0xf]
  %v1274 = vld [vmem:[%s3 + $0xc4] sm:$0xf]
  %v1275 = vld [vmem:[%s3 + $0xc8] sm:$0xf]
  %v1276 = vld [vmem:[%s3 + $0xcc] sm:$0xf]
  %v1277 = vld [vmem:[%s3 + $0xd0] sm:$0xf]
  %v1278 = vld [vmem:[%s3 + $0xd4] sm:$0xf]
  %v1279 = vld [vmem:[%s3 + $0xd8] sm:$0xf]
  %v1280 = vld [vmem:[%s3 + $0xdc] sm:$0xf]
  %v1281 = vld [vmem:[%s3 + $0xe0] sm:$0xf]
  %v1282 = vld [vmem:[%s3 + $0xe4] sm:$0xf]
  %v1283 = vld [vmem:[%s3 + $0xe8] sm:$0xf]
  %v1284 = vld [vmem:[%s3 + $0xec] sm:$0xf]
  %v1285 = vld [vmem:[%s3 + $0xf0] sm:$0xf]
  %v1286 = vld [vmem:[%s3 + $0xf4] sm:$0xf]
  %v1287 = vld [vmem:[%s3 + $0xf8] sm:$0xf]
  %v1288 = vld [vmem:[%s3 + $0xfc] sm:$0xf]
  %v1289 = vld [vmem:[%s3 + $0x100] sm:$0xf]
  %v1290 = vld [vmem:[%s3 + $0x104] sm:$0xf]
  %v1291 = vld [vmem:[%s3 + $0x108] sm:$0xf]
  %v1292 = vld [vmem:[%s3 + $0x10c] sm:$0xf]
  %v1293 = vld [vmem:[%s3 + $0x110] sm:$0xf]
  %v1294 = vld [vmem:[%s3 + $0x114] sm:$0xf]
  %v1295 = vld [vmem:[%s3 + $0x118] sm:$0xf]
  %v1296 = vld [vmem:[%s3 + $0x11c] sm:$0xf]
  %v1297 = vld [vmem:[%s3 + $0x120] sm:$0xf]
  %v1298 = vld [vmem:[%s3 + $0x124] sm:$0xf]
  %v1299 = vld [vmem:[%s3 + $0x128] sm:$0xf]
  %v1300 = vld [vmem:[%s3 + $0x12c] sm:$0xf]
  %v1301 = vld [vmem:[%s3 + $0x130] sm:$0xf]
  %v1302 = vld [vmem:[%s3 + $0x134] sm:$0xf]
  %v1303 = vld [vmem:[%s3 + $0x138] sm:$0xf]
  %v1304 = vld [vmem:[%s3 + $0x13c] sm:$0xf]
  %v1305 = vld [vmem:[%s3 + $0x140] sm:$0xf]
  %v1306 = vld [vmem:[%s3 + $0x144] sm:$0xf]
  %v1307 = vld [vmem:[%s3 + $0x148] sm:$0xf]
  %v1308 = vld [vmem:[%s3 + $0x14c] sm:$0xf]
  %v1309 = vld [vmem:[%s3 + $0x150] sm:$0xf]
  %v1310 = vld [vmem:[%s3 + $0x154] sm:$0xf]
  %v1311 = vld [vmem:[%s3 + $0x158] sm:$0xf]
  %v1312 = vld [vmem:[%s3 + $0x15c] sm:$0xf]
  %v1313 = vld [vmem:[%s3 + $0x160] sm:$0xf]
  %v1314 = vld [vmem:[%s3 + $0x164] sm:$0xf]
  %v1315 = vld [vmem:[%s3 + $0x168] sm:$0xf]
  %v1316 = vld [vmem:[%s3 + $0x16c] sm:$0xf]
  %v1317 = vld [vmem:[%s3 + $0x170] sm:$0xf]
  %v1318 = vld [vmem:[%s3 + $0x174] sm:$0xf]
  %v1319 = vld [vmem:[%s3 + $0x178] sm:$0xf]
  %v1320 = vld [vmem:[%s3 + $0x17c] sm:$0xf]
  %v1321 = vld [vmem:[%s3 + $0x180] sm:$0xf]
  %v1322 = vld [vmem:[%s3 + $0x184] sm:$0xf]
  %v1323 = vld [vmem:[%s3 + $0x188] sm:$0xf]
  %v1324 = vld [vmem:[%s3 + $0x18c] sm:$0xf]
  %v1325 = vld [vmem:[%s3 + $0x190] sm:$0xf]
  %v1326 = vld [vmem:[%s3 + $0x194] sm:$0xf]
  %v1327 = vld [vmem:[%s3 + $0x198] sm:$0xf]
  %v1328 = vld [vmem:[%s3 + $0x19c] sm:$0xf]
  %v1329 = vld [vmem:[%s3 + $0x1a0] sm:$0xf]
  %v1330 = vld [vmem:[%s3 + $0x1a4] sm:$0xf]
  %v1331 = vld [vmem:[%s3 + $0x1a8] sm:$0xf]
  %v1332 = vld [vmem:[%s3 + $0x1ac] sm:$0xf]
  %v1333 = vld [vmem:[%s3 + $0x1b0] sm:$0xf]
  %v1334 = vld [vmem:[%s3 + $0x1b4] sm:$0xf]
  %v1335 = vld [vmem:[%s3 + $0x1b8] sm:$0xf]
  %v1336 = vld [vmem:[%s3 + $0x1bc] sm:$0xf]
  %v1337 = vld [vmem:[%s3 + $0x1c0] sm:$0xf]
  %v1338 = vld [vmem:[%s3 + $0x1c4] sm:$0xf]
  %v1339 = vld [vmem:[%s3 + $0x1c8] sm:$0xf]
  %v1340 = vld [vmem:[%s3 + $0x1cc] sm:$0xf]
  %v1341 = vld [vmem:[%s3 + $0x1d0] sm:$0xf]
  %v1342 = vld [vmem:[%s3 + $0x1d4] sm:$0xf]
  %v1343 = vld [vmem:[%s3 + $0x1d8] sm:$0xf]
  %v1344 = vld [vmem:[%s3 + $0x1dc] sm:$0xf]
  %v1345 = vld [vmem:[%s3 + $0x1e0] sm:$0xf]
  %v1346 = vld [vmem:[%s3 + $0x1e4] sm:$0xf]
  %v1347 = vld [vmem:[%s3 + $0x1e8] sm:$0xf]
  %v1348 = vld [vmem:[%s3 + $0x1ec] sm:$0xf]
  %v1349 = vld [vmem:[%s3 + $0x1f0] sm:$0xf]
  %v1350 = vld [vmem:[%s3 + $0x1f4] sm:$0xf]
  %v1351 = vld [vmem:[%s3 + $0x1f8] sm:$0xf]
  %v1352 = vld [vmem:[%s3 + $0x1fc] sm:$0xf]
  %v1353 = vld [vmem:[%s3 + $0x200] sm:$0xf]
  %v1354 = vld [vmem:[%s3 + $0x204] sm:$0xf]
  %v1355 = vld [vmem:[%s3 + $0x208] sm:$0xf]
  %v1356 = vld [vmem:[%s3 + $0x20c] sm:$0xf]
  %v1357 = vld [vmem:[%s3 + $0x210] sm:$0xf]
  %v1358 = vld [vmem:[%s3 + $0x214] sm:$0xf]
  %v1359 = vld [vmem:[%s3 + $0x218] sm:$0xf]
  %v1360 = vld [vmem:[%s3 + $0x21c] sm:$0xf]
  %v1361 = vld [vmem:[%s3 + $0x220] sm:$0xf]
  %v1362 = vld [vmem:[%s3 + $0x224] sm:$0xf]
  %v1363 = vld [vmem:[%s3 + $0x228] sm:$0xf]
  %v1364 = vld [vmem:[%s3 + $0x22c] sm:$0xf]
  %v1365 = vld [vmem:[%s3 + $0x230] sm:$0xf]
  %v1366 = vld [vmem:[%s3 + $0x234] sm:$0xf]
  %v1367 = vld [vmem:[%s3 + $0x238] sm:$0xf]
  %v1368 = vld [vmem:[%s3 + $0x23c] sm:$0xf]
  %v1404 = vunpack.c.l.b16 %v1190
  %v1405 = vunpack.c.h.b16 %v1190
  %v1406 = vunpack.c.l.b16 %v1191
  %v1407 = vunpack.c.h.b16 %v1191
  %v1408 = vunpack.c.l.b16 %v1192
  %v1409 = vunpack.c.h.b16 %v1192
  %v1410 = vunpack.c.l.b16 %v1193
  %v1411 = vunpack.c.h.b16 %v1193
  %v1412 = vunpack.c.l.b16 %v1194
  %v1413 = vunpack.c.l.b16 %v1195
  %v1414 = vunpack.c.h.b16 %v1195
  %v1415 = vunpack.c.l.b16 %v1196
  %v1416 = vunpack.c.h.b16 %v1196
  %v1417 = vunpack.c.l.b16 %v1197
  %v1418 = vunpack.c.h.b16 %v1197
  %v1419 = vunpack.c.l.b16 %v1198
  %v1420 = vunpack.c.h.b16 %v1198
  %v1421 = vunpack.c.l.b16 %v1199
  %v1422 = vunpack.c.l.b16 %v1200
  %v1423 = vunpack.c.h.b16 %v1200
  %v1424 = vunpack.c.l.b16 %v1201
  %v1425 = vunpack.c.h.b16 %v1201
  %v1426 = vunpack.c.l.b16 %v1202
  %v1427 = vunpack.c.h.b16 %v1202
  %v1428 = vunpack.c.l.b16 %v1203
  %v1429 = vunpack.c.h.b16 %v1203
  %v1430 = vunpack.c.l.b16 %v1204
  %v1431 = vunpack.c.l.b16 %v1205
  %v1432 = vunpack.c.h.b16 %v1205
  %v1433 = vunpack.c.l.b16 %v1206
  %v1434 = vunpack.c.h.b16 %v1206
  %v1435 = vunpack.c.l.b16 %v1207
  %v1436 = vunpack.c.h.b16 %v1207
  %v1437 = vunpack.c.l.b16 %v1208
  %v1438 = vunpack.c.h.b16 %v1208
  %v1439 = vunpack.c.l.b16 %v1209
  %v1440 = vunpack.c.l.b16 %v1210
  %v1441 = vunpack.c.h.b16 %v1210
  %v1442 = vunpack.c.l.b16 %v1211
  %v1443 = vunpack.c.h.b16 %v1211
  %v1444 = vunpack.c.l.b16 %v1212
  %v1445 = vunpack.c.h.b16 %v1212
  %v1446 = vunpack.c.l.b16 %v1213
  %v1447 = vunpack.c.h.b16 %v1213
  %v1448 = vunpack.c.l.b16 %v1214
  %v1449 = vunpack.c.l.b16 %v1215
  %v1450 = vunpack.c.h.b16 %v1215
  %v1451 = vunpack.c.l.b16 %v1216
  %v1452 = vunpack.c.h.b16 %v1216
  %v1453 = vunpack.c.l.b16 %v1217
  %v1454 = vunpack.c.h.b16 %v1217
  %v1455 = vunpack.c.l.b16 %v1218
  %v1456 = vunpack.c.h.b16 %v1218
  %v1457 = vunpack.c.l.b16 %v1219
  %v1458 = vunpack.c.l.b16 %v1220
  %v1459 = vunpack.c.h.b16 %v1220
  %v1460 = vunpack.c.l.b16 %v1221
  %v1461 = vunpack.c.h.b16 %v1221
  %v1462 = vunpack.c.l.b16 %v1222
  %v1463 = vunpack.c.h.b16 %v1222
  %v1464 = vunpack.c.l.b16 %v1223
  %v1465 = vunpack.c.h.b16 %v1223
  %v1466 = vunpack.c.l.b16 %v1224
  %v1467 = vpack.c.b16 %v1413, %v1404
  %v1468 = vpack.c.b16 %v1414, %v1405
  %v1469 = vpack.c.b16 %v1415, %v1406
  %v1470 = vpack.c.b16 %v1416, %v1407
  %v1471 = vpack.c.b16 %v1417, %v1408
  %v1472 = vpack.c.b16 %v1418, %v1409
  %v1473 = vpack.c.b16 %v1419, %v1410
  %v1474 = vpack.c.b16 %v1420, %v1411
  %v1475 = vpack.c.b16 %v1421, %v1412
  %v1476 = vpack.c.b16 %v1431, %v1422
  %v1477 = vpack.c.b16 %v1432, %v1423
  %v1478 = vpack.c.b16 %v1433, %v1424
  %v1479 = vpack.c.b16 %v1434, %v1425
  %v1480 = vpack.c.b16 %v1435, %v1426
  %v1481 = vpack.c.b16 %v1436, %v1427
  %v1482 = vpack.c.b16 %v1437, %v1428
  %v1483 = vpack.c.b16 %v1438, %v1429
  %v1484 = vpack.c.b16 %v1439, %v1430
  %v1485 = vpack.c.b16 %v1449, %v1440
  %v1486 = vpack.c.b16 %v1450, %v1441
  %v1487 = vpack.c.b16 %v1451, %v1442
  %v1488 = vpack.c.b16 %v1452, %v1443
  %v1489 = vpack.c.b16 %v1453, %v1444
  %v1490 = vpack.c.b16 %v1454, %v1445
  %v1491 = vpack.c.b16 %v1455, %v1446
  %v1492 = vpack.c.b16 %v1456, %v1447
  %v1493 = vpack.c.b16 %v1457, %v1448
  %v1494 = vpack.c.b16 %v1458, %v1458
  %v1495 = vpack.c.b16 %v1459, %v1459
  %v1496 = vpack.c.b16 %v1460, %v1460
  %v1497 = vpack.c.b16 %v1461, %v1461
  %v1498 = vpack.c.b16 %v1462, %v1462
  %v1499 = vpack.c.b16 %v1463, %v1463
  %v1500 = vpack.c.b16 %v1464, %v1464
  %v1501 = vpack.c.b16 %v1465, %v1465
  %v1502 = vpack.c.b16 %v1466, %v1466
  %v1683 = vunpack.c.l.b16 %v1225
  %v1684 = vunpack.c.l.b16 %v1226
  %v1685 = vunpack.c.l.b16 %v1227
  %v1686 = vunpack.c.l.b16 %v1228
  %v1687 = vunpack.c.l.b16 %v1229
  %v1688 = vunpack.c.l.b16 %v1230
  %v1689 = vunpack.c.l.b16 %v1231
  %v1690 = vunpack.c.l.b16 %v1232
  %v1691 = vunpack.c.l.b16 %v1233
  %v1692 = vunpack.c.l.b16 %v1234
  %v1693 = vunpack.c.l.b16 %v1235
  %v1694 = vunpack.c.l.b16 %v1236
  %v1695 = vunpack.c.l.b16 %v1237
  %v1696 = vunpack.c.l.b16 %v1238
  %v1697 = vunpack.c.l.b16 %v1239
  %v1698 = vunpack.c.l.b16 %v1240
  %v1699 = vunpack.c.l.b16 %v1241
  %v1700 = vunpack.c.l.b16 %v1242
  %v1701 = vunpack.c.l.b16 %v1243
  %v1702 = vunpack.c.l.b16 %v1244
  %v1703 = vunpack.c.l.b16 %v1245
  %v1704 = vunpack.c.l.b16 %v1246
  %v1705 = vunpack.c.l.b16 %v1247
  %v1706 = vunpack.c.l.b16 %v1248
  %v1707 = vunpack.c.l.b16 %v1249
  %v1708 = vunpack.c.l.b16 %v1250
  %v1709 = vunpack.c.l.b16 %v1251
  %v1710 = vunpack.c.l.b16 %v1252
  %v1711 = vunpack.c.l.b16 %v1253
  %v1712 = vunpack.c.l.b16 %v1254
  %v1713 = vunpack.c.l.b16 %v1255
  %v1714 = vunpack.c.l.b16 %v1256
  %v1715 = vunpack.c.l.b16 %v1257
  %v1716 = vunpack.c.l.b16 %v1258
  %v1717 = vunpack.c.l.b16 %v1259
  %v1718 = vunpack.c.l.b16 %v1260
  %v1719 = vunpack.c.l.b16 %v1261
  %v1720 = vunpack.c.l.b16 %v1262
  %v1721 = vunpack.c.l.b16 %v1263
  %v1722 = vunpack.c.l.b16 %v1264
  %v1723 = vunpack.c.l.b16 %v1265
  %v1724 = vunpack.c.l.b16 %v1266
  %v1725 = vunpack.c.l.b16 %v1267
  %v1726 = vunpack.c.l.b16 %v1268
  %v1727 = vunpack.c.l.b16 %v1269
  %v1728 = vunpack.c.l.b16 %v1270
  %v1729 = vunpack.c.l.b16 %v1271
  %v1730 = vunpack.c.l.b16 %v1272
  %v1731 = vunpack.c.l.b16 %v1273
  %v1732 = vunpack.c.l.b16 %v1274
  %v1733 = vunpack.c.l.b16 %v1275
  %v1734 = vunpack.c.l.b16 %v1276
  %v1735 = vunpack.c.l.b16 %v1277
  %v1736 = vunpack.c.l.b16 %v1278
  %v1737 = vunpack.c.l.b16 %v1279
  %v1738 = vunpack.c.l.b16 %v1280
  %v1739 = vunpack.c.l.b16 %v1281
  %v1740 = vunpack.c.l.b16 %v1282
  %v1741 = vunpack.c.l.b16 %v1283
  %v1742 = vunpack.c.l.b16 %v1284
  %v1743 = vunpack.c.l.b16 %v1285
  %v1744 = vunpack.c.l.b16 %v1286
  %v1745 = vunpack.c.l.b16 %v1287
  %v1746 = vunpack.c.l.b16 %v1288
  %v1747 = vunpack.c.l.b16 %v1289
  %v1748 = vunpack.c.l.b16 %v1290
  %v1749 = vunpack.c.l.b16 %v1291
  %v1750 = vunpack.c.l.b16 %v1292
  %v1751 = vunpack.c.l.b16 %v1293
  %v1752 = vunpack.c.l.b16 %v1294
  %v1753 = vunpack.c.l.b16 %v1295
  %v1754 = vunpack.c.l.b16 %v1296
  %v1755 = vunpack.c.l.b16 %v1297
  %v1756 = vunpack.c.l.b16 %v1298
  %v1757 = vunpack.c.l.b16 %v1299
  %v1758 = vunpack.c.l.b16 %v1300
  %v1759 = vunpack.c.l.b16 %v1301
  %v1760 = vunpack.c.l.b16 %v1302
  %v1761 = vunpack.c.l.b16 %v1303
  %v1762 = vunpack.c.l.b16 %v1304
  %v1763 = vunpack.c.l.b16 %v1305
  %v1764 = vunpack.c.l.b16 %v1306
  %v1765 = vunpack.c.l.b16 %v1307
  %v1766 = vunpack.c.l.b16 %v1308
  %v1767 = vunpack.c.l.b16 %v1309
  %v1768 = vunpack.c.l.b16 %v1310
  %v1769 = vunpack.c.l.b16 %v1311
  %v1770 = vunpack.c.l.b16 %v1312
  %v1771 = vunpack.c.l.b16 %v1313
  %v1772 = vunpack.c.l.b16 %v1314
  %v1773 = vunpack.c.l.b16 %v1315
  %v1774 = vunpack.c.l.b16 %v1316
  %v1775 = vunpack.c.l.b16 %v1317
  %v1776 = vunpack.c.l.b16 %v1318
  %v1777 = vunpack.c.l.b16 %v1319
  %v1778 = vunpack.c.l.b16 %v1320
  %v1779 = vunpack.c.l.b16 %v1321
  %v1780 = vunpack.c.l.b16 %v1322
  %v1781 = vunpack.c.l.b16 %v1323
  %v1782 = vunpack.c.l.b16 %v1324
  %v1783 = vunpack.c.l.b16 %v1325
  %v1784 = vunpack.c.l.b16 %v1326
  %v1785 = vunpack.c.l.b16 %v1327
  %v1786 = vunpack.c.l.b16 %v1328
  %v1787 = vunpack.c.l.b16 %v1329
  %v1788 = vunpack.c.l.b16 %v1330
  %v1789 = vunpack.c.l.b16 %v1331
  %v1790 = vunpack.c.l.b16 %v1332
  %v1791 = vunpack.c.l.b16 %v1333
  %v1792 = vunpack.c.l.b16 %v1334
  %v1793 = vunpack.c.l.b16 %v1335
  %v1794 = vunpack.c.l.b16 %v1336
  %v1795 = vunpack.c.l.b16 %v1337
  %v1796 = vunpack.c.l.b16 %v1338
  %v1797 = vunpack.c.l.b16 %v1339
  %v1798 = vunpack.c.l.b16 %v1340
  %v1799 = vunpack.c.l.b16 %v1341
  %v1800 = vunpack.c.l.b16 %v1342
  %v1801 = vunpack.c.l.b16 %v1343
  %v1802 = vunpack.c.l.b16 %v1344
  %v1803 = vunpack.c.l.b16 %v1345
  %v1804 = vunpack.c.l.b16 %v1346
  %v1805 = vunpack.c.l.b16 %v1347
  %v1806 = vunpack.c.l.b16 %v1348
  %v1807 = vunpack.c.l.b16 %v1349
  %v1808 = vunpack.c.l.b16 %v1350
  %v1809 = vunpack.c.l.b16 %v1351
  %v1810 = vunpack.c.l.b16 %v1352
  %v1811 = vunpack.c.l.b16 %v1353
  %v1812 = vunpack.c.l.b16 %v1354
  %v1813 = vunpack.c.l.b16 %v1355
  %v1814 = vunpack.c.l.b16 %v1356
  %v1815 = vunpack.c.l.b16 %v1357
  %v1816 = vunpack.c.l.b16 %v1358
  %v1817 = vunpack.c.l.b16 %v1359
  %v1818 = vunpack.c.l.b16 %v1360
  %v1819 = vunpack.c.l.b16 %v1361
  %v1820 = vunpack.c.l.b16 %v1362
  %v1821 = vunpack.c.l.b16 %v1363
  %v1822 = vunpack.c.l.b16 %v1364
  %v1823 = vunpack.c.l.b16 %v1365
  %v1824 = vunpack.c.l.b16 %v1366
  %v1825 = vunpack.c.l.b16 %v1367
  %v1826 = vunpack.c.l.b16 %v1368
  %v1827 = vpack.c.b16 %v1684, %v1683
  %v1828 = vpack.c.b16 %v1686, %v1685
  %v1829 = vpack.c.b16 %v1688, %v1687
  %v1830 = vpack.c.b16 %v1690, %v1689
  %v1831 = vpack.c.b16 %v1692, %v1691
  %v1832 = vpack.c.b16 %v1694, %v1693
  %v1833 = vpack.c.b16 %v1696, %v1695
  %v1834 = vpack.c.b16 %v1698, %v1697
  %v1835 = vpack.c.b16 %v1700, %v1699
  %v1836 = vpack.c.b16 %v1702, %v1701
  %v1837 = vpack.c.b16 %v1704, %v1703
  %v1838 = vpack.c.b16 %v1706, %v1705
  %v1839 = vpack.c.b16 %v1708, %v1707
  %v1840 = vpack.c.b16 %v1710, %v1709
  %v1841 = vpack.c.b16 %v1712, %v1711
  %v1842 = vpack.c.b16 %v1714, %v1713
  %v1843 = vpack.c.b16 %v1716, %v1715
  %v1844 = vpack.c.b16 %v1718, %v1717
  %v1845 = vpack.c.b16 %v1720, %v1719
  %v1846 = vpack.c.b16 %v1722, %v1721
  %v1847 = vpack.c.b16 %v1724, %v1723
  %v1848 = vpack.c.b16 %v1726, %v1725
  %v1849 = vpack.c.b16 %v1728, %v1727
  %v1850 = vpack.c.b16 %v1730, %v1729
  %v1851 = vpack.c.b16 %v1732, %v1731
  %v1852 = vpack.c.b16 %v1734, %v1733
  %v1853 = vpack.c.b16 %v1736, %v1735
  %v1854 = vpack.c.b16 %v1738, %v1737
  %v1855 = vpack.c.b16 %v1740, %v1739
  %v1856 = vpack.c.b16 %v1742, %v1741
  %v1857 = vpack.c.b16 %v1744, %v1743
  %v1858 = vpack.c.b16 %v1746, %v1745
  %v1859 = vpack.c.b16 %v1748, %v1747
  %v1860 = vpack.c.b16 %v1750, %v1749
  %v1861 = vpack.c.b16 %v1752, %v1751
  %v1862 = vpack.c.b16 %v1754, %v1753
  %v1863 = vpack.c.b16 %v1756, %v1755
  %v1864 = vpack.c.b16 %v1758, %v1757
  %v1865 = vpack.c.b16 %v1760, %v1759
  %v1866 = vpack.c.b16 %v1762, %v1761
  %v1867 = vpack.c.b16 %v1764, %v1763
  %v1868 = vpack.c.b16 %v1766, %v1765
  %v1869 = vpack.c.b16 %v1768, %v1767
  %v1870 = vpack.c.b16 %v1770, %v1769
  %v1871 = vpack.c.b16 %v1772, %v1771
  %v1872 = vpack.c.b16 %v1774, %v1773
  %v1873 = vpack.c.b16 %v1776, %v1775
  %v1874 = vpack.c.b16 %v1778, %v1777
  %v1875 = vpack.c.b16 %v1780, %v1779
  %v1876 = vpack.c.b16 %v1782, %v1781
  %v1877 = vpack.c.b16 %v1784, %v1783
  %v1878 = vpack.c.b16 %v1786, %v1785
  %v1879 = vpack.c.b16 %v1788, %v1787
  %v1880 = vpack.c.b16 %v1790, %v1789
  %v1881 = vpack.c.b16 %v1792, %v1791
  %v1882 = vpack.c.b16 %v1794, %v1793
  %v1883 = vpack.c.b16 %v1796, %v1795
  %v1884 = vpack.c.b16 %v1798, %v1797
  %v1885 = vpack.c.b16 %v1800, %v1799
  %v1886 = vpack.c.b16 %v1802, %v1801
  %v1887 = vpack.c.b16 %v1804, %v1803
  %v1888 = vpack.c.b16 %v1806, %v1805
  %v1889 = vpack.c.b16 %v1808, %v1807
  %v1890 = vpack.c.b16 %v1810, %v1809
  %v1891 = vpack.c.b16 %v1812, %v1811
  %v1892 = vpack.c.b16 %v1814, %v1813
  %v1893 = vpack.c.b16 %v1816, %v1815
  %v1894 = vpack.c.b16 %v1818, %v1817
  %v1895 = vpack.c.b16 %v1820, %v1819
  %v1896 = vpack.c.b16 %v1822, %v1821
  %v1897 = vpack.c.b16 %v1824, %v1823
  %v1898 = vpack.c.b16 %v1826, %v1825
  %1971 = vmatprep.subr.bf16.mxu0 0
  %1972 = vmatpush1.bf16.msra.mxu0 %v1827
  %1973 = vmatprep.subr.bf16.mxu0 0
  %1974 = vmatpush1.bf16.msra.mxu0 %v1828
  %1975 = vmatprep.subr.bf16.mxu0 0
  %1976 = vmatpush1.bf16.msra.mxu0 %v1829
  %1977 = vmatprep.subr.bf16.mxu0 0
  %1978 = vmatpush1.bf16.msra.mxu0 %v1830
  %1979 = vmatprep.subr.bf16.mxu0 0
  %1980 = vmatpush1.bf16.msra.mxu0 %v1831
  %1981 = vmatprep.subr.bf16.mxu0 0
  %1982 = vmatpush1.bf16.msra.mxu0 %v1832
  %1983 = vmatprep.subr.bf16.mxu0 0
  %1984 = vmatpush1.bf16.msra.mxu0 %v1833
  %1985 = vmatprep.subr.bf16.mxu0 0
  %1986 = vmatpush1.bf16.msra.mxu0 %v1834
  %1987 = vmatprep.subr.bf16.mxu0 0
  %1988 = vmatpush1.bf16.msra.mxu0 %v1835
  %1989 = vmatprep.subr.bf16.mxu0 0
  %1990 = vmatpush1.bf16.msra.mxu0 %v1836
  %1991 = vmatprep.subr.bf16.mxu0 0
  %1992 = vmatpush1.bf16.msra.mxu0 %v1837
  %1993 = vmatprep.subr.bf16.mxu0 0
  %1994 = vmatpush1.bf16.msra.mxu0 %v1838
  %1995 = vmatprep.subr.bf16.mxu0 0
  %1996 = vmatpush1.bf16.msra.mxu0 %v1839
  %1997 = vmatprep.subr.bf16.mxu0 0
  %1998 = vmatpush1.bf16.msra.mxu0 %v1840
  %1999 = vmatprep.subr.bf16.mxu0 0
  %2000 = vmatpush1.bf16.msra.mxu0 %v1841
  %2001 = vmatprep.subr.bf16.mxu0 0
  %2002 = vmatpush1.bf16.msra.mxu0 %v1842
  %2003 = vmatprep.mubr.bf16.mxu0 %v1468
  %2004 = vmatmul.mubr.bf16.gmra.mrb[0].mxu0 %v1467
  %v2005 = vpop.f32.mrb[0].mxu0
  %v2006 = vadd.f32 0.0, %v2005
  %v2007 = vpop.f32.mrb[0].mxu0
  %v2008 = vpop.f32.mrb[0].mxu0
  %v2009 = vadd.f32 0.0, %v2008
  %v2010 = vpop.f32.mrb[0].mxu0
  %2011 = vmatprep.mubr.bf16.mxu0 %v1477
  %2012 = vmatmul.mubr.bf16.gmra.mrb[0].mxu0 %v1476
  %v2013 = vpop.f32.mrb[0].mxu0
  %v2014 = vadd.f32 0.0, %v2013
  %v2015 = vpop.f32.mrb[0].mxu0
  %v2016 = vpop.f32.mrb[0].mxu0
  %v2017 = vadd.f32 0.0, %v2016
  %v2018 = vpop.f32.mrb[0].mxu0
  %2019 = vmatprep.mubr.bf16.mxu0 %v1486
  %2020 = vmatmul.mubr.bf16.gmra.mrb[0].mxu0 %v1485
  %v2021 = vpop.f32.mrb[0].mxu0
  %v2022 = vadd.f32 0.0, %v2021
  %v2023 = vpop.f32.mrb[0].mxu0
  %v2024 = vpop.f32.mrb[0].mxu0
  %v2025 = vadd.f32 0.0, %v2024
  %v2026 = vpop.f32.mrb[0].mxu0
  %2027 = vmatprep.mubr.bf16.mxu0 %v1495
  %2028 = vmatmul.mubr.bf16.gmra.mrb[0].mxu0 %v1494
  %v2029 = vpop.f32.mrb[0].mxu0
  %v2030 = vadd.f32 0.0, %v2029
  %v2031 = vpop.f32.mrb[0].mxu0
  %v2032 = vpop.f32.mrb[0].mxu0
  %v2033 = vpop.f32.mrb[0].mxu0
  %2034 = vdwg.mxu0
  %2035 = vmatprep.subr.bf16.mxu0 0
  %2036 = vmatpush1.bf16.msra.mxu0 %v1843
  %2037 = vmatprep.subr.bf16.mxu0 0
  %2038 = vmatpush1.bf16.msra.mxu0 %v1844
  %2039 = vmatprep.subr.bf16.mxu0 0
  %2040 = vmatpush1.bf16.msra.mxu0 %v1845
  %2041 = vmatprep.subr.bf16.mxu0 0
  %2042 = vmatpush1.bf16.msra.mxu0 %v1846
  %2043 = vmatprep.subr.bf16.mxu0 0
  %2044 = vmatpush1.bf16.msra.mxu0 %v1847
  %2045 = vmatprep.subr.bf16.mxu0 0
  %2046 = vmatpush1.bf16.msra.mxu0 %v1848
  %2047 = vmatprep.subr.bf16.mxu0 0
  %2048 = vmatpush1.bf16.msra.mxu0 %v1849
  %2049 = vmatprep.subr.bf16.mxu0 0
  %2050 = vmatpush1.bf16.msra.mxu0 %v1850
  %2051 = vmatprep.subr.bf16.mxu0 0
  %2052 = vmatpush1.bf16.msra.mxu0 %v1851
  %2053 = vmatprep.subr.bf16.mxu0 0
  %2054 = vmatpush1.bf16.msra.mxu0 %v1852
  %2055 = vmatprep.subr.bf16.mxu0 0
  %2056 = vmatpush1.bf16.msra.mxu0 %v1853
  %2057 = vmatprep.subr.bf16.mxu0 0
  %2058 = vmatpush1.bf16.msra.mxu0 %v1854
  %2059 = vmatprep.subr.bf16.mxu0 0
  %2060 = vmatpush1.bf16.msra.mxu0 %v1855
  %2061 = vmatprep.subr.bf16.mxu0 0
  %2062 = vmatpush1.bf16.msra.mxu0 %v1856
  %2063 = vmatprep.subr.bf16.mxu0 0
  %2064 = vmatpush1.bf16.msra.mxu0 %v1857
  %2065 = vmatprep.subr.bf16.mxu0 0
  %2066 = vmatpush1.bf16.msra.mxu0 %v1858
  %2067 = vmatprep.mubr.bf16.mxu0 %v1470
  %2068 = vmatmul.mubr.bf16.gmra.mrb[0].mxu0 %v1469
  %v2069 = vpop.f32.mrb[0].mxu0
  %v2070 = vadd.f32 %v2006, %v2069
  %v2071 = vpop.f32.mrb[0].mxu0
  %v2072 = vpop.f32.mrb[0].mxu0
  %v2073 = vadd.f32 %v2009, %v2072
  %v2074 = vpop.f32.mrb[0].mxu0
  %2075 = vmatprep.mubr.bf16.mxu0 %v1479
  %2076 = vmatmul.mubr.bf16.gmra.mrb[0].mxu0 %v1478
  %v2077 = vpop.f32.mrb[0].mxu0
  %v2078 = vadd.f32 %v2014, %v2077
  %v2079 = vpop.f32.mrb[0].mxu0
  %v2080 = vpop.f32.mrb[0].mxu0
  %v2081 = vadd.f32 %v2017, %v2080
  %v2082 = vpop.f32.mrb[0].mxu0
  %2083 = vmatprep.mubr.bf16.mxu0 %v1488
  %2084 = vmatmul.mubr.bf16.gmra.mrb[0].mxu0 %v1487
  %v2085 = vpop.f32.mrb[0].mxu0
  %v2086 = vadd.f32 %v2022, %v2085
  %v2087 = vpop.f32.mrb[0].mxu0
  %v2088 = vpop.f32.mrb[0].mxu0
  %v2089 = vadd.f32 %v2025, %v2088
  %v2090 = vpop.f32.mrb[0].mxu0
  %2091 = vmatprep.mubr.bf16.mxu0 %v1497
  %2092 = vmatmul.mubr.bf16.gmra.mrb[0].mxu0 %v1496
  %v2093 = vpop.f32.mrb[0].mxu0
  %v2094 = vadd.f32 %v2030, %v2093
  %v2095 = vpop.f32.mrb[0].mxu0
  %v2096 = vpop.f32.mrb[0].mxu0
  %v2097 = vpop.f32.mrb[0].mxu0
  %2098 = vdwg.mxu0
  %2099 = vmatprep.subr.bf16.mxu0 0
  %2100 = vmatpush1.bf16.msra.mxu0 %v1859
  %2101 = vmatprep.subr.bf16.mxu0 0
  %2102 = vmatpush1.bf16.msra.mxu0 %v1860
  %2103 = vmatprep.subr.bf16.mxu0 0
  %2104 = vmatpush1.bf16.msra.mxu0 %v1861
  %2105 = vmatprep.subr.bf16.mxu0 0
  %2106 = vmatpush1.bf16.msra.mxu0 %v1862
  %2107 = vmatprep.subr.bf16.mxu0 0
  %2108 = vmatpush1.bf16.msra.mxu0 %v1863
  %2109 = vmatprep.subr.bf16.mxu0 0
  %2110 = vmatpush1.bf16.msra.mxu0 %v1864
  %2111 = vmatprep.subr.bf16.mxu0 0
  %2112 = vmatpush1.bf16.msra.mxu0 %v1865
  %2113 = vmatprep.subr.bf16.mxu0 0
  %2114 = vmatpush1.bf16.msra.mxu0 %v1866
  %2115 = vmatprep.subr.bf16.mxu0 0
  %2116 = vmatpush1.bf16.msra.mxu0 %v1867
  %2117 = vmatprep.subr.bf16.mxu0 0
  %2118 = vmatpush1.bf16.msra.mxu0 %v1868
  %2119 = vmatprep.subr.bf16.mxu0 0
  %2120 = vmatpush1.bf16.msra.mxu0 %v1869
  %2121 = vmatprep.subr.bf16.mxu0 0
  %2122 = vmatpush1.bf16.msra.mxu0 %v1870
  %2123 = vmatprep.subr.bf16.mxu0 0
  %2124 = vmatpush1.bf16.msra.mxu0 %v1871
  %2125 = vmatprep.subr.bf16.mxu0 0
  %2126 = vmatpush1.bf16.msra.mxu0 %v1872
  %2127 = vmatprep.subr.bf16.mxu0 0
  %2128 = vmatpush1.bf16.msra.mxu0 %v1873
  %2129 = vmatprep.subr.bf16.mxu0 0
  %2130 = vmatpush1.bf16.msra.mxu0 %v1874
  %2131 = vmatprep.mubr.bf16.mxu0 %v1472
  %2132 = vmatmul.mubr.bf16.gmra.mrb[0].mxu0 %v1471
  %v2133 = vpop.f32.mrb[0].mxu0
  %v2134 = vadd.f32 %v2070, %v2133
  %v2135 = vpop.f32.mrb[0].mxu0
  %v2136 = vpop.f32.mrb[0].mxu0
  %v2137 = vadd.f32 %v2073, %v2136
  %v2138 = vpop.f32.mrb[0].mxu0
  %2139 = vmatprep.mubr.bf16.mxu0 %v1481
  %2140 = vmatmul.mubr.bf16.gmra.mrb[0].mxu0 %v1480
  %v2141 = vpop.f32.mrb[0].mxu0
  %v2142 = vadd.f32 %v2078, %v2141
  %v2143 = vpop.f32.mrb[0].mxu0
  %v2144 = vpop.f32.mrb[0].mxu0
  %v2145 = vadd.f32 %v2081, %v2144
  %v2146 = vpop.f32.mrb[0].mxu0
  %2147 = vmatprep.mubr.bf16.mxu0 %v1490
  %2148 = vmatmul.mubr.bf16.gmra.mrb[0].mxu0 %v1489
  %v2149 = vpop.f32.mrb[0].mxu0
  %v2150 = vadd.f32 %v2086, %v2149
  %v2151 = vpop.f32.mrb[0].mxu0
  %v2152 = vpop.f32.mrb[0].mxu0
  %v2153 = vadd.f32 %v2089, %v2152
  %v2154 = vpop.f32.mrb[0].mxu0
  %2155 = vmatprep.mubr.bf16.mxu0 %v1499
  %2156 = vmatmul.mubr.bf16.gmra.mrb[0].mxu0 %v1498
  %v2157 = vpop.f32.mrb[0].mxu0
  %v2158 = vadd.f32 %v2094, %v2157
  %v2159 = vpop.f32.mrb[0].mxu0
  %v2160 = vpop.f32.mrb[0].mxu0
  %v2161 = vpop.f32.mrb[0].mxu0
  %2162 = vdwg.mxu0
  %2163 = vmatprep.subr.bf16.mxu0 0
  %2164 = vmatpush1.bf16.msra.mxu0 %v1875
  %2165 = vmatprep.subr.bf16.mxu0 0
  %2166 = vmatpush1.bf16.msra.mxu0 %v1876
  %2167 = vmatprep.subr.bf16.mxu0 0
  %2168 = vmatpush1.bf16.msra.mxu0 %v1877
  %2169 = vmatprep.subr.bf16.mxu0 0
  %2170 = vmatpush1.bf16.msra.mxu0 %v1878
  %2171 = vmatprep.subr.bf16.mxu0 0
  %2172 = vmatpush1.bf16.msra.mxu0 %v1879
  %2173 = vmatprep.subr.bf16.mxu0 0
  %2174 = vmatpush1.bf16.msra.mxu0 %v1880
  %2175 = vmatprep.subr.bf16.mxu0 0
  %2176 = vmatpush1.bf16.msra.mxu0 %v1881
  %2177 = vmatprep.subr.bf16.mxu0 0
  %2178 = vmatpush1.bf16.msra.mxu0 %v1882
  %2179 = vmatprep.subr.bf16.mxu0 0
  %2180 = vmatpush1.bf16.msra.mxu0 %v1883
  %2181 = vmatprep.subr.bf16.mxu0 0
  %2182 = vmatpush1.bf16.msra.mxu0 %v1884
  %2183 = vmatprep.subr.bf16.mxu0 0
  %2184 = vmatpush1.bf16.msra.mxu0 %v1885
  %2185 = vmatprep.subr.bf16.mxu0 0
  %2186 = vmatpush1.bf16.msra.mxu0 %v1886
  %2187 = vmatprep.subr.bf16.mxu0 0
  %2188 = vmatpush1.bf16.msra.mxu0 %v1887
  %2189 = vmatprep.subr.bf16.mxu0 0
  %2190 = vmatpush1.bf16.msra.mxu0 %v1888
  %2191 = vmatprep.subr.bf16.mxu0 0
  %2192 = vmatpush1.bf16.msra.mxu0 %v1889
  %2193 = vmatprep.subr.bf16.mxu0 0
  %2194 = vmatpush1.bf16.msra.mxu0 %v1890
  %2195 = vmatprep.mubr.bf16.mxu0 %v1474
  %2196 = vmatmul.mubr.bf16.gmra.mrb[0].mxu0 %v1473
  %v2197 = vpop.f32.mrb[0].mxu0
  %v2198 = vadd.f32 %v2134, %v2197
  %v2199 = vpop.f32.mrb[0].mxu0
  %v2200 = vpop.f32.mrb[0].mxu0
  %v2201 = vadd.f32 %v2137, %v2200
  %v2202 = vpop.f32.mrb[0].mxu0
  %2203 = vmatprep.mubr.bf16.mxu0 %v1483
  %2204 = vmatmul.mubr.bf16.gmra.mrb[0].mxu0 %v1482
  %v2205 = vpop.f32.mrb[0].mxu0
  %v2206 = vadd.f32 %v2142, %v2205
  %v2207 = vpop.f32.mrb[0].mxu0
  %v2208 = vpop.f32.mrb[0].mxu0
  %v2209 = vadd.f32 %v2145, %v2208
  %v2210 = vpop.f32.mrb[0].mxu0
  %2211 = vmatprep.mubr.bf16.mxu0 %v1492
  %2212 = vmatmul.mubr.bf16.gmra.mrb[0].mxu0 %v1491
  %v2213 = vpop.f32.mrb[0].mxu0
  %v2214 = vadd.f32 %v2150, %v2213
  %v2215 = vpop.f32.mrb[0].mxu0
  %v2216 = vpop.f32.mrb[0].mxu0
  %v2217 = vadd.f32 %v2153, %v2216
  %v2218 = vpop.f32.mrb[0].mxu0
  %2219 = vmatprep.mubr.bf16.mxu0 %v1501
  %2220 = vmatmul.mubr.bf16.gmra.mrb[0].mxu0 %v1500
  %v2221 = vpop.f32.mrb[0].mxu0
  %v2222 = vadd.f32 %v2158, %v2221
  %v2223 = vpop.f32.mrb[0].mxu0
  %v2224 = vpop.f32.mrb[0].mxu0
  %v2225 = vpop.f32.mrb[0].mxu0
  %2226 = vdwg.mxu0
  %2227 = vmatprep.subr.bf16.mxu0 0
  %2228 = vmatpush1.bf16.msra.mxu0 %v1891
  %2229 = vmatprep.subr.bf16.mxu0 0
  %2230 = vmatpush1.bf16.msra.mxu0 %v1892
  %2231 = vmatprep.subr.bf16.mxu0 0
  %2232 = vmatpush1.bf16.msra.mxu0 %v1893
  %2233 = vmatprep.subr.bf16.mxu0 0
  %2234 = vmatpush1.bf16.msra.mxu0 %v1894
  %2235 = vmatprep.subr.bf16.mxu0 0
  %2236 = vmatpush1.bf16.msra.mxu0 %v1895
  %2237 = vmatprep.subr.bf16.mxu0 0
  %2238 = vmatpush1.bf16.msra.mxu0 %v1896
  %2239 = vmatprep.subr.bf16.mxu0 0
  %2240 = vmatpush1.bf16.msra.mxu0 %v1897
  %2241 = vmatprep.subr.bf16.mxu0 0
  %2242 = vmatpush1.bf16.msra.mxu0 %v1898
  %2243 = vmatprep.subr.bf16.mxu0 0
  %2244 = vmatpush1.bf16.msra.mxu0 0
  %2245 = vmatprep.subr.bf16.mxu0 0
  %2246 = vmatpush1.bf16.msra.mxu0 0
  %2247 = vmatprep.subr.bf16.mxu0 0
  %2248 = vmatpush1.bf16.msra.mxu0 0
  %2249 = vmatprep.subr.bf16.mxu0 0
  %2250 = vmatpush1.bf16.msra.mxu0 0
  %2251 = vmatprep.subr.bf16.mxu0 0
  %2252 = vmatpush1.bf16.msra.mxu0 0
  %2253 = vmatprep.subr.bf16.mxu0 0
  %2254 = vmatpush1.bf16.msra.mxu0 0
  %2255 = vmatprep.subr.bf16.mxu0 0
  %2256 = vmatpush1.bf16.msra.mxu0 0
  %2257 = vmatprep.subr.bf16.mxu0 0
  %2258 = vmatpush1.bf16.msra.mxu0 0
  %2259 = vmatprep.mubr.bf16.mxu0 0
  %2260 = vmatmul.mubr.bf16.gmra.mrb[0].mxu0 %v1475
  %v2261 = vpop.f32.mrb[0].mxu0
  %v2262 = vadd.f32 %v2198, %v2261
  %v2263 = vpop.f32.mrb[0].mxu0
  %v2264 = vpop.f32.mrb[0].mxu0
  %v2265 = vadd.f32 %v2201, %v2264
  %v2266 = vpop.f32.mrb[0].mxu0
  %2267 = vmatprep.mubr.bf16.mxu0 0
  %2268 = vmatmul.mubr.bf16.gmra.mrb[0].mxu0 %v1484
  %v2269 = vpop.f32.mrb[0].mxu0
  %v2270 = vadd.f32 %v2206, %v2269
  %v2271 = vpop.f32.mrb[0].mxu0
  %v2272 = vpop.f32.mrb[0].mxu0
  %v2273 = vadd.f32 %v2209, %v2272
  %v2274 = vpop.f32.mrb[0].mxu0
  %2275 = vmatprep.mubr.bf16.mxu0 0
  %2276 = vmatmul.mubr.bf16.gmra.mrb[0].mxu0 %v1493
  %v2277 = vpop.f32.mrb[0].mxu0
  %v2278 = vadd.f32 %v2214, %v2277
  %v2279 = vpop.f32.mrb[0].mxu0
  %v2280 = vpop.f32.mrb[0].mxu0
  %v2281 = vadd.f32 %v2217, %v2280
  %v2282 = vpop.f32.mrb[0].mxu0
  %2283 = vmatprep.mubr.bf16.mxu0 0
  %2284 = vmatmul.mubr.bf16.gmra.mrb[0].mxu0 %v1502
  %v2285 = vpop.f32.mrb[0].mxu0
  %v2286 = vadd.f32 %v2222, %v2285
  %v2287 = vpop.f32.mrb[0].mxu0
  %v2288 = vpop.f32.mrb[0].mxu0
  %v2289 = vpop.f32.mrb[0].mxu0
  %2290 = vdwg.mxu0
  %s2291 = scalar_lea.vmem %s3, 576
  %v2292 = vld [vmem:[%s2291] sm:$0xf]
  %v2293 = vld [vmem:[%s2291 + $0x4] sm:$0xf]
  %v2294 = vld [vmem:[%s2291 + $0x8] sm:$0xf]
  %v2295 = vld [vmem:[%s2291 + $0xc] sm:$0xf]
  %v2296 = vld [vmem:[%s2291 + $0x10] sm:$0xf]
  %v2297 = vld [vmem:[%s2291 + $0x14] sm:$0xf]
  %v2298 = vld [vmem:[%s2291 + $0x18] sm:$0xf]
  %v2299 = vld [vmem:[%s2291 + $0x1c] sm:$0xf]
  %v2300 = vld [vmem:[%s2291 + $0x20] sm:$0xf]
  %v2301 = vld [vmem:[%s2291 + $0x24] sm:$0xf]
  %v2302 = vld [vmem:[%s2291 + $0x28] sm:$0xf]
  %v2303 = vld [vmem:[%s2291 + $0x2c] sm:$0xf]
  %v2304 = vld [vmem:[%s2291 + $0x30] sm:$0xf]
  %v2305 = vld [vmem:[%s2291 + $0x34] sm:$0xf]
  %v2306 = vld [vmem:[%s2291 + $0x38] sm:$0xf]
  %v2307 = vld [vmem:[%s2291 + $0x3c] sm:$0xf]
  %v2308 = vld [vmem:[%s2291 + $0x40] sm:$0xf]
  %v2309 = vld [vmem:[%s2291 + $0x44] sm:$0xf]
  %v2310 = vld [vmem:[%s2291 + $0x48] sm:$0xf]
  %v2311 = vld [vmem:[%s2291 + $0x4c] sm:$0xf]
  %v2312 = vld [vmem:[%s2291 + $0x50] sm:$0xf]
  %v2313 = vld [vmem:[%s2291 + $0x54] sm:$0xf]
  %v2314 = vld [vmem:[%s2291 + $0x58] sm:$0xf]
  %v2315 = vld [vmem:[%s2291 + $0x5c] sm:$0xf]
  %v2316 = vld [vmem:[%s2291 + $0x60] sm:$0xf]
  %v2317 = vld [vmem:[%s2291 + $0x64] sm:$0xf]
  %v2318 = vld [vmem:[%s2291 + $0x68] sm:$0xf]
  %v2319 = vld [vmem:[%s2291 + $0x6c] sm:$0xf]
  %v2320 = vld [vmem:[%s2291 + $0x70] sm:$0xf]
  %v2321 = vld [vmem:[%s2291 + $0x74] sm:$0xf]
  %v2322 = vld [vmem:[%s2291 + $0x78] sm:$0xf]
  %v2323 = vld [vmem:[%s2291 + $0x7c] sm:$0xf]
  %v2324 = vld [vmem:[%s2291 + $0x80] sm:$0xf]
  %v2325 = vld [vmem:[%s2291 + $0x84] sm:$0xf]
  %v2326 = vld [vmem:[%s2291 + $0x88] sm:$0xf]
  %v2327 = vld [vmem:[%s2291 + $0x8c] sm:$0xf]
  %v2328 = vld [vmem:[%s2291 + $0x90] sm:$0xf]
  %v2329 = vld [vmem:[%s2291 + $0x94] sm:$0xf]
  %v2330 = vld [vmem:[%s2291 + $0x98] sm:$0xf]
  %v2331 = vld [vmem:[%s2291 + $0x9c] sm:$0xf]
  %v2332 = vld [vmem:[%s2291 + $0xa0] sm:$0xf]
  %v2333 = vld [vmem:[%s2291 + $0xa4] sm:$0xf]
  %v2334 = vld [vmem:[%s2291 + $0xa8] sm:$0xf]
  %v2335 = vld [vmem:[%s2291 + $0xac] sm:$0xf]
  %v2336 = vld [vmem:[%s2291 + $0xb0] sm:$0xf]
  %v2337 = vld [vmem:[%s2291 + $0xb4] sm:$0xf]
  %v2338 = vld [vmem:[%s2291 + $0xb8] sm:$0xf]
  %v2339 = vld [vmem:[%s2291 + $0xbc] sm:$0xf]
  %v2340 = vld [vmem:[%s2291 + $0xc0] sm:$0xf]
  %v2341 = vld [vmem:[%s2291 + $0xc4] sm:$0xf]
  %v2342 = vld [vmem:[%s2291 + $0xc8] sm:$0xf]
  %v2343 = vld [vmem:[%s2291 + $0xcc] sm:$0xf]
  %v2344 = vld [vmem:[%s2291 + $0xd0] sm:$0xf]
  %v2345 = vld [vmem:[%s2291 + $0xd4] sm:$0xf]
  %v2346 = vld [vmem:[%s2291 + $0xd8] sm:$0xf]
  %v2347 = vld [vmem:[%s2291 + $0xdc] sm:$0xf]
  %v2348 = vld [vmem:[%s2291 + $0xe0] sm:$0xf]
  %v2349 = vld [vmem:[%s2291 + $0xe4] sm:$0xf]
  %v2350 = vld [vmem:[%s2291 + $0xe8] sm:$0xf]
  %v2351 = vld [vmem:[%s2291 + $0xec] sm:$0xf]
  %v2352 = vld [vmem:[%s2291 + $0xf0] sm:$0xf]
  %v2353 = vld [vmem:[%s2291 + $0xf4] sm:$0xf]
  %v2354 = vld [vmem:[%s2291 + $0xf8] sm:$0xf]
  %v2355 = vld [vmem:[%s2291 + $0xfc] sm:$0xf]
  %v2356 = vld [vmem:[%s2291 + $0x100] sm:$0xf]
  %v2357 = vld [vmem:[%s2291 + $0x104] sm:$0xf]
  %v2358 = vld [vmem:[%s2291 + $0x108] sm:$0xf]
  %v2359 = vld [vmem:[%s2291 + $0x10c] sm:$0xf]
  %v2360 = vld [vmem:[%s2291 + $0x110] sm:$0xf]
  %v2361 = vld [vmem:[%s2291 + $0x114] sm:$0xf]
  %v2362 = vld [vmem:[%s2291 + $0x118] sm:$0xf]
  %v2363 = vld [vmem:[%s2291 + $0x11c] sm:$0xf]
  %v2364 = vld [vmem:[%s2291 + $0x120] sm:$0xf]
  %v2365 = vld [vmem:[%s2291 + $0x124] sm:$0xf]
  %v2366 = vld [vmem:[%s2291 + $0x128] sm:$0xf]
  %v2367 = vld [vmem:[%s2291 + $0x12c] sm:$0xf]
  %v2368 = vld [vmem:[%s2291 + $0x130] sm:$0xf]
  %v2369 = vld [vmem:[%s2291 + $0x134] sm:$0xf]
  %v2370 = vld [vmem:[%s2291 + $0x138] sm:$0xf]
  %v2371 = vld [vmem:[%s2291 + $0x13c] sm:$0xf]
  %v2372 = vld [vmem:[%s2291 + $0x140] sm:$0xf]
  %v2373 = vld [vmem:[%s2291 + $0x144] sm:$0xf]
  %v2374 = vld [vmem:[%s2291 + $0x148] sm:$0xf]
  %v2375 = vld [vmem:[%s2291 + $0x14c] sm:$0xf]
  %v2376 = vld [vmem:[%s2291 + $0x150] sm:$0xf]
  %v2377 = vld [vmem:[%s2291 + $0x154] sm:$0xf]
  %v2378 = vld [vmem:[%s2291 + $0x158] sm:$0xf]
  %v2379 = vld [vmem:[%s2291 + $0x15c] sm:$0xf]
  %v2380 = vld [vmem:[%s2291 + $0x160] sm:$0xf]
  %v2381 = vld [vmem:[%s2291 + $0x164] sm:$0xf]
  %v2382 = vld [vmem:[%s2291 + $0x168] sm:$0xf]
  %v2383 = vld [vmem:[%s2291 + $0x16c] sm:$0xf]
  %v2384 = vld [vmem:[%s2291 + $0x170] sm:$0xf]
  %v2385 = vld [vmem:[%s2291 + $0x174] sm:$0xf]
  %v2386 = vld [vmem:[%s2291 + $0x178] sm:$0xf]
  %v2387 = vld [vmem:[%s2291 + $0x17c] sm:$0xf]
  %v2388 = vld [vmem:[%s2291 + $0x180] sm:$0xf]
  %v2389 = vld [vmem:[%s2291 + $0x184] sm:$0xf]
  %v2390 = vld [vmem:[%s2291 + $0x188] sm:$0xf]
  %v2391 = vld [vmem:[%s2291 + $0x18c] sm:$0xf]
  %v2392 = vld [vmem:[%s2291 + $0x190] sm:$0xf]
  %v2393 = vld [vmem:[%s2291 + $0x194] sm:$0xf]
  %v2394 = vld [vmem:[%s2291 + $0x198] sm:$0xf]
  %v2395 = vld [vmem:[%s2291 + $0x19c] sm:$0xf]
  %v2396 = vld [vmem:[%s2291 + $0x1a0] sm:$0xf]
  %v2397 = vld [vmem:[%s2291 + $0x1a4] sm:$0xf]
  %v2398 = vld [vmem:[%s2291 + $0x1a8] sm:$0xf]
  %v2399 = vld [vmem:[%s2291 + $0x1ac] sm:$0xf]
  %v2400 = vld [vmem:[%s2291 + $0x1b0] sm:$0xf]
  %v2401 = vld [vmem:[%s2291 + $0x1b4] sm:$0xf]
  %v2402 = vld [vmem:[%s2291 + $0x1b8] sm:$0xf]
  %v2403 = vld [vmem:[%s2291 + $0x1bc] sm:$0xf]
  %v2404 = vld [vmem:[%s2291 + $0x1c0] sm:$0xf]
  %v2405 = vld [vmem:[%s2291 + $0x1c4] sm:$0xf]
  %v2406 = vld [vmem:[%s2291 + $0x1c8] sm:$0xf]
  %v2407 = vld [vmem:[%s2291 + $0x1cc] sm:$0xf]
  %v2408 = vld [vmem:[%s2291 + $0x1d0] sm:$0xf]
  %v2409 = vld [vmem:[%s2291 + $0x1d4] sm:$0xf]
  %v2410 = vld [vmem:[%s2291 + $0x1d8] sm:$0xf]
  %v2411 = vld [vmem:[%s2291 + $0x1dc] sm:$0xf]
  %v2412 = vld [vmem:[%s2291 + $0x1e0] sm:$0xf]
  %v2413 = vld [vmem:[%s2291 + $0x1e4] sm:$0xf]
  %v2414 = vld [vmem:[%s2291 + $0x1e8] sm:$0xf]
  %v2415 = vld [vmem:[%s2291 + $0x1ec] sm:$0xf]
  %v2416 = vld [vmem:[%s2291 + $0x1f0] sm:$0xf]
  %v2417 = vld [vmem:[%s2291 + $0x1f4] sm:$0xf]
  %v2418 = vld [vmem:[%s2291 + $0x1f8] sm:$0xf]
  %v2419 = vld [vmem:[%s2291 + $0x1fc] sm:$0xf]
  %v2420 = vld [vmem:[%s2291 + $0x200] sm:$0xf]
  %v2421 = vld [vmem:[%s2291 + $0x204] sm:$0xf]
  %v2422 = vld [vmem:[%s2291 + $0x208] sm:$0xf]
  %v2423 = vld [vmem:[%s2291 + $0x20c] sm:$0xf]
  %v2424 = vld [vmem:[%s2291 + $0x210] sm:$0xf]
  %v2425 = vld [vmem:[%s2291 + $0x214] sm:$0xf]
  %v2426 = vld [vmem:[%s2291 + $0x218] sm:$0xf]
  %v2427 = vld [vmem:[%s2291 + $0x21c] sm:$0xf]
  %v2428 = vld [vmem:[%s2291 + $0x220] sm:$0xf]
  %v2429 = vld [vmem:[%s2291 + $0x224] sm:$0xf]
  %v2430 = vld [vmem:[%s2291 + $0x228] sm:$0xf]
  %v2431 = vld [vmem:[%s2291 + $0x22c] sm:$0xf]
  %v2432 = vld [vmem:[%s2291 + $0x230] sm:$0xf]
  %v2433 = vld [vmem:[%s2291 + $0x234] sm:$0xf]
  %v2434 = vld [vmem:[%s2291 + $0x238] sm:$0xf]
  %v2435 = vld [vmem:[%s2291 + $0x23c] sm:$0xf]
  %v2580 = vunpack.c.l.b16 %v2292
  %v2581 = vunpack.c.l.b16 %v2293
  %v2582 = vunpack.c.l.b16 %v2294
  %v2583 = vunpack.c.l.b16 %v2295
  %v2584 = vunpack.c.l.b16 %v2296
  %v2585 = vunpack.c.l.b16 %v2297
  %v2586 = vunpack.c.l.b16 %v2298
  %v2587 = vunpack.c.l.b16 %v2299
  %v2588 = vunpack.c.l.b16 %v2300
  %v2589 = vunpack.c.l.b16 %v2301
  %v2590 = vunpack.c.l.b16 %v2302
  %v2591 = vunpack.c.l.b16 %v2303
  %v2592 = vunpack.c.l.b16 %v2304
  %v2593 = vunpack.c.l.b16 %v2305
  %v2594 = vunpack.c.l.b16 %v2306
  %v2595 = vunpack.c.l.b16 %v2307
  %v2596 = vunpack.c.l.b16 %v2308
  %v2597 = vunpack.c.l.b16 %v2309
  %v2598 = vunpack.c.l.b16 %v2310
  %v2599 = vunpack.c.l.b16 %v2311
  %v2600 = vunpack.c.l.b16 %v2312
  %v2601 = vunpack.c.l.b16 %v2313
  %v2602 = vunpack.c.l.b16 %v2314
  %v2603 = vunpack.c.l.b16 %v2315
  %v2604 = vunpack.c.l.b16 %v2316
  %v2605 = vunpack.c.l.b16 %v2317
  %v2606 = vunpack.c.l.b16 %v2318
  %v2607 = vunpack.c.l.b16 %v2319
  %v2608 = vunpack.c.l.b16 %v2320
  %v2609 = vunpack.c.l.b16 %v2321
  %v2610 = vunpack.c.l.b16 %v2322
  %v2611 = vunpack.c.l.b16 %v2323
  %v2612 = vunpack.c.l.b16 %v2324
  %v2613 = vunpack.c.l.b16 %v2325
  %v2614 = vunpack.c.l.b16 %v2326
  %v2615 = vunpack.c.l.b16 %v2327
  %v2616 = vunpack.c.l.b16 %v2328
  %v2617 = vunpack.c.l.b16 %v2329
  %v2618 = vunpack.c.l.b16 %v2330
  %v2619 = vunpack.c.l.b16 %v2331
  %v2620 = vunpack.c.l.b16 %v2332
  %v2621 = vunpack.c.l.b16 %v2333
  %v2622 = vunpack.c.l.b16 %v2334
  %v2623 = vunpack.c.l.b16 %v2335
  %v2624 = vunpack.c.l.b16 %v2336
  %v2625 = vunpack.c.l.b16 %v2337
  %v2626 = vunpack.c.l.b16 %v2338
  %v2627 = vunpack.c.l.b16 %v2339
  %v2628 = vunpack.c.l.b16 %v2340
  %v2629 = vunpack.c.l.b16 %v2341
  %v2630 = vunpack.c.l.b16 %v2342
  %v2631 = vunpack.c.l.b16 %v2343
  %v2632 = vunpack.c.l.b16 %v2344
  %v2633 = vunpack.c.l.b16 %v2345
  %v2634 = vunpack.c.l.b16 %v2346
  %v2635 = vunpack.c.l.b16 %v2347
  %v2636 = vunpack.c.l.b16 %v2348
  %v2637 = vunpack.c.l.b16 %v2349
  %v2638 = vunpack.c.l.b16 %v2350
  %v2639 = vunpack.c.l.b16 %v2351
  %v2640 = vunpack.c.l.b16 %v2352
  %v2641 = vunpack.c.l.b16 %v2353
  %v2642 = vunpack.c.l.b16 %v2354
  %v2643 = vunpack.c.l.b16 %v2355
  %v2644 = vunpack.c.l.b16 %v2356
  %v2645 = vunpack.c.l.b16 %v2357
  %v2646 = vunpack.c.l.b16 %v2358
  %v2647 = vunpack.c.l.b16 %v2359
  %v2648 = vunpack.c.l.b16 %v2360
  %v2649 = vunpack.c.l.b16 %v2361
  %v2650 = vunpack.c.l.b16 %v2362
  %v2651 = vunpack.c.l.b16 %v2363
  %v2652 = vunpack.c.l.b16 %v2364
  %v2653 = vunpack.c.l.b16 %v2365
  %v2654 = vunpack.c.l.b16 %v2366
  %v2655 = vunpack.c.l.b16 %v2367
  %v2656 = vunpack.c.l.b16 %v2368
  %v2657 = vunpack.c.l.b16 %v2369
  %v2658 = vunpack.c.l.b16 %v2370
  %v2659 = vunpack.c.l.b16 %v2371
  %v2660 = vunpack.c.l.b16 %v2372
  %v2661 = vunpack.c.l.b16 %v2373
  %v2662 = vunpack.c.l.b16 %v2374
  %v2663 = vunpack.c.l.b16 %v2375
  %v2664 = vunpack.c.l.b16 %v2376
  %v2665 = vunpack.c.l.b16 %v2377
  %v2666 = vunpack.c.l.b16 %v2378
  %v2667 = vunpack.c.l.b16 %v2379
  %v2668 = vunpack.c.l.b16 %v2380
  %v2669 = vunpack.c.l.b16 %v2381
  %v2670 = vunpack.c.l.b16 %v2382
  %v2671 = vunpack.c.l.b16 %v2383
  %v2672 = vunpack.c.l.b16 %v2384
  %v2673 = vunpack.c.l.b16 %v2385
  %v2674 = vunpack.c.l.b16 %v2386
  %v2675 = vunpack.c.l.b16 %v2387
  %v2676 = vunpack.c.l.b16 %v2388
  %v2677 = vunpack.c.l.b16 %v2389
  %v2678 = vunpack.c.l.b16 %v2390
  %v2679 = vunpack.c.l.b16 %v2391
  %v2680 = vunpack.c.l.b16 %v2392
  %v2681 = vunpack.c.l.b16 %v2393
  %v2682 = vunpack.c.l.b16 %v2394
  %v2683 = vunpack.c.l.b16 %v2395
  %v2684 = vunpack.c.l.b16 %v2396
  %v2685 = vunpack.c.l.b16 %v2397
  %v2686 = vunpack.c.l.b16 %v2398
  %v2687 = vunpack.c.l.b16 %v2399
  %v2688 = vunpack.c.l.b16 %v2400
  %v2689 = vunpack.c.l.b16 %v2401
  %v2690 = vunpack.c.l.b16 %v2402
  %v2691 = vunpack.c.l.b16 %v2403
  %v2692 = vunpack.c.l.b16 %v2404
  %v2693 = vunpack.c.l.b16 %v2405
  %v2694 = vunpack.c.l.b16 %v2406
  %v2695 = vunpack.c.l.b16 %v2407
  %v2696 = vunpack.c.l.b16 %v2408
  %v2697 = vunpack.c.l.b16 %v2409
  %v2698 = vunpack.c.l.b16 %v2410
  %v2699 = vunpack.c.l.b16 %v2411
  %v2700 = vunpack.c.l.b16 %v2412
  %v2701 = vunpack.c.l.b16 %v2413
  %v2702 = vunpack.c.l.b16 %v2414
  %v2703 = vunpack.c.l.b16 %v2415
  %v2704 = vunpack.c.l.b16 %v2416
  %v2705 = vunpack.c.l.b16 %v2417
  %v2706 = vunpack.c.l.b16 %v2418
  %v2707 = vunpack.c.l.b16 %v2419
  %v2708 = vunpack.c.l.b16 %v2420
  %v2709 = vunpack.c.l.b16 %v2421
  %v2710 = vunpack.c.l.b16 %v2422
  %v2711 = vunpack.c.l.b16 %v2423
  %v2712 = vunpack.c.l.b16 %v2424
  %v2713 = vunpack.c.l.b16 %v2425
  %v2714 = vunpack.c.l.b16 %v2426
  %v2715 = vunpack.c.l.b16 %v2427
  %v2716 = vunpack.c.l.b16 %v2428
  %v2717 = vunpack.c.l.b16 %v2429
  %v2718 = vunpack.c.l.b16 %v2430
  %v2719 = vunpack.c.l.b16 %v2431
  %v2720 = vunpack.c.l.b16 %v2432
  %v2721 = vunpack.c.l.b16 %v2433
  %v2722 = vunpack.c.l.b16 %v2434
  %v2723 = vunpack.c.l.b16 %v2435
  %v2724 = vpack.c.b16 %v2581, %v2580
  %v2725 = vpack.c.b16 %v2583, %v2582
  %v2726 = vpack.c.b16 %v2585, %v2584
  %v2727 = vpack.c.b16 %v2587, %v2586
  %v2728 = vpack.c.b16 %v2589, %v2588
  %v2729 = vpack.c.b16 %v2591, %v2590
  %v2730 = vpack.c.b16 %v2593, %v2592
  %v2731 = vpack.c.b16 %v2595, %v2594
  %v2732 = vpack.c.b16 %v2597, %v2596
  %v2733 = vpack.c.b16 %v2599, %v2598
  %v2734 = vpack.c.b16 %v2601, %v2600
  %v2735 = vpack.c.b16 %v2603, %v2602
  %v2736 = vpack.c.b16 %v2605, %v2604
  %v2737 = vpack.c.b16 %v2607, %v2606
  %v2738 = vpack.c.b16 %v2609, %v2608
  %v2739 = vpack.c.b16 %v2611, %v2610
  %v2740 = vpack.c.b16 %v2613, %v2612
  %v2741 = vpack.c.b16 %v2615, %v2614
  %v2742 = vpack.c.b16 %v2617, %v2616
  %v2743 = vpack.c.b16 %v2619, %v2618
  %v2744 = vpack.c.b16 %v2621, %v2620
  %v2745 = vpack.c.b16 %v2623, %v2622
  %v2746 = vpack.c.b16 %v2625, %v2624
  %v2747 = vpack.c.b16 %v2627, %v2626
  %v2748 = vpack.c.b16 %v2629, %v2628
  %v2749 = vpack.c.b16 %v2631, %v2630
  %v2750 = vpack.c.b16 %v2633, %v2632
  %v2751 = vpack.c.b16 %v2635, %v2634
  %v2752 = vpack.c.b16 %v2637, %v2636
  %v2753 = vpack.c.b16 %v2639, %v2638
  %v2754 = vpack.c.b16 %v2641, %v2640
  %v2755 = vpack.c.b16 %v2643, %v2642
  %v2756 = vpack.c.b16 %v2645, %v2644
  %v2757 = vpack.c.b16 %v2647, %v2646
  %v2758 = vpack.c.b16 %v2649, %v2648
  %v2759 = vpack.c.b16 %v2651, %v2650
  %v2760 = vpack.c.b16 %v2653, %v2652
  %v2761 = vpack.c.b16 %v2655, %v2654
  %v2762 = vpack.c.b16 %v2657, %v2656
  %v2763 = vpack.c.b16 %v2659, %v2658
  %v2764 = vpack.c.b16 %v2661, %v2660
  %v2765 = vpack.c.b16 %v2663, %v2662
  %v2766 = vpack.c.b16 %v2665, %v2664
  %v2767 = vpack.c.b16 %v2667, %v2666
  %v2768 = vpack.c.b16 %v2669, %v2668
  %v2769 = vpack.c.b16 %v2671, %v2670
  %v2770 = vpack.c.b16 %v2673, %v2672
  %v2771 = vpack.c.b16 %v2675, %v2674
  %v2772 = vpack.c.b16 %v2677, %v2676
  %v2773 = vpack.c.b16 %v2679, %v2678
  %v2774 = vpack.c.b16 %v2681, %v2680
  %v2775 = vpack.c.b16 %v2683, %v2682
  %v2776 = vpack.c.b16 %v2685, %v2684
  %v2777 = vpack.c.b16 %v2687, %v2686
  %v2778 = vpack.c.b16 %v2689, %v2688
  %v2779 = vpack.c.b16 %v2691, %v2690
  %v2780 = vpack.c.b16 %v2693, %v2692
  %v2781 = vpack.c.b16 %v2695, %v2694
  %v2782 = vpack.c.b16 %v2697, %v2696
  %v2783 = vpack.c.b16 %v2699, %v2698
  %v2784 = vpack.c.b16 %v2701, %v2700
  %v2785 = vpack.c.b16 %v2703, %v2702
  %v2786 = vpack.c.b16 %v2705, %v2704
  %v2787 = vpack.c.b16 %v2707, %v2706
  %v2788 = vpack.c.b16 %v2709, %v2708
  %v2789 = vpack.c.b16 %v2711, %v2710
  %v2790 = vpack.c.b16 %v2713, %v2712
  %v2791 = vpack.c.b16 %v2715, %v2714
  %v2792 = vpack.c.b16 %v2717, %v2716
  %v2793 = vpack.c.b16 %v2719, %v2718
  %v2794 = vpack.c.b16 %v2721, %v2720
  %v2795 = vpack.c.b16 %v2723, %v2722
  %2868 = vmatprep.subr.bf16.mxu0 0
  %2869 = vmatpush1.bf16.msra.mxu0 %v2724
  %2870 = vmatprep.subr.bf16.mxu0 0
  %2871 = vmatpush1.bf16.msra.mxu0 %v2725
  %2872 = vmatprep.subr.bf16.mxu0 0
  %2873 = vmatpush1.bf16.msra.mxu0 %v2726
  %2874 = vmatprep.subr.bf16.mxu0 0
  %2875 = vmatpush1.bf16.msra.mxu0 %v2727
  %2876 = vmatprep.subr.bf16.mxu0 0
  %2877 = vmatpush1.bf16.msra.mxu0 %v2728
  %2878 = vmatprep.subr.bf16.mxu0 0
  %2879 = vmatpush1.bf16.msra.mxu0 %v2729
  %2880 = vmatprep.subr.bf16.mxu0 0
  %2881 = vmatpush1.bf16.msra.mxu0 %v2730
  %2882 = vmatprep.subr.bf16.mxu0 0
  %2883 = vmatpush1.bf16.msra.mxu0 %v2731
  %2884 = vmatprep.subr.bf16.mxu0 0
  %2885 = vmatpush1.bf16.msra.mxu0 %v2732
  %2886 = vmatprep.subr.bf16.mxu0 0
  %2887 = vmatpush1.bf16.msra.mxu0 %v2733
  %2888 = vmatprep.subr.bf16.mxu0 0
  %2889 = vmatpush1.bf16.msra.mxu0 %v2734
  %2890 = vmatprep.subr.bf16.mxu0 0
  %2891 = vmatpush1.bf16.msra.mxu0 %v2735
  %2892 = vmatprep.subr.bf16.mxu0 0
  %2893 = vmatpush1.bf16.msra.mxu0 %v2736
  %2894 = vmatprep.subr.bf16.mxu0 0
  %2895 = vmatpush1.bf16.msra.mxu0 %v2737
  %2896 = vmatprep.subr.bf16.mxu0 0
  %2897 = vmatpush1.bf16.msra.mxu0 %v2738
  %2898 = vmatprep.subr.bf16.mxu0 0
  %2899 = vmatpush1.bf16.msra.mxu0 %v2739
  %2900 = vmatprep.mubr.bf16.mxu0 %v1468
  %2901 = vmatmul.mubr.bf16.gmra.mrb[0].mxu0 %v1467
  %v2902 = vpop.f32.mrb[0].mxu0
  %v2903 = vadd.f32 0.0, %v2902
  %v2904 = vpop.f32.mrb[0].mxu0
  %v2905 = vpop.f32.mrb[0].mxu0
  %v2906 = vadd.f32 0.0, %v2905
  %v2907 = vpop.f32.mrb[0].mxu0
  %2908 = vmatprep.mubr.bf16.mxu0 %v1477
  %2909 = vmatmul.mubr.bf16.gmra.mrb[0].mxu0 %v1476
  %v2910 = vpop.f32.mrb[0].mxu0
  %v2911 = vadd.f32 0.0, %v2910
  %v2912 = vpop.f32.mrb[0].mxu0
  %v2913 = vpop.f32.mrb[0].mxu0
  %v2914 = vadd.f32 0.0, %v2913
  %v2915 = vpop.f32.mrb[0].mxu0
  %2916 = vmatprep.mubr.bf16.mxu0 %v1486
  %2917 = vmatmul.mubr.bf16.gmra.mrb[0].mxu0 %v1485
  %v2918 = vpop.f32.mrb[0].mxu0
  %v2919 = vadd.f32 0.0, %v2918
  %v2920 = vpop.f32.mrb[0].mxu0
  %v2921 = vpop.f32.mrb[0].mxu0
  %v2922 = vadd.f32 0.0, %v2921
  %v2923 = vpop.f32.mrb[0].mxu0
  %2924 = vmatprep.mubr.bf16.mxu0 %v1495
  %2925 = vmatmul.mubr.bf16.gmra.mrb[0].mxu0 %v1494
  %v2926 = vpop.f32.mrb[0].mxu0
  %v2927 = vadd.f32 0.0, %v2926
  %v2928 = vpop.f32.mrb[0].mxu0
  %v2929 = vpop.f32.mrb[0].mxu0
  %v2930 = vpop.f32.mrb[0].mxu0
  %2931 = vdwg.mxu0
  %2932 = vmatprep.subr.bf16.mxu0 0
  %2933 = vmatpush1.bf16.msra.mxu0 %v2740
  %2934 = vmatprep.subr.bf16.mxu0 0
  %2935 = vmatpush1.bf16.msra.mxu0 %v2741
  %2936 = vmatprep.subr.bf16.mxu0 0
  %2937 = vmatpush1.bf16.msra.mxu0 %v2742
  %2938 = vmatprep.subr.bf16.mxu0 0
  %2939 = vmatpush1.bf16.msra.mxu0 %v2743
  %2940 = vmatprep.subr.bf16.mxu0 0
  %2941 = vmatpush1.bf16.msra.mxu0 %v2744
  %2942 = vmatprep.subr.bf16.mxu0 0
  %2943 = vmatpush1.bf16.msra.mxu0 %v2745
  %2944 = vmatprep.subr.bf16.mxu0 0
  %2945 = vmatpush1.bf16.msra.mxu0 %v2746
  %2946 = vmatprep.subr.bf16.mxu0 0
  %2947 = vmatpush1.bf16.msra.mxu0 %v2747
  %2948 = vmatprep.subr.bf16.mxu0 0
  %2949 = vmatpush1.bf16.msra.mxu0 %v2748
  %2950 = vmatprep.subr.bf16.mxu0 0
  %2951 = vmatpush1.bf16.msra.mxu0 %v2749
  %2952 = vmatprep.subr.bf16.mxu0 0
  %2953 = vmatpush1.bf16.msra.mxu0 %v2750
  %2954 = vmatprep.subr.bf16.mxu0 0
  %2955 = vmatpush1.bf16.msra.mxu0 %v2751
  %2956 = vmatprep.subr.bf16.mxu0 0
  %2957 = vmatpush1.bf16.msra.mxu0 %v2752
  %2958 = vmatprep.subr.bf16.mxu0 0
  %2959 = vmatpush1.bf16.msra.mxu0 %v2753
  %2960 = vmatprep.subr.bf16.mxu0 0
  %2961 = vmatpush1.bf16.msra.mxu0 %v2754
  %2962 = vmatprep.subr.bf16.mxu0 0
  %2963 = vmatpush1.bf16.msra.mxu0 %v2755
  %2964 = vmatprep.mubr.bf16.mxu0 %v1470
  %2965 = vmatmul.mubr.bf16.gmra.mrb[0].mxu0 %v1469
  %v2966 = vpop.f32.mrb[0].mxu0
  %v2967 = vadd.f32 %v2903, %v2966
  %v2968 = vpop.f32.mrb[0].mxu0
  %v2969 = vpop.f32.mrb[0].mxu0
  %v2970 = vadd.f32 %v2906, %v2969
  %v2971 = vpop.f32.mrb[0].mxu0
  %2972 = vmatprep.mubr.bf16.mxu0 %v1479
  %2973 = vmatmul.mubr.bf16.gmra.mrb[0].mxu0 %v1478
  %v2974 = vpop.f32.mrb[0].mxu0
  %v2975 = vadd.f32 %v2911, %v2974
  %v2976 = vpop.f32.mrb[0].mxu0
  %v2977 = vpop.f32.mrb[0].mxu0
  %v2978 = vadd.f32 %v2914, %v2977
  %v2979 = vpop.f32.mrb[0].mxu0
  %2980 = vmatprep.mubr.bf16.mxu0 %v1488
  %2981 = vmatmul.mubr.bf16.gmra.mrb[0].mxu0 %v1487
  %v2982 = vpop.f32.mrb[0].mxu0
  %v2983 = vadd.f32 %v2919, %v2982
  %v2984 = vpop.f32.mrb[0].mxu0
  %v2985 = vpop.f32.mrb[0].mxu0
  %v2986 = vadd.f32 %v2922, %v2985
  %v2987 = vpop.f32.mrb[0].mxu0
  %2988 = vmatprep.mubr.bf16.mxu0 %v1497
  %2989 = vmatmul.mubr.bf16.gmra.mrb[0].mxu0 %v1496
  %v2990 = vpop.f32.mrb[0].mxu0
  %v2991 = vadd.f32 %v2927, %v2990
  %v2992 = vpop.f32.mrb[0].mxu0
  %v2993 = vpop.f32.mrb[0].mxu0
  %v2994 = vpop.f32.mrb[0].mxu0
  %2995 = vdwg.mxu0
  %2996 = vmatprep.subr.bf16.mxu0 0
  %2997 = vmatpush1.bf16.msra.mxu0 %v2756
  %2998 = vmatprep.subr.bf16.mxu0 0
  %2999 = vmatpush1.bf16.msra.mxu0 %v2757
  %3000 = vmatprep.subr.bf16.mxu0 0
  %3001 = vmatpush1.bf16.msra.mxu0 %v2758
  %3002 = vmatprep.subr.bf16.mxu0 0
  %3003 = vmatpush1.bf16.msra.mxu0 %v2759
  %3004 = vmatprep.subr.bf16.mxu0 0
  %3005 = vmatpush1.bf16.msra.mxu0 %v2760
  %3006 = vmatprep.subr.bf16.mxu0 0
  %3007 = vmatpush1.bf16.msra.mxu0 %v2761
  %3008 = vmatprep.subr.bf16.mxu0 0
  %3009 = vmatpush1.bf16.msra.mxu0 %v2762
  %3010 = vmatprep.subr.bf16.mxu0 0
  %3011 = vmatpush1.bf16.msra.mxu0 %v2763
  %3012 = vmatprep.subr.bf16.mxu0 0
  %3013 = vmatpush1.bf16.msra.mxu0 %v2764
  %3014 = vmatprep.subr.bf16.mxu0 0
  %3015 = vmatpush1.bf16.msra.mxu0 %v2765
  %3016 = vmatprep.subr.bf16.mxu0 0
  %3017 = vmatpush1.bf16.msra.mxu0 %v2766
  %3018 = vmatprep.subr.bf16.mxu0 0
  %3019 = vmatpush1.bf16.msra.mxu0 %v2767
  %3020 = vmatprep.subr.bf16.mxu0 0
  %3021 = vmatpush1.bf16.msra.mxu0 %v2768
  %3022 = vmatprep.subr.bf16.mxu0 0
  %3023 = vmatpush1.bf16.msra.mxu0 %v2769
  %3024 = vmatprep.subr.bf16.mxu0 0
  %3025 = vmatpush1.bf16.msra.mxu0 %v2770
  %3026 = vmatprep.subr.bf16.mxu0 0
  %3027 = vmatpush1.bf16.msra.mxu0 %v2771
  %3028 = vmatprep.mubr.bf16.mxu0 %v1472
  %3029 = vmatmul.mubr.bf16.gmra.mrb[0].mxu0 %v1471
  %v3030 = vpop.f32.mrb[0].mxu0
  %v3031 = vadd.f32 %v2967, %v3030
  %v3032 = vpop.f32.mrb[0].mxu0
  %v3033 = vpop.f32.mrb[0].mxu0
  %v3034 = vadd.f32 %v2970, %v3033
  %v3035 = vpop.f32.mrb[0].mxu0
  %3036 = vmatprep.mubr.bf16.mxu0 %v1481
  %3037 = vmatmul.mubr.bf16.gmra.mrb[0].mxu0 %v1480
  %v3038 = vpop.f32.mrb[0].mxu0
  %v3039 = vadd.f32 %v2975, %v3038
  %v3040 = vpop.f32.mrb[0].mxu0
  %v3041 = vpop.f32.mrb[0].mxu0
  %v3042 = vadd.f32 %v2978, %v3041
  %v3043 = vpop.f32.mrb[0].mxu0
  %3044 = vmatprep.mubr.bf16.mxu0 %v1490
  %3045 = vmatmul.mubr.bf16.gmra.mrb[0].mxu0 %v1489
  %v3046 = vpop.f32.mrb[0].mxu0
  %v3047 = vadd.f32 %v2983, %v3046
  %v3048 = vpop.f32.mrb[0].mxu0
  %v3049 = vpop.f32.mrb[0].mxu0
  %v3050 = vadd.f32 %v2986, %v3049
  %v3051 = vpop.f32.mrb[0].mxu0
  %3052 = vmatprep.mubr.bf16.mxu0 %v1499
  %3053 = vmatmul.mubr.bf16.gmra.mrb[0].mxu0 %v1498
  %v3054 = vpop.f32.mrb[0].mxu0
  %v3055 = vadd.f32 %v2991, %v3054
  %v3056 = vpop.f32.mrb[0].mxu0
  %v3057 = vpop.f32.mrb[0].mxu0
  %v3058 = vpop.f32.mrb[0].mxu0
  %3059 = vdwg.mxu0
  %3060 = vmatprep.subr.bf16.mxu0 0
  %3061 = vmatpush1.bf16.msra.mxu0 %v2772
  %3062 = vmatprep.subr.bf16.mxu0 0
  %3063 = vmatpush1.bf16.msra.mxu0 %v2773
  %3064 = vmatprep.subr.bf16.mxu0 0
  %3065 = vmatpush1.bf16.msra.mxu0 %v2774
  %3066 = vmatprep.subr.bf16.mxu0 0
  %3067 = vmatpush1.bf16.msra.mxu0 %v2775
  %3068 = vmatprep.subr.bf16.mxu0 0
  %3069 = vmatpush1.bf16.msra.mxu0 %v2776
  %3070 = vmatprep.subr.bf16.mxu0 0
  %3071 = vmatpush1.bf16.msra.mxu0 %v2777
  %3072 = vmatprep.subr.bf16.mxu0 0
  %3073 = vmatpush1.bf16.msra.mxu0 %v2778
  %3074 = vmatprep.subr.bf16.mxu0 0
  %3075 = vmatpush1.bf16.msra.mxu0 %v2779
  %3076 = vmatprep.subr.bf16.mxu0 0
  %3077 = vmatpush1.bf16.msra.mxu0 %v2780
  %3078 = vmatprep.subr.bf16.mxu0 0
  %3079 = vmatpush1.bf16.msra.mxu0 %v2781
  %3080 = vmatprep.subr.bf16.mxu0 0
  %3081 = vmatpush1.bf16.msra.mxu0 %v2782
  %3082 = vmatprep.subr.bf16.mxu0 0
  %3083 = vmatpush1.bf16.msra.mxu0 %v2783
  %3084 = vmatprep.subr.bf16.mxu0 0
  %3085 = vmatpush1.bf16.msra.mxu0 %v2784
  %3086 = vmatprep.subr.bf16.mxu0 0
  %3087 = vmatpush1.bf16.msra.mxu0 %v2785
  %3088 = vmatprep.subr.bf16.mxu0 0
  %3089 = vmatpush1.bf16.msra.mxu0 %v2786
  %3090 = vmatprep.subr.bf16.mxu0 0
  %3091 = vmatpush1.bf16.msra.mxu0 %v2787
  %3092 = vmatprep.mubr.bf16.mxu0 %v1474
  %3093 = vmatmul.mubr.bf16.gmra.mrb[0].mxu0 %v1473
  %v3094 = vpop.f32.mrb[0].mxu0
  %v3095 = vadd.f32 %v3031, %v3094
  %v3096 = vpop.f32.mrb[0].mxu0
  %v3097 = vpop.f32.mrb[0].mxu0
  %v3098 = vadd.f32 %v3034, %v3097
  %v3099 = vpop.f32.mrb[0].mxu0
  %3100 = vmatprep.mubr.bf16.mxu0 %v1483
  %3101 = vmatmul.mubr.bf16.gmra.mrb[0].mxu0 %v1482
  %v3102 = vpop.f32.mrb[0].mxu0
  %v3103 = vadd.f32 %v3039, %v3102
  %v3104 = vpop.f32.mrb[0].mxu0
  %v3105 = vpop.f32.mrb[0].mxu0
  %v3106 = vadd.f32 %v3042, %v3105
  %v3107 = vpop.f32.mrb[0].mxu0
  %3108 = vmatprep.mubr.bf16.mxu0 %v1492
  %3109 = vmatmul.mubr.bf16.gmra.mrb[0].mxu0 %v1491
  %v3110 = vpop.f32.mrb[0].mxu0
  %v3111 = vadd.f32 %v3047, %v3110
  %v3112 = vpop.f32.mrb[0].mxu0
  %v3113 = vpop.f32.mrb[0].mxu0
  %v3114 = vadd.f32 %v3050, %v3113
  %v3115 = vpop.f32.mrb[0].mxu0
  %3116 = vmatprep.mubr.bf16.mxu0 %v1501
  %3117 = vmatmul.mubr.bf16.gmra.mrb[0].mxu0 %v1500
  %v3118 = vpop.f32.mrb[0].mxu0
  %v3119 = vadd.f32 %v3055, %v3118
  %v3120 = vpop.f32.mrb[0].mxu0
  %v3121 = vpop.f32.mrb[0].mxu0
  %v3122 = vpop.f32.mrb[0].mxu0
  %3123 = vdwg.mxu0
  %3124 = vmatprep.subr.bf16.mxu0 0
  %3125 = vmatpush1.bf16.msra.mxu0 %v2788
  %3126 = vmatprep.subr.bf16.mxu0 0
  %3127 = vmatpush1.bf16.msra.mxu0 %v2789
  %3128 = vmatprep.subr.bf16.mxu0 0
  %3129 = vmatpush1.bf16.msra.mxu0 %v2790
  %3130 = vmatprep.subr.bf16.mxu0 0
  %3131 = vmatpush1.bf16.msra.mxu0 %v2791
  %3132 = vmatprep.subr.bf16.mxu0 0
  %3133 = vmatpush1.bf16.msra.mxu0 %v2792
  %3134 = vmatprep.subr.bf16.mxu0 0
  %3135 = vmatpush1.bf16.msra.mxu0 %v2793
  %3136 = vmatprep.subr.bf16.mxu0 0
  %3137 = vmatpush1.bf16.msra.mxu0 %v2794
  %3138 = vmatprep.subr.bf16.mxu0 0
  %3139 = vmatpush1.bf16.msra.mxu0 %v2795
  %3140 = vmatprep.subr.bf16.mxu0 0
  %3141 = vmatpush1.bf16.msra.mxu0 0
  %3142 = vmatprep.subr.bf16.mxu0 0
  %3143 = vmatpush1.bf16.msra.mxu0 0
  %3144 = vmatprep.subr.bf16.mxu0 0
  %3145 = vmatpush1.bf16.msra.mxu0 0
  %3146 = vmatprep.subr.bf16.mxu0 0
  %3147 = vmatpush1.bf16.msra.mxu0 0
  %3148 = vmatprep.subr.bf16.mxu0 0
  %3149 = vmatpush1.bf16.msra.mxu0 0
  %3150 = vmatprep.subr.bf16.mxu0 0
  %3151 = vmatpush1.bf16.msra.mxu0 0
  %3152 = vmatprep.subr.bf16.mxu0 0
  %3153 = vmatpush1.bf16.msra.mxu0 0
  %3154 = vmatprep.subr.bf16.mxu0 0
  %3155 = vmatpush1.bf16.msra.mxu0 0
  %3156 = vmatprep.mubr.bf16.mxu0 0
  %3157 = vmatmul.mubr.bf16.gmra.mrb[0].mxu0 %v1475
  %v3158 = vpop.f32.mrb[0].mxu0
  %v3159 = vadd.f32 %v3095, %v3158
  %v3160 = vpop.f32.mrb[0].mxu0
  %v3161 = vpop.f32.mrb[0].mxu0
  %v3162 = vadd.f32 %v3098, %v3161
  %v3163 = vpop.f32.mrb[0].mxu0
  %3164 = vmatprep.mubr.bf16.mxu0 0
  %3165 = vmatmul.mubr.bf16.gmra.mrb[0].mxu0 %v1484
  %v3166 = vpop.f32.mrb[0].mxu0
  %v3167 = vadd.f32 %v3103, %v3166
  %v3168 = vpop.f32.mrb[0].mxu0
  %v3169 = vpop.f32.mrb[0].mxu0
  %v3170 = vadd.f32 %v3106, %v3169
  %v3171 = vpop.f32.mrb[0].mxu0
  %3172 = vmatprep.mubr.bf16.mxu0 0
  %3173 = vmatmul.mubr.bf16.gmra.mrb[0].mxu0 %v1493
  %v3174 = vpop.f32.mrb[0].mxu0
  %v3175 = vadd.f32 %v3111, %v3174
  %v3176 = vpop.f32.mrb[0].mxu0
  %v3177 = vpop.f32.mrb[0].mxu0
  %v3178 = vadd.f32 %v3114, %v3177
  %v3179 = vpop.f32.mrb[0].mxu0
  %3180 = vmatprep.mubr.bf16.mxu0 0
  %3181 = vmatmul.mubr.bf16.gmra.mrb[0].mxu0 %v1502
  %v3182 = vpop.f32.mrb[0].mxu0
  %v3183 = vadd.f32 %v3119, %v3182
  %v3184 = vpop.f32.mrb[0].mxu0
  %v3185 = vpop.f32.mrb[0].mxu0
  %v3186 = vpop.f32.mrb[0].mxu0
  %3187 = vdwg.mxu0
  %v3188 = vmax.f32 %v2262, %v3159
  %v3189 = vmax.f32 %v2265, %v3162
  %v3190 = vmax.f32 %v2270, %v3167
  %v3191 = vmax.f32 %v2273, %v3170
  %v3192 = vmax.f32 %v2278, %v3175
  %v3193 = vmax.f32 %v2281, %v3178
  %v3194 = vmax.f32 %v2286, %v3183
  %s3195 = scalar_lea.vmem %s3, 1152
  %v3196 = vld [vmem:[%s3195] sm:$0xf]
  %v3197 = vld [vmem:[%s3195 + $0x4] sm:$0xf]
  %v3198 = vld [vmem:[%s3195 + $0x8] sm:$0xf]
  %v3199 = vld [vmem:[%s3195 + $0xc] sm:$0xf]
  %v3200 = vld [vmem:[%s3195 + $0x10] sm:$0xf]
  %v3201 = vld [vmem:[%s3195 + $0x14] sm:$0xf]
  %v3202 = vld [vmem:[%s3195 + $0x18] sm:$0xf]
  %v3203 = vld [vmem:[%s3195 + $0x1c] sm:$0xf]
  %v3204 = vld [vmem:[%s3195 + $0x20] sm:$0xf]
  %v3205 = vld [vmem:[%s3195 + $0x24] sm:$0xf]
  %v3206 = vld [vmem:[%s3195 + $0x28] sm:$0xf]
  %v3207 = vld [vmem:[%s3195 + $0x2c] sm:$0xf]
  %v3208 = vld [vmem:[%s3195 + $0x30] sm:$0xf]
  %v3209 = vld [vmem:[%s3195 + $0x34] sm:$0xf]
  %v3210 = vld [vmem:[%s3195 + $0x38] sm:$0xf]
  %v3211 = vld [vmem:[%s3195 + $0x3c] sm:$0xf]
  %v3212 = vld [vmem:[%s3195 + $0x40] sm:$0xf]
  %v3213 = vld [vmem:[%s3195 + $0x44] sm:$0xf]
  %v3214 = vld [vmem:[%s3195 + $0x48] sm:$0xf]
  %v3215 = vld [vmem:[%s3195 + $0x4c] sm:$0xf]
  %v3216 = vld [vmem:[%s3195 + $0x50] sm:$0xf]
  %v3217 = vld [vmem:[%s3195 + $0x54] sm:$0xf]
  %v3218 = vld [vmem:[%s3195 + $0x58] sm:$0xf]
  %v3219 = vld [vmem:[%s3195 + $0x5c] sm:$0xf]
  %v3220 = vld [vmem:[%s3195 + $0x60] sm:$0xf]
  %v3221 = vld [vmem:[%s3195 + $0x64] sm:$0xf]
  %v3222 = vld [vmem:[%s3195 + $0x68] sm:$0xf]
  %v3223 = vld [vmem:[%s3195 + $0x6c] sm:$0xf]
  %v3224 = vld [vmem:[%s3195 + $0x70] sm:$0xf]
  %v3225 = vld [vmem:[%s3195 + $0x74] sm:$0xf]
  %v3226 = vld [vmem:[%s3195 + $0x78] sm:$0xf]
  %v3227 = vld [vmem:[%s3195 + $0x7c] sm:$0xf]
  %v3228 = vld [vmem:[%s3195 + $0x80] sm:$0xf]
  %v3229 = vld [vmem:[%s3195 + $0x84] sm:$0xf]
  %v3230 = vld [vmem:[%s3195 + $0x88] sm:$0xf]
  %v3231 = vld [vmem:[%s3195 + $0x8c] sm:$0xf]
  %v3232 = vld [vmem:[%s3195 + $0x90] sm:$0xf]
  %v3233 = vld [vmem:[%s3195 + $0x94] sm:$0xf]
  %v3234 = vld [vmem:[%s3195 + $0x98] sm:$0xf]
  %v3235 = vld [vmem:[%s3195 + $0x9c] sm:$0xf]
  %v3236 = vld [vmem:[%s3195 + $0xa0] sm:$0xf]
  %v3237 = vld [vmem:[%s3195 + $0xa4] sm:$0xf]
  %v3238 = vld [vmem:[%s3195 + $0xa8] sm:$0xf]
  %v3239 = vld [vmem:[%s3195 + $0xac] sm:$0xf]
  %v3240 = vld [vmem:[%s3195 + $0xb0] sm:$0xf]
  %v3241 = vld [vmem:[%s3195 + $0xb4] sm:$0xf]
  %v3242 = vld [vmem:[%s3195 + $0xb8] sm:$0xf]
  %v3243 = vld [vmem:[%s3195 + $0xbc] sm:$0xf]
  %v3244 = vld [vmem:[%s3195 + $0xc0] sm:$0xf]
  %v3245 = vld [vmem:[%s3195 + $0xc4] sm:$0xf]
  %v3246 = vld [vmem:[%s3195 + $0xc8] sm:$0xf]
  %v3247 = vld [vmem:[%s3195 + $0xcc] sm:$0xf]
  %v3248 = vld [vmem:[%s3195 + $0xd0] sm:$0xf]
  %v3249 = vld [vmem:[%s3195 + $0xd4] sm:$0xf]
  %v3250 = vld [vmem:[%s3195 + $0xd8] sm:$0xf]
  %v3251 = vld [vmem:[%s3195 + $0xdc] sm:$0xf]
  %v3252 = vld [vmem:[%s3195 + $0xe0] sm:$0xf]
  %v3253 = vld [vmem:[%s3195 + $0xe4] sm:$0xf]
  %v3254 = vld [vmem:[%s3195 + $0xe8] sm:$0xf]
  %v3255 = vld [vmem:[%s3195 + $0xec] sm:$0xf]
  %v3256 = vld [vmem:[%s3195 + $0xf0] sm:$0xf]
  %v3257 = vld [vmem:[%s3195 + $0xf4] sm:$0xf]
  %v3258 = vld [vmem:[%s3195 + $0xf8] sm:$0xf]
  %v3259 = vld [vmem:[%s3195 + $0xfc] sm:$0xf]
  %v3260 = vld [vmem:[%s3195 + $0x100] sm:$0xf]
  %v3261 = vld [vmem:[%s3195 + $0x104] sm:$0xf]
  %v3262 = vld [vmem:[%s3195 + $0x108] sm:$0xf]
  %v3263 = vld [vmem:[%s3195 + $0x10c] sm:$0xf]
  %v3264 = vld [vmem:[%s3195 + $0x110] sm:$0xf]
  %v3265 = vld [vmem:[%s3195 + $0x114] sm:$0xf]
  %v3266 = vld [vmem:[%s3195 + $0x118] sm:$0xf]
  %v3267 = vld [vmem:[%s3195 + $0x11c] sm:$0xf]
  %v3268 = vld [vmem:[%s3195 + $0x120] sm:$0xf]
  %v3269 = vld [vmem:[%s3195 + $0x124] sm:$0xf]
  %v3270 = vld [vmem:[%s3195 + $0x128] sm:$0xf]
  %v3271 = vld [vmem:[%s3195 + $0x12c] sm:$0xf]
  %v3272 = vld [vmem:[%s3195 + $0x130] sm:$0xf]
  %v3273 = vld [vmem:[%s3195 + $0x134] sm:$0xf]
  %v3274 = vld [vmem:[%s3195 + $0x138] sm:$0xf]
  %v3275 = vld [vmem:[%s3195 + $0x13c] sm:$0xf]
  %v3276 = vld [vmem:[%s3195 + $0x140] sm:$0xf]
  %v3277 = vld [vmem:[%s3195 + $0x144] sm:$0xf]
  %v3278 = vld [vmem:[%s3195 + $0x148] sm:$0xf]
  %v3279 = vld [vmem:[%s3195 + $0x14c] sm:$0xf]
  %v3280 = vld [vmem:[%s3195 + $0x150] sm:$0xf]
  %v3281 = vld [vmem:[%s3195 + $0x154] sm:$0xf]
  %v3282 = vld [vmem:[%s3195 + $0x158] sm:$0xf]
  %v3283 = vld [vmem:[%s3195 + $0x15c] sm:$0xf]
  %v3284 = vld [vmem:[%s3195 + $0x160] sm:$0xf]
  %v3285 = vld [vmem:[%s3195 + $0x164] sm:$0xf]
  %v3286 = vld [vmem:[%s3195 + $0x168] sm:$0xf]
  %v3287 = vld [vmem:[%s3195 + $0x16c] sm:$0xf]
  %v3288 = vld [vmem:[%s3195 + $0x170] sm:$0xf]
  %v3289 = vld [vmem:[%s3195 + $0x174] sm:$0xf]
  %v3290 = vld [vmem:[%s3195 + $0x178] sm:$0xf]
  %v3291 = vld [vmem:[%s3195 + $0x17c] sm:$0xf]
  %v3292 = vld [vmem:[%s3195 + $0x180] sm:$0xf]
  %v3293 = vld [vmem:[%s3195 + $0x184] sm:$0xf]
  %v3294 = vld [vmem:[%s3195 + $0x188] sm:$0xf]
  %v3295 = vld [vmem:[%s3195 + $0x18c] sm:$0xf]
  %v3296 = vld [vmem:[%s3195 + $0x190] sm:$0xf]
  %v3297 = vld [vmem:[%s3195 + $0x194] sm:$0xf]
  %v3298 = vld [vmem:[%s3195 + $0x198] sm:$0xf]
  %v3299 = vld [vmem:[%s3195 + $0x19c] sm:$0xf]
  %v3300 = vld [vmem:[%s3195 + $0x1a0] sm:$0xf]
  %v3301 = vld [vmem:[%s3195 + $0x1a4] sm:$0xf]
  %v3302 = vld [vmem:[%s3195 + $0x1a8] sm:$0xf]
  %v3303 = vld [vmem:[%s3195 + $0x1ac] sm:$0xf]
  %v3304 = vld [vmem:[%s3195 + $0x1b0] sm:$0xf]
  %v3305 = vld [vmem:[%s3195 + $0x1b4] sm:$0xf]
  %v3306 = vld [vmem:[%s3195 + $0x1b8] sm:$0xf]
  %v3307 = vld [vmem:[%s3195 + $0x1bc] sm:$0xf]
  %v3308 = vld [vmem:[%s3195 + $0x1c0] sm:$0xf]
  %v3309 = vld [vmem:[%s3195 + $0x1c4] sm:$0xf]
  %v3310 = vld [vmem:[%s3195 + $0x1c8] sm:$0xf]
  %v3311 = vld [vmem:[%s3195 + $0x1cc] sm:$0xf]
  %v3312 = vld [vmem:[%s3195 + $0x1d0] sm:$0xf]
  %v3313 = vld [vmem:[%s3195 + $0x1d4] sm:$0xf]
  %v3314 = vld [vmem:[%s3195 + $0x1d8] sm:$0xf]
  %v3315 = vld [vmem:[%s3195 + $0x1dc] sm:$0xf]
  %v3316 = vld [vmem:[%s3195 + $0x1e0] sm:$0xf]
  %v3317 = vld [vmem:[%s3195 + $0x1e4] sm:$0xf]
  %v3318 = vld [vmem:[%s3195 + $0x1e8] sm:$0xf]
  %v3319 = vld [vmem:[%s3195 + $0x1ec] sm:$0xf]
  %v3320 = vld [vmem:[%s3195 + $0x1f0] sm:$0xf]
  %v3321 = vld [vmem:[%s3195 + $0x1f4] sm:$0xf]
  %v3322 = vld [vmem:[%s3195 + $0x1f8] sm:$0xf]
  %v3323 = vld [vmem:[%s3195 + $0x1fc] sm:$0xf]
  %v3324 = vld [vmem:[%s3195 + $0x200] sm:$0xf]
  %v3325 = vld [vmem:[%s3195 + $0x204] sm:$0xf]
  %v3326 = vld [vmem:[%s3195 + $0x208] sm:$0xf]
  %v3327 = vld [vmem:[%s3195 + $0x20c] sm:$0xf]
  %v3328 = vld [vmem:[%s3195 + $0x210] sm:$0xf]
  %v3329 = vld [vmem:[%s3195 + $0x214] sm:$0xf]
  %v3330 = vld [vmem:[%s3195 + $0x218] sm:$0xf]
  %v3331 = vld [vmem:[%s3195 + $0x21c] sm:$0xf]
  %v3332 = vld [vmem:[%s3195 + $0x220] sm:$0xf]
  %v3333 = vld [vmem:[%s3195 + $0x224] sm:$0xf]
  %v3334 = vld [vmem:[%s3195 + $0x228] sm:$0xf]
  %v3335 = vld [vmem:[%s3195 + $0x22c] sm:$0xf]
  %v3336 = vld [vmem:[%s3195 + $0x230] sm:$0xf]
  %v3337 = vld [vmem:[%s3195 + $0x234] sm:$0xf]
  %v3338 = vld [vmem:[%s3195 + $0x238] sm:$0xf]
  %v3339 = vld [vmem:[%s3195 + $0x23c] sm:$0xf]
  %v3484 = vunpack.c.l.b16 %v3196
  %v3485 = vunpack.c.l.b16 %v3197
  %v3486 = vunpack.c.l.b16 %v3198
  %v3487 = vunpack.c.l.b16 %v3199
  %v3488 = vunpack.c.l.b16 %v3200
  %v3489 = vunpack.c.l.b16 %v3201
  %v3490 = vunpack.c.l.b16 %v3202
  %v3491 = vunpack.c.l.b16 %v3203
  %v3492 = vunpack.c.l.b16 %v3204
  %v3493 = vunpack.c.l.b16 %v3205
  %v3494 = vunpack.c.l.b16 %v3206
  %v3495 = vunpack.c.l.b16 %v3207
  %v3496 = vunpack.c.l.b16 %v3208
  %v3497 = vunpack.c.l.b16 %v3209
  %v3498 = vunpack.c.l.b16 %v3210
  %v3499 = vunpack.c.l.b16 %v3211
  %v3500 = vunpack.c.l.b16 %v3212
  %v3501 = vunpack.c.l.b16 %v3213
  %v3502 = vunpack.c.l.b16 %v3214
  %v3503 = vunpack.c.l.b16 %v3215
  %v3504 = vunpack.c.l.b16 %v3216
  %v3505 = vunpack.c.l.b16 %v3217
  %v3506 = vunpack.c.l.b16 %v3218
  %v3507 = vunpack.c.l.b16 %v3219
  %v3508 = vunpack.c.l.b16 %v3220
  %v3509 = vunpack.c.l.b16 %v3221
  %v3510 = vunpack.c.l.b16 %v3222
  %v3511 = vunpack.c.l.b16 %v3223
  %v3512 = vunpack.c.l.b16 %v3224
  %v3513 = vunpack.c.l.b16 %v3225
  %v3514 = vunpack.c.l.b16 %v3226
  %v3515 = vunpack.c.l.b16 %v3227
  %v3516 = vunpack.c.l.b16 %v3228
  %v3517 = vunpack.c.l.b16 %v3229
  %v3518 = vunpack.c.l.b16 %v3230
  %v3519 = vunpack.c.l.b16 %v3231
  %v3520 = vunpack.c.l.b16 %v3232
  %v3521 = vunpack.c.l.b16 %v3233
  %v3522 = vunpack.c.l.b16 %v3234
  %v3523 = vunpack.c.l.b16 %v3235
  %v3524 = vunpack.c.l.b16 %v3236
  %v3525 = vunpack.c.l.b16 %v3237
  %v3526 = vunpack.c.l.b16 %v3238
  %v3527 = vunpack.c.l.b16 %v3239
  %v3528 = vunpack.c.l.b16 %v3240
  %v3529 = vunpack.c.l.b16 %v3241
  %v3530 = vunpack.c.l.b16 %v3242
  %v3531 = vunpack.c.l.b16 %v3243
  %v3532 = vunpack.c.l.b16 %v3244
  %v3533 = vunpack.c.l.b16 %v3245
  %v3534 = vunpack.c.l.b16 %v3246
  %v3535 = vunpack.c.l.b16 %v3247
  %v3536 = vunpack.c.l.b16 %v3248
  %v3537 = vunpack.c.l.b16 %v3249
  %v3538 = vunpack.c.l.b16 %v3250
  %v3539 = vunpack.c.l.b16 %v3251
  %v3540 = vunpack.c.l.b16 %v3252
  %v3541 = vunpack.c.l.b16 %v3253
  %v3542 = vunpack.c.l.b16 %v3254
  %v3543 = vunpack.c.l.b16 %v3255
  %v3544 = vunpack.c.l.b16 %v3256
  %v3545 = vunpack.c.l.b16 %v3257
  %v3546 = vunpack.c.l.b16 %v3258
  %v3547 = vunpack.c.l.b16 %v3259
  %v3548 = vunpack.c.l.b16 %v3260
  %v3549 = vunpack.c.l.b16 %v3261
  %v3550 = vunpack.c.l.b16 %v3262
  %v3551 = vunpack.c.l.b16 %v3263
  %v3552 = vunpack.c.l.b16 %v3264
  %v3553 = vunpack.c.l.b16 %v3265
  %v3554 = vunpack.c.l.b16 %v3266
  %v3555 = vunpack.c.l.b16 %v3267
  %v3556 = vunpack.c.l.b16 %v3268
  %v3557 = vunpack.c.l.b16 %v3269
  %v3558 = vunpack.c.l.b16 %v3270
  %v3559 = vunpack.c.l.b16 %v3271
  %v3560 = vunpack.c.l.b16 %v3272
  %v3561 = vunpack.c.l.b16 %v3273
  %v3562 = vunpack.c.l.b16 %v3274
  %v3563 = vunpack.c.l.b16 %v3275
  %v3564 = vunpack.c.l.b16 %v3276
  %v3565 = vunpack.c.l.b16 %v3277
  %v3566 = vunpack.c.l.b16 %v3278
  %v3567 = vunpack.c.l.b16 %v3279
  %v3568 = vunpack.c.l.b16 %v3280
  %v3569 = vunpack.c.l.b16 %v3281
  %v3570 = vunpack.c.l.b16 %v3282
  %v3571 = vunpack.c.l.b16 %v3283
  %v3572 = vunpack.c.l.b16 %v3284
  %v3573 = vunpack.c.l.b16 %v3285
  %v3574 = vunpack.c.l.b16 %v3286
  %v3575 = vunpack.c.l.b16 %v3287
  %v3576 = vunpack.c.l.b16 %v3288
  %v3577 = vunpack.c.l.b16 %v3289
  %v3578 = vunpack.c.l.b16 %v3290
  %v3579 = vunpack.c.l.b16 %v3291
  %v3580 = vunpack.c.l.b16 %v3292
  %v3581 = vunpack.c.l.b16 %v3293
  %v3582 = vunpack.c.l.b16 %v3294
  %v3583 = vunpack.c.l.b16 %v3295
  %v3584 = vunpack.c.l.b16 %v3296
  %v3585 = vunpack.c.l.b16 %v3297
  %v3586 = vunpack.c.l.b16 %v3298
  %v3587 = vunpack.c.l.b16 %v3299
  %v3588 = vunpack.c.l.b16 %v3300
  %v3589 = vunpack.c.l.b16 %v3301
  %v3590 = vunpack.c.l.b16 %v3302
  %v3591 = vunpack.c.l.b16 %v3303
  %v3592 = vunpack.c.l.b16 %v3304
  %v3593 = vunpack.c.l.b16 %v3305
  %v3594 = vunpack.c.l.b16 %v3306
  %v3595 = vunpack.c.l.b16 %v3307
  %v3596 = vunpack.c.l.b16 %v3308
  %v3597 = vunpack.c.l.b16 %v3309
  %v3598 = vunpack.c.l.b16 %v3310
  %v3599 = vunpack.c.l.b16 %v3311
  %v3600 = vunpack.c.l.b16 %v3312
  %v3601 = vunpack.c.l.b16 %v3313
  %v3602 = vunpack.c.l.b16 %v3314
  %v3603 = vunpack.c.l.b16 %v3315
  %v3604 = vunpack.c.l.b16 %v3316
  %v3605 = vunpack.c.l.b16 %v3317
  %v3606 = vunpack.c.l.b16 %v3318
  %v3607 = vunpack.c.l.b16 %v3319
  %v3608 = vunpack.c.l.b16 %v3320
  %v3609 = vunpack.c.l.b16 %v3321
  %v3610 = vunpack.c.l.b16 %v3322
  %v3611 = vunpack.c.l.b16 %v3323
  %v3612 = vunpack.c.l.b16 %v3324
  %v3613 = vunpack.c.l.b16 %v3325
  %v3614 = vunpack.c.l.b16 %v3326
  %v3615 = vunpack.c.l.b16 %v3327
  %v3616 = vunpack.c.l.b16 %v3328
  %v3617 = vunpack.c.l.b16 %v3329
  %v3618 = vunpack.c.l.b16 %v3330
  %v3619 = vunpack.c.l.b16 %v3331
  %v3620 = vunpack.c.l.b16 %v3332
  %v3621 = vunpack.c.l.b16 %v3333
  %v3622 = vunpack.c.l.b16 %v3334
  %v3623 = vunpack.c.l.b16 %v3335
  %v3624 = vunpack.c.l.b16 %v3336
  %v3625 = vunpack.c.l.b16 %v3337
  %v3626 = vunpack.c.l.b16 %v3338
  %v3627 = vunpack.c.l.b16 %v3339
  %v3628 = vpack.c.b16 %v3485, %v3484
  %v3629 = vpack.c.b16 %v3487, %v3486
  %v3630 = vpack.c.b16 %v3489, %v3488
  %v3631 = vpack.c.b16 %v3491, %v3490
  %v3632 = vpack.c.b16 %v3493, %v3492
  %v3633 = vpack.c.b16 %v3495, %v3494
  %v3634 = vpack.c.b16 %v3497, %v3496
  %v3635 = vpack.c.b16 %v3499, %v3498
  %v3636 = vpack.c.b16 %v3501, %v3500
  %v3637 = vpack.c.b16 %v3503, %v3502
  %v3638 = vpack.c.b16 %v3505, %v3504
  %v3639 = vpack.c.b16 %v3507, %v3506
  %v3640 = vpack.c.b16 %v3509, %v3508
  %v3641 = vpack.c.b16 %v3511, %v3510
  %v3642 = vpack.c.b16 %v3513, %v3512
  %v3643 = vpack.c.b16 %v3515, %v3514
  %v3644 = vpack.c.b16 %v3517, %v3516
  %v3645 = vpack.c.b16 %v3519, %v3518
  %v3646 = vpack.c.b16 %v3521, %v3520
  %v3647 = vpack.c.b16 %v3523, %v3522
  %v3648 = vpack.c.b16 %v3525, %v3524
  %v3649 = vpack.c.b16 %v3527, %v3526
  %v3650 = vpack.c.b16 %v3529, %v3528
  %v3651 = vpack.c.b16 %v3531, %v3530
  %v3652 = vpack.c.b16 %v3533, %v3532
  %v3653 = vpack.c.b16 %v3535, %v3534
  %v3654 = vpack.c.b16 %v3537, %v3536
  %v3655 = vpack.c.b16 %v3539, %v3538
  %v3656 = vpack.c.b16 %v3541, %v3540
  %v3657 = vpack.c.b16 %v3543, %v3542
  %v3658 = vpack.c.b16 %v3545, %v3544
  %v3659 = vpack.c.b16 %v3547, %v3546
  %v3660 = vpack.c.b16 %v3549, %v3548
  %v3661 = vpack.c.b16 %v3551, %v3550
  %v3662 = vpack.c.b16 %v3553, %v3552
  %v3663 = vpack.c.b16 %v3555, %v3554
  %v3664 = vpack.c.b16 %v3557, %v3556
  %v3665 = vpack.c.b16 %v3559, %v3558
  %v3666 = vpack.c.b16 %v3561, %v3560
  %v3667 = vpack.c.b16 %v3563, %v3562
  %v3668 = vpack.c.b16 %v3565, %v3564
  %v3669 = vpack.c.b16 %v3567, %v3566
  %v3670 = vpack.c.b16 %v3569, %v3568
  %v3671 = vpack.c.b16 %v3571, %v3570
  %v3672 = vpack.c.b16 %v3573, %v3572
  %v3673 = vpack.c.b16 %v3575, %v3574
  %v3674 = vpack.c.b16 %v3577, %v3576
  %v3675 = vpack.c.b16 %v3579, %v3578
  %v3676 = vpack.c.b16 %v3581, %v3580
  %v3677 = vpack.c.b16 %v3583, %v3582
  %v3678 = vpack.c.b16 %v3585, %v3584
  %v3679 = vpack.c.b16 %v3587, %v3586
  %v3680 = vpack.c.b16 %v3589, %v3588
  %v3681 = vpack.c.b16 %v3591, %v3590
  %v3682 = vpack.c.b16 %v3593, %v3592
  %v3683 = vpack.c.b16 %v3595, %v3594
  %v3684 = vpack.c.b16 %v3597, %v3596
  %v3685 = vpack.c.b16 %v3599, %v3598
  %v3686 = vpack.c.b16 %v3601, %v3600
  %v3687 = vpack.c.b16 %v3603, %v3602
  %v3688 = vpack.c.b16 %v3605, %v3604
  %v3689 = vpack.c.b16 %v3607, %v3606
  %v3690 = vpack.c.b16 %v3609, %v3608
  %v3691 = vpack.c.b16 %v3611, %v3610
  %v3692 = vpack.c.b16 %v3613, %v3612
  %v3693 = vpack.c.b16 %v3615, %v3614
  %v3694 = vpack.c.b16 %v3617, %v3616
  %v3695 = vpack.c.b16 %v3619, %v3618
  %v3696 = vpack.c.b16 %v3621, %v3620
  %v3697 = vpack.c.b16 %v3623, %v3622
  %v3698 = vpack.c.b16 %v3625, %v3624
  %v3699 = vpack.c.b16 %v3627, %v3626
  %3772 = vmatprep.subr.bf16.mxu0 0
  %3773 = vmatpush1.bf16.msra.mxu0 %v3628
  %3774 = vmatprep.subr.bf16.mxu0 0
  %3775 = vmatpush1.bf16.msra.mxu0 %v3629
  %3776 = vmatprep.subr.bf16.mxu0 0
  %3777 = vmatpush1.bf16.msra.mxu0 %v3630
  %3778 = vmatprep.subr.bf16.mxu0 0
  %3779 = vmatpush1.bf16.msra.mxu0 %v3631
  %3780 = vmatprep.subr.bf16.mxu0 0
  %3781 = vmatpush1.bf16.msra.mxu0 %v3632
  %3782 = vmatprep.subr.bf16.mxu0 0
  %3783 = vmatpush1.bf16.msra.mxu0 %v3633
  %3784 = vmatprep.subr.bf16.mxu0 0
  %3785 = vmatpush1.bf16.msra.mxu0 %v3634
  %3786 = vmatprep.subr.bf16.mxu0 0
  %3787 = vmatpush1.bf16.msra.mxu0 %v3635
  %3788 = vmatprep.subr.bf16.mxu0 0
  %3789 = vmatpush1.bf16.msra.mxu0 %v3636
  %3790 = vmatprep.subr.bf16.mxu0 0
  %3791 = vmatpush1.bf16.msra.mxu0 %v3637
  %3792 = vmatprep.subr.bf16.mxu0 0
  %3793 = vmatpush1.bf16.msra.mxu0 %v3638
  %3794 = vmatprep.subr.bf16.mxu0 0
  %3795 = vmatpush1.bf16.msra.mxu0 %v3639
  %3796 = vmatprep.subr.bf16.mxu0 0
  %3797 = vmatpush1.bf16.msra.mxu0 %v3640
  %3798 = vmatprep.subr.bf16.mxu0 0
  %3799 = vmatpush1.bf16.msra.mxu0 %v3641
  %3800 = vmatprep.subr.bf16.mxu0 0
  %3801 = vmatpush1.bf16.msra.mxu0 %v3642
  %3802 = vmatprep.subr.bf16.mxu0 0
  %3803 = vmatpush1.bf16.msra.mxu0 %v3643
  %3804 = vmatprep.mubr.bf16.mxu0 %v1468
  %3805 = vmatmul.mubr.bf16.gmra.mrb[0].mxu0 %v1467
  %v3806 = vpop.f32.mrb[0].mxu0
  %v3807 = vadd.f32 0.0, %v3806
  %v3808 = vpop.f32.mrb[0].mxu0
  %v3809 = vpop.f32.mrb[0].mxu0
  %v3810 = vadd.f32 0.0, %v3809
  %v3811 = vpop.f32.mrb[0].mxu0
  %3812 = vmatprep.mubr.bf16.mxu0 %v1477
  %3813 = vmatmul.mubr.bf16.gmra.mrb[0].mxu0 %v1476
  %v3814 = vpop.f32.mrb[0].mxu0
  %v3815 = vadd.f32 0.0, %v3814
  %v3816 = vpop.f32.mrb[0].mxu0
  %v3817 = vpop.f32.mrb[0].mxu0
  %v3818 = vadd.f32 0.0, %v3817
  %v3819 = vpop.f32.mrb[0].mxu0
  %3820 = vmatprep.mubr.bf16.mxu0 %v1486
  %3821 = vmatmul.mubr.bf16.gmra.mrb[0].mxu0 %v1485
  %v3822 = vpop.f32.mrb[0].mxu0
  %v3823 = vadd.f32 0.0, %v3822
  %v3824 = vpop.f32.mrb[0].mxu0
  %v3825 = vpop.f32.mrb[0].mxu0
  %v3826 = vadd.f32 0.0, %v3825
  %v3827 = vpop.f32.mrb[0].mxu0
  %3828 = vmatprep.mubr.bf16.mxu0 %v1495
  %3829 = vmatmul.mubr.bf16.gmra.mrb[0].mxu0 %v1494
  %v3830 = vpop.f32.mrb[0].mxu0
  %v3831 = vadd.f32 0.0, %v3830
  %v3832 = vpop.f32.mrb[0].mxu0
  %v3833 = vpop.f32.mrb[0].mxu0
  %v3834 = vpop.f32.mrb[0].mxu0
  %3835 = vdwg.mxu0
  %3836 = vmatprep.subr.bf16.mxu0 0
  %3837 = vmatpush1.bf16.msra.mxu0 %v3644
  %3838 = vmatprep.subr.bf16.mxu0 0
  %3839 = vmatpush1.bf16.msra.mxu0 %v3645
  %3840 = vmatprep.subr.bf16.mxu0 0
  %3841 = vmatpush1.bf16.msra.mxu0 %v3646
  %3842 = vmatprep.subr.bf16.mxu0 0
  %3843 = vmatpush1.bf16.msra.mxu0 %v3647
  %3844 = vmatprep.subr.bf16.mxu0 0
  %3845 = vmatpush1.bf16.msra.mxu0 %v3648
  %3846 = vmatprep.subr.bf16.mxu0 0
  %3847 = vmatpush1.bf16.msra.mxu0 %v3649
  %3848 = vmatprep.subr.bf16.mxu0 0
  %3849 = vmatpush1.bf16.msra.mxu0 %v3650
  %3850 = vmatprep.subr.bf16.mxu0 0
  %3851 = vmatpush1.bf16.msra.mxu0 %v3651
  %3852 = vmatprep.subr.bf16.mxu0 0
  %3853 = vmatpush1.bf16.msra.mxu0 %v3652
  %3854 = vmatprep.subr.bf16.mxu0 0
  %3855 = vmatpush1.bf16.msra.mxu0 %v3653
  %3856 = vmatprep.subr.bf16.mxu0 0
  %3857 = vmatpush1.bf16.msra.mxu0 %v3654
  %3858 = vmatprep.subr.bf16.mxu0 0
  %3859 = vmatpush1.bf16.msra.mxu0 %v3655
  %3860 = vmatprep.subr.bf16.mxu0 0
  %3861 = vmatpush1.bf16.msra.mxu0 %v3656
  %3862 = vmatprep.subr.bf16.mxu0 0
  %3863 = vmatpush1.bf16.msra.mxu0 %v3657
  %3864 = vmatprep.subr.bf16.mxu0 0
  %3865 = vmatpush1.bf16.msra.mxu0 %v3658
  %3866 = vmatprep.subr.bf16.mxu0 0
  %3867 = vmatpush1.bf16.msra.mxu0 %v3659
  %3868 = vmatprep.mubr.bf16.mxu0 %v1470
  %3869 = vmatmul.mubr.bf16.gmra.mrb[0].mxu0 %v1469
  %v3870 = vpop.f32.mrb[0].mxu0
  %v3871 = vadd.f32 %v3807, %v3870
  %v3872 = vpop.f32.mrb[0].mxu0
  %v3873 = vpop.f32.mrb[0].mxu0
  %v3874 = vadd.f32 %v3810, %v3873
  %v3875 = vpop.f32.mrb[0].mxu0
  %3876 = vmatprep.mubr.bf16.mxu0 %v1479
  %3877 = vmatmul.mubr.bf16.gmra.mrb[0].mxu0 %v1478
  %v3878 = vpop.f32.mrb[0].mxu0
  %v3879 = vadd.f32 %v3815, %v3878
  %v3880 = vpop.f32.mrb[0].mxu0
  %v3881 = vpop.f32.mrb[0].mxu0
  %v3882 = vadd.f32 %v3818, %v3881
  %v3883 = vpop.f32.mrb[0].mxu0
  %3884 = vmatprep.mubr.bf16.mxu0 %v1488
  %3885 = vmatmul.mubr.bf16.gmra.mrb[0].mxu0 %v1487
  %v3886 = vpop.f32.mrb[0].mxu0
  %v3887 = vadd.f32 %v3823, %v3886
  %v3888 = vpop.f32.mrb[0].mxu0
  %v3889 = vpop.f32.mrb[0].mxu0
  %v3890 = vadd.f32 %v3826, %v3889
  %v3891 = vpop.f32.mrb[0].mxu0
  %3892 = vmatprep.mubr.bf16.mxu0 %v1497
  %3893 = vmatmul.mubr.bf16.gmra.mrb[0].mxu0 %v1496
  %v3894 = vpop.f32.mrb[0].mxu0
  %v3895 = vadd.f32 %v3831, %v3894
  %v3896 = vpop.f32.mrb[0].mxu0
  %v3897 = vpop.f32.mrb[0].mxu0
  %v3898 = vpop.f32.mrb[0].mxu0
  %3899 = vdwg.mxu0
  %3900 = vmatprep.subr.bf16.mxu0 0
  %3901 = vmatpush1.bf16.msra.mxu0 %v3660
  %3902 = vmatprep.subr.bf16.mxu0 0
  %3903 = vmatpush1.bf16.msra.mxu0 %v3661
  %3904 = vmatprep.subr.bf16.mxu0 0
  %3905 = vmatpush1.bf16.msra.mxu0 %v3662
  %3906 = vmatprep.subr.bf16.mxu0 0
  %3907 = vmatpush1.bf16.msra.mxu0 %v3663
  %3908 = vmatprep.subr.bf16.mxu0 0
  %3909 = vmatpush1.bf16.msra.mxu0 %v3664
  %3910 = vmatprep.subr.bf16.mxu0 0
  %3911 = vmatpush1.bf16.msra.mxu0 %v3665
  %3912 = vmatprep.subr.bf16.mxu0 0
  %3913 = vmatpush1.bf16.msra.mxu0 %v3666
  %3914 = vmatprep.subr.bf16.mxu0 0
  %3915 = vmatpush1.bf16.msra.mxu0 %v3667
  %3916 = vmatprep.subr.bf16.mxu0 0
  %3917 = vmatpush1.bf16.msra.mxu0 %v3668
  %3918 = vmatprep.subr.bf16.mxu0 0
  %3919 = vmatpush1.bf16.msra.mxu0 %v3669
  %3920 = vmatprep.subr.bf16.mxu0 0
  %3921 = vmatpush1.bf16.msra.mxu0 %v3670
  %3922 = vmatprep.subr.bf16.mxu0 0
  %3923 = vmatpush1.bf16.msra.mxu0 %v3671
  %3924 = vmatprep.subr.bf16.mxu0 0
  %3925 = vmatpush1.bf16.msra.mxu0 %v3672
  %3926 = vmatprep.subr.bf16.mxu0 0
  %3927 = vmatpush1.bf16.msra.mxu0 %v3673
  %3928 = vmatprep.subr.bf16.mxu0 0
  %3929 = vmatpush1.bf16.msra.mxu0 %v3674
  %3930 = vmatprep.subr.bf16.mxu0 0
  %3931 = vmatpush1.bf16.msra.mxu0 %v3675
  %3932 = vmatprep.mubr.bf16.mxu0 %v1472
  %3933 = vmatmul.mubr.bf16.gmra.mrb[0].mxu0 %v1471
  %v3934 = vpop.f32.mrb[0].mxu0
  %v3935 = vadd.f32 %v3871, %v3934
  %v3936 = vpop.f32.mrb[0].mxu0
  %v3937 = vpop.f32.mrb[0].mxu0
  %v3938 = vadd.f32 %v3874, %v3937
  %v3939 = vpop.f32.mrb[0].mxu0
  %3940 = vmatprep.mubr.bf16.mxu0 %v1481
  %3941 = vmatmul.mubr.bf16.gmra.mrb[0].mxu0 %v1480
  %v3942 = vpop.f32.mrb[0].mxu0
  %v3943 = vadd.f32 %v3879, %v3942
  %v3944 = vpop.f32.mrb[0].mxu0
  %v3945 = vpop.f32.mrb[0].mxu0
  %v3946 = vadd.f32 %v3882, %v3945
  %v3947 = vpop.f32.mrb[0].mxu0
  %3948 = vmatprep.mubr.bf16.mxu0 %v1490
  %3949 = vmatmul.mubr.bf16.gmra.mrb[0].mxu0 %v1489
  %v3950 = vpop.f32.mrb[0].mxu0
  %v3951 = vadd.f32 %v3887, %v3950
  %v3952 = vpop.f32.mrb[0].mxu0
  %v3953 = vpop.f32.mrb[0].mxu0
  %v3954 = vadd.f32 %v3890, %v3953
  %v3955 = vpop.f32.mrb[0].mxu0
  %3956 = vmatprep.mubr.bf16.mxu0 %v1499
  %3957 = vmatmul.mubr.bf16.gmra.mrb[0].mxu0 %v1498
  %v3958 = vpop.f32.mrb[0].mxu0
  %v3959 = vadd.f32 %v3895, %v3958
  %v3960 = vpop.f32.mrb[0].mxu0
  %v3961 = vpop.f32.mrb[0].mxu0
  %v3962 = vpop.f32.mrb[0].mxu0
  %3963 = vdwg.mxu0
  %3964 = vmatprep.subr.bf16.mxu0 0
  %3965 = vmatpush1.bf16.msra.mxu0 %v3676
  %3966 = vmatprep.subr.bf16.mxu0 0
  %3967 = vmatpush1.bf16.msra.mxu0 %v3677
  %3968 = vmatprep.subr.bf16.mxu0 0
  %3969 = vmatpush1.bf16.msra.mxu0 %v3678
  %3970 = vmatprep.subr.bf16.mxu0 0
  %3971 = vmatpush1.bf16.msra.mxu0 %v3679
  %3972 = vmatprep.subr.bf16.mxu0 0
  %3973 = vmatpush1.bf16.msra.mxu0 %v3680
  %3974 = vmatprep.subr.bf16.mxu0 0
  %3975 = vmatpush1.bf16.msra.mxu0 %v3681
  %3976 = vmatprep.subr.bf16.mxu0 0
  %3977 = vmatpush1.bf16.msra.mxu0 %v3682
  %3978 = vmatprep.subr.bf16.mxu0 0
  %3979 = vmatpush1.bf16.msra.mxu0 %v3683
  %3980 = vmatprep.subr.bf16.mxu0 0
  %3981 = vmatpush1.bf16.msra.mxu0 %v3684
  %3982 = vmatprep.subr.bf16.mxu0 0
  %3983 = vmatpush1.bf16.msra.mxu0 %v3685
  %3984 = vmatprep.subr.bf16.mxu0 0
  %3985 = vmatpush1.bf16.msra.mxu0 %v3686
  %3986 = vmatprep.subr.bf16.mxu0 0
  %3987 = vmatpush1.bf16.msra.mxu0 %v3687
  %3988 = vmatprep.subr.bf16.mxu0 0
  %3989 = vmatpush1.bf16.msra.mxu0 %v3688
  %3990 = vmatprep.subr.bf16.mxu0 0
  %3991 = vmatpush1.bf16.msra.mxu0 %v3689
  %3992 = vmatprep.subr.bf16.mxu0 0
  %3993 = vmatpush1.bf16.msra.mxu0 %v3690
  %3994 = vmatprep.subr.bf16.mxu0 0
  %3995 = vmatpush1.bf16.msra.mxu0 %v3691
  %3996 = vmatprep.mubr.bf16.mxu0 %v1474
  %3997 = vmatmul.mubr.bf16.gmra.mrb[0].mxu0 %v1473
  %v3998 = vpop.f32.mrb[0].mxu0
  %v3999 = vadd.f32 %v3935, %v3998
  %v4000 = vpop.f32.mrb[0].mxu0
  %v4001 = vpop.f32.mrb[0].mxu0
  %v4002 = vadd.f32 %v3938, %v4001
  %v4003 = vpop.f32.mrb[0].mxu0
  %4004 = vmatprep.mubr.bf16.mxu0 %v1483
  %4005 = vmatmul.mubr.bf16.gmra.mrb[0].mxu0 %v1482
  %v4006 = vpop.f32.mrb[0].mxu0
  %v4007 = vadd.f32 %v3943, %v4006
  %v4008 = vpop.f32.mrb[0].mxu0
  %v4009 = vpop.f32.mrb[0].mxu0
  %v4010 = vadd.f32 %v3946, %v4009
  %v4011 = vpop.f32.mrb[0].mxu0
  %4012 = vmatprep.mubr.bf16.mxu0 %v1492
  %4013 = vmatmul.mubr.bf16.gmra.mrb[0].mxu0 %v1491
  %v4014 = vpop.f32.mrb[0].mxu0
  %v4015 = vadd.f32 %v3951, %v4014
  %v4016 = vpop.f32.mrb[0].mxu0
  %v4017 = vpop.f32.mrb[0].mxu0
  %v4018 = vadd.f32 %v3954, %v4017
  %v4019 = vpop.f32.mrb[0].mxu0
  %4020 = vmatprep.mubr.bf16.mxu0 %v1501
  %4021 = vmatmul.mubr.bf16.gmra.mrb[0].mxu0 %v1500
  %v4022 = vpop.f32.mrb[0].mxu0
  %v4023 = vadd.f32 %v3959, %v4022
  %v4024 = vpop.f32.mrb[0].mxu0
  %v4025 = vpop.f32.mrb[0].mxu0
  %v4026 = vpop.f32.mrb[0].mxu0
  %4027 = vdwg.mxu0
  %4028 = vmatprep.subr.bf16.mxu0 0
  %4029 = vmatpush1.bf16.msra.mxu0 %v3692
  %4030 = vmatprep.subr.bf16.mxu0 0
  %4031 = vmatpush1.bf16.msra.mxu0 %v3693
  %4032 = vmatprep.subr.bf16.mxu0 0
  %4033 = vmatpush1.bf16.msra.mxu0 %v3694
  %4034 = vmatprep.subr.bf16.mxu0 0
  %4035 = vmatpush1.bf16.msra.mxu0 %v3695
  %4036 = vmatprep.subr.bf16.mxu0 0
  %4037 = vmatpush1.bf16.msra.mxu0 %v3696
  %4038 = vmatprep.subr.bf16.mxu0 0
  %4039 = vmatpush1.bf16.msra.mxu0 %v3697
  %4040 = vmatprep.subr.bf16.mxu0 0
  %4041 = vmatpush1.bf16.msra.mxu0 %v3698
  %4042 = vmatprep.subr.bf16.mxu0 0
  %4043 = vmatpush1.bf16.msra.mxu0 %v3699
  %4044 = vmatprep.subr.bf16.mxu0 0
  %4045 = vmatpush1.bf16.msra.mxu0 0
  %4046 = vmatprep.subr.bf16.mxu0 0
  %4047 = vmatpush1.bf16.msra.mxu0 0
  %4048 = vmatprep.subr.bf16.mxu0 0
  %4049 = vmatpush1.bf16.msra.mxu0 0
  %4050 = vmatprep.subr.bf16.mxu0 0
  %4051 = vmatpush1.bf16.msra.mxu0 0
  %4052 = vmatprep.subr.bf16.mxu0 0
  %4053 = vmatpush1.bf16.msra.mxu0 0
  %4054 = vmatprep.subr.bf16.mxu0 0
  %4055 = vmatpush1.bf16.msra.mxu0 0
  %4056 = vmatprep.subr.bf16.mxu0 0
  %4057 = vmatpush1.bf16.msra.mxu0 0
  %4058 = vmatprep.subr.bf16.mxu0 0
  %4059 = vmatpush1.bf16.msra.mxu0 0
  %4060 = vmatprep.mubr.bf16.mxu0 0
  %4061 = vmatmul.mubr.bf16.gmra.mrb[0].mxu0 %v1475
  %v4062 = vpop.f32.mrb[0].mxu0
  %v4063 = vadd.f32 %v3999, %v4062
  %v4064 = vpop.f32.mrb[0].mxu0
  %v4065 = vpop.f32.mrb[0].mxu0
  %v4066 = vadd.f32 %v4002, %v4065
  %v4067 = vpop.f32.mrb[0].mxu0
  %4068 = vmatprep.mubr.bf16.mxu0 0
  %4069 = vmatmul.mubr.bf16.gmra.mrb[0].mxu0 %v1484
  %v4070 = vpop.f32.mrb[0].mxu0
  %v4071 = vadd.f32 %v4007, %v4070
  %v4072 = vpop.f32.mrb[0].mxu0
  %v4073 = vpop.f32.mrb[0].mxu0
  %v4074 = vadd.f32 %v4010, %v4073
  %v4075 = vpop.f32.mrb[0].mxu0
  %4076 = vmatprep.mubr.bf16.mxu0 0
  %4077 = vmatmul.mubr.bf16.gmra.mrb[0].mxu0 %v1493
  %v4078 = vpop.f32.mrb[0].mxu0
  %v4079 = vadd.f32 %v4015, %v4078
  %v4080 = vpop.f32.mrb[0].mxu0
  %v4081 = vpop.f32.mrb[0].mxu0
  %v4082 = vadd.f32 %v4018, %v4081
  %v4083 = vpop.f32.mrb[0].mxu0
  %4084 = vmatprep.mubr.bf16.mxu0 0
  %4085 = vmatmul.mubr.bf16.gmra.mrb[0].mxu0 %v1502
  %v4086 = vpop.f32.mrb[0].mxu0
  %v4087 = vadd.f32 %v4023, %v4086
  %v4088 = vpop.f32.mrb[0].mxu0
  %v4089 = vpop.f32.mrb[0].mxu0
  %v4090 = vpop.f32.mrb[0].mxu0
  %4091 = vdwg.mxu0
  %v4092 = vmax.f32 %v3188, %v4063
  %v4093 = vmax.f32 %v3189, %v4066
  %v4094 = vmax.f32 %v3190, %v4071
  %v4095 = vmax.f32 %v3191, %v4074
  %v4096 = vmax.f32 %v3192, %v4079
  %v4097 = vmax.f32 %v3193, %v4082
  %v4098 = vmax.f32 %v3194, %v4087
  %s4099 = scalar_lea.vmem %s3, 1728
  %v4100 = vld [vmem:[%s4099] sm:$0xf]
  %v4101 = vld [vmem:[%s4099 + $0x4] sm:$0xf]
  %v4102 = vld [vmem:[%s4099 + $0x8] sm:$0xf]
  %v4103 = vld [vmem:[%s4099 + $0xc] sm:$0xf]
  %v4104 = vld [vmem:[%s4099 + $0x10] sm:$0xf]
  %v4105 = vld [vmem:[%s4099 + $0x14] sm:$0xf]
  %v4106 = vld [vmem:[%s4099 + $0x18] sm:$0xf]
  %v4107 = vld [vmem:[%s4099 + $0x1c] sm:$0xf]
  %v4108 = vld [vmem:[%s4099 + $0x20] sm:$0xf]
  %v4109 = vld [vmem:[%s4099 + $0x24] sm:$0xf]
  %v4110 = vld [vmem:[%s4099 + $0x28] sm:$0xf]
  %v4111 = vld [vmem:[%s4099 + $0x2c] sm:$0xf]
  %v4112 = vld [vmem:[%s4099 + $0x30] sm:$0xf]
  %v4113 = vld [vmem:[%s4099 + $0x34] sm:$0xf]
  %v4114 = vld [vmem:[%s4099 + $0x38] sm:$0xf]
  %v4115 = vld [vmem:[%s4099 + $0x3c] sm:$0xf]
  %v4116 = vld [vmem:[%s4099 + $0x40] sm:$0xf]
  %v4117 = vld [vmem:[%s4099 + $0x44] sm:$0xf]
  %v4118 = vld [vmem:[%s4099 + $0x48] sm:$0xf]
  %v4119 = vld [vmem:[%s4099 + $0x4c] sm:$0xf]
  %v4120 = vld [vmem:[%s4099 + $0x50] sm:$0xf]
  %v4121 = vld [vmem:[%s4099 + $0x54] sm:$0xf]
  %v4122 = vld [vmem:[%s4099 + $0x58] sm:$0xf]
  %v4123 = vld [vmem:[%s4099 + $0x5c] sm:$0xf]
  %v4124 = vld [vmem:[%s4099 + $0x60] sm:$0xf]
  %v4125 = vld [vmem:[%s4099 + $0x64] sm:$0xf]
  %v4126 = vld [vmem:[%s4099 + $0x68] sm:$0xf]
  %v4127 = vld [vmem:[%s4099 + $0x6c] sm:$0xf]
  %v4128 = vld [vmem:[%s4099 + $0x70] sm:$0xf]
  %v4129 = vld [vmem:[%s4099 + $0x74] sm:$0xf]
  %v4130 = vld [vmem:[%s4099 + $0x78] sm:$0xf]
  %v4131 = vld [vmem:[%s4099 + $0x7c] sm:$0xf]
  %v4132 = vld [vmem:[%s4099 + $0x80] sm:$0xf]
  %v4133 = vld [vmem:[%s4099 + $0x84] sm:$0xf]
  %v4134 = vld [vmem:[%s4099 + $0x88] sm:$0xf]
  %v4135 = vld [vmem:[%s4099 + $0x8c] sm:$0xf]
  %v4136 = vld [vmem:[%s4099 + $0x90] sm:$0xf]
  %v4137 = vld [vmem:[%s4099 + $0x94] sm:$0xf]
  %v4138 = vld [vmem:[%s4099 + $0x98] sm:$0xf]
  %v4139 = vld [vmem:[%s4099 + $0x9c] sm:$0xf]
  %v4140 = vld [vmem:[%s4099 + $0xa0] sm:$0xf]
  %v4141 = vld [vmem:[%s4099 + $0xa4] sm:$0xf]
  %v4142 = vld [vmem:[%s4099 + $0xa8] sm:$0xf]
  %v4143 = vld [vmem:[%s4099 + $0xac] sm:$0xf]
  %v4144 = vld [vmem:[%s4099 + $0xb0] sm:$0xf]
  %v4145 = vld [vmem:[%s4099 + $0xb4] sm:$0xf]
  %v4146 = vld [vmem:[%s4099 + $0xb8] sm:$0xf]
  %v4147 = vld [vmem:[%s4099 + $0xbc] sm:$0xf]
  %v4148 = vld [vmem:[%s4099 + $0xc0] sm:$0xf]
  %v4149 = vld [vmem:[%s4099 + $0xc4] sm:$0xf]
  %v4150 = vld [vmem:[%s4099 + $0xc8] sm:$0xf]
  %v4151 = vld [vmem:[%s4099 + $0xcc] sm:$0xf]
  %v4152 = vld [vmem:[%s4099 + $0xd0] sm:$0xf]
  %v4153 = vld [vmem:[%s4099 + $0xd4] sm:$0xf]
  %v4154 = vld [vmem:[%s4099 + $0xd8] sm:$0xf]
  %v4155 = vld [vmem:[%s4099 + $0xdc] sm:$0xf]
  %v4156 = vld [vmem:[%s4099 + $0xe0] sm:$0xf]
  %v4157 = vld [vmem:[%s4099 + $0xe4] sm:$0xf]
  %v4158 = vld [vmem:[%s4099 + $0xe8] sm:$0xf]
  %v4159 = vld [vmem:[%s4099 + $0xec] sm:$0xf]
  %v4160 = vld [vmem:[%s4099 + $0xf0] sm:$0xf]
  %v4161 = vld [vmem:[%s4099 + $0xf4] sm:$0xf]
  %v4162 = vld [vmem:[%s4099 + $0xf8] sm:$0xf]
  %v4163 = vld [vmem:[%s4099 + $0xfc] sm:$0xf]
  %v4164 = vld [vmem:[%s4099 + $0x100] sm:$0xf]
  %v4165 = vld [vmem:[%s4099 + $0x104] sm:$0xf]
  %v4166 = vld [vmem:[%s4099 + $0x108] sm:$0xf]
  %v4167 = vld [vmem:[%s4099 + $0x10c] sm:$0xf]
  %v4168 = vld [vmem:[%s4099 + $0x110] sm:$0xf]
  %v4169 = vld [vmem:[%s4099 + $0x114] sm:$0xf]
  %v4170 = vld [vmem:[%s4099 + $0x118] sm:$0xf]
  %v4171 = vld [vmem:[%s4099 + $0x11c] sm:$0xf]
  %v4172 = vld [vmem:[%s4099 + $0x120] sm:$0xf]
  %v4173 = vld [vmem:[%s4099 + $0x124] sm:$0xf]
  %v4174 = vld [vmem:[%s4099 + $0x128] sm:$0xf]
  %v4175 = vld [vmem:[%s4099 + $0x12c] sm:$0xf]
  %v4176 = vld [vmem:[%s4099 + $0x130] sm:$0xf]
  %v4177 = vld [vmem:[%s4099 + $0x134] sm:$0xf]
  %v4178 = vld [vmem:[%s4099 + $0x138] sm:$0xf]
  %v4179 = vld [vmem:[%s4099 + $0x13c] sm:$0xf]
  %v4180 = vld [vmem:[%s4099 + $0x140] sm:$0xf]
  %v4181 = vld [vmem:[%s4099 + $0x144] sm:$0xf]
  %v4182 = vld [vmem:[%s4099 + $0x148] sm:$0xf]
  %v4183 = vld [vmem:[%s4099 + $0x14c] sm:$0xf]
  %v4184 = vld [vmem:[%s4099 + $0x150] sm:$0xf]
  %v4185 = vld [vmem:[%s4099 + $0x154] sm:$0xf]
  %v4186 = vld [vmem:[%s4099 + $0x158] sm:$0xf]
  %v4187 = vld [vmem:[%s4099 + $0x15c] sm:$0xf]
  %v4188 = vld [vmem:[%s4099 + $0x160] sm:$0xf]
  %v4189 = vld [vmem:[%s4099 + $0x164] sm:$0xf]
  %v4190 = vld [vmem:[%s4099 + $0x168] sm:$0xf]
  %v4191 = vld [vmem:[%s4099 + $0x16c] sm:$0xf]
  %v4192 = vld [vmem:[%s4099 + $0x170] sm:$0xf]
  %v4193 = vld [vmem:[%s4099 + $0x174] sm:$0xf]
  %v4194 = vld [vmem:[%s4099 + $0x178] sm:$0xf]
  %v4195 = vld [vmem:[%s4099 + $0x17c] sm:$0xf]
  %v4196 = vld [vmem:[%s4099 + $0x180] sm:$0xf]
  %v4197 = vld [vmem:[%s4099 + $0x184] sm:$0xf]
  %v4198 = vld [vmem:[%s4099 + $0x188] sm:$0xf]
  %v4199 = vld [vmem:[%s4099 + $0x18c] sm:$0xf]
  %v4200 = vld [vmem:[%s4099 + $0x190] sm:$0xf]
  %v4201 = vld [vmem:[%s4099 + $0x194] sm:$0xf]
  %v4202 = vld [vmem:[%s4099 + $0x198] sm:$0xf]
  %v4203 = vld [vmem:[%s4099 + $0x19c] sm:$0xf]
  %v4204 = vld [vmem:[%s4099 + $0x1a0] sm:$0xf]
  %v4205 = vld [vmem:[%s4099 + $0x1a4] sm:$0xf]
  %v4206 = vld [vmem:[%s4099 + $0x1a8] sm:$0xf]
  %v4207 = vld [vmem:[%s4099 + $0x1ac] sm:$0xf]
  %v4208 = vld [vmem:[%s4099 + $0x1b0] sm:$0xf]
  %v4209 = vld [vmem:[%s4099 + $0x1b4] sm:$0xf]
  %v4210 = vld [vmem:[%s4099 + $0x1b8] sm:$0xf]
  %v4211 = vld [vmem:[%s4099 + $0x1bc] sm:$0xf]
  %v4212 = vld [vmem:[%s4099 + $0x1c0] sm:$0xf]
  %v4213 = vld [vmem:[%s4099 + $0x1c4] sm:$0xf]
  %v4214 = vld [vmem:[%s4099 + $0x1c8] sm:$0xf]
  %v4215 = vld [vmem:[%s4099 + $0x1cc] sm:$0xf]
  %v4216 = vld [vmem:[%s4099 + $0x1d0] sm:$0xf]
  %v4217 = vld [vmem:[%s4099 + $0x1d4] sm:$0xf]
  %v4218 = vld [vmem:[%s4099 + $0x1d8] sm:$0xf]
  %v4219 = vld [vmem:[%s4099 + $0x1dc] sm:$0xf]
  %v4220 = vld [vmem:[%s4099 + $0x1e0] sm:$0xf]
  %v4221 = vld [vmem:[%s4099 + $0x1e4] sm:$0xf]
  %v4222 = vld [vmem:[%s4099 + $0x1e8] sm:$0xf]
  %v4223 = vld [vmem:[%s4099 + $0x1ec] sm:$0xf]
  %v4224 = vld [vmem:[%s4099 + $0x1f0] sm:$0xf]
  %v4225 = vld [vmem:[%s4099 + $0x1f4] sm:$0xf]
  %v4226 = vld [vmem:[%s4099 + $0x1f8] sm:$0xf]
  %v4227 = vld [vmem:[%s4099 + $0x1fc] sm:$0xf]
  %v4228 = vld [vmem:[%s4099 + $0x200] sm:$0xf]
  %v4229 = vld [vmem:[%s4099 + $0x204] sm:$0xf]
  %v4230 = vld [vmem:[%s4099 + $0x208] sm:$0xf]
  %v4231 = vld [vmem:[%s4099 + $0x20c] sm:$0xf]
  %v4232 = vld [vmem:[%s4099 + $0x210] sm:$0xf]
  %v4233 = vld [vmem:[%s4099 + $0x214] sm:$0xf]
  %v4234 = vld [vmem:[%s4099 + $0x218] sm:$0xf]
  %v4235 = vld [vmem:[%s4099 + $0x21c] sm:$0xf]
  %v4236 = vld [vmem:[%s4099 + $0x220] sm:$0xf]
  %v4237 = vld [vmem:[%s4099 + $0x224] sm:$0xf]
  %v4238 = vld [vmem:[%s4099 + $0x228] sm:$0xf]
  %v4239 = vld [vmem:[%s4099 + $0x22c] sm:$0xf]
  %v4240 = vld [vmem:[%s4099 + $0x230] sm:$0xf]
  %v4241 = vld [vmem:[%s4099 + $0x234] sm:$0xf]
  %v4242 = vld [vmem:[%s4099 + $0x238] sm:$0xf]
  %v4243 = vld [vmem:[%s4099 + $0x23c] sm:$0xf]
  %v4388 = vunpack.c.l.b16 %v4100
  %v4389 = vunpack.c.l.b16 %v4101
  %v4390 = vunpack.c.l.b16 %v4102
  %v4391 = vunpack.c.l.b16 %v4103
  %v4392 = vunpack.c.l.b16 %v4104
  %v4393 = vunpack.c.l.b16 %v4105
  %v4394 = vunpack.c.l.b16 %v4106
  %v4395 = vunpack.c.l.b16 %v4107
  %v4396 = vunpack.c.l.b16 %v4108
  %v4397 = vunpack.c.l.b16 %v4109
  %v4398 = vunpack.c.l.b16 %v4110
  %v4399 = vunpack.c.l.b16 %v4111
  %v4400 = vunpack.c.l.b16 %v4112
  %v4401 = vunpack.c.l.b16 %v4113
  %v4402 = vunpack.c.l.b16 %v4114
  %v4403 = vunpack.c.l.b16 %v4115
  %v4404 = vunpack.c.l.b16 %v4116
  %v4405 = vunpack.c.l.b16 %v4117
  %v4406 = vunpack.c.l.b16 %v4118
  %v4407 = vunpack.c.l.b16 %v4119
  %v4408 = vunpack.c.l.b16 %v4120
  %v4409 = vunpack.c.l.b16 %v4121
  %v4410 = vunpack.c.l.b16 %v4122
  %v4411 = vunpack.c.l.b16 %v4123
  %v4412 = vunpack.c.l.b16 %v4124
  %v4413 = vunpack.c.l.b16 %v4125
  %v4414 = vunpack.c.l.b16 %v4126
  %v4415 = vunpack.c.l.b16 %v4127
  %v4416 = vunpack.c.l.b16 %v4128
  %v4417 = vunpack.c.l.b16 %v4129
  %v4418 = vunpack.c.l.b16 %v4130
  %v4419 = vunpack.c.l.b16 %v4131
  %v4420 = vunpack.c.l.b16 %v4132
  %v4421 = vunpack.c.l.b16 %v4133
  %v4422 = vunpack.c.l.b16 %v4134
  %v4423 = vunpack.c.l.b16 %v4135
  %v4424 = vunpack.c.l.b16 %v4136
  %v4425 = vunpack.c.l.b16 %v4137
  %v4426 = vunpack.c.l.b16 %v4138
  %v4427 = vunpack.c.l.b16 %v4139
  %v4428 = vunpack.c.l.b16 %v4140
  %v4429 = vunpack.c.l.b16 %v4141
  %v4430 = vunpack.c.l.b16 %v4142
  %v4431 = vunpack.c.l.b16 %v4143
  %v4432 = vunpack.c.l.b16 %v4144
  %v4433 = vunpack.c.l.b16 %v4145
  %v4434 = vunpack.c.l.b16 %v4146
  %v4435 = vunpack.c.l.b16 %v4147
  %v4436 = vunpack.c.l.b16 %v4148
  %v4437 = vunpack.c.l.b16 %v4149
  %v4438 = vunpack.c.l.b16 %v4150
  %v4439 = vunpack.c.l.b16 %v4151
  %v4440 = vunpack.c.l.b16 %v4152
  %v4441 = vunpack.c.l.b16 %v4153
  %v4442 = vunpack.c.l.b16 %v4154
  %v4443 = vunpack.c.l.b16 %v4155
  %v4444 = vunpack.c.l.b16 %v4156
  %v4445 = vunpack.c.l.b16 %v4157
  %v4446 = vunpack.c.l.b16 %v4158
  %v4447 = vunpack.c.l.b16 %v4159
  %v4448 = vunpack.c.l.b16 %v4160
  %v4449 = vunpack.c.l.b16 %v4161
  %v4450 = vunpack.c.l.b16 %v4162
  %v4451 = vunpack.c.l.b16 %v4163
  %v4452 = vunpack.c.l.b16 %v4164
  %v4453 = vunpack.c.l.b16 %v4165
  %v4454 = vunpack.c.l.b16 %v4166
  %v4455 = vunpack.c.l.b16 %v4167
  %v4456 = vunpack.c.l.b16 %v4168
  %v4457 = vunpack.c.l.b16 %v4169
  %v4458 = vunpack.c.l.b16 %v4170
  %v4459 = vunpack.c.l.b16 %v4171
  %v4460 = vunpack.c.l.b16 %v4172
  %v4461 = vunpack.c.l.b16 %v4173
  %v4462 = vunpack.c.l.b16 %v4174
  %v4463 = vunpack.c.l.b16 %v4175
  %v4464 = vunpack.c.l.b16 %v4176
  %v4465 = vunpack.c.l.b16 %v4177
  %v4466 = vunpack.c.l.b16 %v4178
  %v4467 = vunpack.c.l.b16 %v4179
  %v4468 = vunpack.c.l.b16 %v4180
  %v4469 = vunpack.c.l.b16 %v4181
  %v4470 = vunpack.c.l.b16 %v4182
  %v4471 = vunpack.c.l.b16 %v4183
  %v4472 = vunpack.c.l.b16 %v4184
  %v4473 = vunpack.c.l.b16 %v4185
  %v4474 = vunpack.c.l.b16 %v4186
  %v4475 = vunpack.c.l.b16 %v4187
  %v4476 = vunpack.c.l.b16 %v4188
  %v4477 = vunpack.c.l.b16 %v4189
  %v4478 = vunpack.c.l.b16 %v4190
  %v4479 = vunpack.c.l.b16 %v4191
  %v4480 = vunpack.c.l.b16 %v4192
  %v4481 = vunpack.c.l.b16 %v4193
  %v4482 = vunpack.c.l.b16 %v4194
  %v4483 = vunpack.c.l.b16 %v4195
  %v4484 = vunpack.c.l.b16 %v4196
  %v4485 = vunpack.c.l.b16 %v4197
  %v4486 = vunpack.c.l.b16 %v4198
  %v4487 = vunpack.c.l.b16 %v4199
  %v4488 = vunpack.c.l.b16 %v4200
  %v4489 = vunpack.c.l.b16 %v4201
  %v4490 = vunpack.c.l.b16 %v4202
  %v4491 = vunpack.c.l.b16 %v4203
  %v4492 = vunpack.c.l.b16 %v4204
  %v4493 = vunpack.c.l.b16 %v4205
  %v4494 = vunpack.c.l.b16 %v4206
  %v4495 = vunpack.c.l.b16 %v4207
  %v4496 = vunpack.c.l.b16 %v4208
  %v4497 = vunpack.c.l.b16 %v4209
  %v4498 = vunpack.c.l.b16 %v4210
  %v4499 = vunpack.c.l.b16 %v4211
  %v4500 = vunpack.c.l.b16 %v4212
  %v4501 = vunpack.c.l.b16 %v4213
  %v4502 = vunpack.c.l.b16 %v4214
  %v4503 = vunpack.c.l.b16 %v4215
  %v4504 = vunpack.c.l.b16 %v4216
  %v4505 = vunpack.c.l.b16 %v4217
  %v4506 = vunpack.c.l.b16 %v4218
  %v4507 = vunpack.c.l.b16 %v4219
  %v4508 = vunpack.c.l.b16 %v4220
  %v4509 = vunpack.c.l.b16 %v4221
  %v4510 = vunpack.c.l.b16 %v4222
  %v4511 = vunpack.c.l.b16 %v4223
  %v4512 = vunpack.c.l.b16 %v4224
  %v4513 = vunpack.c.l.b16 %v4225
  %v4514 = vunpack.c.l.b16 %v4226
  %v4515 = vunpack.c.l.b16 %v4227
  %v4516 = vunpack.c.l.b16 %v4228
  %v4517 = vunpack.c.l.b16 %v4229
  %v4518 = vunpack.c.l.b16 %v4230
  %v4519 = vunpack.c.l.b16 %v4231
  %v4520 = vunpack.c.l.b16 %v4232
  %v4521 = vunpack.c.l.b16 %v4233
  %v4522 = vunpack.c.l.b16 %v4234
  %v4523 = vunpack.c.l.b16 %v4235
  %v4524 = vunpack.c.l.b16 %v4236
  %v4525 = vunpack.c.l.b16 %v4237
  %v4526 = vunpack.c.l.b16 %v4238
  %v4527 = vunpack.c.l.b16 %v4239
  %v4528 = vunpack.c.l.b16 %v4240
  %v4529 = vunpack.c.l.b16 %v4241
  %v4530 = vunpack.c.l.b16 %v4242
  %v4531 = vunpack.c.l.b16 %v4243
  %v4532 = vpack.c.b16 %v4389, %v4388
  %v4533 = vpack.c.b16 %v4391, %v4390
  %v4534 = vpack.c.b16 %v4393, %v4392
  %v4535 = vpack.c.b16 %v4395, %v4394
  %v4536 = vpack.c.b16 %v4397, %v4396
  %v4537 = vpack.c.b16 %v4399, %v4398
  %v4538 = vpack.c.b16 %v4401, %v4400
  %v4539 = vpack.c.b16 %v4403, %v4402
  %v4540 = vpack.c.b16 %v4405, %v4404
  %v4541 = vpack.c.b16 %v4407, %v4406
  %v4542 = vpack.c.b16 %v4409, %v4408
  %v4543 = vpack.c.b16 %v4411, %v4410
  %v4544 = vpack.c.b16 %v4413, %v4412
  %v4545 = vpack.c.b16 %v4415, %v4414
  %v4546 = vpack.c.b16 %v4417, %v4416
  %v4547 = vpack.c.b16 %v4419, %v4418
  %v4548 = vpack.c.b16 %v4421, %v4420
  %v4549 = vpack.c.b16 %v4423, %v4422
  %v4550 = vpack.c.b16 %v4425, %v4424
  %v4551 = vpack.c.b16 %v4427, %v4426
  %v4552 = vpack.c.b16 %v4429, %v4428
  %v4553 = vpack.c.b16 %v4431, %v4430
  %v4554 = vpack.c.b16 %v4433, %v4432
  %v4555 = vpack.c.b16 %v4435, %v4434
  %v4556 = vpack.c.b16 %v4437, %v4436
  %v4557 = vpack.c.b16 %v4439, %v4438
  %v4558 = vpack.c.b16 %v4441, %v4440
  %v4559 = vpack.c.b16 %v4443, %v4442
  %v4560 = vpack.c.b16 %v4445, %v4444
  %v4561 = vpack.c.b16 %v4447, %v4446
  %v4562 = vpack.c.b16 %v4449, %v4448
  %v4563 = vpack.c.b16 %v4451, %v4450
  %v4564 = vpack.c.b16 %v4453, %v4452
  %v4565 = vpack.c.b16 %v4455, %v4454
  %v4566 = vpack.c.b16 %v4457, %v4456
  %v4567 = vpack.c.b16 %v4459, %v4458
  %v4568 = vpack.c.b16 %v4461, %v4460
  %v4569 = vpack.c.b16 %v4463, %v4462
  %v4570 = vpack.c.b16 %v4465, %v4464
  %v4571 = vpack.c.b16 %v4467, %v4466
  %v4572 = vpack.c.b16 %v4469, %v4468
  %v4573 = vpack.c.b16 %v4471, %v4470
  %v4574 = vpack.c.b16 %v4473, %v4472
  %v4575 = vpack.c.b16 %v4475, %v4474
  %v4576 = vpack.c.b16 %v4477, %v4476
  %v4577 = vpack.c.b16 %v4479, %v4478
  %v4578 = vpack.c.b16 %v4481, %v4480
  %v4579 = vpack.c.b16 %v4483, %v4482
  %v4580 = vpack.c.b16 %v4485, %v4484
  %v4581 = vpack.c.b16 %v4487, %v4486
  %v4582 = vpack.c.b16 %v4489, %v4488
  %v4583 = vpack.c.b16 %v4491, %v4490
  %v4584 = vpack.c.b16 %v4493, %v4492
  %v4585 = vpack.c.b16 %v4495, %v4494
  %v4586 = vpack.c.b16 %v4497, %v4496
  %v4587 = vpack.c.b16 %v4499, %v4498
  %v4588 = vpack.c.b16 %v4501, %v4500
  %v4589 = vpack.c.b16 %v4503, %v4502
  %v4590 = vpack.c.b16 %v4505, %v4504
  %v4591 = vpack.c.b16 %v4507, %v4506
  %v4592 = vpack.c.b16 %v4509, %v4508
  %v4593 = vpack.c.b16 %v4511, %v4510
  %v4594 = vpack.c.b16 %v4513, %v4512
  %v4595 = vpack.c.b16 %v4515, %v4514
  %v4596 = vpack.c.b16 %v4517, %v4516
  %v4597 = vpack.c.b16 %v4519, %v4518
  %v4598 = vpack.c.b16 %v4521, %v4520
  %v4599 = vpack.c.b16 %v4523, %v4522
  %v4600 = vpack.c.b16 %v4525, %v4524
  %v4601 = vpack.c.b16 %v4527, %v4526
  %v4602 = vpack.c.b16 %v4529, %v4528
  %v4603 = vpack.c.b16 %v4531, %v4530
  %4676 = vmatprep.subr.bf16.mxu0 0
  %4677 = vmatpush1.bf16.msra.mxu0 %v4532
  %4678 = vmatprep.subr.bf16.mxu0 0
  %4679 = vmatpush1.bf16.msra.mxu0 %v4533
  %4680 = vmatprep.subr.bf16.mxu0 0
  %4681 = vmatpush1.bf16.msra.mxu0 %v4534
  %4682 = vmatprep.subr.bf16.mxu0 0
  %4683 = vmatpush1.bf16.msra.mxu0 %v4535
  %4684 = vmatprep.subr.bf16.mxu0 0
  %4685 = vmatpush1.bf16.msra.mxu0 %v4536
  %4686 = vmatprep.subr.bf16.mxu0 0
  %4687 = vmatpush1.bf16.msra.mxu0 %v4537
  %4688 = vmatprep.subr.bf16.mxu0 0
  %4689 = vmatpush1.bf16.msra.mxu0 %v4538
  %4690 = vmatprep.subr.bf16.mxu0 0
  %4691 = vmatpush1.bf16.msra.mxu0 %v4539
  %4692 = vmatprep.subr.bf16.mxu0 0
  %4693 = vmatpush1.bf16.msra.mxu0 %v4540
  %4694 = vmatprep.subr.bf16.mxu0 0
  %4695 = vmatpush1.bf16.msra.mxu0 %v4541
  %4696 = vmatprep.subr.bf16.mxu0 0
  %4697 = vmatpush1.bf16.msra.mxu0 %v4542
  %4698 = vmatprep.subr.bf16.mxu0 0
  %4699 = vmatpush1.bf16.msra.mxu0 %v4543
  %4700 = vmatprep.subr.bf16.mxu0 0
  %4701 = vmatpush1.bf16.msra.mxu0 %v4544
  %4702 = vmatprep.subr.bf16.mxu0 0
  %4703 = vmatpush1.bf16.msra.mxu0 %v4545
  %4704 = vmatprep.subr.bf16.mxu0 0
  %4705 = vmatpush1.bf16.msra.mxu0 %v4546
  %4706 = vmatprep.subr.bf16.mxu0 0
  %4707 = vmatpush1.bf16.msra.mxu0 %v4547
  %4708 = vmatprep.mubr.bf16.mxu0 %v1468
  %4709 = vmatmul.mubr.bf16.gmra.mrb[0].mxu0 %v1467
  %v4710 = vpop.f32.mrb[0].mxu0
  %v4711 = vadd.f32 0.0, %v4710
  %v4712 = vpop.f32.mrb[0].mxu0
  %v4713 = vpop.f32.mrb[0].mxu0
  %v4714 = vadd.f32 0.0, %v4713
  %v4715 = vpop.f32.mrb[0].mxu0
  %4716 = vmatprep.mubr.bf16.mxu0 %v1477
  %4717 = vmatmul.mubr.bf16.gmra.mrb[0].mxu0 %v1476
  %v4718 = vpop.f32.mrb[0].mxu0
  %v4719 = vadd.f32 0.0, %v4718
  %v4720 = vpop.f32.mrb[0].mxu0
  %v4721 = vpop.f32.mrb[0].mxu0
  %v4722 = vadd.f32 0.0, %v4721
  %v4723 = vpop.f32.mrb[0].mxu0
  %4724 = vmatprep.mubr.bf16.mxu0 %v1486
  %4725 = vmatmul.mubr.bf16.gmra.mrb[0].mxu0 %v1485
  %v4726 = vpop.f32.mrb[0].mxu0
  %v4727 = vadd.f32 0.0, %v4726
  %v4728 = vpop.f32.mrb[0].mxu0
  %v4729 = vpop.f32.mrb[0].mxu0
  %v4730 = vadd.f32 0.0, %v4729
  %v4731 = vpop.f32.mrb[0].mxu0
  %4732 = vmatprep.mubr.bf16.mxu0 %v1495
  %4733 = vmatmul.mubr.bf16.gmra.mrb[0].mxu0 %v1494
  %v4734 = vpop.f32.mrb[0].mxu0
  %v4735 = vadd.f32 0.0, %v4734
  %v4736 = vpop.f32.mrb[0].mxu0
  %v4737 = vpop.f32.mrb[0].mxu0
  %v4738 = vpop.f32.mrb[0].mxu0
  %4739 = vdwg.mxu0
  %4740 = vmatprep.subr.bf16.mxu0 0
  %4741 = vmatpush1.bf16.msra.mxu0 %v4548
  %4742 = vmatprep.subr.bf16.mxu0 0
  %4743 = vmatpush1.bf16.msra.mxu0 %v4549
  %4744 = vmatprep.subr.bf16.mxu0 0
  %4745 = vmatpush1.bf16.msra.mxu0 %v4550
  %4746 = vmatprep.subr.bf16.mxu0 0
  %4747 = vmatpush1.bf16.msra.mxu0 %v4551
  %4748 = vmatprep.subr.bf16.mxu0 0
  %4749 = vmatpush1.bf16.msra.mxu0 %v4552
  %4750 = vmatprep.subr.bf16.mxu0 0
  %4751 = vmatpush1.bf16.msra.mxu0 %v4553
  %4752 = vmatprep.subr.bf16.mxu0 0
  %4753 = vmatpush1.bf16.msra.mxu0 %v4554
  %4754 = vmatprep.subr.bf16.mxu0 0
  %4755 = vmatpush1.bf16.msra.mxu0 %v4555
  %4756 = vmatprep.subr.bf16.mxu0 0
  %4757 = vmatpush1.bf16.msra.mxu0 %v4556
  %4758 = vmatprep.subr.bf16.mxu0 0
  %4759 = vmatpush1.bf16.msra.mxu0 %v4557
  %4760 = vmatprep.subr.bf16.mxu0 0
  %4761 = vmatpush1.bf16.msra.mxu0 %v4558
  %4762 = vmatprep.subr.bf16.mxu0 0
  %4763 = vmatpush1.bf16.msra.mxu0 %v4559
  %4764 = vmatprep.subr.bf16.mxu0 0
  %4765 = vmatpush1.bf16.msra.mxu0 %v4560
  %4766 = vmatprep.subr.bf16.mxu0 0
  %4767 = vmatpush1.bf16.msra.mxu0 %v4561
  %4768 = vmatprep.subr.bf16.mxu0 0
  %4769 = vmatpush1.bf16.msra.mxu0 %v4562
  %4770 = vmatprep.subr.bf16.mxu0 0
  %4771 = vmatpush1.bf16.msra.mxu0 %v4563
  %4772 = vmatprep.mubr.bf16.mxu0 %v1470
  %4773 = vmatmul.mubr.bf16.gmra.mrb[0].mxu0 %v1469
  %v4774 = vpop.f32.mrb[0].mxu0
  %v4775 = vadd.f32 %v4711, %v4774
  %v4776 = vpop.f32.mrb[0].mxu0
  %v4777 = vpop.f32.mrb[0].mxu0
  %v4778 = vadd.f32 %v4714, %v4777
  %v4779 = vpop.f32.mrb[0].mxu0
  %4780 = vmatprep.mubr.bf16.mxu0 %v1479
  %4781 = vmatmul.mubr.bf16.gmra.mrb[0].mxu0 %v1478
  %v4782 = vpop.f32.mrb[0].mxu0
  %v4783 = vadd.f32 %v4719, %v4782
  %v4784 = vpop.f32.mrb[0].mxu0
  %v4785 = vpop.f32.mrb[0].mxu0
  %v4786 = vadd.f32 %v4722, %v4785
  %v4787 = vpop.f32.mrb[0].mxu0
  %4788 = vmatprep.mubr.bf16.mxu0 %v1488
  %4789 = vmatmul.mubr.bf16.gmra.mrb[0].mxu0 %v1487
  %v4790 = vpop.f32.mrb[0].mxu0
  %v4791 = vadd.f32 %v4727, %v4790
  %v4792 = vpop.f32.mrb[0].mxu0
  %v4793 = vpop.f32.mrb[0].mxu0
  %v4794 = vadd.f32 %v4730, %v4793
  %v4795 = vpop.f32.mrb[0].mxu0
  %4796 = vmatprep.mubr.bf16.mxu0 %v1497
  %4797 = vmatmul.mubr.bf16.gmra.mrb[0].mxu0 %v1496
  %v4798 = vpop.f32.mrb[0].mxu0
  %v4799 = vadd.f32 %v4735, %v4798
  %v4800 = vpop.f32.mrb[0].mxu0
  %v4801 = vpop.f32.mrb[0].mxu0
  %v4802 = vpop.f32.mrb[0].mxu0
  %4803 = vdwg.mxu0
  %4804 = vmatprep.subr.bf16.mxu0 0
  %4805 = vmatpush1.bf16.msra.mxu0 %v4564
  %4806 = vmatprep.subr.bf16.mxu0 0
  %4807 = vmatpush1.bf16.msra.mxu0 %v4565
  %4808 = vmatprep.subr.bf16.mxu0 0
  %4809 = vmatpush1.bf16.msra.mxu0 %v4566
  %4810 = vmatprep.subr.bf16.mxu0 0
  %4811 = vmatpush1.bf16.msra.mxu0 %v4567
  %4812 = vmatprep.subr.bf16.mxu0 0
  %4813 = vmatpush1.bf16.msra.mxu0 %v4568
  %4814 = vmatprep.subr.bf16.mxu0 0
  %4815 = vmatpush1.bf16.msra.mxu0 %v4569
  %4816 = vmatprep.subr.bf16.mxu0 0
  %4817 = vmatpush1.bf16.msra.mxu0 %v4570
  %4818 = vmatprep.subr.bf16.mxu0 0
  %4819 = vmatpush1.bf16.msra.mxu0 %v4571
  %4820 = vmatprep.subr.bf16.mxu0 0
  %4821 = vmatpush1.bf16.msra.mxu0 %v4572
  %4822 = vmatprep.subr.bf16.mxu0 0
  %4823 = vmatpush1.bf16.msra.mxu0 %v4573
  %4824 = vmatprep.subr.bf16.mxu0 0
  %4825 = vmatpush1.bf16.msra.mxu0 %v4574
  %4826 = vmatprep.subr.bf16.mxu0 0
  %4827 = vmatpush1.bf16.msra.mxu0 %v4575
  %4828 = vmatprep.subr.bf16.mxu0 0
  %4829 = vmatpush1.bf16.msra.mxu0 %v4576
  %4830 = vmatprep.subr.bf16.mxu0 0
  %4831 = vmatpush1.bf16.msra.mxu0 %v4577
  %4832 = vmatprep.subr.bf16.mxu0 0
  %4833 = vmatpush1.bf16.msra.mxu0 %v4578
  %4834 = vmatprep.subr.bf16.mxu0 0
  %4835 = vmatpush1.bf16.msra.mxu0 %v4579
  %4836 = vmatprep.mubr.bf16.mxu0 %v1472
  %4837 = vmatmul.mubr.bf16.gmra.mrb[0].mxu0 %v1471
  %v4838 = vpop.f32.mrb[0].mxu0
  %v4839 = vadd.f32 %v4775, %v4838
  %v4840 = vpop.f32.mrb[0].mxu0
  %v4841 = vpop.f32.mrb[0].mxu0
  %v4842 = vadd.f32 %v4778, %v4841
  %v4843 = vpop.f32.mrb[0].mxu0
  %4844 = vmatprep.mubr.bf16.mxu0 %v1481
  %4845 = vmatmul.mubr.bf16.gmra.mrb[0].mxu0 %v1480
  %v4846 = vpop.f32.mrb[0].mxu0
  %v4847 = vadd.f32 %v4783, %v4846
  %v4848 = vpop.f32.mrb[0].mxu0
  %v4849 = vpop.f32.mrb[0].mxu0
  %v4850 = vadd.f32 %v4786, %v4849
  %v4851 = vpop.f32.mrb[0].mxu0
  %4852 = vmatprep.mubr.bf16.mxu0 %v1490
  %4853 = vmatmul.mubr.bf16.gmra.mrb[0].mxu0 %v1489
  %v4854 = vpop.f32.mrb[0].mxu0
  %v4855 = vadd.f32 %v4791, %v4854
  %v4856 = vpop.f32.mrb[0].mxu0
  %v4857 = vpop.f32.mrb[0].mxu0
  %v4858 = vadd.f32 %v4794, %v4857
  %v4859 = vpop.f32.mrb[0].mxu0
  %4860 = vmatprep.mubr.bf16.mxu0 %v1499
  %4861 = vmatmul.mubr.bf16.gmra.mrb[0].mxu0 %v1498
  %v4862 = vpop.f32.mrb[0].mxu0
  %v4863 = vadd.f32 %v4799, %v4862
  %v4864 = vpop.f32.mrb[0].mxu0
  %v4865 = vpop.f32.mrb[0].mxu0
  %v4866 = vpop.f32.mrb[0].mxu0
  %4867 = vdwg.mxu0
  %4868 = vmatprep.subr.bf16.mxu0 0
  %4869 = vmatpush1.bf16.msra.mxu0 %v4580
  %4870 = vmatprep.subr.bf16.mxu0 0
  %4871 = vmatpush1.bf16.msra.mxu0 %v4581
  %4872 = vmatprep.subr.bf16.mxu0 0
  %4873 = vmatpush1.bf16.msra.mxu0 %v4582
  %4874 = vmatprep.subr.bf16.mxu0 0
  %4875 = vmatpush1.bf16.msra.mxu0 %v4583
  %4876 = vmatprep.subr.bf16.mxu0 0
  %4877 = vmatpush1.bf16.msra.mxu0 %v4584
  %4878 = vmatprep.subr.bf16.mxu0 0
  %4879 = vmatpush1.bf16.msra.mxu0 %v4585
  %4880 = vmatprep.subr.bf16.mxu0 0
  %4881 = vmatpush1.bf16.msra.mxu0 %v4586
  %4882 = vmatprep.subr.bf16.mxu0 0
  %4883 = vmatpush1.bf16.msra.mxu0 %v4587
  %4884 = vmatprep.subr.bf16.mxu0 0
  %4885 = vmatpush1.bf16.msra.mxu0 %v4588
  %4886 = vmatprep.subr.bf16.mxu0 0
  %4887 = vmatpush1.bf16.msra.mxu0 %v4589
  %4888 = vmatprep.subr.bf16.mxu0 0
  %4889 = vmatpush1.bf16.msra.mxu0 %v4590
  %4890 = vmatprep.subr.bf16.mxu0 0
  %4891 = vmatpush1.bf16.msra.mxu0 %v4591
  %4892 = vmatprep.subr.bf16.mxu0 0
  %4893 = vmatpush1.bf16.msra.mxu0 %v4592
  %4894 = vmatprep.subr.bf16.mxu0 0
  %4895 = vmatpush1.bf16.msra.mxu0 %v4593
  %4896 = vmatprep.subr.bf16.mxu0 0
  %4897 = vmatpush1.bf16.msra.mxu0 %v4594
  %4898 = vmatprep.subr.bf16.mxu0 0
  %4899 = vmatpush1.bf16.msra.mxu0 %v4595
  %4900 = vmatprep.mubr.bf16.mxu0 %v1474
  %4901 = vmatmul.mubr.bf16.gmra.mrb[0].mxu0 %v1473
  %v4902 = vpop.f32.mrb[0].mxu0
  %v4903 = vadd.f32 %v4839, %v4902
  %v4904 = vpop.f32.mrb[0].mxu0
  %v4905 = vpop.f32.mrb[0].mxu0
  %v4906 = vadd.f32 %v4842, %v4905
  %v4907 = vpop.f32.mrb[0].mxu0
  %4908 = vmatprep.mubr.bf16.mxu0 %v1483
  %4909 = vmatmul.mubr.bf16.gmra.mrb[0].mxu0 %v1482
  %v4910 = vpop.f32.mrb[0].mxu0
  %v4911 = vadd.f32 %v4847, %v4910
  %v4912 = vpop.f32.mrb[0].mxu0
  %v4913 = vpop.f32.mrb[0].mxu0
  %v4914 = vadd.f32 %v4850, %v4913
  %v4915 = vpop.f32.mrb[0].mxu0
  %4916 = vmatprep.mubr.bf16.mxu0 %v1492
  %4917 = vmatmul.mubr.bf16.gmra.mrb[0].mxu0 %v1491
  %v4918 = vpop.f32.mrb[0].mxu0
  %v4919 = vadd.f32 %v4855, %v4918
  %v4920 = vpop.f32.mrb[0].mxu0
  %v4921 = vpop.f32.mrb[0].mxu0
  %v4922 = vadd.f32 %v4858, %v4921
  %v4923 = vpop.f32.mrb[0].mxu0
  %4924 = vmatprep.mubr.bf16.mxu0 %v1501
  %4925 = vmatmul.mubr.bf16.gmra.mrb[0].mxu0 %v1500
  %v4926 = vpop.f32.mrb[0].mxu0
  %v4927 = vadd.f32 %v4863, %v4926
  %v4928 = vpop.f32.mrb[0].mxu0
  %v4929 = vpop.f32.mrb[0].mxu0
  %v4930 = vpop.f32.mrb[0].mxu0
  %4931 = vdwg.mxu0
  %4932 = vmatprep.subr.bf16.mxu0 0
  %4933 = vmatpush1.bf16.msra.mxu0 %v4596
  %4934 = vmatprep.subr.bf16.mxu0 0
  %4935 = vmatpush1.bf16.msra.mxu0 %v4597
  %4936 = vmatprep.subr.bf16.mxu0 0
  %4937 = vmatpush1.bf16.msra.mxu0 %v4598
  %4938 = vmatprep.subr.bf16.mxu0 0
  %4939 = vmatpush1.bf16.msra.mxu0 %v4599
  %4940 = vmatprep.subr.bf16.mxu0 0
  %4941 = vmatpush1.bf16.msra.mxu0 %v4600
  %4942 = vmatprep.subr.bf16.mxu0 0
  %4943 = vmatpush1.bf16.msra.mxu0 %v4601
  %4944 = vmatprep.subr.bf16.mxu0 0
  %4945 = vmatpush1.bf16.msra.mxu0 %v4602
  %4946 = vmatprep.subr.bf16.mxu0 0
  %4947 = vmatpush1.bf16.msra.mxu0 %v4603
  %4948 = vmatprep.subr.bf16.mxu0 0
  %4949 = vmatpush1.bf16.msra.mxu0 0
  %4950 = vmatprep.subr.bf16.mxu0 0
  %4951 = vmatpush1.bf16.msra.mxu0 0
  %4952 = vmatprep.subr.bf16.mxu0 0
  %4953 = vmatpush1.bf16.msra.mxu0 0
  %4954 = vmatprep.subr.bf16.mxu0 0
  %4955 = vmatpush1.bf16.msra.mxu0 0
  %4956 = vmatprep.subr.bf16.mxu0 0
  %4957 = vmatpush1.bf16.msra.mxu0 0
  %4958 = vmatprep.subr.bf16.mxu0 0
  %4959 = vmatpush1.bf16.msra.mxu0 0
  %4960 = vmatprep.subr.bf16.mxu0 0
  %4961 = vmatpush1.bf16.msra.mxu0 0
  %4962 = vmatprep.subr.bf16.mxu0 0
  %4963 = vmatpush1.bf16.msra.mxu0 0
  %4964 = vmatprep.mubr.bf16.mxu0 0
  %4965 = vmatmul.mubr.bf16.gmra.mrb[0].mxu0 %v1475
  %v4966 = vpop.f32.mrb[0].mxu0
  %v4967 = vadd.f32 %v4903, %v4966
  %v4968 = vpop.f32.mrb[0].mxu0
  %v4969 = vpop.f32.mrb[0].mxu0
  %v4970 = vadd.f32 %v4906, %v4969
  %v4971 = vpop.f32.mrb[0].mxu0
  %4972 = vmatprep.mubr.bf16.mxu0 0
  %4973 = vmatmul.mubr.bf16.gmra.mrb[0].mxu0 %v1484
  %v4974 = vpop.f32.mrb[0].mxu0
  %v4975 = vadd.f32 %v4911, %v4974
  %v4976 = vpop.f32.mrb[0].mxu0
  %v4977 = vpop.f32.mrb[0].mxu0
  %v4978 = vadd.f32 %v4914, %v4977
  %v4979 = vpop.f32.mrb[0].mxu0
  %4980 = vmatprep.mubr.bf16.mxu0 0
  %4981 = vmatmul.mubr.bf16.gmra.mrb[0].mxu0 %v1493
  %v4982 = vpop.f32.mrb[0].mxu0
  %v4983 = vadd.f32 %v4919, %v4982
  %v4984 = vpop.f32.mrb[0].mxu0
  %v4985 = vpop.f32.mrb[0].mxu0
  %v4986 = vadd.f32 %v4922, %v4985
  %v4987 = vpop.f32.mrb[0].mxu0
  %4988 = vmatprep.mubr.bf16.mxu0 0
  %4989 = vmatmul.mubr.bf16.gmra.mrb[0].mxu0 %v1502
  %v4990 = vpop.f32.mrb[0].mxu0
  %v4991 = vadd.f32 %v4927, %v4990
  %v4992 = vpop.f32.mrb[0].mxu0
  %v4993 = vpop.f32.mrb[0].mxu0
  %v4994 = vpop.f32.mrb[0].mxu0
  %4995 = vdwg.mxu0
  %v4996 = vmax.f32 %v4092, %v4967
  %v4997 = vmax.f32 %v4093, %v4970
  %v4998 = vmax.f32 %v4094, %v4975
  %v4999 = vmax.f32 %v4095, %v4978
  %v5000 = vmax.f32 %v4096, %v4983
  %v5001 = vmax.f32 %v4097, %v4986
  %v5002 = vmax.f32 %v4098, %v4991
  %v5004 = vlaneseq
  %v5005 = vshrl.u32 %v5004, 7
  %v5006 = vsub.s32 0, %v5005
  %v5007 = vrot.slane %v27, %v5006
  %v5009 = vadd.f32 %v4996, %v5007
  %v5010 = vadd.f32 %v4997, %v5007
  %v5011 = vadd.f32 %v4998, %v5007
  %v5012 = vadd.f32 %v4999, %v5007
  %v5013 = vadd.f32 %v5000, %v5007
  %v5014 = vadd.f32 %v5001, %v5007
  %v5015 = vadd.f32 %v5002, %v5007
  %v5016 = vmax.f32 %v5009, 0.0
  %v5017 = vmax.f32 %v5010, 0.0
  %v5018 = vmax.f32 %v5011, 0.0
  %v5019 = vmax.f32 %v5012, 0.0
  %v5020 = vmax.f32 %v5013, 0.0
  %v5021 = vmax.f32 %v5014, 0.0
  %v5022 = vmax.f32 %v5015, 0.0
  %v5023 = vpack.c.bf16 %v5017, %v5016
  %v5024 = vpack.c.bf16 %v5019, %v5018
  %v5025 = vpack.c.bf16 %v5021, %v5020
  %v5026 = vpack.c.bf16 %v5022, %v5022
  %v5031 = vunpack.c.l.b16 %v5023
  %v5032 = vunpack.c.h.b16 %v5023
  %v5033 = vunpack.c.l.b16 %v5024
  %v5034 = vunpack.c.h.b16 %v5024
  %v5035 = vunpack.c.l.b16 %v5025
  %v5036 = vunpack.c.h.b16 %v5025
  %v5037 = vunpack.c.l.b16 %v5026
  %v5038 = vpack.c.b16 %v5031, %v5031
  %v5039 = vpack.c.b16 %v5032, %v5032
  %v5040 = vpack.c.b16 %v5033, %v5033
  %v5041 = vpack.c.b16 %v5034, %v5034
  %v5042 = vpack.c.b16 %v5035, %v5035
  %v5043 = vpack.c.b16 %v5036, %v5036
  %v5044 = vpack.c.b16 %v5037, %v5037
  %5052 = vst [vmem:[%s5] sm:$0xf] %v5038
  %5053 = vst [vmem:[%s5 + $0x4] sm:$0xf] %v5039
  %5054 = vst [vmem:[%s5 + $0x8] sm:$0xf] %v5040
  %5055 = vst [vmem:[%s5 + $0xc] sm:$0xf] %v5041
  %5056 = vst [vmem:[%s5 + $0x10] sm:$0xf] %v5042
  %5057 = vst [vmem:[%s5 + $0x14] sm:$0xf] %v5043
  %5058 = vst [vmem:[%s5 + $0x18] sm:$0xf] %v5044
  %s5059 = scalar_lea.vmem %s0, 112
  %v5060 = vld [vmem:[%s5059] sm:$0xf]
  %v5061 = vld [vmem:[%s5059 + $0x4] sm:$0xf]
  %v5062 = vld [vmem:[%s5059 + $0x8] sm:$0xf]
  %v5063 = vld [vmem:[%s5059 + $0xc] sm:$0xf]
  %v5064 = vld [vmem:[%s5059 + $0x10] sm:$0xf]
  %v5065 = vld [vmem:[%s5059 + $0x14] sm:$0xf]
  %v5066 = vld [vmem:[%s5059 + $0x18] sm:$0xf]
  %v5067 = vld [vmem:[%s5059 + $0x1c] sm:$0xf]
  %v5068 = vld [vmem:[%s5059 + $0x20] sm:$0xf]
  %v5069 = vld [vmem:[%s5059 + $0x24] sm:$0xf]
  %v5070 = vld [vmem:[%s5059 + $0x28] sm:$0xf]
  %v5071 = vld [vmem:[%s5059 + $0x2c] sm:$0xf]
  %v5072 = vld [vmem:[%s5059 + $0x30] sm:$0xf]
  %v5073 = vld [vmem:[%s5059 + $0x34] sm:$0xf]
  %v5074 = vld [vmem:[%s5059 + $0x38] sm:$0xf]
  %v5075 = vld [vmem:[%s5059 + $0x3c] sm:$0xf]
  %v5076 = vld [vmem:[%s5059 + $0x40] sm:$0xf]
  %v5077 = vld [vmem:[%s5059 + $0x44] sm:$0xf]
  %v5078 = vld [vmem:[%s5059 + $0x48] sm:$0xf]
  %v5079 = vld [vmem:[%s5059 + $0x4c] sm:$0xf]
  %v5080 = vld [vmem:[%s5059 + $0x50] sm:$0xf]
  %v5081 = vld [vmem:[%s5059 + $0x54] sm:$0xf]
  %v5082 = vld [vmem:[%s5059 + $0x58] sm:$0xf]
  %v5083 = vld [vmem:[%s5059 + $0x5c] sm:$0xf]
  %v5084 = vld [vmem:[%s5059 + $0x60] sm:$0xf]
  %v5085 = vld [vmem:[%s5059 + $0x64] sm:$0xf]
  %v5086 = vld [vmem:[%s5059 + $0x68] sm:$0xf]
  %v5087 = vld [vmem:[%s5059 + $0x6c] sm:$0xf]
  %v5116 = vunpack.c.l.b16 %v5060
  %v5117 = vunpack.c.l.b16 %v5061
  %v5118 = vunpack.c.l.b16 %v5062
  %v5119 = vunpack.c.l.b16 %v5063
  %v5120 = vunpack.c.l.b16 %v5064
  %v5121 = vunpack.c.l.b16 %v5065
  %v5122 = vunpack.c.l.b16 %v5066
  %v5123 = vunpack.c.l.b16 %v5067
  %v5124 = vunpack.c.l.b16 %v5068
  %v5125 = vunpack.c.l.b16 %v5069
  %v5126 = vunpack.c.l.b16 %v5070
  %v5127 = vunpack.c.l.b16 %v5071
  %v5128 = vunpack.c.l.b16 %v5072
  %v5129 = vunpack.c.l.b16 %v5073
  %v5130 = vunpack.c.l.b16 %v5074
  %v5131 = vunpack.c.l.b16 %v5075
  %v5132 = vunpack.c.l.b16 %v5076
  %v5133 = vunpack.c.l.b16 %v5077
  %v5134 = vunpack.c.l.b16 %v5078
  %v5135 = vunpack.c.l.b16 %v5079
  %v5136 = vunpack.c.l.b16 %v5080
  %v5137 = vunpack.c.l.b16 %v5081
  %v5138 = vunpack.c.l.b16 %v5082
  %v5139 = vunpack.c.l.b16 %v5083
  %v5140 = vunpack.c.l.b16 %v5084
  %v5141 = vunpack.c.l.b16 %v5085
  %v5142 = vunpack.c.l.b16 %v5086
  %v5143 = vunpack.c.l.b16 %v5087
  %v5144 = vpack.c.b16 %v5117, %v5116
  %v5145 = vpack.c.b16 %v5119, %v5118
  %v5146 = vpack.c.b16 %v5121, %v5120
  %v5147 = vpack.c.b16 %v5123, %v5122
  %v5148 = vpack.c.b16 %v5125, %v5124
  %v5149 = vpack.c.b16 %v5127, %v5126
  %v5150 = vpack.c.b16 %v5129, %v5128
  %v5151 = vpack.c.b16 %v5131, %v5130
  %v5152 = vpack.c.b16 %v5133, %v5132
  %v5153 = vpack.c.b16 %v5135, %v5134
  %v5154 = vpack.c.b16 %v5137, %v5136
  %v5155 = vpack.c.b16 %v5139, %v5138
  %v5156 = vpack.c.b16 %v5141, %v5140
  %v5157 = vpack.c.b16 %v5143, %v5142
  %5172 = vmatprep.subr.bf16.mxu0 0
  %5173 = vmatpush1.bf16.msra.mxu0 %v287
  %5174 = vmatprep.subr.bf16.mxu0 0
  %5175 = vmatpush1.bf16.msra.mxu0 %v288
  %5176 = vmatprep.subr.bf16.mxu0 0
  %5177 = vmatpush1.bf16.msra.mxu0 %v289
  %5178 = vmatprep.subr.bf16.mxu0 0
  %5179 = vmatpush1.bf16.msra.mxu0 %v290
  %5180 = vmatprep.subr.bf16.mxu0 0
  %5181 = vmatpush1.bf16.msra.mxu0 %v291
  %5182 = vmatprep.subr.bf16.mxu0 0
  %5183 = vmatpush1.bf16.msra.mxu0 %v292
  %5184 = vmatprep.subr.bf16.mxu0 0
  %5185 = vmatpush1.bf16.msra.mxu0 %v293
  %5186 = vmatprep.subr.bf16.mxu0 0
  %5187 = vmatpush1.bf16.msra.mxu0 %v294
  %5188 = vmatprep.subr.bf16.mxu0 0
  %5189 = vmatpush1.bf16.msra.mxu0 0
  %5190 = vmatprep.subr.bf16.mxu0 0
  %5191 = vmatpush1.bf16.msra.mxu0 0
  %5192 = vmatprep.subr.bf16.mxu0 0
  %5193 = vmatpush1.bf16.msra.mxu0 0
  %5194 = vmatprep.subr.bf16.mxu0 0
  %5195 = vmatpush1.bf16.msra.mxu0 0
  %5196 = vmatprep.subr.bf16.mxu0 0
  %5197 = vmatpush1.bf16.msra.mxu0 0
  %5198 = vmatprep.subr.bf16.mxu0 0
  %5199 = vmatpush1.bf16.msra.mxu0 0
  %5200 = vmatprep.subr.bf16.mxu0 0
  %5201 = vmatpush1.bf16.msra.mxu0 0
  %5202 = vmatprep.subr.bf16.mxu0 0
  %5203 = vmatpush1.bf16.msra.mxu0 0
  %5204 = vmatprep.mubr.bf16.mxu0 0
  %5205 = vmatmul.mubr.bf16.gmra.mrb[0].mxu0 %v5144
  %v5206 = vpop.f32.mrb[0].mxu0
  %v5207 = vadd.f32 0.0, %v5206
  %v5208 = vpop.f32.mrb[0].mxu0
  %v5209 = vpop.f32.mrb[0].mxu0
  %v5210 = vadd.f32 0.0, %v5209
  %v5211 = vpop.f32.mrb[0].mxu0
  %5212 = vmatprep.mubr.bf16.mxu0 0
  %5213 = vmatmul.mubr.bf16.gmra.mrb[0].mxu0 %v5145
  %v5214 = vpop.f32.mrb[0].mxu0
  %v5215 = vadd.f32 0.0, %v5214
  %v5216 = vpop.f32.mrb[0].mxu0
  %v5217 = vpop.f32.mrb[0].mxu0
  %v5218 = vadd.f32 0.0, %v5217
  %v5219 = vpop.f32.mrb[0].mxu0
  %5220 = vmatprep.mubr.bf16.mxu0 0
  %5221 = vmatmul.mubr.bf16.gmra.mrb[0].mxu0 %v5146
  %v5222 = vpop.f32.mrb[0].mxu0
  %v5223 = vadd.f32 0.0, %v5222
  %v5224 = vpop.f32.mrb[0].mxu0
  %v5225 = vpop.f32.mrb[0].mxu0
  %v5226 = vadd.f32 0.0, %v5225
  %v5227 = vpop.f32.mrb[0].mxu0
  %5228 = vmatprep.mubr.bf16.mxu0 0
  %5229 = vmatmul.mubr.bf16.gmra.mrb[0].mxu0 %v5147
  %v5230 = vpop.f32.mrb[0].mxu0
  %v5231 = vadd.f32 0.0, %v5230
  %v5232 = vpop.f32.mrb[0].mxu0
  %v5233 = vpop.f32.mrb[0].mxu0
  %v5234 = vadd.f32 0.0, %v5233
  %v5235 = vpop.f32.mrb[0].mxu0
  %5236 = vmatprep.mubr.bf16.mxu0 0
  %5237 = vmatmul.mubr.bf16.gmra.mrb[0].mxu0 %v5148
  %v5238 = vpop.f32.mrb[0].mxu0
  %v5239 = vadd.f32 0.0, %v5238
  %v5240 = vpop.f32.mrb[0].mxu0
  %v5241 = vpop.f32.mrb[0].mxu0
  %v5242 = vadd.f32 0.0, %v5241
  %v5243 = vpop.f32.mrb[0].mxu0
  %5244 = vmatprep.mubr.bf16.mxu0 0
  %5245 = vmatmul.mubr.bf16.gmra.mrb[0].mxu0 %v5149
  %v5246 = vpop.f32.mrb[0].mxu0
  %v5247 = vadd.f32 0.0, %v5246
  %v5248 = vpop.f32.mrb[0].mxu0
  %v5249 = vpop.f32.mrb[0].mxu0
  %v5250 = vadd.f32 0.0, %v5249
  %v5251 = vpop.f32.mrb[0].mxu0
  %5252 = vmatprep.mubr.bf16.mxu0 0
  %5253 = vmatmul.mubr.bf16.gmra.mrb[0].mxu0 %v5150
  %v5254 = vpop.f32.mrb[0].mxu0
  %v5255 = vadd.f32 0.0, %v5254
  %v5256 = vpop.f32.mrb[0].mxu0
  %v5257 = vpop.f32.mrb[0].mxu0
  %v5258 = vadd.f32 0.0, %v5257
  %v5259 = vpop.f32.mrb[0].mxu0
  %5260 = vmatprep.mubr.bf16.mxu0 0
  %5261 = vmatmul.mubr.bf16.gmra.mrb[0].mxu0 %v5151
  %v5262 = vpop.f32.mrb[0].mxu0
  %v5263 = vadd.f32 0.0, %v5262
  %v5264 = vpop.f32.mrb[0].mxu0
  %v5265 = vpop.f32.mrb[0].mxu0
  %v5266 = vadd.f32 0.0, %v5265
  %v5267 = vpop.f32.mrb[0].mxu0
  %5268 = vmatprep.mubr.bf16.mxu0 0
  %5269 = vmatmul.mubr.bf16.gmra.mrb[0].mxu0 %v5152
  %v5270 = vpop.f32.mrb[0].mxu0
  %v5271 = vadd.f32 0.0, %v5270
  %v5272 = vpop.f32.mrb[0].mxu0
  %v5273 = vpop.f32.mrb[0].mxu0
  %v5274 = vadd.f32 0.0, %v5273
  %v5275 = vpop.f32.mrb[0].mxu0
  %5276 = vmatprep.mubr.bf16.mxu0 0
  %5277 = vmatmul.mubr.bf16.gmra.mrb[0].mxu0 %v5153
  %v5278 = vpop.f32.mrb[0].mxu0
  %v5279 = vadd.f32 0.0, %v5278
  %v5280 = vpop.f32.mrb[0].mxu0
  %v5281 = vpop.f32.mrb[0].mxu0
  %v5282 = vadd.f32 0.0, %v5281
  %v5283 = vpop.f32.mrb[0].mxu0
  %5284 = vmatprep.mubr.bf16.mxu0 0
  %5285 = vmatmul.mubr.bf16.gmra.mrb[0].mxu0 %v5154
  %v5286 = vpop.f32.mrb[0].mxu0
  %v5287 = vadd.f32 0.0, %v5286
  %v5288 = vpop.f32.mrb[0].mxu0
  %v5289 = vpop.f32.mrb[0].mxu0
  %v5290 = vadd.f32 0.0, %v5289
  %v5291 = vpop.f32.mrb[0].mxu0
  %5292 = vmatprep.mubr.bf16.mxu0 0
  %5293 = vmatmul.mubr.bf16.gmra.mrb[0].mxu0 %v5155
  %v5294 = vpop.f32.mrb[0].mxu0
  %v5295 = vadd.f32 0.0, %v5294
  %v5296 = vpop.f32.mrb[0].mxu0
  %v5297 = vpop.f32.mrb[0].mxu0
  %v5298 = vadd.f32 0.0, %v5297
  %v5299 = vpop.f32.mrb[0].mxu0
  %5300 = vmatprep.mubr.bf16.mxu0 0
  %5301 = vmatmul.mubr.bf16.gmra.mrb[0].mxu0 %v5156
  %v5302 = vpop.f32.mrb[0].mxu0
  %v5303 = vadd.f32 0.0, %v5302
  %v5304 = vpop.f32.mrb[0].mxu0
  %v5305 = vpop.f32.mrb[0].mxu0
  %v5306 = vadd.f32 0.0, %v5305
  %v5307 = vpop.f32.mrb[0].mxu0
  %5308 = vmatprep.mubr.bf16.mxu0 0
  %5309 = vmatmul.mubr.bf16.gmra.mrb[0].mxu0 %v5157
  %v5310 = vpop.f32.mrb[0].mxu0
  %v5311 = vadd.f32 0.0, %v5310
  %v5312 = vpop.f32.mrb[0].mxu0
  %v5313 = vpop.f32.mrb[0].mxu0
  %v5314 = vadd.f32 0.0, %v5313
  %v5315 = vpop.f32.mrb[0].mxu0
  %5316 = vdwg.mxu0
  %v5317 = vmax.f32 %v5207, %v5234
  %v5318 = vmax.f32 %v5210, %v5239
  %v5319 = vmax.f32 %v5215, %v5242
  %v5320 = vmax.f32 %v5218, %v5247
  %v5321 = vmax.f32 %v5223, %v5250
  %v5322 = vmax.f32 %v5226, %v5255
  %v5323 = vmax.f32 %v5231, %v5258
  %v5324 = vmax.f32 %v5263, %v5290
  %v5325 = vmax.f32 %v5266, %v5295
  %v5326 = vmax.f32 %v5271, %v5298
  %v5327 = vmax.f32 %v5274, %v5303
  %v5328 = vmax.f32 %v5279, %v5306
  %v5329 = vmax.f32 %v5282, %v5311
  %v5330 = vmax.f32 %v5287, %v5314
  %v5331 = vmax.f32 %v5317, %v5324
  %v5332 = vmax.f32 %v5318, %v5325
  %v5333 = vmax.f32 %v5319, %v5326
  %v5334 = vmax.f32 %v5320, %v5327
  %v5335 = vmax.f32 %v5321, %v5328
  %v5336 = vmax.f32 %v5322, %v5329
  %v5337 = vmax.f32 %v5323, %v5330
  %v5338 = vadd.f32 %v5331, %v473
  %v5339 = vadd.f32 %v5332, %v473
  %v5340 = vadd.f32 %v5333, %v473
  %v5341 = vadd.f32 %v5334, %v473
  %v5342 = vadd.f32 %v5335, %v473
  %v5343 = vadd.f32 %v5336, %v473
  %v5344 = vadd.f32 %v5337, %v473
  %v5345 = vmax.f32 %v5338, 0.0
  %v5346 = vmax.f32 %v5339, 0.0
  %v5347 = vmax.f32 %v5340, 0.0
  %v5348 = vmax.f32 %v5341, 0.0
  %v5349 = vmax.f32 %v5342, 0.0
  %v5350 = vmax.f32 %v5343, 0.0
  %v5351 = vmax.f32 %v5344, 0.0
  %v5352 = vsel %vm136, %v5345, 0.0
  %v5353 = vsel %vm137, %v5346, 0.0
  %v5354 = vsel %vm138, %v5347, 0.0
  %v5355 = vsel %vm139, %v5348, 0.0
  %v5356 = vsel %vm140, %v5349, 0.0
  %v5357 = vsel %vm141, %v5350, 0.0
  %v5358 = vsel %vm142, %v5351, 0.0
  %v5359 = vpack.c.bf16 %v5353, %v5352
  %v5360 = vpack.c.bf16 %v5355, %v5354
  %v5361 = vpack.c.bf16 %v5357, %v5356
  %v5362 = vpack.c.bf16 %v5358, %v5358
  %v5364 = vshrl.u32 %v5359, 16
  %v5366 = vrot.slane %v5364, 3
  %v5367 = vshll.u32 %v5359, 16
  %v5369 = vrot.slane %v5367, 4
  %v5370 = vor.u32 %v5366, %v5369
  %v5372 = vshrl.u32 %v5360, 16
  %v5374 = vrot.slane %v5372, 3
  %v5375 = vshll.u32 %v5360, 16
  %v5377 = vrot.slane %v5375, 4
  %v5378 = vor.u32 %v5374, %v5377
  %v5379 = vsel %vm500, %v5370, %v5378
  %v5381 = vshrl.u32 %v5361, 16
  %v5383 = vrot.slane %v5381, 3
  %v5384 = vshll.u32 %v5361, 16
  %v5386 = vrot.slane %v5384, 4
  %v5387 = vor.u32 %v5383, %v5386
  %v5388 = vsel %vm500, %v5378, %v5387
  %v5390 = vshrl.u32 %v5362, 16
  %v5392 = vrot.slane %v5390, 3
  %v5393 = vshll.u32 %v5362, 16
  %v5395 = vrot.slane %v5393, 4
  %v5396 = vor.u32 %v5392, %v5395
  %v5397 = vsel %vm500, %v5387, %v5396
  %v5403 = vld [vmem:[#allocation2] sm:$0xf0]
  %v5404 = vsel %vm543, %v5370, %v5403
  %5405 = vst [vmem:[#allocation2] sm:$0xf0] %v5404
  %5406 = vst [vmem:[#allocation2 + $0x8] sm:$0xff] %v5379
  %5407 = vst [vmem:[#allocation2 + $0x10] sm:$0xff] %v5388
  %5408 = vst [vmem:[#allocation2 + $0x18] sm:$0xff] %v5397
  %v5409 = vld [vmem:[#allocation2 + $0x20] sm:$0x1]
  %v5410 = vsel %vm552, %v5392, %v5409
  %5411 = vst [vmem:[#allocation2 + $0x20] sm:$0x1] %v5410
  %v5412 = vld [vmem:[#allocation2] sm:$0xff]
  %v5413 = vld [vmem:[#allocation2 + $0x8] sm:$0xff]
  %v5414 = vld [vmem:[#allocation2 + $0x10] sm:$0xff]
  %v5415 = vld [vmem:[#allocation2 + $0x18] sm:$0xf]
  %v5420 = vunpack.c.l.b16 %v5412
  %v5421 = vunpack.c.h.b16 %v5412
  %v5422 = vunpack.c.l.b16 %v5413
  %v5423 = vunpack.c.h.b16 %v5413
  %v5424 = vunpack.c.l.b16 %v5414
  %v5425 = vunpack.c.h.b16 %v5414
  %v5426 = vunpack.c.l.b16 %v5415
  %v5427 = vpack.c.b16 %v5420, %v5420
  %v5428 = vpack.c.b16 %v5421, %v5421
  %v5429 = vpack.c.b16 %v5422, %v5422
  %v5430 = vpack.c.b16 %v5423, %v5423
  %v5431 = vpack.c.b16 %v5424, %v5424
  %v5432 = vpack.c.b16 %v5425, %v5425
  %v5433 = vpack.c.b16 %v5426, %v5426
  %5441 = vst [vmem:[#allocation3] sm:$0xf] %v5427
  %5442 = vst [vmem:[#allocation3 + $0x24] sm:$0xf] %v5428
  %5443 = vst [vmem:[#allocation3 + $0x48] sm:$0xf] %v5429
  %5444 = vst [vmem:[#allocation3 + $0x6c] sm:$0xf] %v5430
  %5445 = vst [vmem:[#allocation3 + $0x90] sm:$0xf] %v5431
  %5446 = vst [vmem:[#allocation3 + $0xb4] sm:$0xf] %v5432
  %5447 = vst [vmem:[#allocation3 + $0xd8] sm:$0xf] %v5433
  %v5448 = vld [vmem:[#allocation2] sm:$0xff]
  %v5449 = vld [vmem:[#allocation2 + $0x8] sm:$0xff]
  %v5450 = vld [vmem:[#allocation2 + $0x10] sm:$0xff]
  %v5451 = vld [vmem:[#allocation2 + $0x18] sm:$0x1f]
  %v5456 = vunpack.c.l.b16 %v5448
  %v5457 = vunpack.c.h.b16 %v5448
  %v5458 = vunpack.c.l.b16 %v5449
  %v5459 = vunpack.c.h.b16 %v5449
  %v5460 = vunpack.c.l.b16 %v5450
  %v5461 = vunpack.c.h.b16 %v5450
  %v5462 = vunpack.c.l.b16 %v5451
  %v5463 = vunpack.c.h.b16 %v5451
  %v5464 = vpack.c.b16 %v5456, %v5456
  %v5465 = vpack.c.b16 %v5457, %v5457
  %v5466 = vpack.c.b16 %v5458, %v5458
  %v5467 = vpack.c.b16 %v5459, %v5459
  %v5468 = vpack.c.b16 %v5460, %v5460
  %v5469 = vpack.c.b16 %v5461, %v5461
  %v5470 = vpack.c.b16 %v5462, %v5462
  %v5471 = vpack.c.b16 %v5463, %v5463
  %v5473 = vshrl.u32 %v5464, 16
  %v5475 = vrot.slane %v5473, 4
  %v5476 = vshll.u32 %v5464, 16
  %v5478 = vrot.slane %v5476, 5
  %v5479 = vor.u32 %v5475, %v5478
  %v5480 = vrot.slane %v5479, 4
  %v5482 = vshll.u32 %v5465, 16
  %v5484 = vrot.slane %v5482, 5
  %v5485 = vsel %vm618, %v5480, %v5484
  %v5486 = vshrl.u32 %v5465, 16
  %v5488 = vrot.slane %v5486, 4
  %v5489 = vor.u32 %v5488, %v5484
  %v5490 = vrot.slane %v5489, 4
  %v5492 = vshll.u32 %v5466, 16
  %v5494 = vrot.slane %v5492, 5
  %v5495 = vsel %vm618, %v5490, %v5494
  %v5496 = vshrl.u32 %v5466, 16
  %v5498 = vrot.slane %v5496, 4
  %v5499 = vor.u32 %v5498, %v5494
  %v5500 = vrot.slane %v5499, 4
  %v5502 = vshll.u32 %v5467, 16
  %v5504 = vrot.slane %v5502, 5
  %v5505 = vsel %vm618, %v5500, %v5504
  %v5506 = vshrl.u32 %v5467, 16
  %v5508 = vrot.slane %v5506, 4
  %v5509 = vor.u32 %v5508, %v5504
  %v5510 = vrot.slane %v5509, 4
  %v5512 = vshll.u32 %v5468, 16
  %v5514 = vrot.slane %v5512, 5
  %v5515 = vsel %vm618, %v5510, %v5514
  %v5516 = vshrl.u32 %v5468, 16
  %v5518 = vrot.slane %v5516, 4
  %v5519 = vor.u32 %v5518, %v5514
  %v5520 = vrot.slane %v5519, 4
  %v5522 = vshll.u32 %v5469, 16
  %v5524 = vrot.slane %v5522, 5
  %v5525 = vsel %vm618, %v5520, %v5524
  %v5526 = vshrl.u32 %v5469, 16
  %v5528 = vrot.slane %v5526, 4
  %v5529 = vor.u32 %v5528, %v5524
  %v5530 = vrot.slane %v5529, 4
  %v5532 = vshll.u32 %v5470, 16
  %v5534 = vrot.slane %v5532, 5
  %v5535 = vsel %vm618, %v5530, %v5534
  %v5536 = vshrl.u32 %v5470, 16
  %v5538 = vrot.slane %v5536, 4
  %v5539 = vor.u32 %v5538, %v5534
  %v5540 = vrot.slane %v5539, 4
  %v5542 = vshll.u32 %v5471, 16
  %v5544 = vrot.slane %v5542, 5
  %v5545 = vsel %vm618, %v5540, %v5544
  %5553 = vst [vmem:[#allocation3 + $0x4] sm:$0xf] %v5485
  %5554 = vst [vmem:[#allocation3 + $0x28] sm:$0xf] %v5495
  %5555 = vst [vmem:[#allocation3 + $0x4c] sm:$0xf] %v5505
  %5556 = vst [vmem:[#allocation3 + $0x70] sm:$0xf] %v5515
  %5557 = vst [vmem:[#allocation3 + $0x94] sm:$0xf] %v5525
  %5558 = vst [vmem:[#allocation3 + $0xb8] sm:$0xf] %v5535
  %5559 = vst [vmem:[#allocation3 + $0xdc] sm:$0xf] %v5545
  %v5560 = vld [vmem:[#allocation2] sm:$0xfe]
  %v5561 = vld [vmem:[#allocation2 + $0x8] sm:$0xff]
  %v5562 = vld [vmem:[#allocation2 + $0x10] sm:$0xff]
  %v5563 = vld [vmem:[#allocation2 + $0x18] sm:$0x1f]
  %v5568 = vunpack.c.l.b16 %v5560
  %v5569 = vunpack.c.h.b16 %v5560
  %v5570 = vunpack.c.l.b16 %v5561
  %v5571 = vunpack.c.h.b16 %v5561
  %v5572 = vunpack.c.l.b16 %v5562
  %v5573 = vunpack.c.h.b16 %v5562
  %v5574 = vunpack.c.l.b16 %v5563
  %v5575 = vunpack.c.h.b16 %v5563
  %v5576 = vpack.c.b16 %v5568, %v5568
  %v5577 = vpack.c.b16 %v5569, %v5569
  %v5578 = vpack.c.b16 %v5570, %v5570
  %v5579 = vpack.c.b16 %v5571, %v5571
  %v5580 = vpack.c.b16 %v5572, %v5572
  %v5581 = vpack.c.b16 %v5573, %v5573
  %v5582 = vpack.c.b16 %v5574, %v5574
  %v5583 = vpack.c.b16 %v5575, %v5575
  %v5584 = vrot.slane %v5576, 5
  %v5585 = vrot.slane %v5584, 4
  %v5586 = vrot.slane %v5577, 5
  %v5587 = vsel %vm733, %v5585, %v5586
  %v5588 = vrot.slane %v5586, 4
  %v5589 = vrot.slane %v5578, 5
  %v5590 = vsel %vm733, %v5588, %v5589
  %v5591 = vrot.slane %v5589, 4
  %v5592 = vrot.slane %v5579, 5
  %v5593 = vsel %vm733, %v5591, %v5592
  %v5594 = vrot.slane %v5592, 4
  %v5595 = vrot.slane %v5580, 5
  %v5596 = vsel %vm733, %v5594, %v5595
  %v5597 = vrot.slane %v5595, 4
  %v5598 = vrot.slane %v5581, 5
  %v5599 = vsel %vm733, %v5597, %v5598
  %v5600 = vrot.slane %v5598, 4
  %v5601 = vrot.slane %v5582, 5
  %v5602 = vsel %vm733, %v5600, %v5601
  %v5603 = vrot.slane %v5601, 4
  %v5604 = vrot.slane %v5583, 5
  %v5605 = vsel %vm733, %v5603, %v5604
  %5613 = vst [vmem:[#allocation3 + $0x8] sm:$0xf] %v5587
  %5614 = vst [vmem:[#allocation3 + $0x2c] sm:$0xf] %v5590
  %5615 = vst [vmem:[#allocation3 + $0x50] sm:$0xf] %v5593
  %5616 = vst [vmem:[#allocation3 + $0x74] sm:$0xf] %v5596
  %5617 = vst [vmem:[#allocation3 + $0x98] sm:$0xf] %v5599
  %5618 = vst [vmem:[#allocation3 + $0xbc] sm:$0xf] %v5602
  %5619 = vst [vmem:[#allocation3 + $0xe0] sm:$0xf] %v5605
  %v5620 = vld [vmem:[#allocation2] sm:$0xf0]
  %v5621 = vld [vmem:[#allocation2 + $0x8] sm:$0xff]
  %v5622 = vld [vmem:[#allocation2 + $0x10] sm:$0xff]
  %v5623 = vld [vmem:[#allocation2 + $0x18] sm:$0xff]
  %v5628 = vunpack.c.h.b16 %v5620
  %v5629 = vunpack.c.l.b16 %v5621
  %v5630 = vunpack.c.h.b16 %v5621
  %v5631 = vunpack.c.l.b16 %v5622
  %v5632 = vunpack.c.h.b16 %v5622
  %v5633 = vunpack.c.l.b16 %v5623
  %v5634 = vunpack.c.h.b16 %v5623
  %v5635 = vpack.c.b16 %v5628, %v5628
  %v5636 = vpack.c.b16 %v5629, %v5629
  %v5637 = vpack.c.b16 %v5630, %v5630
  %v5638 = vpack.c.b16 %v5631, %v5631
  %v5639 = vpack.c.b16 %v5632, %v5632
  %v5640 = vpack.c.b16 %v5633, %v5633
  %v5641 = vpack.c.b16 %v5634, %v5634
  %5649 = vst [vmem:[#allocation3 + $0xc] sm:$0xf] %v5635
  %5650 = vst [vmem:[#allocation3 + $0x30] sm:$0xf] %v5636
  %5651 = vst [vmem:[#allocation3 + $0x54] sm:$0xf] %v5637
  %5652 = vst [vmem:[#allocation3 + $0x78] sm:$0xf] %v5638
  %5653 = vst [vmem:[#allocation3 + $0x9c] sm:$0xf] %v5639
  %5654 = vst [vmem:[#allocation3 + $0xc0] sm:$0xf] %v5640
  %5655 = vst [vmem:[#allocation3 + $0xe4] sm:$0xf] %v5641
  %v5656 = vld [vmem:[#allocation2] sm:$0xf0]
  %v5657 = vld [vmem:[#allocation2 + $0x8] sm:$0xff]
  %v5658 = vld [vmem:[#allocation2 + $0x10] sm:$0xff]
  %v5659 = vld [vmem:[#allocation2 + $0x18] sm:$0xff]
  %v5660 = vld [vmem:[#allocation2 + $0x20] sm:$0x1]
  %v5666 = vunpack.c.h.b16 %v5656
  %v5667 = vunpack.c.l.b16 %v5657
  %v5668 = vunpack.c.h.b16 %v5657
  %v5669 = vunpack.c.l.b16 %v5658
  %v5670 = vunpack.c.h.b16 %v5658
  %v5671 = vunpack.c.l.b16 %v5659
  %v5672 = vunpack.c.h.b16 %v5659
  %v5673 = vunpack.c.l.b16 %v5660
  %v5674 = vpack.c.b16 %v5666, %v5666
  %v5675 = vpack.c.b16 %v5667, %v5667
  %v5676 = vpack.c.b16 %v5668, %v5668
  %v5677 = vpack.c.b16 %v5669, %v5669
  %v5678 = vpack.c.b16 %v5670, %v5670
  %v5679 = vpack.c.b16 %v5671, %v5671
  %v5680 = vpack.c.b16 %v5672, %v5672
  %v5681 = vpack.c.b16 %v5673, %v5673
  %v5683 = vshrl.u32 %v5674, 16
  %v5685 = vrot.slane %v5683, 4
  %v5686 = vshll.u32 %v5674, 16
  %v5688 = vrot.slane %v5686, 5
  %v5689 = vor.u32 %v5685, %v5688
  %v5690 = vrot.slane %v5689, 4
  %v5692 = vshll.u32 %v5675, 16
  %v5694 = vrot.slane %v5692, 5
  %v5695 = vsel %vm618, %v5690, %v5694
  %v5696 = vshrl.u32 %v5675, 16
  %v5698 = vrot.slane %v5696, 4
  %v5699 = vor.u32 %v5698, %v5694
  %v5700 = vrot.slane %v5699, 4
  %v5702 = vshll.u32 %v5676, 16
  %v5704 = vrot.slane %v5702, 5
  %v5705 = vsel %vm618, %v5700, %v5704
  %v5706 = vshrl.u32 %v5676, 16
  %v5708 = vrot.slane %v5706, 4
  %v5709 = vor.u32 %v5708, %v5704
  %v5710 = vrot.slane %v5709, 4
  %v5712 = vshll.u32 %v5677, 16
  %v5714 = vrot.slane %v5712, 5
  %v5715 = vsel %vm618, %v5710, %v5714
  %v5716 = vshrl.u32 %v5677, 16
  %v5718 = vrot.slane %v5716, 4
  %v5719 = vor.u32 %v5718, %v5714
  %v5720 = vrot.slane %v5719, 4
  %v5722 = vshll.u32 %v5678, 16
  %v5724 = vrot.slane %v5722, 5
  %v5725 = vsel %vm618, %v5720, %v5724
  %v5726 = vshrl.u32 %v5678, 16
  %v5728 = vrot.slane %v5726, 4
  %v5729 = vor.u32 %v5728, %v5724
  %v5730 = vrot.slane %v5729, 4
  %v5732 = vshll.u32 %v5679, 16
  %v5734 = vrot.slane %v5732, 5
  %v5735 = vsel %vm618, %v5730, %v5734
  %v5736 = vshrl.u32 %v5679, 16
  %v5738 = vrot.slane %v5736, 4
  %v5739 = vor.u32 %v5738, %v5734
  %v5740 = vrot.slane %v5739, 4
  %v5742 = vshll.u32 %v5680, 16
  %v5744 = vrot.slane %v5742, 5
  %v5745 = vsel %vm618, %v5740, %v5744
  %v5746 = vshrl.u32 %v5680, 16
  %v5748 = vrot.slane %v5746, 4
  %v5749 = vor.u32 %v5748, %v5744
  %v5750 = vrot.slane %v5749, 4
  %v5752 = vshll.u32 %v5681, 16
  %v5754 = vrot.slane %v5752, 5
  %v5755 = vsel %vm618, %v5750, %v5754
  %5763 = vst [vmem:[#allocation3 + $0x10] sm:$0xf] %v5695
  %5764 = vst [vmem:[#allocation3 + $0x34] sm:$0xf] %v5705
  %5765 = vst [vmem:[#allocation3 + $0x58] sm:$0xf] %v5715
  %5766 = vst [vmem:[#allocation3 + $0x7c] sm:$0xf] %v5725
  %5767 = vst [vmem:[#allocation3 + $0xa0] sm:$0xf] %v5735
  %5768 = vst [vmem:[#allocation3 + $0xc4] sm:$0xf] %v5745
  %5769 = vst [vmem:[#allocation3 + $0xe8] sm:$0xf] %v5755
  %v5770 = vld [vmem:[#allocation2] sm:$0xe0]
  %v5771 = vld [vmem:[#allocation2 + $0x8] sm:$0xff]
  %v5772 = vld [vmem:[#allocation2 + $0x10] sm:$0xff]
  %v5773 = vld [vmem:[#allocation2 + $0x18] sm:$0xff]
  %v5774 = vld [vmem:[#allocation2 + $0x20] sm:$0x1]
  %v5780 = vunpack.c.h.b16 %v5770
  %v5781 = vunpack.c.l.b16 %v5771
  %v5782 = vunpack.c.h.b16 %v5771
  %v5783 = vunpack.c.l.b16 %v5772
  %v5784 = vunpack.c.h.b16 %v5772
  %v5785 = vunpack.c.l.b16 %v5773
  %v5786 = vunpack.c.h.b16 %v5773
  %v5787 = vunpack.c.l.b16 %v5774
  %v5788 = vpack.c.b16 %v5780, %v5780
  %v5789 = vpack.c.b16 %v5781, %v5781
  %v5790 = vpack.c.b16 %v5782, %v5782
  %v5791 = vpack.c.b16 %v5783, %v5783
  %v5792 = vpack.c.b16 %v5784, %v5784
  %v5793 = vpack.c.b16 %v5785, %v5785
  %v5794 = vpack.c.b16 %v5786, %v5786
  %v5795 = vpack.c.b16 %v5787, %v5787
  %v5796 = vrot.slane %v5788, 5
  %v5797 = vrot.slane %v5796, 4
  %v5798 = vrot.slane %v5789, 5
  %v5799 = vsel %vm733, %v5797, %v5798
  %v5800 = vrot.slane %v5798, 4
  %v5801 = vrot.slane %v5790, 5
  %v5802 = vsel %vm733, %v5800, %v5801
  %v5803 = vrot.slane %v5801, 4
  %v5804 = vrot.slane %v5791, 5
  %v5805 = vsel %vm733, %v5803, %v5804
  %v5806 = vrot.slane %v5804, 4
  %v5807 = vrot.slane %v5792, 5
  %v5808 = vsel %vm733, %v5806, %v5807
  %v5809 = vrot.slane %v5807, 4
  %v5810 = vrot.slane %v5793, 5
  %v5811 = vsel %vm733, %v5809, %v5810
  %v5812 = vrot.slane %v5810, 4
  %v5813 = vrot.slane %v5794, 5
  %v5814 = vsel %vm733, %v5812, %v5813
  %v5815 = vrot.slane %v5813, 4
  %v5816 = vrot.slane %v5795, 5
  %v5817 = vsel %vm733, %v5815, %v5816
  %5825 = vst [vmem:[#allocation3 + $0x14] sm:$0xf] %v5799
  %5826 = vst [vmem:[#allocation3 + $0x38] sm:$0xf] %v5802
  %5827 = vst [vmem:[#allocation3 + $0x5c] sm:$0xf] %v5805
  %5828 = vst [vmem:[#allocation3 + $0x80] sm:$0xf] %v5808
  %5829 = vst [vmem:[#allocation3 + $0xa4] sm:$0xf] %v5811
  %5830 = vst [vmem:[#allocation3 + $0xc8] sm:$0xf] %v5814
  %5831 = vst [vmem:[#allocation3 + $0xec] sm:$0xf] %v5817
  %v5832 = vld [vmem:[#allocation2 + $0x8] sm:$0xff]
  %v5833 = vld [vmem:[#allocation2 + $0x10] sm:$0xff]
  %v5834 = vld [vmem:[#allocation2 + $0x18] sm:$0xff]
  %v5835 = vld [vmem:[#allocation2 + $0x20] sm:$0xf]
  %v5840 = vunpack.c.l.b16 %v5832
  %v5841 = vunpack.c.h.b16 %v5832
  %v5842 = vunpack.c.l.b16 %v5833
  %v5843 = vunpack.c.h.b16 %v5833
  %v5844 = vunpack.c.l.b16 %v5834
  %v5845 = vunpack.c.h.b16 %v5834
  %v5846 = vunpack.c.l.b16 %v5835
  %v5847 = vpack.c.b16 %v5840, %v5840
  %v5848 = vpack.c.b16 %v5841, %v5841
  %v5849 = vpack.c.b16 %v5842, %v5842
  %v5850 = vpack.c.b16 %v5843, %v5843
  %v5851 = vpack.c.b16 %v5844, %v5844
  %v5852 = vpack.c.b16 %v5845, %v5845
  %v5853 = vpack.c.b16 %v5846, %v5846
  %5861 = vst [vmem:[#allocation3 + $0x18] sm:$0xf] %v5847
  %5862 = vst [vmem:[#allocation3 + $0x3c] sm:$0xf] %v5848
  %5863 = vst [vmem:[#allocation3 + $0x60] sm:$0xf] %v5849
  %5864 = vst [vmem:[#allocation3 + $0x84] sm:$0xf] %v5850
  %5865 = vst [vmem:[#allocation3 + $0xa8] sm:$0xf] %v5851
  %5866 = vst [vmem:[#allocation3 + $0xcc] sm:$0xf] %v5852
  %5867 = vst [vmem:[#allocation3 + $0xf0] sm:$0xf] %v5853
  %v5868 = vld [vmem:[#allocation2 + $0x8] sm:$0xff]
  %v5869 = vld [vmem:[#allocation2 + $0x10] sm:$0xff]
  %v5870 = vld [vmem:[#allocation2 + $0x18] sm:$0xff]
  %v5871 = vld [vmem:[#allocation2 + $0x20] sm:$0x1f]
  %v5876 = vunpack.c.l.b16 %v5868
  %v5877 = vunpack.c.h.b16 %v5868
  %v5878 = vunpack.c.l.b16 %v5869
  %v5879 = vunpack.c.h.b16 %v5869
  %v5880 = vunpack.c.l.b16 %v5870
  %v5881 = vunpack.c.h.b16 %v5870
  %v5882 = vunpack.c.l.b16 %v5871
  %v5883 = vunpack.c.h.b16 %v5871
  %v5884 = vpack.c.b16 %v5876, %v5876
  %v5885 = vpack.c.b16 %v5877, %v5877
  %v5886 = vpack.c.b16 %v5878, %v5878
  %v5887 = vpack.c.b16 %v5879, %v5879
  %v5888 = vpack.c.b16 %v5880, %v5880
  %v5889 = vpack.c.b16 %v5881, %v5881
  %v5890 = vpack.c.b16 %v5882, %v5882
  %v5891 = vpack.c.b16 %v5883, %v5883
  %v5893 = vshrl.u32 %v5884, 16
  %v5895 = vrot.slane %v5893, 4
  %v5896 = vshll.u32 %v5884, 16
  %v5898 = vrot.slane %v5896, 5
  %v5899 = vor.u32 %v5895, %v5898
  %v5900 = vrot.slane %v5899, 4
  %v5902 = vshll.u32 %v5885, 16
  %v5904 = vrot.slane %v5902, 5
  %v5905 = vsel %vm618, %v5900, %v5904
  %v5906 = vshrl.u32 %v5885, 16
  %v5908 = vrot.slane %v5906, 4
  %v5909 = vor.u32 %v5908, %v5904
  %v5910 = vrot.slane %v5909, 4
  %v5912 = vshll.u32 %v5886, 16
  %v5914 = vrot.slane %v5912, 5
  %v5915 = vsel %vm618, %v5910, %v5914
  %v5916 = vshrl.u32 %v5886, 16
  %v5918 = vrot.slane %v5916, 4
  %v5919 = vor.u32 %v5918, %v5914
  %v5920 = vrot.slane %v5919, 4
  %v5922 = vshll.u32 %v5887, 16
  %v5924 = vrot.slane %v5922, 5
  %v5925 = vsel %vm618, %v5920, %v5924
  %v5926 = vshrl.u32 %v5887, 16
  %v5928 = vrot.slane %v5926, 4
  %v5929 = vor.u32 %v5928, %v5924
  %v5930 = vrot.slane %v5929, 4
  %v5932 = vshll.u32 %v5888, 16
  %v5934 = vrot.slane %v5932, 5
  %v5935 = vsel %vm618, %v5930, %v5934
  %v5936 = vshrl.u32 %v5888, 16
  %v5938 = vrot.slane %v5936, 4
  %v5939 = vor.u32 %v5938, %v5934
  %v5940 = vrot.slane %v5939, 4
  %v5942 = vshll.u32 %v5889, 16
  %v5944 = vrot.slane %v5942, 5
  %v5945 = vsel %vm618, %v5940, %v5944
  %v5946 = vshrl.u32 %v5889, 16
  %v5948 = vrot.slane %v5946, 4
  %v5949 = vor.u32 %v5948, %v5944
  %v5950 = vrot.slane %v5949, 4
  %v5952 = vshll.u32 %v5890, 16
  %v5954 = vrot.slane %v5952, 5
  %v5955 = vsel %vm618, %v5950, %v5954
  %v5956 = vshrl.u32 %v5890, 16
  %v5958 = vrot.slane %v5956, 4
  %v5959 = vor.u32 %v5958, %v5954
  %v5960 = vrot.slane %v5959, 4
  %v5962 = vshll.u32 %v5891, 16
  %v5964 = vrot.slane %v5962, 5
  %v5965 = vsel %vm618, %v5960, %v5964
  %5973 = vst [vmem:[#allocation3 + $0x1c] sm:$0xf] %v5905
  %5974 = vst [vmem:[#allocation3 + $0x40] sm:$0xf] %v5915
  %5975 = vst [vmem:[#allocation3 + $0x64] sm:$0xf] %v5925
  %5976 = vst [vmem:[#allocation3 + $0x88] sm:$0xf] %v5935
  %5977 = vst [vmem:[#allocation3 + $0xac] sm:$0xf] %v5945
  %5978 = vst [vmem:[#allocation3 + $0xd0] sm:$0xf] %v5955
  %5979 = vst [vmem:[#allocation3 + $0xf4] sm:$0xf] %v5965
  %v5980 = vld [vmem:[#allocation2 + $0x8] sm:$0xfe]
  %v5981 = vld [vmem:[#allocation2 + $0x10] sm:$0xff]
  %v5982 = vld [vmem:[#allocation2 + $0x18] sm:$0xff]
  %v5983 = vld [vmem:[#allocation2 + $0x20] sm:$0x1f]
  %v5988 = vunpack.c.l.b16 %v5980
  %v5989 = vunpack.c.h.b16 %v5980
  %v5990 = vunpack.c.l.b16 %v5981
  %v5991 = vunpack.c.h.b16 %v5981
  %v5992 = vunpack.c.l.b16 %v5982
  %v5993 = vunpack.c.h.b16 %v5982
  %v5994 = vunpack.c.l.b16 %v5983
  %v5995 = vunpack.c.h.b16 %v5983
  %v5996 = vpack.c.b16 %v5988, %v5988
  %v5997 = vpack.c.b16 %v5989, %v5989
  %v5998 = vpack.c.b16 %v5990, %v5990
  %v5999 = vpack.c.b16 %v5991, %v5991
  %v6000 = vpack.c.b16 %v5992, %v5992
  %v6001 = vpack.c.b16 %v5993, %v5993
  %v6002 = vpack.c.b16 %v5994, %v5994
  %v6003 = vpack.c.b16 %v5995, %v5995
  %v6004 = vrot.slane %v5996, 5
  %v6005 = vrot.slane %v6004, 4
  %v6006 = vrot.slane %v5997, 5
  %v6007 = vsel %vm733, %v6005, %v6006
  %v6008 = vrot.slane %v6006, 4
  %v6009 = vrot.slane %v5998, 5
  %v6010 = vsel %vm733, %v6008, %v6009
  %v6011 = vrot.slane %v6009, 4
  %v6012 = vrot.slane %v5999, 5
  %v6013 = vsel %vm733, %v6011, %v6012
  %v6014 = vrot.slane %v6012, 4
  %v6015 = vrot.slane %v6000, 5
  %v6016 = vsel %vm733, %v6014, %v6015
  %v6017 = vrot.slane %v6015, 4
  %v6018 = vrot.slane %v6001, 5
  %v6019 = vsel %vm733, %v6017, %v6018
  %v6020 = vrot.slane %v6018, 4
  %v6021 = vrot.slane %v6002, 5
  %v6022 = vsel %vm733, %v6020, %v6021
  %v6023 = vrot.slane %v6021, 4
  %v6024 = vrot.slane %v6003, 5
  %v6025 = vsel %vm733, %v6023, %v6024
  %6033 = vst [vmem:[#allocation3 + $0x20] sm:$0xf] %v6007
  %6034 = vst [vmem:[#allocation3 + $0x44] sm:$0xf] %v6010
  %6035 = vst [vmem:[#allocation3 + $0x68] sm:$0xf] %v6013
  %6036 = vst [vmem:[#allocation3 + $0x8c] sm:$0xf] %v6016
  %6037 = vst [vmem:[#allocation3 + $0xb0] sm:$0xf] %v6019
  %6038 = vst [vmem:[#allocation3 + $0xd4] sm:$0xf] %v6022
  %6039 = vst [vmem:[#allocation3 + $0xf8] sm:$0xf] %v6025
  %v6040 = vld [vmem:[#allocation3] sm:$0xff]
  %v6041 = vld [vmem:[#allocation3 + $0x8] sm:$0xff]
  %v6042 = vld [vmem:[#allocation3 + $0x10] sm:$0xff]
  %v6043 = vld [vmem:[#allocation3 + $0x18] sm:$0xff]
  %v6044 = vld [vmem:[#allocation3 + $0x20] sm:$0xf]
  %v6045 = vld [vmem:[#allocation3 + $0x24] sm:$0xff]
  %v6046 = vld [vmem:[#allocation3 + $0x2c] sm:$0xff]
  %v6047 = vld [vmem:[#allocation3 + $0x34] sm:$0xff]
  %v6048 = vld [vmem:[#allocation3 + $0x3c] sm:$0xff]
  %v6049 = vld [vmem:[#allocation3 + $0x44] sm:$0xf]
  %v6050 = vld [vmem:[#allocation3 + $0x48] sm:$0xff]
  %v6051 = vld [vmem:[#allocation3 + $0x50] sm:$0xff]
  %v6052 = vld [vmem:[#allocation3 + $0x58] sm:$0xff]
  %v6053 = vld [vmem:[#allocation3 + $0x60] sm:$0xff]
  %v6054 = vld [vmem:[#allocation3 + $0x68] sm:$0xf]
  %v6055 = vld [vmem:[#allocation3 + $0x6c] sm:$0xff]
  %v6056 = vld [vmem:[#allocation3 + $0x74] sm:$0xff]
  %v6057 = vld [vmem:[#allocation3 + $0x7c] sm:$0xff]
  %v6058 = vld [vmem:[#allocation3 + $0x84] sm:$0xff]
  %v6059 = vld [vmem:[#allocation3 + $0x8c] sm:$0xf]
  %v6060 = vld [vmem:[#allocation3 + $0x90] sm:$0xff]
  %v6061 = vld [vmem:[#allocation3 + $0x98] sm:$0xff]
  %v6062 = vld [vmem:[#allocation3 + $0xa0] sm:$0xff]
  %v6063 = vld [vmem:[#allocation3 + $0xa8] sm:$0xff]
  %v6064 = vld [vmem:[#allocation3 + $0xb0] sm:$0xf]
  %v6065 = vld [vmem:[#allocation3 + $0xb4] sm:$0xff]
  %v6066 = vld [vmem:[#allocation3 + $0xbc] sm:$0xff]
  %v6067 = vld [vmem:[#allocation3 + $0xc4] sm:$0xff]
  %v6068 = vld [vmem:[#allocation3 + $0xcc] sm:$0xff]
  %v6069 = vld [vmem:[#allocation3 + $0xd4] sm:$0xf]
  %v6070 = vld [vmem:[#allocation3 + $0xd8] sm:$0xff]
  %v6071 = vld [vmem:[#allocation3 + $0xe0] sm:$0xff]
  %v6072 = vld [vmem:[#allocation3 + $0xe8] sm:$0xff]
  %v6073 = vld [vmem:[#allocation3 + $0xf0] sm:$0xff]
  %v6074 = vld [vmem:[#allocation3 + $0xf8] sm:$0xf]
  %v6075 = vld [vmem:[%s3] sm:$0xf]
  %v6076 = vld [vmem:[%s3 + $0x4] sm:$0xf]
  %v6077 = vld [vmem:[%s3 + $0x8] sm:$0xf]
  %v6078 = vld [vmem:[%s3 + $0xc] sm:$0xf]
  %v6079 = vld [vmem:[%s3 + $0x10] sm:$0xf]
  %v6080 = vld [vmem:[%s3 + $0x14] sm:$0xf]
  %v6081 = vld [vmem:[%s3 + $0x18] sm:$0xf]
  %v6082 = vld [vmem:[%s3 + $0x1c] sm:$0xf]
  %v6083 = vld [vmem:[%s3 + $0x20] sm:$0xf]
  %v6084 = vld [vmem:[%s3 + $0x24] sm:$0xf]
  %v6085 = vld [vmem:[%s3 + $0x28] sm:$0xf]
  %v6086 = vld [vmem:[%s3 + $0x2c] sm:$0xf]
  %v6087 = vld [vmem:[%s3 + $0x30] sm:$0xf]
  %v6088 = vld [vmem:[%s3 + $0x34] sm:$0xf]
  %v6089 = vld [vmem:[%s3 + $0x38] sm:$0xf]
  %v6090 = vld [vmem:[%s3 + $0x3c] sm:$0xf]
  %v6091 = vld [vmem:[%s3 + $0x40] sm:$0xf]
  %v6092 = vld [vmem:[%s3 + $0x44] sm:$0xf]
  %v6093 = vld [vmem:[%s3 + $0x48] sm:$0xf]
  %v6094 = vld [vmem:[%s3 + $0x4c] sm:$0xf]
  %v6095 = vld [vmem:[%s3 + $0x50] sm:$0xf]
  %v6096 = vld [vmem:[%s3 + $0x54] sm:$0xf]
  %v6097 = vld [vmem:[%s3 + $0x58] sm:$0xf]
  %v6098 = vld [vmem:[%s3 + $0x5c] sm:$0xf]
  %v6099 = vld [vmem:[%s3 + $0x60] sm:$0xf]
  %v6100 = vld [vmem:[%s3 + $0x64] sm:$0xf]
  %v6101 = vld [vmem:[%s3 + $0x68] sm:$0xf]
  %v6102 = vld [vmem:[%s3 + $0x6c] sm:$0xf]
  %v6103 = vld [vmem:[%s3 + $0x70] sm:$0xf]
  %v6104 = vld [vmem:[%s3 + $0x74] sm:$0xf]
  %v6105 = vld [vmem:[%s3 + $0x78] sm:$0xf]
  %v6106 = vld [vmem:[%s3 + $0x7c] sm:$0xf]
  %v6107 = vld [vmem:[%s3 + $0x80] sm:$0xf]
  %v6108 = vld [vmem:[%s3 + $0x84] sm:$0xf]
  %v6109 = vld [vmem:[%s3 + $0x88] sm:$0xf]
  %v6110 = vld [vmem:[%s3 + $0x8c] sm:$0xf]
  %v6111 = vld [vmem:[%s3 + $0x90] sm:$0xf]
  %v6112 = vld [vmem:[%s3 + $0x94] sm:$0xf]
  %v6113 = vld [vmem:[%s3 + $0x98] sm:$0xf]
  %v6114 = vld [vmem:[%s3 + $0x9c] sm:$0xf]
  %v6115 = vld [vmem:[%s3 + $0xa0] sm:$0xf]
  %v6116 = vld [vmem:[%s3 + $0xa4] sm:$0xf]
  %v6117 = vld [vmem:[%s3 + $0xa8] sm:$0xf]
  %v6118 = vld [vmem:[%s3 + $0xac] sm:$0xf]
  %v6119 = vld [vmem:[%s3 + $0xb0] sm:$0xf]
  %v6120 = vld [vmem:[%s3 + $0xb4] sm:$0xf]
  %v6121 = vld [vmem:[%s3 + $0xb8] sm:$0xf]
  %v6122 = vld [vmem:[%s3 + $0xbc] sm:$0xf]
  %v6123 = vld [vmem:[%s3 + $0xc0] sm:$0xf]
  %v6124 = vld [vmem:[%s3 + $0xc4] sm:$0xf]
  %v6125 = vld [vmem:[%s3 + $0xc8] sm:$0xf]
  %v6126 = vld [vmem:[%s3 + $0xcc] sm:$0xf]
  %v6127 = vld [vmem:[%s3 + $0xd0] sm:$0xf]
  %v6128 = vld [vmem:[%s3 + $0xd4] sm:$0xf]
  %v6129 = vld [vmem:[%s3 + $0xd8] sm:$0xf]
  %v6130 = vld [vmem:[%s3 + $0xdc] sm:$0xf]
  %v6131 = vld [vmem:[%s3 + $0xe0] sm:$0xf]
  %v6132 = vld [vmem:[%s3 + $0xe4] sm:$0xf]
  %v6133 = vld [vmem:[%s3 + $0xe8] sm:$0xf]
  %v6134 = vld [vmem:[%s3 + $0xec] sm:$0xf]
  %v6135 = vld [vmem:[%s3 + $0xf0] sm:$0xf]
  %v6136 = vld [vmem:[%s3 + $0xf4] sm:$0xf]
  %v6137 = vld [vmem:[%s3 + $0xf8] sm:$0xf]
  %v6138 = vld [vmem:[%s3 + $0xfc] sm:$0xf]
  %v6139 = vld [vmem:[%s3 + $0x100] sm:$0xf]
  %v6140 = vld [vmem:[%s3 + $0x104] sm:$0xf]
  %v6141 = vld [vmem:[%s3 + $0x108] sm:$0xf]
  %v6142 = vld [vmem:[%s3 + $0x10c] sm:$0xf]
  %v6143 = vld [vmem:[%s3 + $0x110] sm:$0xf]
  %v6144 = vld [vmem:[%s3 + $0x114] sm:$0xf]
  %v6145 = vld [vmem:[%s3 + $0x118] sm:$0xf]
  %v6146 = vld [vmem:[%s3 + $0x11c] sm:$0xf]
  %v6147 = vld [vmem:[%s3 + $0x120] sm:$0xf]
  %v6148 = vld [vmem:[%s3 + $0x124] sm:$0xf]
  %v6149 = vld [vmem:[%s3 + $0x128] sm:$0xf]
  %v6150 = vld [vmem:[%s3 + $0x12c] sm:$0xf]
  %v6151 = vld [vmem:[%s3 + $0x130] sm:$0xf]
  %v6152 = vld [vmem:[%s3 + $0x134] sm:$0xf]
  %v6153 = vld [vmem:[%s3 + $0x138] sm:$0xf]
  %v6154 = vld [vmem:[%s3 + $0x13c] sm:$0xf]
  %v6155 = vld [vmem:[%s3 + $0x140] sm:$0xf]
  %v6156 = vld [vmem:[%s3 + $0x144] sm:$0xf]
  %v6157 = vld [vmem:[%s3 + $0x148] sm:$0xf]
  %v6158 = vld [vmem:[%s3 + $0x14c] sm:$0xf]
  %v6159 = vld [vmem:[%s3 + $0x150] sm:$0xf]
  %v6160 = vld [vmem:[%s3 + $0x154] sm:$0xf]
  %v6161 = vld [vmem:[%s3 + $0x158] sm:$0xf]
  %v6162 = vld [vmem:[%s3 + $0x15c] sm:$0xf]
  %v6163 = vld [vmem:[%s3 + $0x160] sm:$0xf]
  %v6164 = vld [vmem:[%s3 + $0x164] sm:$0xf]
  %v6165 = vld [vmem:[%s3 + $0x168] sm:$0xf]
  %v6166 = vld [vmem:[%s3 + $0x16c] sm:$0xf]
  %v6167 = vld [vmem:[%s3 + $0x170] sm:$0xf]
  %v6168 = vld [vmem:[%s3 + $0x174] sm:$0xf]
  %v6169 = vld [vmem:[%s3 + $0x178] sm:$0xf]
  %v6170 = vld [vmem:[%s3 + $0x17c] sm:$0xf]
  %v6171 = vld [vmem:[%s3 + $0x180] sm:$0xf]
  %v6172 = vld [vmem:[%s3 + $0x184] sm:$0xf]
  %v6173 = vld [vmem:[%s3 + $0x188] sm:$0xf]
  %v6174 = vld [vmem:[%s3 + $0x18c] sm:$0xf]
  %v6175 = vld [vmem:[%s3 + $0x190] sm:$0xf]
  %v6176 = vld [vmem:[%s3 + $0x194] sm:$0xf]
  %v6177 = vld [vmem:[%s3 + $0x198] sm:$0xf]
  %v6178 = vld [vmem:[%s3 + $0x19c] sm:$0xf]
  %v6179 = vld [vmem:[%s3 + $0x1a0] sm:$0xf]
  %v6180 = vld [vmem:[%s3 + $0x1a4] sm:$0xf]
  %v6181 = vld [vmem:[%s3 + $0x1a8] sm:$0xf]
  %v6182 = vld [vmem:[%s3 + $0x1ac] sm:$0xf]
  %v6183 = vld [vmem:[%s3 + $0x1b0] sm:$0xf]
  %v6184 = vld [vmem:[%s3 + $0x1b4] sm:$0xf]
  %v6185 = vld [vmem:[%s3 + $0x1b8] sm:$0xf]
  %v6186 = vld [vmem:[%s3 + $0x1bc] sm:$0xf]
  %v6187 = vld [vmem:[%s3 + $0x1c0] sm:$0xf]
  %v6188 = vld [vmem:[%s3 + $0x1c4] sm:$0xf]
  %v6189 = vld [vmem:[%s3 + $0x1c8] sm:$0xf]
  %v6190 = vld [vmem:[%s3 + $0x1cc] sm:$0xf]
  %v6191 = vld [vmem:[%s3 + $0x1d0] sm:$0xf]
  %v6192 = vld [vmem:[%s3 + $0x1d4] sm:$0xf]
  %v6193 = vld [vmem:[%s3 + $0x1d8] sm:$0xf]
  %v6194 = vld [vmem:[%s3 + $0x1dc] sm:$0xf]
  %v6195 = vld [vmem:[%s3 + $0x1e0] sm:$0xf]
  %v6196 = vld [vmem:[%s3 + $0x1e4] sm:$0xf]
  %v6197 = vld [vmem:[%s3 + $0x1e8] sm:$0xf]
  %v6198 = vld [vmem:[%s3 + $0x1ec] sm:$0xf]
  %v6199 = vld [vmem:[%s3 + $0x1f0] sm:$0xf]
  %v6200 = vld [vmem:[%s3 + $0x1f4] sm:$0xf]
  %v6201 = vld [vmem:[%s3 + $0x1f8] sm:$0xf]
  %v6202 = vld [vmem:[%s3 + $0x1fc] sm:$0xf]
  %v6203 = vld [vmem:[%s3 + $0x200] sm:$0xf]
  %v6204 = vld [vmem:[%s3 + $0x204] sm:$0xf]
  %v6205 = vld [vmem:[%s3 + $0x208] sm:$0xf]
  %v6206 = vld [vmem:[%s3 + $0x20c] sm:$0xf]
  %v6207 = vld [vmem:[%s3 + $0x210] sm:$0xf]
  %v6208 = vld [vmem:[%s3 + $0x214] sm:$0xf]
  %v6209 = vld [vmem:[%s3 + $0x218] sm:$0xf]
  %v6210 = vld [vmem:[%s3 + $0x21c] sm:$0xf]
  %v6211 = vld [vmem:[%s3 + $0x220] sm:$0xf]
  %v6212 = vld [vmem:[%s3 + $0x224] sm:$0xf]
  %v6213 = vld [vmem:[%s3 + $0x228] sm:$0xf]
  %v6214 = vld [vmem:[%s3 + $0x22c] sm:$0xf]
  %v6215 = vld [vmem:[%s3 + $0x230] sm:$0xf]
  %v6216 = vld [vmem:[%s3 + $0x234] sm:$0xf]
  %v6217 = vld [vmem:[%s3 + $0x238] sm:$0xf]
  %v6218 = vld [vmem:[%s3 + $0x23c] sm:$0xf]
  %v6254 = vunpack.c.l.b16 %v6040
  %v6255 = vunpack.c.h.b16 %v6040
  %v6256 = vunpack.c.l.b16 %v6041
  %v6257 = vunpack.c.h.b16 %v6041
  %v6258 = vunpack.c.l.b16 %v6042
  %v6259 = vunpack.c.h.b16 %v6042
  %v6260 = vunpack.c.l.b16 %v6043
  %v6261 = vunpack.c.h.b16 %v6043
  %v6262 = vunpack.c.l.b16 %v6044
  %v6263 = vunpack.c.l.b16 %v6045
  %v6264 = vunpack.c.h.b16 %v6045
  %v6265 = vunpack.c.l.b16 %v6046
  %v6266 = vunpack.c.h.b16 %v6046
  %v6267 = vunpack.c.l.b16 %v6047
  %v6268 = vunpack.c.h.b16 %v6047
  %v6269 = vunpack.c.l.b16 %v6048
  %v6270 = vunpack.c.h.b16 %v6048
  %v6271 = vunpack.c.l.b16 %v6049
  %v6272 = vunpack.c.l.b16 %v6050
  %v6273 = vunpack.c.h.b16 %v6050
  %v6274 = vunpack.c.l.b16 %v6051
  %v6275 = vunpack.c.h.b16 %v6051
  %v6276 = vunpack.c.l.b16 %v6052
  %v6277 = vunpack.c.h.b16 %v6052
  %v6278 = vunpack.c.l.b16 %v6053
  %v6279 = vunpack.c.h.b16 %v6053
  %v6280 = vunpack.c.l.b16 %v6054
  %v6281 = vunpack.c.l.b16 %v6055
  %v6282 = vunpack.c.h.b16 %v6055
  %v6283 = vunpack.c.l.b16 %v6056
  %v6284 = vunpack.c.h.b16 %v6056
  %v6285 = vunpack.c.l.b16 %v6057
  %v6286 = vunpack.c.h.b16 %v6057
  %v6287 = vunpack.c.l.b16 %v6058
  %v6288 = vunpack.c.h.b16 %v6058
  %v6289 = vunpack.c.l.b16 %v6059
  %v6290 = vunpack.c.l.b16 %v6060
  %v6291 = vunpack.c.h.b16 %v6060
  %v6292 = vunpack.c.l.b16 %v6061
  %v6293 = vunpack.c.h.b16 %v6061
  %v6294 = vunpack.c.l.b16 %v6062
  %v6295 = vunpack.c.h.b16 %v6062
  %v6296 = vunpack.c.l.b16 %v6063
  %v6297 = vunpack.c.h.b16 %v6063
  %v6298 = vunpack.c.l.b16 %v6064
  %v6299 = vunpack.c.l.b16 %v6065
  %v6300 = vunpack.c.h.b16 %v6065
  %v6301 = vunpack.c.l.b16 %v6066
  %v6302 = vunpack.c.h.b16 %v6066
  %v6303 = vunpack.c.l.b16 %v6067
  %v6304 = vunpack.c.h.b16 %v6067
  %v6305 = vunpack.c.l.b16 %v6068
  %v6306 = vunpack.c.h.b16 %v6068
  %v6307 = vunpack.c.l.b16 %v6069
  %v6308 = vunpack.c.l.b16 %v6070
  %v6309 = vunpack.c.h.b16 %v6070
  %v6310 = vunpack.c.l.b16 %v6071
  %v6311 = vunpack.c.h.b16 %v6071
  %v6312 = vunpack.c.l.b16 %v6072
  %v6313 = vunpack.c.h.b16 %v6072
  %v6314 = vunpack.c.l.b16 %v6073
  %v6315 = vunpack.c.h.b16 %v6073
  %v6316 = vunpack.c.l.b16 %v6074
  %v6317 = vpack.c.b16 %v6263, %v6254
  %v6318 = vpack.c.b16 %v6264, %v6255
  %v6319 = vpack.c.b16 %v6265, %v6256
  %v6320 = vpack.c.b16 %v6266, %v6257
  %v6321 = vpack.c.b16 %v6267, %v6258
  %v6322 = vpack.c.b16 %v6268, %v6259
  %v6323 = vpack.c.b16 %v6269, %v6260
  %v6324 = vpack.c.b16 %v6270, %v6261
  %v6325 = vpack.c.b16 %v6271, %v6262
  %v6326 = vpack.c.b16 %v6281, %v6272
  %v6327 = vpack.c.b16 %v6282, %v6273
  %v6328 = vpack.c.b16 %v6283, %v6274
  %v6329 = vpack.c.b16 %v6284, %v6275
  %v6330 = vpack.c.b16 %v6285, %v6276
  %v6331 = vpack.c.b16 %v6286, %v6277
  %v6332 = vpack.c.b16 %v6287, %v6278
  %v6333 = vpack.c.b16 %v6288, %v6279
  %v6334 = vpack.c.b16 %v6289, %v6280
  %v6335 = vpack.c.b16 %v6299, %v6290
  %v6336 = vpack.c.b16 %v6300, %v6291
  %v6337 = vpack.c.b16 %v6301, %v6292
  %v6338 = vpack.c.b16 %v6302, %v6293
  %v6339 = vpack.c.b16 %v6303, %v6294
  %v6340 = vpack.c.b16 %v6304, %v6295
  %v6341 = vpack.c.b16 %v6305, %v6296
  %v6342 = vpack.c.b16 %v6306, %v6297
  %v6343 = vpack.c.b16 %v6307, %v6298
  %v6344 = vpack.c.b16 %v6308, %v6308
  %v6345 = vpack.c.b16 %v6309, %v6309
  %v6346 = vpack.c.b16 %v6310, %v6310
  %v6347 = vpack.c.b16 %v6311, %v6311
  %v6348 = vpack.c.b16 %v6312, %v6312
  %v6349 = vpack.c.b16 %v6313, %v6313
  %v6350 = vpack.c.b16 %v6314, %v6314
  %v6351 = vpack.c.b16 %v6315, %v6315
  %v6352 = vpack.c.b16 %v6316, %v6316
  %v6533 = vunpack.c.l.b16 %v6075
  %v6534 = vunpack.c.l.b16 %v6076
  %v6535 = vunpack.c.l.b16 %v6077
  %v6536 = vunpack.c.l.b16 %v6078
  %v6537 = vunpack.c.l.b16 %v6079
  %v6538 = vunpack.c.l.b16 %v6080
  %v6539 = vunpack.c.l.b16 %v6081
  %v6540 = vunpack.c.l.b16 %v6082
  %v6541 = vunpack.c.l.b16 %v6083
  %v6542 = vunpack.c.l.b16 %v6084
  %v6543 = vunpack.c.l.b16 %v6085
  %v6544 = vunpack.c.l.b16 %v6086
  %v6545 = vunpack.c.l.b16 %v6087
  %v6546 = vunpack.c.l.b16 %v6088
  %v6547 = vunpack.c.l.b16 %v6089
  %v6548 = vunpack.c.l.b16 %v6090
  %v6549 = vunpack.c.l.b16 %v6091
  %v6550 = vunpack.c.l.b16 %v6092
  %v6551 = vunpack.c.l.b16 %v6093
  %v6552 = vunpack.c.l.b16 %v6094
  %v6553 = vunpack.c.l.b16 %v6095
  %v6554 = vunpack.c.l.b16 %v6096
  %v6555 = vunpack.c.l.b16 %v6097
  %v6556 = vunpack.c.l.b16 %v6098
  %v6557 = vunpack.c.l.b16 %v6099
  %v6558 = vunpack.c.l.b16 %v6100
  %v6559 = vunpack.c.l.b16 %v6101
  %v6560 = vunpack.c.l.b16 %v6102
  %v6561 = vunpack.c.l.b16 %v6103
  %v6562 = vunpack.c.l.b16 %v6104
  %v6563 = vunpack.c.l.b16 %v6105
  %v6564 = vunpack.c.l.b16 %v6106
  %v6565 = vunpack.c.l.b16 %v6107
  %v6566 = vunpack.c.l.b16 %v6108
  %v6567 = vunpack.c.l.b16 %v6109
  %v6568 = vunpack.c.l.b16 %v6110
  %v6569 = vunpack.c.l.b16 %v6111
  %v6570 = vunpack.c.l.b16 %v6112
  %v6571 = vunpack.c.l.b16 %v6113
  %v6572 = vunpack.c.l.b16 %v6114
  %v6573 = vunpack.c.l.b16 %v6115
  %v6574 = vunpack.c.l.b16 %v6116
  %v6575 = vunpack.c.l.b16 %v6117
  %v6576 = vunpack.c.l.b16 %v6118
  %v6577 = vunpack.c.l.b16 %v6119
  %v6578 = vunpack.c.l.b16 %v6120
  %v6579 = vunpack.c.l.b16 %v6121
  %v6580 = vunpack.c.l.b16 %v6122
  %v6581 = vunpack.c.l.b16 %v6123
  %v6582 = vunpack.c.l.b16 %v6124
  %v6583 = vunpack.c.l.b16 %v6125
  %v6584 = vunpack.c.l.b16 %v6126
  %v6585 = vunpack.c.l.b16 %v6127
  %v6586 = vunpack.c.l.b16 %v6128
  %v6587 = vunpack.c.l.b16 %v6129
  %v6588 = vunpack.c.l.b16 %v6130
  %v6589 = vunpack.c.l.b16 %v6131
  %v6590 = vunpack.c.l.b16 %v6132
  %v6591 = vunpack.c.l.b16 %v6133
  %v6592 = vunpack.c.l.b16 %v6134
  %v6593 = vunpack.c.l.b16 %v6135
  %v6594 = vunpack.c.l.b16 %v6136
  %v6595 = vunpack.c.l.b16 %v6137
  %v6596 = vunpack.c.l.b16 %v6138
  %v6597 = vunpack.c.l.b16 %v6139
  %v6598 = vunpack.c.l.b16 %v6140
  %v6599 = vunpack.c.l.b16 %v6141
  %v6600 = vunpack.c.l.b16 %v6142
  %v6601 = vunpack.c.l.b16 %v6143
  %v6602 = vunpack.c.l.b16 %v6144
  %v6603 = vunpack.c.l.b16 %v6145
  %v6604 = vunpack.c.l.b16 %v6146
  %v6605 = vunpack.c.l.b16 %v6147
  %v6606 = vunpack.c.l.b16 %v6148
  %v6607 = vunpack.c.l.b16 %v6149
  %v6608 = vunpack.c.l.b16 %v6150
  %v6609 = vunpack.c.l.b16 %v6151
  %v6610 = vunpack.c.l.b16 %v6152
  %v6611 = vunpack.c.l.b16 %v6153
  %v6612 = vunpack.c.l.b16 %v6154
  %v6613 = vunpack.c.l.b16 %v6155
  %v6614 = vunpack.c.l.b16 %v6156
  %v6615 = vunpack.c.l.b16 %v6157
  %v6616 = vunpack.c.l.b16 %v6158
  %v6617 = vunpack.c.l.b16 %v6159
  %v6618 = vunpack.c.l.b16 %v6160
  %v6619 = vunpack.c.l.b16 %v6161
  %v6620 = vunpack.c.l.b16 %v6162
  %v6621 = vunpack.c.l.b16 %v6163
  %v6622 = vunpack.c.l.b16 %v6164
  %v6623 = vunpack.c.l.b16 %v6165
  %v6624 = vunpack.c.l.b16 %v6166
  %v6625 = vunpack.c.l.b16 %v6167
  %v6626 = vunpack.c.l.b16 %v6168
  %v6627 = vunpack.c.l.b16 %v6169
  %v6628 = vunpack.c.l.b16 %v6170
  %v6629 = vunpack.c.l.b16 %v6171
  %v6630 = vunpack.c.l.b16 %v6172
  %v6631 = vunpack.c.l.b16 %v6173
  %v6632 = vunpack.c.l.b16 %v6174
  %v6633 = vunpack.c.l.b16 %v6175
  %v6634 = vunpack.c.l.b16 %v6176
  %v6635 = vunpack.c.l.b16 %v6177
  %v6636 = vunpack.c.l.b16 %v6178
  %v6637 = vunpack.c.l.b16 %v6179
  %v6638 = vunpack.c.l.b16 %v6180
  %v6639 = vunpack.c.l.b16 %v6181
  %v6640 = vunpack.c.l.b16 %v6182
  %v6641 = vunpack.c.l.b16 %v6183
  %v6642 = vunpack.c.l.b16 %v6184
  %v6643 = vunpack.c.l.b16 %v6185
  %v6644 = vunpack.c.l.b16 %v6186
  %v6645 = vunpack.c.l.b16 %v6187
  %v6646 = vunpack.c.l.b16 %v6188
  %v6647 = vunpack.c.l.b16 %v6189
  %v6648 = vunpack.c.l.b16 %v6190
  %v6649 = vunpack.c.l.b16 %v6191
  %v6650 = vunpack.c.l.b16 %v6192
  %v6651 = vunpack.c.l.b16 %v6193
  %v6652 = vunpack.c.l.b16 %v6194
  %v6653 = vunpack.c.l.b16 %v6195
  %v6654 = vunpack.c.l.b16 %v6196
  %v6655 = vunpack.c.l.b16 %v6197
  %v6656 = vunpack.c.l.b16 %v6198
  %v6657 = vunpack.c.l.b16 %v6199
  %v6658 = vunpack.c.l.b16 %v6200
  %v6659 = vunpack.c.l.b16 %v6201
  %v6660 = vunpack.c.l.b16 %v6202
  %v6661 = vunpack.c.l.b16 %v6203
  %v6662 = vunpack.c.l.b16 %v6204
  %v6663 = vunpack.c.l.b16 %v6205
  %v6664 = vunpack.c.l.b16 %v6206
  %v6665 = vunpack.c.l.b16 %v6207
  %v6666 = vunpack.c.l.b16 %v6208
  %v6667 = vunpack.c.l.b16 %v6209
  %v6668 = vunpack.c.l.b16 %v6210
  %v6669 = vunpack.c.l.b16 %v6211
  %v6670 = vunpack.c.l.b16 %v6212
  %v6671 = vunpack.c.l.b16 %v6213
  %v6672 = vunpack.c.l.b16 %v6214
  %v6673 = vunpack.c.l.b16 %v6215
  %v6674 = vunpack.c.l.b16 %v6216
  %v6675 = vunpack.c.l.b16 %v6217
  %v6676 = vunpack.c.l.b16 %v6218
  %v6677 = vpack.c.b16 %v6534, %v6533
  %v6678 = vpack.c.b16 %v6536, %v6535
  %v6679 = vpack.c.b16 %v6538, %v6537
  %v6680 = vpack.c.b16 %v6540, %v6539
  %v6681 = vpack.c.b16 %v6542, %v6541
  %v6682 = vpack.c.b16 %v6544, %v6543
  %v6683 = vpack.c.b16 %v6546, %v6545
  %v6684 = vpack.c.b16 %v6548, %v6547
  %v6685 = vpack.c.b16 %v6550, %v6549
  %v6686 = vpack.c.b16 %v6552, %v6551
  %v6687 = vpack.c.b16 %v6554, %v6553
  %v6688 = vpack.c.b16 %v6556, %v6555
  %v6689 = vpack.c.b16 %v6558, %v6557
  %v6690 = vpack.c.b16 %v6560, %v6559
  %v6691 = vpack.c.b16 %v6562, %v6561
  %v6692 = vpack.c.b16 %v6564, %v6563
  %v6693 = vpack.c.b16 %v6566, %v6565
  %v6694 = vpack.c.b16 %v6568, %v6567
  %v6695 = vpack.c.b16 %v6570, %v6569
  %v6696 = vpack.c.b16 %v6572, %v6571
  %v6697 = vpack.c.b16 %v6574, %v6573
  %v6698 = vpack.c.b16 %v6576, %v6575
  %v6699 = vpack.c.b16 %v6578, %v6577
  %v6700 = vpack.c.b16 %v6580, %v6579
  %v6701 = vpack.c.b16 %v6582, %v6581
  %v6702 = vpack.c.b16 %v6584, %v6583
  %v6703 = vpack.c.b16 %v6586, %v6585
  %v6704 = vpack.c.b16 %v6588, %v6587
  %v6705 = vpack.c.b16 %v6590, %v6589
  %v6706 = vpack.c.b16 %v6592, %v6591
  %v6707 = vpack.c.b16 %v6594, %v6593
  %v6708 = vpack.c.b16 %v6596, %v6595
  %v6709 = vpack.c.b16 %v6598, %v6597
  %v6710 = vpack.c.b16 %v6600, %v6599
  %v6711 = vpack.c.b16 %v6602, %v6601
  %v6712 = vpack.c.b16 %v6604, %v6603
  %v6713 = vpack.c.b16 %v6606, %v6605
  %v6714 = vpack.c.b16 %v6608, %v6607
  %v6715 = vpack.c.b16 %v6610, %v6609
  %v6716 = vpack.c.b16 %v6612, %v6611
  %v6717 = vpack.c.b16 %v6614, %v6613
  %v6718 = vpack.c.b16 %v6616, %v6615
  %v6719 = vpack.c.b16 %v6618, %v6617
  %v6720 = vpack.c.b16 %v6620, %v6619
  %v6721 = vpack.c.b16 %v6622, %v6621
  %v6722 = vpack.c.b16 %v6624, %v6623
  %v6723 = vpack.c.b16 %v6626, %v6625
  %v6724 = vpack.c.b16 %v6628, %v6627
  %v6725 = vpack.c.b16 %v6630, %v6629
  %v6726 = vpack.c.b16 %v6632, %v6631
  %v6727 = vpack.c.b16 %v6634, %v6633
  %v6728 = vpack.c.b16 %v6636, %v6635
  %v6729 = vpack.c.b16 %v6638, %v6637
  %v6730 = vpack.c.b16 %v6640, %v6639
  %v6731 = vpack.c.b16 %v6642, %v6641
  %v6732 = vpack.c.b16 %v6644, %v6643
  %v6733 = vpack.c.b16 %v6646, %v6645
  %v6734 = vpack.c.b16 %v6648, %v6647
  %v6735 = vpack.c.b16 %v6650, %v6649
  %v6736 = vpack.c.b16 %v6652, %v6651
  %v6737 = vpack.c.b16 %v6654, %v6653
  %v6738 = vpack.c.b16 %v6656, %v6655
  %v6739 = vpack.c.b16 %v6658, %v6657
  %v6740 = vpack.c.b16 %v6660, %v6659
  %v6741 = vpack.c.b16 %v6662, %v6661
  %v6742 = vpack.c.b16 %v6664, %v6663
  %v6743 = vpack.c.b16 %v6666, %v6665
  %v6744 = vpack.c.b16 %v6668, %v6667
  %v6745 = vpack.c.b16 %v6670, %v6669
  %v6746 = vpack.c.b16 %v6672, %v6671
  %v6747 = vpack.c.b16 %v6674, %v6673
  %v6748 = vpack.c.b16 %v6676, %v6675
  %6821 = vmatprep.subr.bf16.mxu0 0
  %6822 = vmatpush1.bf16.msra.mxu0 %v6677
  %6823 = vmatprep.subr.bf16.mxu0 0
  %6824 = vmatpush1.bf16.msra.mxu0 %v6678
  %6825 = vmatprep.subr.bf16.mxu0 0
  %6826 = vmatpush1.bf16.msra.mxu0 %v6679
  %6827 = vmatprep.subr.bf16.mxu0 0
  %6828 = vmatpush1.bf16.msra.mxu0 %v6680
  %6829 = vmatprep.subr.bf16.mxu0 0
  %6830 = vmatpush1.bf16.msra.mxu0 %v6681
  %6831 = vmatprep.subr.bf16.mxu0 0
  %6832 = vmatpush1.bf16.msra.mxu0 %v6682
  %6833 = vmatprep.subr.bf16.mxu0 0
  %6834 = vmatpush1.bf16.msra.mxu0 %v6683
  %6835 = vmatprep.subr.bf16.mxu0 0
  %6836 = vmatpush1.bf16.msra.mxu0 %v6684
  %6837 = vmatprep.subr.bf16.mxu0 0
  %6838 = vmatpush1.bf16.msra.mxu0 %v6685
  %6839 = vmatprep.subr.bf16.mxu0 0
  %6840 = vmatpush1.bf16.msra.mxu0 %v6686
  %6841 = vmatprep.subr.bf16.mxu0 0
  %6842 = vmatpush1.bf16.msra.mxu0 %v6687
  %6843 = vmatprep.subr.bf16.mxu0 0
  %6844 = vmatpush1.bf16.msra.mxu0 %v6688
  %6845 = vmatprep.subr.bf16.mxu0 0
  %6846 = vmatpush1.bf16.msra.mxu0 %v6689
  %6847 = vmatprep.subr.bf16.mxu0 0
  %6848 = vmatpush1.bf16.msra.mxu0 %v6690
  %6849 = vmatprep.subr.bf16.mxu0 0
  %6850 = vmatpush1.bf16.msra.mxu0 %v6691
  %6851 = vmatprep.subr.bf16.mxu0 0
  %6852 = vmatpush1.bf16.msra.mxu0 %v6692
  %6853 = vmatprep.mubr.bf16.mxu0 %v6318
  %6854 = vmatmul.mubr.bf16.gmra.mrb[0].mxu0 %v6317
  %v6855 = vpop.f32.mrb[0].mxu0
  %v6856 = vadd.f32 0.0, %v6855
  %v6857 = vpop.f32.mrb[0].mxu0
  %v6858 = vpop.f32.mrb[0].mxu0
  %v6859 = vadd.f32 0.0, %v6858
  %v6860 = vpop.f32.mrb[0].mxu0
  %6861 = vmatprep.mubr.bf16.mxu0 %v6327
  %6862 = vmatmul.mubr.bf16.gmra.mrb[0].mxu0 %v6326
  %v6863 = vpop.f32.mrb[0].mxu0
  %v6864 = vadd.f32 0.0, %v6863
  %v6865 = vpop.f32.mrb[0].mxu0
  %v6866 = vpop.f32.mrb[0].mxu0
  %v6867 = vadd.f32 0.0, %v6866
  %v6868 = vpop.f32.mrb[0].mxu0
  %6869 = vmatprep.mubr.bf16.mxu0 %v6336
  %6870 = vmatmul.mubr.bf16.gmra.mrb[0].mxu0 %v6335
  %v6871 = vpop.f32.mrb[0].mxu0
  %v6872 = vadd.f32 0.0, %v6871
  %v6873 = vpop.f32.mrb[0].mxu0
  %v6874 = vpop.f32.mrb[0].mxu0
  %v6875 = vadd.f32 0.0, %v6874
  %v6876 = vpop.f32.mrb[0].mxu0
  %6877 = vmatprep.mubr.bf16.mxu0 %v6345
  %6878 = vmatmul.mubr.bf16.gmra.mrb[0].mxu0 %v6344
  %v6879 = vpop.f32.mrb[0].mxu0
  %v6880 = vadd.f32 0.0, %v6879
  %v6881 = vpop.f32.mrb[0].mxu0
  %v6882 = vpop.f32.mrb[0].mxu0
  %v6883 = vpop.f32.mrb[0].mxu0
  %6884 = vdwg.mxu0
  %6885 = vmatprep.subr.bf16.mxu0 0
  %6886 = vmatpush1.bf16.msra.mxu0 %v6693
  %6887 = vmatprep.subr.bf16.mxu0 0
  %6888 = vmatpush1.bf16.msra.mxu0 %v6694
  %6889 = vmatprep.subr.bf16.mxu0 0
  %6890 = vmatpush1.bf16.msra.mxu0 %v6695
  %6891 = vmatprep.subr.bf16.mxu0 0
  %6892 = vmatpush1.bf16.msra.mxu0 %v6696
  %6893 = vmatprep.subr.bf16.mxu0 0
  %6894 = vmatpush1.bf16.msra.mxu0 %v6697
  %6895 = vmatprep.subr.bf16.mxu0 0
  %6896 = vmatpush1.bf16.msra.mxu0 %v6698
  %6897 = vmatprep.subr.bf16.mxu0 0
  %6898 = vmatpush1.bf16.msra.mxu0 %v6699
  %6899 = vmatprep.subr.bf16.mxu0 0
  %6900 = vmatpush1.bf16.msra.mxu0 %v6700
  %6901 = vmatprep.subr.bf16.mxu0 0
  %6902 = vmatpush1.bf16.msra.mxu0 %v6701
  %6903 = vmatprep.subr.bf16.mxu0 0
  %6904 = vmatpush1.bf16.msra.mxu0 %v6702
  %6905 = vmatprep.subr.bf16.mxu0 0
  %6906 = vmatpush1.bf16.msra.mxu0 %v6703
  %6907 = vmatprep.subr.bf16.mxu0 0
  %6908 = vmatpush1.bf16.msra.mxu0 %v6704
  %6909 = vmatprep.subr.bf16.mxu0 0
  %6910 = vmatpush1.bf16.msra.mxu0 %v6705
  %6911 = vmatprep.subr.bf16.mxu0 0
  %6912 = vmatpush1.bf16.msra.mxu0 %v6706
  %6913 = vmatprep.subr.bf16.mxu0 0
  %6914 = vmatpush1.bf16.msra.mxu0 %v6707
  %6915 = vmatprep.subr.bf16.mxu0 0
  %6916 = vmatpush1.bf16.msra.mxu0 %v6708
  %6917 = vmatprep.mubr.bf16.mxu0 %v6320
  %6918 = vmatmul.mubr.bf16.gmra.mrb[0].mxu0 %v6319
  %v6919 = vpop.f32.mrb[0].mxu0
  %v6920 = vadd.f32 %v6856, %v6919
  %v6921 = vpop.f32.mrb[0].mxu0
  %v6922 = vpop.f32.mrb[0].mxu0
  %v6923 = vadd.f32 %v6859, %v6922
  %v6924 = vpop.f32.mrb[0].mxu0
  %6925 = vmatprep.mubr.bf16.mxu0 %v6329
  %6926 = vmatmul.mubr.bf16.gmra.mrb[0].mxu0 %v6328
  %v6927 = vpop.f32.mrb[0].mxu0
  %v6928 = vadd.f32 %v6864, %v6927
  %v6929 = vpop.f32.mrb[0].mxu0
  %v6930 = vpop.f32.mrb[0].mxu0
  %v6931 = vadd.f32 %v6867, %v6930
  %v6932 = vpop.f32.mrb[0].mxu0
  %6933 = vmatprep.mubr.bf16.mxu0 %v6338
  %6934 = vmatmul.mubr.bf16.gmra.mrb[0].mxu0 %v6337
  %v6935 = vpop.f32.mrb[0].mxu0
  %v6936 = vadd.f32 %v6872, %v6935
  %v6937 = vpop.f32.mrb[0].mxu0
  %v6938 = vpop.f32.mrb[0].mxu0
  %v6939 = vadd.f32 %v6875, %v6938
  %v6940 = vpop.f32.mrb[0].mxu0
  %6941 = vmatprep.mubr.bf16.mxu0 %v6347
  %6942 = vmatmul.mubr.bf16.gmra.mrb[0].mxu0 %v6346
  %v6943 = vpop.f32.mrb[0].mxu0
  %v6944 = vadd.f32 %v6880, %v6943
  %v6945 = vpop.f32.mrb[0].mxu0
  %v6946 = vpop.f32.mrb[0].mxu0
  %v6947 = vpop.f32.mrb[0].mxu0
  %6948 = vdwg.mxu0
  %6949 = vmatprep.subr.bf16.mxu0 0
  %6950 = vmatpush1.bf16.msra.mxu0 %v6709
  %6951 = vmatprep.subr.bf16.mxu0 0
  %6952 = vmatpush1.bf16.msra.mxu0 %v6710
  %6953 = vmatprep.subr.bf16.mxu0 0
  %6954 = vmatpush1.bf16.msra.mxu0 %v6711
  %6955 = vmatprep.subr.bf16.mxu0 0
  %6956 = vmatpush1.bf16.msra.mxu0 %v6712
  %6957 = vmatprep.subr.bf16.mxu0 0
  %6958 = vmatpush1.bf16.msra.mxu0 %v6713
  %6959 = vmatprep.subr.bf16.mxu0 0
  %6960 = vmatpush1.bf16.msra.mxu0 %v6714
  %6961 = vmatprep.subr.bf16.mxu0 0
  %6962 = vmatpush1.bf16.msra.mxu0 %v6715
  %6963 = vmatprep.subr.bf16.mxu0 0
  %6964 = vmatpush1.bf16.msra.mxu0 %v6716
  %6965 = vmatprep.subr.bf16.mxu0 0
  %6966 = vmatpush1.bf16.msra.mxu0 %v6717
  %6967 = vmatprep.subr.bf16.mxu0 0
  %6968 = vmatpush1.bf16.msra.mxu0 %v6718
  %6969 = vmatprep.subr.bf16.mxu0 0
  %6970 = vmatpush1.bf16.msra.mxu0 %v6719
  %6971 = vmatprep.subr.bf16.mxu0 0
  %6972 = vmatpush1.bf16.msra.mxu0 %v6720
  %6973 = vmatprep.subr.bf16.mxu0 0
  %6974 = vmatpush1.bf16.msra.mxu0 %v6721
  %6975 = vmatprep.subr.bf16.mxu0 0
  %6976 = vmatpush1.bf16.msra.mxu0 %v6722
  %6977 = vmatprep.subr.bf16.mxu0 0
  %6978 = vmatpush1.bf16.msra.mxu0 %v6723
  %6979 = vmatprep.subr.bf16.mxu0 0
  %6980 = vmatpush1.bf16.msra.mxu0 %v6724
  %6981 = vmatprep.mubr.bf16.mxu0 %v6322
  %6982 = vmatmul.mubr.bf16.gmra.mrb[0].mxu0 %v6321
  %v6983 = vpop.f32.mrb[0].mxu0
  %v6984 = vadd.f32 %v6920, %v6983
  %v6985 = vpop.f32.mrb[0].mxu0
  %v6986 = vpop.f32.mrb[0].mxu0
  %v6987 = vadd.f32 %v6923, %v6986
  %v6988 = vpop.f32.mrb[0].mxu0
  %6989 = vmatprep.mubr.bf16.mxu0 %v6331
  %6990 = vmatmul.mubr.bf16.gmra.mrb[0].mxu0 %v6330
  %v6991 = vpop.f32.mrb[0].mxu0
  %v6992 = vadd.f32 %v6928, %v6991
  %v6993 = vpop.f32.mrb[0].mxu0
  %v6994 = vpop.f32.mrb[0].mxu0
  %v6995 = vadd.f32 %v6931, %v6994
  %v6996 = vpop.f32.mrb[0].mxu0
  %6997 = vmatprep.mubr.bf16.mxu0 %v6340
  %6998 = vmatmul.mubr.bf16.gmra.mrb[0].mxu0 %v6339
  %v6999 = vpop.f32.mrb[0].mxu0
  %v7000 = vadd.f32 %v6936, %v6999
  %v7001 = vpop.f32.mrb[0].mxu0
  %v7002 = vpop.f32.mrb[0].mxu0
  %v7003 = vadd.f32 %v6939, %v7002
  %v7004 = vpop.f32.mrb[0].mxu0
  %7005 = vmatprep.mubr.bf16.mxu0 %v6349
  %7006 = vmatmul.mubr.bf16.gmra.mrb[0].mxu0 %v6348
  %v7007 = vpop.f32.mrb[0].mxu0
  %v7008 = vadd.f32 %v6944, %v7007
  %v7009 = vpop.f32.mrb[0].mxu0
  %v7010 = vpop.f32.mrb[0].mxu0
  %v7011 = vpop.f32.mrb[0].mxu0
  %7012 = vdwg.mxu0
  %7013 = vmatprep.subr.bf16.mxu0 0
  %7014 = vmatpush1.bf16.msra.mxu0 %v6725
  %7015 = vmatprep.subr.bf16.mxu0 0
  %7016 = vmatpush1.bf16.msra.mxu0 %v6726
  %7017 = vmatprep.subr.bf16.mxu0 0
  %7018 = vmatpush1.bf16.msra.mxu0 %v6727
  %7019 = vmatprep.subr.bf16.mxu0 0
  %7020 = vmatpush1.bf16.msra.mxu0 %v6728
  %7021 = vmatprep.subr.bf16.mxu0 0
  %7022 = vmatpush1.bf16.msra.mxu0 %v6729
  %7023 = vmatprep.subr.bf16.mxu0 0
  %7024 = vmatpush1.bf16.msra.mxu0 %v6730
  %7025 = vmatprep.subr.bf16.mxu0 0
  %7026 = vmatpush1.bf16.msra.mxu0 %v6731
  %7027 = vmatprep.subr.bf16.mxu0 0
  %7028 = vmatpush1.bf16.msra.mxu0 %v6732
  %7029 = vmatprep.subr.bf16.mxu0 0
  %7030 = vmatpush1.bf16.msra.mxu0 %v6733
  %7031 = vmatprep.subr.bf16.mxu0 0
  %7032 = vmatpush1.bf16.msra.mxu0 %v6734
  %7033 = vmatprep.subr.bf16.mxu0 0
  %7034 = vmatpush1.bf16.msra.mxu0 %v6735
  %7035 = vmatprep.subr.bf16.mxu0 0
  %7036 = vmatpush1.bf16.msra.mxu0 %v6736
  %7037 = vmatprep.subr.bf16.mxu0 0
  %7038 = vmatpush1.bf16.msra.mxu0 %v6737
  %7039 = vmatprep.subr.bf16.mxu0 0
  %7040 = vmatpush1.bf16.msra.mxu0 %v6738
  %7041 = vmatprep.subr.bf16.mxu0 0
  %7042 = vmatpush1.bf16.msra.mxu0 %v6739
  %7043 = vmatprep.subr.bf16.mxu0 0
  %7044 = vmatpush1.bf16.msra.mxu0 %v6740
  %7045 = vmatprep.mubr.bf16.mxu0 %v6324
  %7046 = vmatmul.mubr.bf16.gmra.mrb[0].mxu0 %v6323
  %v7047 = vpop.f32.mrb[0].mxu0
  %v7048 = vadd.f32 %v6984, %v7047
  %v7049 = vpop.f32.mrb[0].mxu0
  %v7050 = vpop.f32.mrb[0].mxu0
  %v7051 = vadd.f32 %v6987, %v7050
  %v7052 = vpop.f32.mrb[0].mxu0
  %7053 = vmatprep.mubr.bf16.mxu0 %v6333
  %7054 = vmatmul.mubr.bf16.gmra.mrb[0].mxu0 %v6332
  %v7055 = vpop.f32.mrb[0].mxu0
  %v7056 = vadd.f32 %v6992, %v7055
  %v7057 = vpop.f32.mrb[0].mxu0
  %v7058 = vpop.f32.mrb[0].mxu0
  %v7059 = vadd.f32 %v6995, %v7058
  %v7060 = vpop.f32.mrb[0].mxu0
  %7061 = vmatprep.mubr.bf16.mxu0 %v6342
  %7062 = vmatmul.mubr.bf16.gmra.mrb[0].mxu0 %v6341
  %v7063 = vpop.f32.mrb[0].mxu0
  %v7064 = vadd.f32 %v7000, %v7063
  %v7065 = vpop.f32.mrb[0].mxu0
  %v7066 = vpop.f32.mrb[0].mxu0
  %v7067 = vadd.f32 %v7003, %v7066
  %v7068 = vpop.f32.mrb[0].mxu0
  %7069 = vmatprep.mubr.bf16.mxu0 %v6351
  %7070 = vmatmul.mubr.bf16.gmra.mrb[0].mxu0 %v6350
  %v7071 = vpop.f32.mrb[0].mxu0
  %v7072 = vadd.f32 %v7008, %v7071
  %v7073 = vpop.f32.mrb[0].mxu0
  %v7074 = vpop.f32.mrb[0].mxu0
  %v7075 = vpop.f32.mrb[0].mxu0
  %7076 = vdwg.mxu0
  %7077 = vmatprep.subr.bf16.mxu0 0
  %7078 = vmatpush1.bf16.msra.mxu0 %v6741
  %7079 = vmatprep.subr.bf16.mxu0 0
  %7080 = vmatpush1.bf16.msra.mxu0 %v6742
  %7081 = vmatprep.subr.bf16.mxu0 0
  %7082 = vmatpush1.bf16.msra.mxu0 %v6743
  %7083 = vmatprep.subr.bf16.mxu0 0
  %7084 = vmatpush1.bf16.msra.mxu0 %v6744
  %7085 = vmatprep.subr.bf16.mxu0 0
  %7086 = vmatpush1.bf16.msra.mxu0 %v6745
  %7087 = vmatprep.subr.bf16.mxu0 0
  %7088 = vmatpush1.bf16.msra.mxu0 %v6746
  %7089 = vmatprep.subr.bf16.mxu0 0
  %7090 = vmatpush1.bf16.msra.mxu0 %v6747
  %7091 = vmatprep.subr.bf16.mxu0 0
  %7092 = vmatpush1.bf16.msra.mxu0 %v6748
  %7093 = vmatprep.subr.bf16.mxu0 0
  %7094 = vmatpush1.bf16.msra.mxu0 0
  %7095 = vmatprep.subr.bf16.mxu0 0
  %7096 = vmatpush1.bf16.msra.mxu0 0
  %7097 = vmatprep.subr.bf16.mxu0 0
  %7098 = vmatpush1.bf16.msra.mxu0 0
  %7099 = vmatprep.subr.bf16.mxu0 0
  %7100 = vmatpush1.bf16.msra.mxu0 0
  %7101 = vmatprep.subr.bf16.mxu0 0
  %7102 = vmatpush1.bf16.msra.mxu0 0
  %7103 = vmatprep.subr.bf16.mxu0 0
  %7104 = vmatpush1.bf16.msra.mxu0 0
  %7105 = vmatprep.subr.bf16.mxu0 0
  %7106 = vmatpush1.bf16.msra.mxu0 0
  %7107 = vmatprep.subr.bf16.mxu0 0
  %7108 = vmatpush1.bf16.msra.mxu0 0
  %7109 = vmatprep.mubr.bf16.mxu0 0
  %7110 = vmatmul.mubr.bf16.gmra.mrb[0].mxu0 %v6325
  %v7111 = vpop.f32.mrb[0].mxu0
  %v7112 = vadd.f32 %v7048, %v7111
  %v7113 = vpop.f32.mrb[0].mxu0
  %v7114 = vpop.f32.mrb[0].mxu0
  %v7115 = vadd.f32 %v7051, %v7114
  %v7116 = vpop.f32.mrb[0].mxu0
  %7117 = vmatprep.mubr.bf16.mxu0 0
  %7118 = vmatmul.mubr.bf16.gmra.mrb[0].mxu0 %v6334
  %v7119 = vpop.f32.mrb[0].mxu0
  %v7120 = vadd.f32 %v7056, %v7119
  %v7121 = vpop.f32.mrb[0].mxu0
  %v7122 = vpop.f32.mrb[0].mxu0
  %v7123 = vadd.f32 %v7059, %v7122
  %v7124 = vpop.f32.mrb[0].mxu0
  %7125 = vmatprep.mubr.bf16.mxu0 0
  %7126 = vmatmul.mubr.bf16.gmra.mrb[0].mxu0 %v6343
  %v7127 = vpop.f32.mrb[0].mxu0
  %v7128 = vadd.f32 %v7064, %v7127
  %v7129 = vpop.f32.mrb[0].mxu0
  %v7130 = vpop.f32.mrb[0].mxu0
  %v7131 = vadd.f32 %v7067, %v7130
  %v7132 = vpop.f32.mrb[0].mxu0
  %7133 = vmatprep.mubr.bf16.mxu0 0
  %7134 = vmatmul.mubr.bf16.gmra.mrb[0].mxu0 %v6352
  %v7135 = vpop.f32.mrb[0].mxu0
  %v7136 = vadd.f32 %v7072, %v7135
  %v7137 = vpop.f32.mrb[0].mxu0
  %v7138 = vpop.f32.mrb[0].mxu0
  %v7139 = vpop.f32.mrb[0].mxu0
  %7140 = vdwg.mxu0
  %v7141 = vld [vmem:[%s2291] sm:$0xf]
  %v7142 = vld [vmem:[%s2291 + $0x4] sm:$0xf]
  %v7143 = vld [vmem:[%s2291 + $0x8] sm:$0xf]
  %v7144 = vld [vmem:[%s2291 + $0xc] sm:$0xf]
  %v7145 = vld [vmem:[%s2291 + $0x10] sm:$0xf]
  %v7146 = vld [vmem:[%s2291 + $0x14] sm:$0xf]
  %v7147 = vld [vmem:[%s2291 + $0x18] sm:$0xf]
  %v7148 = vld [vmem:[%s2291 + $0x1c] sm:$0xf]
  %v7149 = vld [vmem:[%s2291 + $0x20] sm:$0xf]
  %v7150 = vld [vmem:[%s2291 + $0x24] sm:$0xf]
  %v7151 = vld [vmem:[%s2291 + $0x28] sm:$0xf]
  %v7152 = vld [vmem:[%s2291 + $0x2c] sm:$0xf]
  %v7153 = vld [vmem:[%s2291 + $0x30] sm:$0xf]
  %v7154 = vld [vmem:[%s2291 + $0x34] sm:$0xf]
  %v7155 = vld [vmem:[%s2291 + $0x38] sm:$0xf]
  %v7156 = vld [vmem:[%s2291 + $0x3c] sm:$0xf]
  %v7157 = vld [vmem:[%s2291 + $0x40] sm:$0xf]
  %v7158 = vld [vmem:[%s2291 + $0x44] sm:$0xf]
  %v7159 = vld [vmem:[%s2291 + $0x48] sm:$0xf]
  %v7160 = vld [vmem:[%s2291 + $0x4c] sm:$0xf]
  %v7161 = vld [vmem:[%s2291 + $0x50] sm:$0xf]
  %v7162 = vld [vmem:[%s2291 + $0x54] sm:$0xf]
  %v7163 = vld [vmem:[%s2291 + $0x58] sm:$0xf]
  %v7164 = vld [vmem:[%s2291 + $0x5c] sm:$0xf]
  %v7165 = vld [vmem:[%s2291 + $0x60] sm:$0xf]
  %v7166 = vld [vmem:[%s2291 + $0x64] sm:$0xf]
  %v7167 = vld [vmem:[%s2291 + $0x68] sm:$0xf]
  %v7168 = vld [vmem:[%s2291 + $0x6c] sm:$0xf]
  %v7169 = vld [vmem:[%s2291 + $0x70] sm:$0xf]
  %v7170 = vld [vmem:[%s2291 + $0x74] sm:$0xf]
  %v7171 = vld [vmem:[%s2291 + $0x78] sm:$0xf]
  %v7172 = vld [vmem:[%s2291 + $0x7c] sm:$0xf]
  %v7173 = vld [vmem:[%s2291 + $0x80] sm:$0xf]
  %v7174 = vld [vmem:[%s2291 + $0x84] sm:$0xf]
  %v7175 = vld [vmem:[%s2291 + $0x88] sm:$0xf]
  %v7176 = vld [vmem:[%s2291 + $0x8c] sm:$0xf]
  %v7177 = vld [vmem:[%s2291 + $0x90] sm:$0xf]
  %v7178 = vld [vmem:[%s2291 + $0x94] sm:$0xf]
  %v7179 = vld [vmem:[%s2291 + $0x98] sm:$0xf]
  %v7180 = vld [vmem:[%s2291 + $0x9c] sm:$0xf]
  %v7181 = vld [vmem:[%s2291 + $0xa0] sm:$0xf]
  %v7182 = vld [vmem:[%s2291 + $0xa4] sm:$0xf]
  %v7183 = vld [vmem:[%s2291 + $0xa8] sm:$0xf]
  %v7184 = vld [vmem:[%s2291 + $0xac] sm:$0xf]
  %v7185 = vld [vmem:[%s2291 + $0xb0] sm:$0xf]
  %v7186 = vld [vmem:[%s2291 + $0xb4] sm:$0xf]
  %v7187 = vld [vmem:[%s2291 + $0xb8] sm:$0xf]
  %v7188 = vld [vmem:[%s2291 + $0xbc] sm:$0xf]
  %v7189 = vld [vmem:[%s2291 + $0xc0] sm:$0xf]
  %v7190 = vld [vmem:[%s2291 + $0xc4] sm:$0xf]
  %v7191 = vld [vmem:[%s2291 + $0xc8] sm:$0xf]
  %v7192 = vld [vmem:[%s2291 + $0xcc] sm:$0xf]
  %v7193 = vld [vmem:[%s2291 + $0xd0] sm:$0xf]
  %v7194 = vld [vmem:[%s2291 + $0xd4] sm:$0xf]
  %v7195 = vld [vmem:[%s2291 + $0xd8] sm:$0xf]
  %v7196 = vld [vmem:[%s2291 + $0xdc] sm:$0xf]
  %v7197 = vld [vmem:[%s2291 + $0xe0] sm:$0xf]
  %v7198 = vld [vmem:[%s2291 + $0xe4] sm:$0xf]
  %v7199 = vld [vmem:[%s2291 + $0xe8] sm:$0xf]
  %v7200 = vld [vmem:[%s2291 + $0xec] sm:$0xf]
  %v7201 = vld [vmem:[%s2291 + $0xf0] sm:$0xf]
  %v7202 = vld [vmem:[%s2291 + $0xf4] sm:$0xf]
  %v7203 = vld [vmem:[%s2291 + $0xf8] sm:$0xf]
  %v7204 = vld [vmem:[%s2291 + $0xfc] sm:$0xf]
  %v7205 = vld [vmem:[%s2291 + $0x100] sm:$0xf]
  %v7206 = vld [vmem:[%s2291 + $0x104] sm:$0xf]
  %v7207 = vld [vmem:[%s2291 + $0x108] sm:$0xf]
  %v7208 = vld [vmem:[%s2291 + $0x10c] sm:$0xf]
  %v7209 = vld [vmem:[%s2291 + $0x110] sm:$0xf]
  %v7210 = vld [vmem:[%s2291 + $0x114] sm:$0xf]
  %v7211 = vld [vmem:[%s2291 + $0x118] sm:$0xf]
  %v7212 = vld [vmem:[%s2291 + $0x11c] sm:$0xf]
  %v7213 = vld [vmem:[%s2291 + $0x120] sm:$0xf]
  %v7214 = vld [vmem:[%s2291 + $0x124] sm:$0xf]
  %v7215 = vld [vmem:[%s2291 + $0x128] sm:$0xf]
  %v7216 = vld [vmem:[%s2291 + $0x12c] sm:$0xf]
  %v7217 = vld [vmem:[%s2291 + $0x130] sm:$0xf]
  %v7218 = vld [vmem:[%s2291 + $0x134] sm:$0xf]
  %v7219 = vld [vmem:[%s2291 + $0x138] sm:$0xf]
  %v7220 = vld [vmem:[%s2291 + $0x13c] sm:$0xf]
  %v7221 = vld [vmem:[%s2291 + $0x140] sm:$0xf]
  %v7222 = vld [vmem:[%s2291 + $0x144] sm:$0xf]
  %v7223 = vld [vmem:[%s2291 + $0x148] sm:$0xf]
  %v7224 = vld [vmem:[%s2291 + $0x14c] sm:$0xf]
  %v7225 = vld [vmem:[%s2291 + $0x150] sm:$0xf]
  %v7226 = vld [vmem:[%s2291 + $0x154] sm:$0xf]
  %v7227 = vld [vmem:[%s2291 + $0x158] sm:$0xf]
  %v7228 = vld [vmem:[%s2291 + $0x15c] sm:$0xf]
  %v7229 = vld [vmem:[%s2291 + $0x160] sm:$0xf]
  %v7230 = vld [vmem:[%s2291 + $0x164] sm:$0xf]
  %v7231 = vld [vmem:[%s2291 + $0x168] sm:$0xf]
  %v7232 = vld [vmem:[%s2291 + $0x16c] sm:$0xf]
  %v7233 = vld [vmem:[%s2291 + $0x170] sm:$0xf]
  %v7234 = vld [vmem:[%s2291 + $0x174] sm:$0xf]
  %v7235 = vld [vmem:[%s2291 + $0x178] sm:$0xf]
  %v7236 = vld [vmem:[%s2291 + $0x17c] sm:$0xf]
  %v7237 = vld [vmem:[%s2291 + $0x180] sm:$0xf]
  %v7238 = vld [vmem:[%s2291 + $0x184] sm:$0xf]
  %v7239 = vld [vmem:[%s2291 + $0x188] sm:$0xf]
  %v7240 = vld [vmem:[%s2291 + $0x18c] sm:$0xf]
  %v7241 = vld [vmem:[%s2291 + $0x190] sm:$0xf]
  %v7242 = vld [vmem:[%s2291 + $0x194] sm:$0xf]
  %v7243 = vld [vmem:[%s2291 + $0x198] sm:$0xf]
  %v7244 = vld [vmem:[%s2291 + $0x19c] sm:$0xf]
  %v7245 = vld [vmem:[%s2291 + $0x1a0] sm:$0xf]
  %v7246 = vld [vmem:[%s2291 + $0x1a4] sm:$0xf]
  %v7247 = vld [vmem:[%s2291 + $0x1a8] sm:$0xf]
  %v7248 = vld [vmem:[%s2291 + $0x1ac] sm:$0xf]
  %v7249 = vld [vmem:[%s2291 + $0x1b0] sm:$0xf]
  %v7250 = vld [vmem:[%s2291 + $0x1b4] sm:$0xf]
  %v7251 = vld [vmem:[%s2291 + $0x1b8] sm:$0xf]
  %v7252 = vld [vmem:[%s2291 + $0x1bc] sm:$0xf]
  %v7253 = vld [vmem:[%s2291 + $0x1c0] sm:$0xf]
  %v7254 = vld [vmem:[%s2291 + $0x1c4] sm:$0xf]
  %v7255 = vld [vmem:[%s2291 + $0x1c8] sm:$0xf]
  %v7256 = vld [vmem:[%s2291 + $0x1cc] sm:$0xf]
  %v7257 = vld [vmem:[%s2291 + $0x1d0] sm:$0xf]
  %v7258 = vld [vmem:[%s2291 + $0x1d4] sm:$0xf]
  %v7259 = vld [vmem:[%s2291 + $0x1d8] sm:$0xf]
  %v7260 = vld [vmem:[%s2291 + $0x1dc] sm:$0xf]
  %v7261 = vld [vmem:[%s2291 + $0x1e0] sm:$0xf]
  %v7262 = vld [vmem:[%s2291 + $0x1e4] sm:$0xf]
  %v7263 = vld [vmem:[%s2291 + $0x1e8] sm:$0xf]
  %v7264 = vld [vmem:[%s2291 + $0x1ec] sm:$0xf]
  %v7265 = vld [vmem:[%s2291 + $0x1f0] sm:$0xf]
  %v7266 = vld [vmem:[%s2291 + $0x1f4] sm:$0xf]
  %v7267 = vld [vmem:[%s2291 + $0x1f8] sm:$0xf]
  %v7268 = vld [vmem:[%s2291 + $0x1fc] sm:$0xf]
  %v7269 = vld [vmem:[%s2291 + $0x200] sm:$0xf]
  %v7270 = vld [vmem:[%s2291 + $0x204] sm:$0xf]
  %v7271 = vld [vmem:[%s2291 + $0x208] sm:$0xf]
  %v7272 = vld [vmem:[%s2291 + $0x20c] sm:$0xf]
  %v7273 = vld [vmem:[%s2291 + $0x210] sm:$0xf]
  %v7274 = vld [vmem:[%s2291 + $0x214] sm:$0xf]
  %v7275 = vld [vmem:[%s2291 + $0x218] sm:$0xf]
  %v7276 = vld [vmem:[%s2291 + $0x21c] sm:$0xf]
  %v7277 = vld [vmem:[%s2291 + $0x220] sm:$0xf]
  %v7278 = vld [vmem:[%s2291 + $0x224] sm:$0xf]
  %v7279 = vld [vmem:[%s2291 + $0x228] sm:$0xf]
  %v7280 = vld [vmem:[%s2291 + $0x22c] sm:$0xf]
  %v7281 = vld [vmem:[%s2291 + $0x230] sm:$0xf]
  %v7282 = vld [vmem:[%s2291 + $0x234] sm:$0xf]
  %v7283 = vld [vmem:[%s2291 + $0x238] sm:$0xf]
  %v7284 = vld [vmem:[%s2291 + $0x23c] sm:$0xf]
  %v7429 = vunpack.c.l.b16 %v7141
  %v7430 = vunpack.c.l.b16 %v7142
  %v7431 = vunpack.c.l.b16 %v7143
  %v7432 = vunpack.c.l.b16 %v7144
  %v7433 = vunpack.c.l.b16 %v7145
  %v7434 = vunpack.c.l.b16 %v7146
  %v7435 = vunpack.c.l.b16 %v7147
  %v7436 = vunpack.c.l.b16 %v7148
  %v7437 = vunpack.c.l.b16 %v7149
  %v7438 = vunpack.c.l.b16 %v7150
  %v7439 = vunpack.c.l.b16 %v7151
  %v7440 = vunpack.c.l.b16 %v7152
  %v7441 = vunpack.c.l.b16 %v7153
  %v7442 = vunpack.c.l.b16 %v7154
  %v7443 = vunpack.c.l.b16 %v7155
  %v7444 = vunpack.c.l.b16 %v7156
  %v7445 = vunpack.c.l.b16 %v7157
  %v7446 = vunpack.c.l.b16 %v7158
  %v7447 = vunpack.c.l.b16 %v7159
  %v7448 = vunpack.c.l.b16 %v7160
  %v7449 = vunpack.c.l.b16 %v7161
  %v7450 = vunpack.c.l.b16 %v7162
  %v7451 = vunpack.c.l.b16 %v7163
  %v7452 = vunpack.c.l.b16 %v7164
  %v7453 = vunpack.c.l.b16 %v7165
  %v7454 = vunpack.c.l.b16 %v7166
  %v7455 = vunpack.c.l.b16 %v7167
  %v7456 = vunpack.c.l.b16 %v7168
  %v7457 = vunpack.c.l.b16 %v7169
  %v7458 = vunpack.c.l.b16 %v7170
  %v7459 = vunpack.c.l.b16 %v7171
  %v7460 = vunpack.c.l.b16 %v7172
  %v7461 = vunpack.c.l.b16 %v7173
  %v7462 = vunpack.c.l.b16 %v7174
  %v7463 = vunpack.c.l.b16 %v7175
  %v7464 = vunpack.c.l.b16 %v7176
  %v7465 = vunpack.c.l.b16 %v7177
  %v7466 = vunpack.c.l.b16 %v7178
  %v7467 = vunpack.c.l.b16 %v7179
  %v7468 = vunpack.c.l.b16 %v7180
  %v7469 = vunpack.c.l.b16 %v7181
  %v7470 = vunpack.c.l.b16 %v7182
  %v7471 = vunpack.c.l.b16 %v7183
  %v7472 = vunpack.c.l.b16 %v7184
  %v7473 = vunpack.c.l.b16 %v7185
  %v7474 = vunpack.c.l.b16 %v7186
  %v7475 = vunpack.c.l.b16 %v7187
  %v7476 = vunpack.c.l.b16 %v7188
  %v7477 = vunpack.c.l.b16 %v7189
  %v7478 = vunpack.c.l.b16 %v7190
  %v7479 = vunpack.c.l.b16 %v7191
  %v7480 = vunpack.c.l.b16 %v7192
  %v7481 = vunpack.c.l.b16 %v7193
  %v7482 = vunpack.c.l.b16 %v7194
  %v7483 = vunpack.c.l.b16 %v7195
  %v7484 = vunpack.c.l.b16 %v7196
  %v7485 = vunpack.c.l.b16 %v7197
  %v7486 = vunpack.c.l.b16 %v7198
  %v7487 = vunpack.c.l.b16 %v7199
  %v7488 = vunpack.c.l.b16 %v7200
  %v7489 = vunpack.c.l.b16 %v7201
  %v7490 = vunpack.c.l.b16 %v7202
  %v7491 = vunpack.c.l.b16 %v7203
  %v7492 = vunpack.c.l.b16 %v7204
  %v7493 = vunpack.c.l.b16 %v7205
  %v7494 = vunpack.c.l.b16 %v7206
  %v7495 = vunpack.c.l.b16 %v7207
  %v7496 = vunpack.c.l.b16 %v7208
  %v7497 = vunpack.c.l.b16 %v7209
  %v7498 = vunpack.c.l.b16 %v7210
  %v7499 = vunpack.c.l.b16 %v7211
  %v7500 = vunpack.c.l.b16 %v7212
  %v7501 = vunpack.c.l.b16 %v7213
  %v7502 = vunpack.c.l.b16 %v7214
  %v7503 = vunpack.c.l.b16 %v7215
  %v7504 = vunpack.c.l.b16 %v7216
  %v7505 = vunpack.c.l.b16 %v7217
  %v7506 = vunpack.c.l.b16 %v7218
  %v7507 = vunpack.c.l.b16 %v7219
  %v7508 = vunpack.c.l.b16 %v7220
  %v7509 = vunpack.c.l.b16 %v7221
  %v7510 = vunpack.c.l.b16 %v7222
  %v7511 = vunpack.c.l.b16 %v7223
  %v7512 = vunpack.c.l.b16 %v7224
  %v7513 = vunpack.c.l.b16 %v7225
  %v7514 = vunpack.c.l.b16 %v7226
  %v7515 = vunpack.c.l.b16 %v7227
  %v7516 = vunpack.c.l.b16 %v7228
  %v7517 = vunpack.c.l.b16 %v7229
  %v7518 = vunpack.c.l.b16 %v7230
  %v7519 = vunpack.c.l.b16 %v7231
  %v7520 = vunpack.c.l.b16 %v7232
  %v7521 = vunpack.c.l.b16 %v7233
  %v7522 = vunpack.c.l.b16 %v7234
  %v7523 = vunpack.c.l.b16 %v7235
  %v7524 = vunpack.c.l.b16 %v7236
  %v7525 = vunpack.c.l.b16 %v7237
  %v7526 = vunpack.c.l.b16 %v7238
  %v7527 = vunpack.c.l.b16 %v7239
  %v7528 = vunpack.c.l.b16 %v7240
  %v7529 = vunpack.c.l.b16 %v7241
  %v7530 = vunpack.c.l.b16 %v7242
  %v7531 = vunpack.c.l.b16 %v7243
  %v7532 = vunpack.c.l.b16 %v7244
  %v7533 = vunpack.c.l.b16 %v7245
  %v7534 = vunpack.c.l.b16 %v7246
  %v7535 = vunpack.c.l.b16 %v7247
  %v7536 = vunpack.c.l.b16 %v7248
  %v7537 = vunpack.c.l.b16 %v7249
  %v7538 = vunpack.c.l.b16 %v7250
  %v7539 = vunpack.c.l.b16 %v7251
  %v7540 = vunpack.c.l.b16 %v7252
  %v7541 = vunpack.c.l.b16 %v7253
  %v7542 = vunpack.c.l.b16 %v7254
  %v7543 = vunpack.c.l.b16 %v7255
  %v7544 = vunpack.c.l.b16 %v7256
  %v7545 = vunpack.c.l.b16 %v7257
  %v7546 = vunpack.c.l.b16 %v7258
  %v7547 = vunpack.c.l.b16 %v7259
  %v7548 = vunpack.c.l.b16 %v7260
  %v7549 = vunpack.c.l.b16 %v7261
  %v7550 = vunpack.c.l.b16 %v7262
  %v7551 = vunpack.c.l.b16 %v7263
  %v7552 = vunpack.c.l.b16 %v7264
  %v7553 = vunpack.c.l.b16 %v7265
  %v7554 = vunpack.c.l.b16 %v7266
  %v7555 = vunpack.c.l.b16 %v7267
  %v7556 = vunpack.c.l.b16 %v7268
  %v7557 = vunpack.c.l.b16 %v7269
  %v7558 = vunpack.c.l.b16 %v7270
  %v7559 = vunpack.c.l.b16 %v7271
  %v7560 = vunpack.c.l.b16 %v7272
  %v7561 = vunpack.c.l.b16 %v7273
  %v7562 = vunpack.c.l.b16 %v7274
  %v7563 = vunpack.c.l.b16 %v7275
  %v7564 = vunpack.c.l.b16 %v7276
  %v7565 = vunpack.c.l.b16 %v7277
  %v7566 = vunpack.c.l.b16 %v7278
  %v7567 = vunpack.c.l.b16 %v7279
  %v7568 = vunpack.c.l.b16 %v7280
  %v7569 = vunpack.c.l.b16 %v7281
  %v7570 = vunpack.c.l.b16 %v7282
  %v7571 = vunpack.c.l.b16 %v7283
  %v7572 = vunpack.c.l.b16 %v7284
  %v7573 = vpack.c.b16 %v7430, %v7429
  %v7574 = vpack.c.b16 %v7432, %v7431
  %v7575 = vpack.c.b16 %v7434, %v7433
  %v7576 = vpack.c.b16 %v7436, %v7435
  %v7577 = vpack.c.b16 %v7438, %v7437
  %v7578 = vpack.c.b16 %v7440, %v7439
  %v7579 = vpack.c.b16 %v7442, %v7441
  %v7580 = vpack.c.b16 %v7444, %v7443
  %v7581 = vpack.c.b16 %v7446, %v7445
  %v7582 = vpack.c.b16 %v7448, %v7447
  %v7583 = vpack.c.b16 %v7450, %v7449
  %v7584 = vpack.c.b16 %v7452, %v7451
  %v7585 = vpack.c.b16 %v7454, %v7453
  %v7586 = vpack.c.b16 %v7456, %v7455
  %v7587 = vpack.c.b16 %v7458, %v7457
  %v7588 = vpack.c.b16 %v7460, %v7459
  %v7589 = vpack.c.b16 %v7462, %v7461
  %v7590 = vpack.c.b16 %v7464, %v7463
  %v7591 = vpack.c.b16 %v7466, %v7465
  %v7592 = vpack.c.b16 %v7468, %v7467
  %v7593 = vpack.c.b16 %v7470, %v7469
  %v7594 = vpack.c.b16 %v7472, %v7471
  %v7595 = vpack.c.b16 %v7474, %v7473
  %v7596 = vpack.c.b16 %v7476, %v7475
  %v7597 = vpack.c.b16 %v7478, %v7477
  %v7598 = vpack.c.b16 %v7480, %v7479
  %v7599 = vpack.c.b16 %v7482, %v7481
  %v7600 = vpack.c.b16 %v7484, %v7483
  %v7601 = vpack.c.b16 %v7486, %v7485
  %v7602 = vpack.c.b16 %v7488, %v7487
  %v7603 = vpack.c.b16 %v7490, %v7489
  %v7604 = vpack.c.b16 %v7492, %v7491
  %v7605 = vpack.c.b16 %v7494, %v7493
  %v7606 = vpack.c.b16 %v7496, %v7495
  %v7607 = vpack.c.b16 %v7498, %v7497
  %v7608 = vpack.c.b16 %v7500, %v7499
  %v7609 = vpack.c.b16 %v7502, %v7501
  %v7610 = vpack.c.b16 %v7504, %v7503
  %v7611 = vpack.c.b16 %v7506, %v7505
  %v7612 = vpack.c.b16 %v7508, %v7507
  %v7613 = vpack.c.b16 %v7510, %v7509
  %v7614 = vpack.c.b16 %v7512, %v7511
  %v7615 = vpack.c.b16 %v7514, %v7513
  %v7616 = vpack.c.b16 %v7516, %v7515
  %v7617 = vpack.c.b16 %v7518, %v7517
  %v7618 = vpack.c.b16 %v7520, %v7519
  %v7619 = vpack.c.b16 %v7522, %v7521
  %v7620 = vpack.c.b16 %v7524, %v7523
  %v7621 = vpack.c.b16 %v7526, %v7525
  %v7622 = vpack.c.b16 %v7528, %v7527
  %v7623 = vpack.c.b16 %v7530, %v7529
  %v7624 = vpack.c.b16 %v7532, %v7531
  %v7625 = vpack.c.b16 %v7534, %v7533
  %v7626 = vpack.c.b16 %v7536, %v7535
  %v7627 = vpack.c.b16 %v7538, %v7537
  %v7628 = vpack.c.b16 %v7540, %v7539
  %v7629 = vpack.c.b16 %v7542, %v7541
  %v7630 = vpack.c.b16 %v7544, %v7543
  %v7631 = vpack.c.b16 %v7546, %v7545
  %v7632 = vpack.c.b16 %v7548, %v7547
  %v7633 = vpack.c.b16 %v7550, %v7549
  %v7634 = vpack.c.b16 %v7552, %v7551
  %v7635 = vpack.c.b16 %v7554, %v7553
  %v7636 = vpack.c.b16 %v7556, %v7555
  %v7637 = vpack.c.b16 %v7558, %v7557
  %v7638 = vpack.c.b16 %v7560, %v7559
  %v7639 = vpack.c.b16 %v7562, %v7561
  %v7640 = vpack.c.b16 %v7564, %v7563
  %v7641 = vpack.c.b16 %v7566, %v7565
  %v7642 = vpack.c.b16 %v7568, %v7567
  %v7643 = vpack.c.b16 %v7570, %v7569
  %v7644 = vpack.c.b16 %v7572, %v7571
  %7717 = vmatprep.subr.bf16.mxu0 0
  %7718 = vmatpush1.bf16.msra.mxu0 %v7573
  %7719 = vmatprep.subr.bf16.mxu0 0
  %7720 = vmatpush1.bf16.msra.mxu0 %v7574
  %7721 = vmatprep.subr.bf16.mxu0 0
  %7722 = vmatpush1.bf16.msra.mxu0 %v7575
  %7723 = vmatprep.subr.bf16.mxu0 0
  %7724 = vmatpush1.bf16.msra.mxu0 %v7576
  %7725 = vmatprep.subr.bf16.mxu0 0
  %7726 = vmatpush1.bf16.msra.mxu0 %v7577
  %7727 = vmatprep.subr.bf16.mxu0 0
  %7728 = vmatpush1.bf16.msra.mxu0 %v7578
  %7729 = vmatprep.subr.bf16.mxu0 0
  %7730 = vmatpush1.bf16.msra.mxu0 %v7579
  %7731 = vmatprep.subr.bf16.mxu0 0
  %7732 = vmatpush1.bf16.msra.mxu0 %v7580
  %7733 = vmatprep.subr.bf16.mxu0 0
  %7734 = vmatpush1.bf16.msra.mxu0 %v7581
  %7735 = vmatprep.subr.bf16.mxu0 0
  %7736 = vmatpush1.bf16.msra.mxu0 %v7582
  %7737 = vmatprep.subr.bf16.mxu0 0
  %7738 = vmatpush1.bf16.msra.mxu0 %v7583
  %7739 = vmatprep.subr.bf16.mxu0 0
  %7740 = vmatpush1.bf16.msra.mxu0 %v7584
  %7741 = vmatprep.subr.bf16.mxu0 0
  %7742 = vmatpush1.bf16.msra.mxu0 %v7585
  %7743 = vmatprep.subr.bf16.mxu0 0
  %7744 = vmatpush1.bf16.msra.mxu0 %v7586
  %7745 = vmatprep.subr.bf16.mxu0 0
  %7746 = vmatpush1.bf16.msra.mxu0 %v7587
  %7747 = vmatprep.subr.bf16.mxu0 0
  %7748 = vmatpush1.bf16.msra.mxu0 %v7588
  %7749 = vmatprep.mubr.bf16.mxu0 %v6318
  %7750 = vmatmul.mubr.bf16.gmra.mrb[0].mxu0 %v6317
  %v7751 = vpop.f32.mrb[0].mxu0
  %v7752 = vadd.f32 0.0, %v7751
  %v7753 = vpop.f32.mrb[0].mxu0
  %v7754 = vpop.f32.mrb[0].mxu0
  %v7755 = vadd.f32 0.0, %v7754
  %v7756 = vpop.f32.mrb[0].mxu0
  %7757 = vmatprep.mubr.bf16.mxu0 %v6327
  %7758 = vmatmul.mubr.bf16.gmra.mrb[0].mxu0 %v6326
  %v7759 = vpop.f32.mrb[0].mxu0
  %v7760 = vadd.f32 0.0, %v7759
  %v7761 = vpop.f32.mrb[0].mxu0
  %v7762 = vpop.f32.mrb[0].mxu0
  %v7763 = vadd.f32 0.0, %v7762
  %v7764 = vpop.f32.mrb[0].mxu0
  %7765 = vmatprep.mubr.bf16.mxu0 %v6336
  %7766 = vmatmul.mubr.bf16.gmra.mrb[0].mxu0 %v6335
  %v7767 = vpop.f32.mrb[0].mxu0
  %v7768 = vadd.f32 0.0, %v7767
  %v7769 = vpop.f32.mrb[0].mxu0
  %v7770 = vpop.f32.mrb[0].mxu0
  %v7771 = vadd.f32 0.0, %v7770
  %v7772 = vpop.f32.mrb[0].mxu0
  %7773 = vmatprep.mubr.bf16.mxu0 %v6345
  %7774 = vmatmul.mubr.bf16.gmra.mrb[0].mxu0 %v6344
  %v7775 = vpop.f32.mrb[0].mxu0
  %v7776 = vadd.f32 0.0, %v7775
  %v7777 = vpop.f32.mrb[0].mxu0
  %v7778 = vpop.f32.mrb[0].mxu0
  %v7779 = vpop.f32.mrb[0].mxu0
  %7780 = vdwg.mxu0
  %7781 = vmatprep.subr.bf16.mxu0 0
  %7782 = vmatpush1.bf16.msra.mxu0 %v7589
  %7783 = vmatprep.subr.bf16.mxu0 0
  %7784 = vmatpush1.bf16.msra.mxu0 %v7590
  %7785 = vmatprep.subr.bf16.mxu0 0
  %7786 = vmatpush1.bf16.msra.mxu0 %v7591
  %7787 = vmatprep.subr.bf16.mxu0 0
  %7788 = vmatpush1.bf16.msra.mxu0 %v7592
  %7789 = vmatprep.subr.bf16.mxu0 0
  %7790 = vmatpush1.bf16.msra.mxu0 %v7593
  %7791 = vmatprep.subr.bf16.mxu0 0
  %7792 = vmatpush1.bf16.msra.mxu0 %v7594
  %7793 = vmatprep.subr.bf16.mxu0 0
  %7794 = vmatpush1.bf16.msra.mxu0 %v7595
  %7795 = vmatprep.subr.bf16.mxu0 0
  %7796 = vmatpush1.bf16.msra.mxu0 %v7596
  %7797 = vmatprep.subr.bf16.mxu0 0
  %7798 = vmatpush1.bf16.msra.mxu0 %v7597
  %7799 = vmatprep.subr.bf16.mxu0 0
  %7800 = vmatpush1.bf16.msra.mxu0 %v7598
  %7801 = vmatprep.subr.bf16.mxu0 0
  %7802 = vmatpush1.bf16.msra.mxu0 %v7599
  %7803 = vmatprep.subr.bf16.mxu0 0
  %7804 = vmatpush1.bf16.msra.mxu0 %v7600
  %7805 = vmatprep.subr.bf16.mxu0 0
  %7806 = vmatpush1.bf16.msra.mxu0 %v7601
  %7807 = vmatprep.subr.bf16.mxu0 0
  %7808 = vmatpush1.bf16.msra.mxu0 %v7602
  %7809 = vmatprep.subr.bf16.mxu0 0
  %7810 = vmatpush1.bf16.msra.mxu0 %v7603
  %7811 = vmatprep.subr.bf16.mxu0 0
  %7812 = vmatpush1.bf16.msra.mxu0 %v7604
  %7813 = vmatprep.mubr.bf16.mxu0 %v6320
  %7814 = vmatmul.mubr.bf16.gmra.mrb[0].mxu0 %v6319
  %v7815 = vpop.f32.mrb[0].mxu0
  %v7816 = vadd.f32 %v7752, %v7815
  %v7817 = vpop.f32.mrb[0].mxu0
  %v7818 = vpop.f32.mrb[0].mxu0
  %v7819 = vadd.f32 %v7755, %v7818
  %v7820 = vpop.f32.mrb[0].mxu0
  %7821 = vmatprep.mubr.bf16.mxu0 %v6329
  %7822 = vmatmul.mubr.bf16.gmra.mrb[0].mxu0 %v6328
  %v7823 = vpop.f32.mrb[0].mxu0
  %v7824 = vadd.f32 %v7760, %v7823
  %v7825 = vpop.f32.mrb[0].mxu0
  %v7826 = vpop.f32.mrb[0].mxu0
  %v7827 = vadd.f32 %v7763, %v7826
  %v7828 = vpop.f32.mrb[0].mxu0
  %7829 = vmatprep.mubr.bf16.mxu0 %v6338
  %7830 = vmatmul.mubr.bf16.gmra.mrb[0].mxu0 %v6337
  %v7831 = vpop.f32.mrb[0].mxu0
  %v7832 = vadd.f32 %v7768, %v7831
  %v7833 = vpop.f32.mrb[0].mxu0
  %v7834 = vpop.f32.mrb[0].mxu0
  %v7835 = vadd.f32 %v7771, %v7834
  %v7836 = vpop.f32.mrb[0].mxu0
  %7837 = vmatprep.mubr.bf16.mxu0 %v6347
  %7838 = vmatmul.mubr.bf16.gmra.mrb[0].mxu0 %v6346
  %v7839 = vpop.f32.mrb[0].mxu0
  %v7840 = vadd.f32 %v7776, %v7839
  %v7841 = vpop.f32.mrb[0].mxu0
  %v7842 = vpop.f32.mrb[0].mxu0
  %v7843 = vpop.f32.mrb[0].mxu0
  %7844 = vdwg.mxu0
  %7845 = vmatprep.subr.bf16.mxu0 0
  %7846 = vmatpush1.bf16.msra.mxu0 %v7605
  %7847 = vmatprep.subr.bf16.mxu0 0
  %7848 = vmatpush1.bf16.msra.mxu0 %v7606
  %7849 = vmatprep.subr.bf16.mxu0 0
  %7850 = vmatpush1.bf16.msra.mxu0 %v7607
  %7851 = vmatprep.subr.bf16.mxu0 0
  %7852 = vmatpush1.bf16.msra.mxu0 %v7608
  %7853 = vmatprep.subr.bf16.mxu0 0
  %7854 = vmatpush1.bf16.msra.mxu0 %v7609
  %7855 = vmatprep.subr.bf16.mxu0 0
  %7856 = vmatpush1.bf16.msra.mxu0 %v7610
  %7857 = vmatprep.subr.bf16.mxu0 0
  %7858 = vmatpush1.bf16.msra.mxu0 %v7611
  %7859 = vmatprep.subr.bf16.mxu0 0
  %7860 = vmatpush1.bf16.msra.mxu0 %v7612
  %7861 = vmatprep.subr.bf16.mxu0 0
  %7862 = vmatpush1.bf16.msra.mxu0 %v7613
  %7863 = vmatprep.subr.bf16.mxu0 0
  %7864 = vmatpush1.bf16.msra.mxu0 %v7614
  %7865 = vmatprep.subr.bf16.mxu0 0
  %7866 = vmatpush1.bf16.msra.mxu0 %v7615
  %7867 = vmatprep.subr.bf16.mxu0 0
  %7868 = vmatpush1.bf16.msra.mxu0 %v7616
  %7869 = vmatprep.subr.bf16.mxu0 0
  %7870 = vmatpush1.bf16.msra.mxu0 %v7617
  %7871 = vmatprep.subr.bf16.mxu0 0
  %7872 = vmatpush1.bf16.msra.mxu0 %v7618
  %7873 = vmatprep.subr.bf16.mxu0 0
  %7874 = vmatpush1.bf16.msra.mxu0 %v7619
  %7875 = vmatprep.subr.bf16.mxu0 0
  %7876 = vmatpush1.bf16.msra.mxu0 %v7620
  %7877 = vmatprep.mubr.bf16.mxu0 %v6322
  %7878 = vmatmul.mubr.bf16.gmra.mrb[0].mxu0 %v6321
  %v7879 = vpop.f32.mrb[0].mxu0
  %v7880 = vadd.f32 %v7816, %v7879
  %v7881 = vpop.f32.mrb[0].mxu0
  %v7882 = vpop.f32.mrb[0].mxu0
  %v7883 = vadd.f32 %v7819, %v7882
  %v7884 = vpop.f32.mrb[0].mxu0
  %7885 = vmatprep.mubr.bf16.mxu0 %v6331
  %7886 = vmatmul.mubr.bf16.gmra.mrb[0].mxu0 %v6330
  %v7887 = vpop.f32.mrb[0].mxu0
  %v7888 = vadd.f32 %v7824, %v7887
  %v7889 = vpop.f32.mrb[0].mxu0
  %v7890 = vpop.f32.mrb[0].mxu0
  %v7891 = vadd.f32 %v7827, %v7890
  %v7892 = vpop.f32.mrb[0].mxu0
  %7893 = vmatprep.mubr.bf16.mxu0 %v6340
  %7894 = vmatmul.mubr.bf16.gmra.mrb[0].mxu0 %v6339
  %v7895 = vpop.f32.mrb[0].mxu0
  %v7896 = vadd.f32 %v7832, %v7895
  %v7897 = vpop.f32.mrb[0].mxu0
  %v7898 = vpop.f32.mrb[0].mxu0
  %v7899 = vadd.f32 %v7835, %v7898
  %v7900 = vpop.f32.mrb[0].mxu0
  %7901 = vmatprep.mubr.bf16.mxu0 %v6349
  %7902 = vmatmul.mubr.bf16.gmra.mrb[0].mxu0 %v6348
  %v7903 = vpop.f32.mrb[0].mxu0
  %v7904 = vadd.f32 %v7840, %v7903
  %v7905 = vpop.f32.mrb[0].mxu0
  %v7906 = vpop.f32.mrb[0].mxu0
  %v7907 = vpop.f32.mrb[0].mxu0
  %7908 = vdwg.mxu0
  %7909 = vmatprep.subr.bf16.mxu0 0
  %7910 = vmatpush1.bf16.msra.mxu0 %v7621
  %7911 = vmatprep.subr.bf16.mxu0 0
  %7912 = vmatpush1.bf16.msra.mxu0 %v7622
  %7913 = vmatprep.subr.bf16.mxu0 0
  %7914 = vmatpush1.bf16.msra.mxu0 %v7623
  %7915 = vmatprep.subr.bf16.mxu0 0
  %7916 = vmatpush1.bf16.msra.mxu0 %v7624
  %7917 = vmatprep.subr.bf16.mxu0 0
  %7918 = vmatpush1.bf16.msra.mxu0 %v7625
  %7919 = vmatprep.subr.bf16.mxu0 0
  %7920 = vmatpush1.bf16.msra.mxu0 %v7626
  %7921 = vmatprep.subr.bf16.mxu0 0
  %7922 = vmatpush1.bf16.msra.mxu0 %v7627
  %7923 = vmatprep.subr.bf16.mxu0 0
  %7924 = vmatpush1.bf16.msra.mxu0 %v7628
  %7925 = vmatprep.subr.bf16.mxu0 0
  %7926 = vmatpush1.bf16.msra.mxu0 %v7629
  %7927 = vmatprep.subr.bf16.mxu0 0
  %7928 = vmatpush1.bf16.msra.mxu0 %v7630
  %7929 = vmatprep.subr.bf16.mxu0 0
  %7930 = vmatpush1.bf16.msra.mxu0 %v7631
  %7931 = vmatprep.subr.bf16.mxu0 0
  %7932 = vmatpush1.bf16.msra.mxu0 %v7632
  %7933 = vmatprep.subr.bf16.mxu0 0
  %7934 = vmatpush1.bf16.msra.mxu0 %v7633
  %7935 = vmatprep.subr.bf16.mxu0 0
  %7936 = vmatpush1.bf16.msra.mxu0 %v7634
  %7937 = vmatprep.subr.bf16.mxu0 0
  %7938 = vmatpush1.bf16.msra.mxu0 %v7635
  %7939 = vmatprep.subr.bf16.mxu0 0
  %7940 = vmatpush1.bf16.msra.mxu0 %v7636
  %7941 = vmatprep.mubr.bf16.mxu0 %v6324
  %7942 = vmatmul.mubr.bf16.gmra.mrb[0].mxu0 %v6323
  %v7943 = vpop.f32.mrb[0].mxu0
  %v7944 = vadd.f32 %v7880, %v7943
  %v7945 = vpop.f32.mrb[0].mxu0
  %v7946 = vpop.f32.mrb[0].mxu0
  %v7947 = vadd.f32 %v7883, %v7946
  %v7948 = vpop.f32.mrb[0].mxu0
  %7949 = vmatprep.mubr.bf16.mxu0 %v6333
  %7950 = vmatmul.mubr.bf16.gmra.mrb[0].mxu0 %v6332
  %v7951 = vpop.f32.mrb[0].mxu0
  %v7952 = vadd.f32 %v7888, %v7951
  %v7953 = vpop.f32.mrb[0].mxu0
  %v7954 = vpop.f32.mrb[0].mxu0
  %v7955 = vadd.f32 %v7891, %v7954
  %v7956 = vpop.f32.mrb[0].mxu0
  %7957 = vmatprep.mubr.bf16.mxu0 %v6342
  %7958 = vmatmul.mubr.bf16.gmra.mrb[0].mxu0 %v6341
  %v7959 = vpop.f32.mrb[0].mxu0
  %v7960 = vadd.f32 %v7896, %v7959
  %v7961 = vpop.f32.mrb[0].mxu0
  %v7962 = vpop.f32.mrb[0].mxu0
  %v7963 = vadd.f32 %v7899, %v7962
  %v7964 = vpop.f32.mrb[0].mxu0
  %7965 = vmatprep.mubr.bf16.mxu0 %v6351
  %7966 = vmatmul.mubr.bf16.gmra.mrb[0].mxu0 %v6350
  %v7967 = vpop.f32.mrb[0].mxu0
  %v7968 = vadd.f32 %v7904, %v7967
  %v7969 = vpop.f32.mrb[0].mxu0
  %v7970 = vpop.f32.mrb[0].mxu0
  %v7971 = vpop.f32.mrb[0].mxu0
  %7972 = vdwg.mxu0
  %7973 = vmatprep.subr.bf16.mxu0 0
  %7974 = vmatpush1.bf16.msra.mxu0 %v7637
  %7975 = vmatprep.subr.bf16.mxu0 0
  %7976 = vmatpush1.bf16.msra.mxu0 %v7638
  %7977 = vmatprep.subr.bf16.mxu0 0
  %7978 = vmatpush1.bf16.msra.mxu0 %v7639
  %7979 = vmatprep.subr.bf16.mxu0 0
  %7980 = vmatpush1.bf16.msra.mxu0 %v7640
  %7981 = vmatprep.subr.bf16.mxu0 0
  %7982 = vmatpush1.bf16.msra.mxu0 %v7641
  %7983 = vmatprep.subr.bf16.mxu0 0
  %7984 = vmatpush1.bf16.msra.mxu0 %v7642
  %7985 = vmatprep.subr.bf16.mxu0 0
  %7986 = vmatpush1.bf16.msra.mxu0 %v7643
  %7987 = vmatprep.subr.bf16.mxu0 0
  %7988 = vmatpush1.bf16.msra.mxu0 %v7644
  %7989 = vmatprep.subr.bf16.mxu0 0
  %7990 = vmatpush1.bf16.msra.mxu0 0
  %7991 = vmatprep.subr.bf16.mxu0 0
  %7992 = vmatpush1.bf16.msra.mxu0 0
  %7993 = vmatprep.subr.bf16.mxu0 0
  %7994 = vmatpush1.bf16.msra.mxu0 0
  %7995 = vmatprep.subr.bf16.mxu0 0
  %7996 = vmatpush1.bf16.msra.mxu0 0
  %7997 = vmatprep.subr.bf16.mxu0 0
  %7998 = vmatpush1.bf16.msra.mxu0 0
  %7999 = vmatprep.subr.bf16.mxu0 0
  %8000 = vmatpush1.bf16.msra.mxu0 0
  %8001 = vmatprep.subr.bf16.mxu0 0
  %8002 = vmatpush1.bf16.msra.mxu0 0
  %8003 = vmatprep.subr.bf16.mxu0 0
  %8004 = vmatpush1.bf16.msra.mxu0 0
  %8005 = vmatprep.mubr.bf16.mxu0 0
  %8006 = vmatmul.mubr.bf16.gmra.mrb[0].mxu0 %v6325
  %v8007 = vpop.f32.mrb[0].mxu0
  %v8008 = vadd.f32 %v7944, %v8007
  %v8009 = vpop.f32.mrb[0].mxu0
  %v8010 = vpop.f32.mrb[0].mxu0
  %v8011 = vadd.f32 %v7947, %v8010
  %v8012 = vpop.f32.mrb[0].mxu0
  %8013 = vmatprep.mubr.bf16.mxu0 0
  %8014 = vmatmul.mubr.bf16.gmra.mrb[0].mxu0 %v6334
  %v8015 = vpop.f32.mrb[0].mxu0
  %v8016 = vadd.f32 %v7952, %v8015
  %v8017 = vpop.f32.mrb[0].mxu0
  %v8018 = vpop.f32.mrb[0].mxu0
  %v8019 = vadd.f32 %v7955, %v8018
  %v8020 = vpop.f32.mrb[0].mxu0
  %8021 = vmatprep.mubr.bf16.mxu0 0
  %8022 = vmatmul.mubr.bf16.gmra.mrb[0].mxu0 %v6343
  %v8023 = vpop.f32.mrb[0].mxu0
  %v8024 = vadd.f32 %v7960, %v8023
  %v8025 = vpop.f32.mrb[0].mxu0
  %v8026 = vpop.f32.mrb[0].mxu0
  %v8027 = vadd.f32 %v7963, %v8026
  %v8028 = vpop.f32.mrb[0].mxu0
  %8029 = vmatprep.mubr.bf16.mxu0 0
  %8030 = vmatmul.mubr.bf16.gmra.mrb[0].mxu0 %v6352
  %v8031 = vpop.f32.mrb[0].mxu0
  %v8032 = vadd.f32 %v7968, %v8031
  %v8033 = vpop.f32.mrb[0].mxu0
  %v8034 = vpop.f32.mrb[0].mxu0
  %v8035 = vpop.f32.mrb[0].mxu0
  %8036 = vdwg.mxu0
  %v8037 = vmax.f32 %v7112, %v8008
  %v8038 = vmax.f32 %v7115, %v8011
  %v8039 = vmax.f32 %v7120, %v8016
  %v8040 = vmax.f32 %v7123, %v8019
  %v8041 = vmax.f32 %v7128, %v8024
  %v8042 = vmax.f32 %v7131, %v8027
  %v8043 = vmax.f32 %v7136, %v8032
  %v8044 = vld [vmem:[%s3195] sm:$0xf]
  %v8045 = vld [vmem:[%s3195 + $0x4] sm:$0xf]
  %v8046 = vld [vmem:[%s3195 + $0x8] sm:$0xf]
  %v8047 = vld [vmem:[%s3195 + $0xc] sm:$0xf]
  %v8048 = vld [vmem:[%s3195 + $0x10] sm:$0xf]
  %v8049 = vld [vmem:[%s3195 + $0x14] sm:$0xf]
  %v8050 = vld [vmem:[%s3195 + $0x18] sm:$0xf]
  %v8051 = vld [vmem:[%s3195 + $0x1c] sm:$0xf]
  %v8052 = vld [vmem:[%s3195 + $0x20] sm:$0xf]
  %v8053 = vld [vmem:[%s3195 + $0x24] sm:$0xf]
  %v8054 = vld [vmem:[%s3195 + $0x28] sm:$0xf]
  %v8055 = vld [vmem:[%s3195 + $0x2c] sm:$0xf]
  %v8056 = vld [vmem:[%s3195 + $0x30] sm:$0xf]
  %v8057 = vld [vmem:[%s3195 + $0x34] sm:$0xf]
  %v8058 = vld [vmem:[%s3195 + $0x38] sm:$0xf]
  %v8059 = vld [vmem:[%s3195 + $0x3c] sm:$0xf]
  %v8060 = vld [vmem:[%s3195 + $0x40] sm:$0xf]
  %v8061 = vld [vmem:[%s3195 + $0x44] sm:$0xf]
  %v8062 = vld [vmem:[%s3195 + $0x48] sm:$0xf]
  %v8063 = vld [vmem:[%s3195 + $0x4c] sm:$0xf]
  %v8064 = vld [vmem:[%s3195 + $0x50] sm:$0xf]
  %v8065 = vld [vmem:[%s3195 + $0x54] sm:$0xf]
  %v8066 = vld [vmem:[%s3195 + $0x58] sm:$0xf]
  %v8067 = vld [vmem:[%s3195 + $0x5c] sm:$0xf]
  %v8068 = vld [vmem:[%s3195 + $0x60] sm:$0xf]
  %v8069 = vld [vmem:[%s3195 + $0x64] sm:$0xf]
  %v8070 = vld [vmem:[%s3195 + $0x68] sm:$0xf]
  %v8071 = vld [vmem:[%s3195 + $0x6c] sm:$0xf]
  %v8072 = vld [vmem:[%s3195 + $0x70] sm:$0xf]
  %v8073 = vld [vmem:[%s3195 + $0x74] sm:$0xf]
  %v8074 = vld [vmem:[%s3195 + $0x78] sm:$0xf]
  %v8075 = vld [vmem:[%s3195 + $0x7c] sm:$0xf]
  %v8076 = vld [vmem:[%s3195 + $0x80] sm:$0xf]
  %v8077 = vld [vmem:[%s3195 + $0x84] sm:$0xf]
  %v8078 = vld [vmem:[%s3195 + $0x88] sm:$0xf]
  %v8079 = vld [vmem:[%s3195 + $0x8c] sm:$0xf]
  %v8080 = vld [vmem:[%s3195 + $0x90] sm:$0xf]
  %v8081 = vld [vmem:[%s3195 + $0x94] sm:$0xf]
  %v8082 = vld [vmem:[%s3195 + $0x98] sm:$0xf]
  %v8083 = vld [vmem:[%s3195 + $0x9c] sm:$0xf]
  %v8084 = vld [vmem:[%s3195 + $0xa0] sm:$0xf]
  %v8085 = vld [vmem:[%s3195 + $0xa4] sm:$0xf]
  %v8086 = vld [vmem:[%s3195 + $0xa8] sm:$0xf]
  %v8087 = vld [vmem:[%s3195 + $0xac] sm:$0xf]
  %v8088 = vld [vmem:[%s3195 + $0xb0] sm:$0xf]
  %v8089 = vld [vmem:[%s3195 + $0xb4] sm:$0xf]
  %v8090 = vld [vmem:[%s3195 + $0xb8] sm:$0xf]
  %v8091 = vld [vmem:[%s3195 + $0xbc] sm:$0xf]
  %v8092 = vld [vmem:[%s3195 + $0xc0] sm:$0xf]
  %v8093 = vld [vmem:[%s3195 + $0xc4] sm:$0xf]
  %v8094 = vld [vmem:[%s3195 + $0xc8] sm:$0xf]
  %v8095 = vld [vmem:[%s3195 + $0xcc] sm:$0xf]
  %v8096 = vld [vmem:[%s3195 + $0xd0] sm:$0xf]
  %v8097 = vld [vmem:[%s3195 + $0xd4] sm:$0xf]
  %v8098 = vld [vmem:[%s3195 + $0xd8] sm:$0xf]
  %v8099 = vld [vmem:[%s3195 + $0xdc] sm:$0xf]
  %v8100 = vld [vmem:[%s3195 + $0xe0] sm:$0xf]
  %v8101 = vld [vmem:[%s3195 + $0xe4] sm:$0xf]
  %v8102 = vld [vmem:[%s3195 + $0xe8] sm:$0xf]
  %v8103 = vld [vmem:[%s3195 + $0xec] sm:$0xf]
  %v8104 = vld [vmem:[%s3195 + $0xf0] sm:$0xf]
  %v8105 = vld [vmem:[%s3195 + $0xf4] sm:$0xf]
  %v8106 = vld [vmem:[%s3195 + $0xf8] sm:$0xf]
  %v8107 = vld [vmem:[%s3195 + $0xfc] sm:$0xf]
  %v8108 = vld [vmem:[%s3195 + $0x100] sm:$0xf]
  %v8109 = vld [vmem:[%s3195 + $0x104] sm:$0xf]
  %v8110 = vld [vmem:[%s3195 + $0x108] sm:$0xf]
  %v8111 = vld [vmem:[%s3195 + $0x10c] sm:$0xf]
  %v8112 = vld [vmem:[%s3195 + $0x110] sm:$0xf]
  %v8113 = vld [vmem:[%s3195 + $0x114] sm:$0xf]
  %v8114 = vld [vmem:[%s3195 + $0x118] sm:$0xf]
  %v8115 = vld [vmem:[%s3195 + $0x11c] sm:$0xf]
  %v8116 = vld [vmem:[%s3195 + $0x120] sm:$0xf]
  %v8117 = vld [vmem:[%s3195 + $0x124] sm:$0xf]
  %v8118 = vld [vmem:[%s3195 + $0x128] sm:$0xf]
  %v8119 = vld [vmem:[%s3195 + $0x12c] sm:$0xf]
  %v8120 = vld [vmem:[%s3195 + $0x130] sm:$0xf]
  %v8121 = vld [vmem:[%s3195 + $0x134] sm:$0xf]
  %v8122 = vld [vmem:[%s3195 + $0x138] sm:$0xf]
  %v8123 = vld [vmem:[%s3195 + $0x13c] sm:$0xf]
  %v8124 = vld [vmem:[%s3195 + $0x140] sm:$0xf]
  %v8125 = vld [vmem:[%s3195 + $0x144] sm:$0xf]
  %v8126 = vld [vmem:[%s3195 + $0x148] sm:$0xf]
  %v8127 = vld [vmem:[%s3195 + $0x14c] sm:$0xf]
  %v8128 = vld [vmem:[%s3195 + $0x150] sm:$0xf]
  %v8129 = vld [vmem:[%s3195 + $0x154] sm:$0xf]
  %v8130 = vld [vmem:[%s3195 + $0x158] sm:$0xf]
  %v8131 = vld [vmem:[%s3195 + $0x15c] sm:$0xf]
  %v8132 = vld [vmem:[%s3195 + $0x160] sm:$0xf]
  %v8133 = vld [vmem:[%s3195 + $0x164] sm:$0xf]
  %v8134 = vld [vmem:[%s3195 + $0x168] sm:$0xf]
  %v8135 = vld [vmem:[%s3195 + $0x16c] sm:$0xf]
  %v8136 = vld [vmem:[%s3195 + $0x170] sm:$0xf]
  %v8137 = vld [vmem:[%s3195 + $0x174] sm:$0xf]
  %v8138 = vld [vmem:[%s3195 + $0x178] sm:$0xf]
  %v8139 = vld [vmem:[%s3195 + $0x17c] sm:$0xf]
  %v8140 = vld [vmem:[%s3195 + $0x180] sm:$0xf]
  %v8141 = vld [vmem:[%s3195 + $0x184] sm:$0xf]
  %v8142 = vld [vmem:[%s3195 + $0x188] sm:$0xf]
  %v8143 = vld [vmem:[%s3195 + $0x18c] sm:$0xf]
  %v8144 = vld [vmem:[%s3195 + $0x190] sm:$0xf]
  %v8145 = vld [vmem:[%s3195 + $0x194] sm:$0xf]
  %v8146 = vld [vmem:[%s3195 + $0x198] sm:$0xf]
  %v8147 = vld [vmem:[%s3195 + $0x19c] sm:$0xf]
  %v8148 = vld [vmem:[%s3195 + $0x1a0] sm:$0xf]
  %v8149 = vld [vmem:[%s3195 + $0x1a4] sm:$0xf]
  %v8150 = vld [vmem:[%s3195 + $0x1a8] sm:$0xf]
  %v8151 = vld [vmem:[%s3195 + $0x1ac] sm:$0xf]
  %v8152 = vld [vmem:[%s3195 + $0x1b0] sm:$0xf]
  %v8153 = vld [vmem:[%s3195 + $0x1b4] sm:$0xf]
  %v8154 = vld [vmem:[%s3195 + $0x1b8] sm:$0xf]
  %v8155 = vld [vmem:[%s3195 + $0x1bc] sm:$0xf]
  %v8156 = vld [vmem:[%s3195 + $0x1c0] sm:$0xf]
  %v8157 = vld [vmem:[%s3195 + $0x1c4] sm:$0xf]
  %v8158 = vld [vmem:[%s3195 + $0x1c8] sm:$0xf]
  %v8159 = vld [vmem:[%s3195 + $0x1cc] sm:$0xf]
  %v8160 = vld [vmem:[%s3195 + $0x1d0] sm:$0xf]
  %v8161 = vld [vmem:[%s3195 + $0x1d4] sm:$0xf]
  %v8162 = vld [vmem:[%s3195 + $0x1d8] sm:$0xf]
  %v8163 = vld [vmem:[%s3195 + $0x1dc] sm:$0xf]
  %v8164 = vld [vmem:[%s3195 + $0x1e0] sm:$0xf]
  %v8165 = vld [vmem:[%s3195 + $0x1e4] sm:$0xf]
  %v8166 = vld [vmem:[%s3195 + $0x1e8] sm:$0xf]
  %v8167 = vld [vmem:[%s3195 + $0x1ec] sm:$0xf]
  %v8168 = vld [vmem:[%s3195 + $0x1f0] sm:$0xf]
  %v8169 = vld [vmem:[%s3195 + $0x1f4] sm:$0xf]
  %v8170 = vld [vmem:[%s3195 + $0x1f8] sm:$0xf]
  %v8171 = vld [vmem:[%s3195 + $0x1fc] sm:$0xf]
  %v8172 = vld [vmem:[%s3195 + $0x200] sm:$0xf]
  %v8173 = vld [vmem:[%s3195 + $0x204] sm:$0xf]
  %v8174 = vld [vmem:[%s3195 + $0x208] sm:$0xf]
  %v8175 = vld [vmem:[%s3195 + $0x20c] sm:$0xf]
  %v8176 = vld [vmem:[%s3195 + $0x210] sm:$0xf]
  %v8177 = vld [vmem:[%s3195 + $0x214] sm:$0xf]
  %v8178 = vld [vmem:[%s3195 + $0x218] sm:$0xf]
  %v8179 = vld [vmem:[%s3195 + $0x21c] sm:$0xf]
  %v8180 = vld [vmem:[%s3195 + $0x220] sm:$0xf]
  %v8181 = vld [vmem:[%s3195 + $0x224] sm:$0xf]
  %v8182 = vld [vmem:[%s3195 + $0x228] sm:$0xf]
  %v8183 = vld [vmem:[%s3195 + $0x22c] sm:$0xf]
  %v8184 = vld [vmem:[%s3195 + $0x230] sm:$0xf]
  %v8185 = vld [vmem:[%s3195 + $0x234] sm:$0xf]
  %v8186 = vld [vmem:[%s3195 + $0x238] sm:$0xf]
  %v8187 = vld [vmem:[%s3195 + $0x23c] sm:$0xf]
  %v8332 = vunpack.c.l.b16 %v8044
  %v8333 = vunpack.c.l.b16 %v8045
  %v8334 = vunpack.c.l.b16 %v8046
  %v8335 = vunpack.c.l.b16 %v8047
  %v8336 = vunpack.c.l.b16 %v8048
  %v8337 = vunpack.c.l.b16 %v8049
  %v8338 = vunpack.c.l.b16 %v8050
  %v8339 = vunpack.c.l.b16 %v8051
  %v8340 = vunpack.c.l.b16 %v8052
  %v8341 = vunpack.c.l.b16 %v8053
  %v8342 = vunpack.c.l.b16 %v8054
  %v8343 = vunpack.c.l.b16 %v8055
  %v8344 = vunpack.c.l.b16 %v8056
  %v8345 = vunpack.c.l.b16 %v8057
  %v8346 = vunpack.c.l.b16 %v8058
  %v8347 = vunpack.c.l.b16 %v8059
  %v8348 = vunpack.c.l.b16 %v8060
  %v8349 = vunpack.c.l.b16 %v8061
  %v8350 = vunpack.c.l.b16 %v8062
  %v8351 = vunpack.c.l.b16 %v8063
  %v8352 = vunpack.c.l.b16 %v8064
  %v8353 = vunpack.c.l.b16 %v8065
  %v8354 = vunpack.c.l.b16 %v8066
  %v8355 = vunpack.c.l.b16 %v8067
  %v8356 = vunpack.c.l.b16 %v8068
  %v8357 = vunpack.c.l.b16 %v8069
  %v8358 = vunpack.c.l.b16 %v8070
  %v8359 = vunpack.c.l.b16 %v8071
  %v8360 = vunpack.c.l.b16 %v8072
  %v8361 = vunpack.c.l.b16 %v8073
  %v8362 = vunpack.c.l.b16 %v8074
  %v8363 = vunpack.c.l.b16 %v8075
  %v8364 = vunpack.c.l.b16 %v8076
  %v8365 = vunpack.c.l.b16 %v8077
  %v8366 = vunpack.c.l.b16 %v8078
  %v8367 = vunpack.c.l.b16 %v8079
  %v8368 = vunpack.c.l.b16 %v8080
  %v8369 = vunpack.c.l.b16 %v8081
  %v8370 = vunpack.c.l.b16 %v8082
  %v8371 = vunpack.c.l.b16 %v8083
  %v8372 = vunpack.c.l.b16 %v8084
  %v8373 = vunpack.c.l.b16 %v8085
  %v8374 = vunpack.c.l.b16 %v8086
  %v8375 = vunpack.c.l.b16 %v8087
  %v8376 = vunpack.c.l.b16 %v8088
  %v8377 = vunpack.c.l.b16 %v8089
  %v8378 = vunpack.c.l.b16 %v8090
  %v8379 = vunpack.c.l.b16 %v8091
  %v8380 = vunpack.c.l.b16 %v8092
  %v8381 = vunpack.c.l.b16 %v8093
  %v8382 = vunpack.c.l.b16 %v8094
  %v8383 = vunpack.c.l.b16 %v8095
  %v8384 = vunpack.c.l.b16 %v8096
  %v8385 = vunpack.c.l.b16 %v8097
  %v8386 = vunpack.c.l.b16 %v8098
  %v8387 = vunpack.c.l.b16 %v8099
  %v8388 = vunpack.c.l.b16 %v8100
  %v8389 = vunpack.c.l.b16 %v8101
  %v8390 = vunpack.c.l.b16 %v8102
  %v8391 = vunpack.c.l.b16 %v8103
  %v8392 = vunpack.c.l.b16 %v8104
  %v8393 = vunpack.c.l.b16 %v8105
  %v8394 = vunpack.c.l.b16 %v8106
  %v8395 = vunpack.c.l.b16 %v8107
  %v8396 = vunpack.c.l.b16 %v8108
  %v8397 = vunpack.c.l.b16 %v8109
  %v8398 = vunpack.c.l.b16 %v8110
  %v8399 = vunpack.c.l.b16 %v8111
  %v8400 = vunpack.c.l.b16 %v8112
  %v8401 = vunpack.c.l.b16 %v8113
  %v8402 = vunpack.c.l.b16 %v8114
  %v8403 = vunpack.c.l.b16 %v8115
  %v8404 = vunpack.c.l.b16 %v8116
  %v8405 = vunpack.c.l.b16 %v8117
  %v8406 = vunpack.c.l.b16 %v8118
  %v8407 = vunpack.c.l.b16 %v8119
  %v8408 = vunpack.c.l.b16 %v8120
  %v8409 = vunpack.c.l.b16 %v8121
  %v8410 = vunpack.c.l.b16 %v8122
  %v8411 = vunpack.c.l.b16 %v8123
  %v8412 = vunpack.c.l.b16 %v8124
  %v8413 = vunpack.c.l.b16 %v8125
  %v8414 = vunpack.c.l.b16 %v8126
  %v8415 = vunpack.c.l.b16 %v8127
  %v8416 = vunpack.c.l.b16 %v8128
  %v8417 = vunpack.c.l.b16 %v8129
  %v8418 = vunpack.c.l.b16 %v8130
  %v8419 = vunpack.c.l.b16 %v8131
  %v8420 = vunpack.c.l.b16 %v8132
  %v8421 = vunpack.c.l.b16 %v8133
  %v8422 = vunpack.c.l.b16 %v8134
  %v8423 = vunpack.c.l.b16 %v8135
  %v8424 = vunpack.c.l.b16 %v8136
  %v8425 = vunpack.c.l.b16 %v8137
  %v8426 = vunpack.c.l.b16 %v8138
  %v8427 = vunpack.c.l.b16 %v8139
  %v8428 = vunpack.c.l.b16 %v8140
  %v8429 = vunpack.c.l.b16 %v8141
  %v8430 = vunpack.c.l.b16 %v8142
  %v8431 = vunpack.c.l.b16 %v8143
  %v8432 = vunpack.c.l.b16 %v8144
  %v8433 = vunpack.c.l.b16 %v8145
  %v8434 = vunpack.c.l.b16 %v8146
  %v8435 = vunpack.c.l.b16 %v8147
  %v8436 = vunpack.c.l.b16 %v8148
  %v8437 = vunpack.c.l.b16 %v8149
  %v8438 = vunpack.c.l.b16 %v8150
  %v8439 = vunpack.c.l.b16 %v8151
  %v8440 = vunpack.c.l.b16 %v8152
  %v8441 = vunpack.c.l.b16 %v8153
  %v8442 = vunpack.c.l.b16 %v8154
  %v8443 = vunpack.c.l.b16 %v8155
  %v8444 = vunpack.c.l.b16 %v8156
  %v8445 = vunpack.c.l.b16 %v8157
  %v8446 = vunpack.c.l.b16 %v8158
  %v8447 = vunpack.c.l.b16 %v8159
  %v8448 = vunpack.c.l.b16 %v8160
  %v8449 = vunpack.c.l.b16 %v8161
  %v8450 = vunpack.c.l.b16 %v8162
  %v8451 = vunpack.c.l.b16 %v8163
  %v8452 = vunpack.c.l.b16 %v8164
  %v8453 = vunpack.c.l.b16 %v8165
  %v8454 = vunpack.c.l.b16 %v8166
  %v8455 = vunpack.c.l.b16 %v8167
  %v8456 = vunpack.c.l.b16 %v8168
  %v8457 = vunpack.c.l.b16 %v8169
  %v8458 = vunpack.c.l.b16 %v8170
  %v8459 = vunpack.c.l.b16 %v8171
  %v8460 = vunpack.c.l.b16 %v8172
  %v8461 = vunpack.c.l.b16 %v8173
  %v8462 = vunpack.c.l.b16 %v8174
  %v8463 = vunpack.c.l.b16 %v8175
  %v8464 = vunpack.c.l.b16 %v8176
  %v8465 = vunpack.c.l.b16 %v8177
  %v8466 = vunpack.c.l.b16 %v8178
  %v8467 = vunpack.c.l.b16 %v8179
  %v8468 = vunpack.c.l.b16 %v8180
  %v8469 = vunpack.c.l.b16 %v8181
  %v8470 = vunpack.c.l.b16 %v8182
  %v8471 = vunpack.c.l.b16 %v8183
  %v8472 = vunpack.c.l.b16 %v8184
  %v8473 = vunpack.c.l.b16 %v8185
  %v8474 = vunpack.c.l.b16 %v8186
  %v8475 = vunpack.c.l.b16 %v8187
  %v8476 = vpack.c.b16 %v8333, %v8332
  %v8477 = vpack.c.b16 %v8335, %v8334
  %v8478 = vpack.c.b16 %v8337, %v8336
  %v8479 = vpack.c.b16 %v8339, %v8338
  %v8480 = vpack.c.b16 %v8341, %v8340
  %v8481 = vpack.c.b16 %v8343, %v8342
  %v8482 = vpack.c.b16 %v8345, %v8344
  %v8483 = vpack.c.b16 %v8347, %v8346
  %v8484 = vpack.c.b16 %v8349, %v8348
  %v8485 = vpack.c.b16 %v8351, %v8350
  %v8486 = vpack.c.b16 %v8353, %v8352
  %v8487 = vpack.c.b16 %v8355, %v8354
  %v8488 = vpack.c.b16 %v8357, %v8356
  %v8489 = vpack.c.b16 %v8359, %v8358
  %v8490 = vpack.c.b16 %v8361, %v8360
  %v8491 = vpack.c.b16 %v8363, %v8362
  %v8492 = vpack.c.b16 %v8365, %v8364
  %v8493 = vpack.c.b16 %v8367, %v8366
  %v8494 = vpack.c.b16 %v8369, %v8368
  %v8495 = vpack.c.b16 %v8371, %v8370
  %v8496 = vpack.c.b16 %v8373, %v8372
  %v8497 = vpack.c.b16 %v8375, %v8374
  %v8498 = vpack.c.b16 %v8377, %v8376
  %v8499 = vpack.c.b16 %v8379, %v8378
  %v8500 = vpack.c.b16 %v8381, %v8380
  %v8501 = vpack.c.b16 %v8383, %v8382
  %v8502 = vpack.c.b16 %v8385, %v8384
  %v8503 = vpack.c.b16 %v8387, %v8386
  %v8504 = vpack.c.b16 %v8389, %v8388
  %v8505 = vpack.c.b16 %v8391, %v8390
  %v8506 = vpack.c.b16 %v8393, %v8392
  %v8507 = vpack.c.b16 %v8395, %v8394
  %v8508 = vpack.c.b16 %v8397, %v8396
  %v8509 = vpack.c.b16 %v8399, %v8398
  %v8510 = vpack.c.b16 %v8401, %v8400
  %v8511 = vpack.c.b16 %v8403, %v8402
  %v8512 = vpack.c.b16 %v8405, %v8404
  %v8513 = vpack.c.b16 %v8407, %v8406
  %v8514 = vpack.c.b16 %v8409, %v8408
  %v8515 = vpack.c.b16 %v8411, %v8410
  %v8516 = vpack.c.b16 %v8413, %v8412
  %v8517 = vpack.c.b16 %v8415, %v8414
  %v8518 = vpack.c.b16 %v8417, %v8416
  %v8519 = vpack.c.b16 %v8419, %v8418
  %v8520 = vpack.c.b16 %v8421, %v8420
  %v8521 = vpack.c.b16 %v8423, %v8422
  %v8522 = vpack.c.b16 %v8425, %v8424
  %v8523 = vpack.c.b16 %v8427, %v8426
  %v8524 = vpack.c.b16 %v8429, %v8428
  %v8525 = vpack.c.b16 %v8431, %v8430
  %v8526 = vpack.c.b16 %v8433, %v8432
  %v8527 = vpack.c.b16 %v8435, %v8434
  %v8528 = vpack.c.b16 %v8437, %v8436
  %v8529 = vpack.c.b16 %v8439, %v8438
  %v8530 = vpack.c.b16 %v8441, %v8440
  %v8531 = vpack.c.b16 %v8443, %v8442
  %v8532 = vpack.c.b16 %v8445, %v8444
  %v8533 = vpack.c.b16 %v8447, %v8446
  %v8534 = vpack.c.b16 %v8449, %v8448
  %v8535 = vpack.c.b16 %v8451, %v8450
  %v8536 = vpack.c.b16 %v8453, %v8452
  %v8537 = vpack.c.b16 %v8455, %v8454
  %v8538 = vpack.c.b16 %v8457, %v8456
  %v8539 = vpack.c.b16 %v8459, %v8458
  %v8540 = vpack.c.b16 %v8461, %v8460
  %v8541 = vpack.c.b16 %v8463, %v8462
  %v8542 = vpack.c.b16 %v8465, %v8464
  %v8543 = vpack.c.b16 %v8467, %v8466
  %v8544 = vpack.c.b16 %v8469, %v8468
  %v8545 = vpack.c.b16 %v8471, %v8470
  %v8546 = vpack.c.b16 %v8473, %v8472
  %v8547 = vpack.c.b16 %v8475, %v8474
  %8620 = vmatprep.subr.bf16.mxu0 0
  %8621 = vmatpush1.bf16.msra.mxu0 %v8476
  %8622 = vmatprep.subr.bf16.mxu0 0
  %8623 = vmatpush1.bf16.msra.mxu0 %v8477
  %8624 = vmatprep.subr.bf16.mxu0 0
  %8625 = vmatpush1.bf16.msra.mxu0 %v8478
  %8626 = vmatprep.subr.bf16.mxu0 0
  %8627 = vmatpush1.bf16.msra.mxu0 %v8479
  %8628 = vmatprep.subr.bf16.mxu0 0
  %8629 = vmatpush1.bf16.msra.mxu0 %v8480
  %8630 = vmatprep.subr.bf16.mxu0 0
  %8631 = vmatpush1.bf16.msra.mxu0 %v8481
  %8632 = vmatprep.subr.bf16.mxu0 0
  %8633 = vmatpush1.bf16.msra.mxu0 %v8482
  %8634 = vmatprep.subr.bf16.mxu0 0
  %8635 = vmatpush1.bf16.msra.mxu0 %v8483
  %8636 = vmatprep.subr.bf16.mxu0 0
  %8637 = vmatpush1.bf16.msra.mxu0 %v8484
  %8638 = vmatprep.subr.bf16.mxu0 0
  %8639 = vmatpush1.bf16.msra.mxu0 %v8485
  %8640 = vmatprep.subr.bf16.mxu0 0
  %8641 = vmatpush1.bf16.msra.mxu0 %v8486
  %8642 = vmatprep.subr.bf16.mxu0 0
  %8643 = vmatpush1.bf16.msra.mxu0 %v8487
  %8644 = vmatprep.subr.bf16.mxu0 0
  %8645 = vmatpush1.bf16.msra.mxu0 %v8488
  %8646 = vmatprep.subr.bf16.mxu0 0
  %8647 = vmatpush1.bf16.msra.mxu0 %v8489
  %8648 = vmatprep.subr.bf16.mxu0 0
  %8649 = vmatpush1.bf16.msra.mxu0 %v8490
  %8650 = vmatprep.subr.bf16.mxu0 0
  %8651 = vmatpush1.bf16.msra.mxu0 %v8491
  %8652 = vmatprep.mubr.bf16.mxu0 %v6318
  %8653 = vmatmul.mubr.bf16.gmra.mrb[0].mxu0 %v6317
  %v8654 = vpop.f32.mrb[0].mxu0
  %v8655 = vadd.f32 0.0, %v8654
  %v8656 = vpop.f32.mrb[0].mxu0
  %v8657 = vpop.f32.mrb[0].mxu0
  %v8658 = vadd.f32 0.0, %v8657
  %v8659 = vpop.f32.mrb[0].mxu0
  %8660 = vmatprep.mubr.bf16.mxu0 %v6327
  %8661 = vmatmul.mubr.bf16.gmra.mrb[0].mxu0 %v6326
  %v8662 = vpop.f32.mrb[0].mxu0
  %v8663 = vadd.f32 0.0, %v8662
  %v8664 = vpop.f32.mrb[0].mxu0
  %v8665 = vpop.f32.mrb[0].mxu0
  %v8666 = vadd.f32 0.0, %v8665
  %v8667 = vpop.f32.mrb[0].mxu0
  %8668 = vmatprep.mubr.bf16.mxu0 %v6336
  %8669 = vmatmul.mubr.bf16.gmra.mrb[0].mxu0 %v6335
  %v8670 = vpop.f32.mrb[0].mxu0
  %v8671 = vadd.f32 0.0, %v8670
  %v8672 = vpop.f32.mrb[0].mxu0
  %v8673 = vpop.f32.mrb[0].mxu0
  %v8674 = vadd.f32 0.0, %v8673
  %v8675 = vpop.f32.mrb[0].mxu0
  %8676 = vmatprep.mubr.bf16.mxu0 %v6345
  %8677 = vmatmul.mubr.bf16.gmra.mrb[0].mxu0 %v6344
  %v8678 = vpop.f32.mrb[0].mxu0
  %v8679 = vadd.f32 0.0, %v8678
  %v8680 = vpop.f32.mrb[0].mxu0
  %v8681 = vpop.f32.mrb[0].mxu0
  %v8682 = vpop.f32.mrb[0].mxu0
  %8683 = vdwg.mxu0
  %8684 = vmatprep.subr.bf16.mxu0 0
  %8685 = vmatpush1.bf16.msra.mxu0 %v8492
  %8686 = vmatprep.subr.bf16.mxu0 0
  %8687 = vmatpush1.bf16.msra.mxu0 %v8493
  %8688 = vmatprep.subr.bf16.mxu0 0
  %8689 = vmatpush1.bf16.msra.mxu0 %v8494
  %8690 = vmatprep.subr.bf16.mxu0 0
  %8691 = vmatpush1.bf16.msra.mxu0 %v8495
  %8692 = vmatprep.subr.bf16.mxu0 0
  %8693 = vmatpush1.bf16.msra.mxu0 %v8496
  %8694 = vmatprep.subr.bf16.mxu0 0
  %8695 = vmatpush1.bf16.msra.mxu0 %v8497
  %8696 = vmatprep.subr.bf16.mxu0 0
  %8697 = vmatpush1.bf16.msra.mxu0 %v8498
  %8698 = vmatprep.subr.bf16.mxu0 0
  %8699 = vmatpush1.bf16.msra.mxu0 %v8499
  %8700 = vmatprep.subr.bf16.mxu0 0
  %8701 = vmatpush1.bf16.msra.mxu0 %v8500
  %8702 = vmatprep.subr.bf16.mxu0 0
  %8703 = vmatpush1.bf16.msra.mxu0 %v8501
  %8704 = vmatprep.subr.bf16.mxu0 0
  %8705 = vmatpush1.bf16.msra.mxu0 %v8502
  %8706 = vmatprep.subr.bf16.mxu0 0
  %8707 = vmatpush1.bf16.msra.mxu0 %v8503
  %8708 = vmatprep.subr.bf16.mxu0 0
  %8709 = vmatpush1.bf16.msra.mxu0 %v8504
  %8710 = vmatprep.subr.bf16.mxu0 0
  %8711 = vmatpush1.bf16.msra.mxu0 %v8505
  %8712 = vmatprep.subr.bf16.mxu0 0
  %8713 = vmatpush1.bf16.msra.mxu0 %v8506
  %8714 = vmatprep.subr.bf16.mxu0 0
  %8715 = vmatpush1.bf16.msra.mxu0 %v8507
  %8716 = vmatprep.mubr.bf16.mxu0 %v6320
  %8717 = vmatmul.mubr.bf16.gmra.mrb[0].mxu0 %v6319
  %v8718 = vpop.f32.mrb[0].mxu0
  %v8719 = vadd.f32 %v8655, %v8718
  %v8720 = vpop.f32.mrb[0].mxu0
  %v8721 = vpop.f32.mrb[0].mxu0
  %v8722 = vadd.f32 %v8658, %v8721
  %v8723 = vpop.f32.mrb[0].mxu0
  %8724 = vmatprep.mubr.bf16.mxu0 %v6329
  %8725 = vmatmul.mubr.bf16.gmra.mrb[0].mxu0 %v6328
  %v8726 = vpop.f32.mrb[0].mxu0
  %v8727 = vadd.f32 %v8663, %v8726
  %v8728 = vpop.f32.mrb[0].mxu0
  %v8729 = vpop.f32.mrb[0].mxu0
  %v8730 = vadd.f32 %v8666, %v8729
  %v8731 = vpop.f32.mrb[0].mxu0
  %8732 = vmatprep.mubr.bf16.mxu0 %v6338
  %8733 = vmatmul.mubr.bf16.gmra.mrb[0].mxu0 %v6337
  %v8734 = vpop.f32.mrb[0].mxu0
  %v8735 = vadd.f32 %v8671, %v8734
  %v8736 = vpop.f32.mrb[0].mxu0
  %v8737 = vpop.f32.mrb[0].mxu0
  %v8738 = vadd.f32 %v8674, %v8737
  %v8739 = vpop.f32.mrb[0].mxu0
  %8740 = vmatprep.mubr.bf16.mxu0 %v6347
  %8741 = vmatmul.mubr.bf16.gmra.mrb[0].mxu0 %v6346
  %v8742 = vpop.f32.mrb[0].mxu0
  %v8743 = vadd.f32 %v8679, %v8742
  %v8744 = vpop.f32.mrb[0].mxu0
  %v8745 = vpop.f32.mrb[0].mxu0
  %v8746 = vpop.f32.mrb[0].mxu0
  %8747 = vdwg.mxu0
  %8748 = vmatprep.subr.bf16.mxu0 0
  %8749 = vmatpush1.bf16.msra.mxu0 %v8508
  %8750 = vmatprep.subr.bf16.mxu0 0
  %8751 = vmatpush1.bf16.msra.mxu0 %v8509
  %8752 = vmatprep.subr.bf16.mxu0 0
  %8753 = vmatpush1.bf16.msra.mxu0 %v8510
  %8754 = vmatprep.subr.bf16.mxu0 0
  %8755 = vmatpush1.bf16.msra.mxu0 %v8511
  %8756 = vmatprep.subr.bf16.mxu0 0
  %8757 = vmatpush1.bf16.msra.mxu0 %v8512
  %8758 = vmatprep.subr.bf16.mxu0 0
  %8759 = vmatpush1.bf16.msra.mxu0 %v8513
  %8760 = vmatprep.subr.bf16.mxu0 0
  %8761 = vmatpush1.bf16.msra.mxu0 %v8514
  %8762 = vmatprep.subr.bf16.mxu0 0
  %8763 = vmatpush1.bf16.msra.mxu0 %v8515
  %8764 = vmatprep.subr.bf16.mxu0 0
  %8765 = vmatpush1.bf16.msra.mxu0 %v8516
  %8766 = vmatprep.subr.bf16.mxu0 0
  %8767 = vmatpush1.bf16.msra.mxu0 %v8517
  %8768 = vmatprep.subr.bf16.mxu0 0
  %8769 = vmatpush1.bf16.msra.mxu0 %v8518
  %8770 = vmatprep.subr.bf16.mxu0 0
  %8771 = vmatpush1.bf16.msra.mxu0 %v8519
  %8772 = vmatprep.subr.bf16.mxu0 0
  %8773 = vmatpush1.bf16.msra.mxu0 %v8520
  %8774 = vmatprep.subr.bf16.mxu0 0
  %8775 = vmatpush1.bf16.msra.mxu0 %v8521
  %8776 = vmatprep.subr.bf16.mxu0 0
  %8777 = vmatpush1.bf16.msra.mxu0 %v8522
  %8778 = vmatprep.subr.bf16.mxu0 0
  %8779 = vmatpush1.bf16.msra.mxu0 %v8523
  %8780 = vmatprep.mubr.bf16.mxu0 %v6322
  %8781 = vmatmul.mubr.bf16.gmra.mrb[0].mxu0 %v6321
  %v8782 = vpop.f32.mrb[0].mxu0
  %v8783 = vadd.f32 %v8719, %v8782
  %v8784 = vpop.f32.mrb[0].mxu0
  %v8785 = vpop.f32.mrb[0].mxu0
  %v8786 = vadd.f32 %v8722, %v8785
  %v8787 = vpop.f32.mrb[0].mxu0
  %8788 = vmatprep.mubr.bf16.mxu0 %v6331
  %8789 = vmatmul.mubr.bf16.gmra.mrb[0].mxu0 %v6330
  %v8790 = vpop.f32.mrb[0].mxu0
  %v8791 = vadd.f32 %v8727, %v8790
  %v8792 = vpop.f32.mrb[0].mxu0
  %v8793 = vpop.f32.mrb[0].mxu0
  %v8794 = vadd.f32 %v8730, %v8793
  %v8795 = vpop.f32.mrb[0].mxu0
  %8796 = vmatprep.mubr.bf16.mxu0 %v6340
  %8797 = vmatmul.mubr.bf16.gmra.mrb[0].mxu0 %v6339
  %v8798 = vpop.f32.mrb[0].mxu0
  %v8799 = vadd.f32 %v8735, %v8798
  %v8800 = vpop.f32.mrb[0].mxu0
  %v8801 = vpop.f32.mrb[0].mxu0
  %v8802 = vadd.f32 %v8738, %v8801
  %v8803 = vpop.f32.mrb[0].mxu0
  %8804 = vmatprep.mubr.bf16.mxu0 %v6349
  %8805 = vmatmul.mubr.bf16.gmra.mrb[0].mxu0 %v6348
  %v8806 = vpop.f32.mrb[0].mxu0
  %v8807 = vadd.f32 %v8743, %v8806
  %v8808 = vpop.f32.mrb[0].mxu0
  %v8809 = vpop.f32.mrb[0].mxu0
  %v8810 = vpop.f32.mrb[0].mxu0
  %8811 = vdwg.mxu0
  %8812 = vmatprep.subr.bf16.mxu0 0
  %8813 = vmatpush1.bf16.msra.mxu0 %v8524
  %8814 = vmatprep.subr.bf16.mxu0 0
  %8815 = vmatpush1.bf16.msra.mxu0 %v8525
  %8816 = vmatprep.subr.bf16.mxu0 0
  %8817 = vmatpush1.bf16.msra.mxu0 %v8526
  %8818 = vmatprep.subr.bf16.mxu0 0
  %8819 = vmatpush1.bf16.msra.mxu0 %v8527
  %8820 = vmatprep.subr.bf16.mxu0 0
  %8821 = vmatpush1.bf16.msra.mxu0 %v8528
  %8822 = vmatprep.subr.bf16.mxu0 0
  %8823 = vmatpush1.bf16.msra.mxu0 %v8529
  %8824 = vmatprep.subr.bf16.mxu0 0
  %8825 = vmatpush1.bf16.msra.mxu0 %v8530
  %8826 = vmatprep.subr.bf16.mxu0 0
  %8827 = vmatpush1.bf16.msra.mxu0 %v8531
  %8828 = vmatprep.subr.bf16.mxu0 0
  %8829 = vmatpush1.bf16.msra.mxu0 %v8532
  %8830 = vmatprep.subr.bf16.mxu0 0
  %8831 = vmatpush1.bf16.msra.mxu0 %v8533
  %8832 = vmatprep.subr.bf16.mxu0 0
  %8833 = vmatpush1.bf16.msra.mxu0 %v8534
  %8834 = vmatprep.subr.bf16.mxu0 0
  %8835 = vmatpush1.bf16.msra.mxu0 %v8535
  %8836 = vmatprep.subr.bf16.mxu0 0
  %8837 = vmatpush1.bf16.msra.mxu0 %v8536
  %8838 = vmatprep.subr.bf16.mxu0 0
  %8839 = vmatpush1.bf16.msra.mxu0 %v8537
  %8840 = vmatprep.subr.bf16.mxu0 0
  %8841 = vmatpush1.bf16.msra.mxu0 %v8538
  %8842 = vmatprep.subr.bf16.mxu0 0
  %8843 = vmatpush1.bf16.msra.mxu0 %v8539
  %8844 = vmatprep.mubr.bf16.mxu0 %v6324
  %8845 = vmatmul.mubr.bf16.gmra.mrb[0].mxu0 %v6323
  %v8846 = vpop.f32.mrb[0].mxu0
  %v8847 = vadd.f32 %v8783, %v8846
  %v8848 = vpop.f32.mrb[0].mxu0
  %v8849 = vpop.f32.mrb[0].mxu0
  %v8850 = vadd.f32 %v8786, %v8849
  %v8851 = vpop.f32.mrb[0].mxu0
  %8852 = vmatprep.mubr.bf16.mxu0 %v6333
  %8853 = vmatmul.mubr.bf16.gmra.mrb[0].mxu0 %v6332
  %v8854 = vpop.f32.mrb[0].mxu0
  %v8855 = vadd.f32 %v8791, %v8854
  %v8856 = vpop.f32.mrb[0].mxu0
  %v8857 = vpop.f32.mrb[0].mxu0
  %v8858 = vadd.f32 %v8794, %v8857
  %v8859 = vpop.f32.mrb[0].mxu0
  %8860 = vmatprep.mubr.bf16.mxu0 %v6342
  %8861 = vmatmul.mubr.bf16.gmra.mrb[0].mxu0 %v6341
  %v8862 = vpop.f32.mrb[0].mxu0
  %v8863 = vadd.f32 %v8799, %v8862
  %v8864 = vpop.f32.mrb[0].mxu0
  %v8865 = vpop.f32.mrb[0].mxu0
  %v8866 = vadd.f32 %v8802, %v8865
  %v8867 = vpop.f32.mrb[0].mxu0
  %8868 = vmatprep.mubr.bf16.mxu0 %v6351
  %8869 = vmatmul.mubr.bf16.gmra.mrb[0].mxu0 %v6350
  %v8870 = vpop.f32.mrb[0].mxu0
  %v8871 = vadd.f32 %v8807, %v8870
  %v8872 = vpop.f32.mrb[0].mxu0
  %v8873 = vpop.f32.mrb[0].mxu0
  %v8874 = vpop.f32.mrb[0].mxu0
  %8875 = vdwg.mxu0
  %8876 = vmatprep.subr.bf16.mxu0 0
  %8877 = vmatpush1.bf16.msra.mxu0 %v8540
  %8878 = vmatprep.subr.bf16.mxu0 0
  %8879 = vmatpush1.bf16.msra.mxu0 %v8541
  %8880 = vmatprep.subr.bf16.mxu0 0
  %8881 = vmatpush1.bf16.msra.mxu0 %v8542
  %8882 = vmatprep.subr.bf16.mxu0 0
  %8883 = vmatpush1.bf16.msra.mxu0 %v8543
  %8884 = vmatprep.subr.bf16.mxu0 0
  %8885 = vmatpush1.bf16.msra.mxu0 %v8544
  %8886 = vmatprep.subr.bf16.mxu0 0
  %8887 = vmatpush1.bf16.msra.mxu0 %v8545
  %8888 = vmatprep.subr.bf16.mxu0 0
  %8889 = vmatpush1.bf16.msra.mxu0 %v8546
  %8890 = vmatprep.subr.bf16.mxu0 0
  %8891 = vmatpush1.bf16.msra.mxu0 %v8547
  %8892 = vmatprep.subr.bf16.mxu0 0
  %8893 = vmatpush1.bf16.msra.mxu0 0
  %8894 = vmatprep.subr.bf16.mxu0 0
  %8895 = vmatpush1.bf16.msra.mxu0 0
  %8896 = vmatprep.subr.bf16.mxu0 0
  %8897 = vmatpush1.bf16.msra.mxu0 0
  %8898 = vmatprep.subr.bf16.mxu0 0
  %8899 = vmatpush1.bf16.msra.mxu0 0
  %8900 = vmatprep.subr.bf16.mxu0 0
  %8901 = vmatpush1.bf16.msra.mxu0 0
  %8902 = vmatprep.subr.bf16.mxu0 0
  %8903 = vmatpush1.bf16.msra.mxu0 0
  %8904 = vmatprep.subr.bf16.mxu0 0
  %8905 = vmatpush1.bf16.msra.mxu0 0
  %8906 = vmatprep.subr.bf16.mxu0 0
  %8907 = vmatpush1.bf16.msra.mxu0 0
  %8908 = vmatprep.mubr.bf16.mxu0 0
  %8909 = vmatmul.mubr.bf16.gmra.mrb[0].mxu0 %v6325
  %v8910 = vpop.f32.mrb[0].mxu0
  %v8911 = vadd.f32 %v8847, %v8910
  %v8912 = vpop.f32.mrb[0].mxu0
  %v8913 = vpop.f32.mrb[0].mxu0
  %v8914 = vadd.f32 %v8850, %v8913
  %v8915 = vpop.f32.mrb[0].mxu0
  %8916 = vmatprep.mubr.bf16.mxu0 0
  %8917 = vmatmul.mubr.bf16.gmra.mrb[0].mxu0 %v6334
  %v8918 = vpop.f32.mrb[0].mxu0
  %v8919 = vadd.f32 %v8855, %v8918
  %v8920 = vpop.f32.mrb[0].mxu0
  %v8921 = vpop.f32.mrb[0].mxu0
  %v8922 = vadd.f32 %v8858, %v8921
  %v8923 = vpop.f32.mrb[0].mxu0
  %8924 = vmatprep.mubr.bf16.mxu0 0
  %8925 = vmatmul.mubr.bf16.gmra.mrb[0].mxu0 %v6343
  %v8926 = vpop.f32.mrb[0].mxu0
  %v8927 = vadd.f32 %v8863, %v8926
  %v8928 = vpop.f32.mrb[0].mxu0
  %v8929 = vpop.f32.mrb[0].mxu0
  %v8930 = vadd.f32 %v8866, %v8929
  %v8931 = vpop.f32.mrb[0].mxu0
  %8932 = vmatprep.mubr.bf16.mxu0 0
  %8933 = vmatmul.mubr.bf16.gmra.mrb[0].mxu0 %v6352
  %v8934 = vpop.f32.mrb[0].mxu0
  %v8935 = vadd.f32 %v8871, %v8934
  %v8936 = vpop.f32.mrb[0].mxu0
  %v8937 = vpop.f32.mrb[0].mxu0
  %v8938 = vpop.f32.mrb[0].mxu0
  %8939 = vdwg.mxu0
  %v8940 = vmax.f32 %v8037, %v8911
  %v8941 = vmax.f32 %v8038, %v8914
  %v8942 = vmax.f32 %v8039, %v8919
  %v8943 = vmax.f32 %v8040, %v8922
  %v8944 = vmax.f32 %v8041, %v8927
  %v8945 = vmax.f32 %v8042, %v8930
  %v8946 = vmax.f32 %v8043, %v8935
  %v8947 = vld [vmem:[%s4099] sm:$0xf]
  %v8948 = vld [vmem:[%s4099 + $0x4] sm:$0xf]
  %v8949 = vld [vmem:[%s4099 + $0x8] sm:$0xf]
  %v8950 = vld [vmem:[%s4099 + $0xc] sm:$0xf]
  %v8951 = vld [vmem:[%s4099 + $0x10] sm:$0xf]
  %v8952 = vld [vmem:[%s4099 + $0x14] sm:$0xf]
  %v8953 = vld [vmem:[%s4099 + $0x18] sm:$0xf]
  %v8954 = vld [vmem:[%s4099 + $0x1c] sm:$0xf]
  %v8955 = vld [vmem:[%s4099 + $0x20] sm:$0xf]
  %v8956 = vld [vmem:[%s4099 + $0x24] sm:$0xf]
  %v8957 = vld [vmem:[%s4099 + $0x28] sm:$0xf]
  %v8958 = vld [vmem:[%s4099 + $0x2c] sm:$0xf]
  %v8959 = vld [vmem:[%s4099 + $0x30] sm:$0xf]
  %v8960 = vld [vmem:[%s4099 + $0x34] sm:$0xf]
  %v8961 = vld [vmem:[%s4099 + $0x38] sm:$0xf]
  %v8962 = vld [vmem:[%s4099 + $0x3c] sm:$0xf]
  %v8963 = vld [vmem:[%s4099 + $0x40] sm:$0xf]
  %v8964 = vld [vmem:[%s4099 + $0x44] sm:$0xf]
  %v8965 = vld [vmem:[%s4099 + $0x48] sm:$0xf]
  %v8966 = vld [vmem:[%s4099 + $0x4c] sm:$0xf]
  %v8967 = vld [vmem:[%s4099 + $0x50] sm:$0xf]
  %v8968 = vld [vmem:[%s4099 + $0x54] sm:$0xf]
  %v8969 = vld [vmem:[%s4099 + $0x58] sm:$0xf]
  %v8970 = vld [vmem:[%s4099 + $0x5c] sm:$0xf]
  %v8971 = vld [vmem:[%s4099 + $0x60] sm:$0xf]
  %v8972 = vld [vmem:[%s4099 + $0x64] sm:$0xf]
  %v8973 = vld [vmem:[%s4099 + $0x68] sm:$0xf]
  %v8974 = vld [vmem:[%s4099 + $0x6c] sm:$0xf]
  %v8975 = vld [vmem:[%s4099 + $0x70] sm:$0xf]
  %v8976 = vld [vmem:[%s4099 + $0x74] sm:$0xf]
  %v8977 = vld [vmem:[%s4099 + $0x78] sm:$0xf]
  %v8978 = vld [vmem:[%s4099 + $0x7c] sm:$0xf]
  %v8979 = vld [vmem:[%s4099 + $0x80] sm:$0xf]
  %v8980 = vld [vmem:[%s4099 + $0x84] sm:$0xf]
  %v8981 = vld [vmem:[%s4099 + $0x88] sm:$0xf]
  %v8982 = vld [vmem:[%s4099 + $0x8c] sm:$0xf]
  %v8983 = vld [vmem:[%s4099 + $0x90] sm:$0xf]
  %v8984 = vld [vmem:[%s4099 + $0x94] sm:$0xf]
  %v8985 = vld [vmem:[%s4099 + $0x98] sm:$0xf]
  %v8986 = vld [vmem:[%s4099 + $0x9c] sm:$0xf]
  %v8987 = vld [vmem:[%s4099 + $0xa0] sm:$0xf]
  %v8988 = vld [vmem:[%s4099 + $0xa4] sm:$0xf]
  %v8989 = vld [vmem:[%s4099 + $0xa8] sm:$0xf]
  %v8990 = vld [vmem:[%s4099 + $0xac] sm:$0xf]
  %v8991 = vld [vmem:[%s4099 + $0xb0] sm:$0xf]
  %v8992 = vld [vmem:[%s4099 + $0xb4] sm:$0xf]
  %v8993 = vld [vmem:[%s4099 + $0xb8] sm:$0xf]
  %v8994 = vld [vmem:[%s4099 + $0xbc] sm:$0xf]
  %v8995 = vld [vmem:[%s4099 + $0xc0] sm:$0xf]
  %v8996 = vld [vmem:[%s4099 + $0xc4] sm:$0xf]
  %v8997 = vld [vmem:[%s4099 + $0xc8] sm:$0xf]
  %v8998 = vld [vmem:[%s4099 + $0xcc] sm:$0xf]
  %v8999 = vld [vmem:[%s4099 + $0xd0] sm:$0xf]
  %v9000 = vld [vmem:[%s4099 + $0xd4] sm:$0xf]
  %v9001 = vld [vmem:[%s4099 + $0xd8] sm:$0xf]
  %v9002 = vld [vmem:[%s4099 + $0xdc] sm:$0xf]
  %v9003 = vld [vmem:[%s4099 + $0xe0] sm:$0xf]
  %v9004 = vld [vmem:[%s4099 + $0xe4] sm:$0xf]
  %v9005 = vld [vmem:[%s4099 + $0xe8] sm:$0xf]
  %v9006 = vld [vmem:[%s4099 + $0xec] sm:$0xf]
  %v9007 = vld [vmem:[%s4099 + $0xf0] sm:$0xf]
  %v9008 = vld [vmem:[%s4099 + $0xf4] sm:$0xf]
  %v9009 = vld [vmem:[%s4099 + $0xf8] sm:$0xf]
  %v9010 = vld [vmem:[%s4099 + $0xfc] sm:$0xf]
  %v9011 = vld [vmem:[%s4099 + $0x100] sm:$0xf]
  %v9012 = vld [vmem:[%s4099 + $0x104] sm:$0xf]
  %v9013 = vld [vmem:[%s4099 + $0x108] sm:$0xf]
  %v9014 = vld [vmem:[%s4099 + $0x10c] sm:$0xf]
  %v9015 = vld [vmem:[%s4099 + $0x110] sm:$0xf]
  %v9016 = vld [vmem:[%s4099 + $0x114] sm:$0xf]
  %v9017 = vld [vmem:[%s4099 + $0x118] sm:$0xf]
  %v9018 = vld [vmem:[%s4099 + $0x11c] sm:$0xf]
  %v9019 = vld [vmem:[%s4099 + $0x120] sm:$0xf]
  %v9020 = vld [vmem:[%s4099 + $0x124] sm:$0xf]
  %v9021 = vld [vmem:[%s4099 + $0x128] sm:$0xf]
  %v9022 = vld [vmem:[%s4099 + $0x12c] sm:$0xf]
  %v9023 = vld [vmem:[%s4099 + $0x130] sm:$0xf]
  %v9024 = vld [vmem:[%s4099 + $0x134] sm:$0xf]
  %v9025 = vld [vmem:[%s4099 + $0x138] sm:$0xf]
  %v9026 = vld [vmem:[%s4099 + $0x13c] sm:$0xf]
  %v9027 = vld [vmem:[%s4099 + $0x140] sm:$0xf]
  %v9028 = vld [vmem:[%s4099 + $0x144] sm:$0xf]
  %v9029 = vld [vmem:[%s4099 + $0x148] sm:$0xf]
  %v9030 = vld [vmem:[%s4099 + $0x14c] sm:$0xf]
  %v9031 = vld [vmem:[%s4099 + $0x150] sm:$0xf]
  %v9032 = vld [vmem:[%s4099 + $0x154] sm:$0xf]
  %v9033 = vld [vmem:[%s4099 + $0x158] sm:$0xf]
  %v9034 = vld [vmem:[%s4099 + $0x15c] sm:$0xf]
  %v9035 = vld [vmem:[%s4099 + $0x160] sm:$0xf]
  %v9036 = vld [vmem:[%s4099 + $0x164] sm:$0xf]
  %v9037 = vld [vmem:[%s4099 + $0x168] sm:$0xf]
  %v9038 = vld [vmem:[%s4099 + $0x16c] sm:$0xf]
  %v9039 = vld [vmem:[%s4099 + $0x170] sm:$0xf]
  %v9040 = vld [vmem:[%s4099 + $0x174] sm:$0xf]
  %v9041 = vld [vmem:[%s4099 + $0x178] sm:$0xf]
  %v9042 = vld [vmem:[%s4099 + $0x17c] sm:$0xf]
  %v9043 = vld [vmem:[%s4099 + $0x180] sm:$0xf]
  %v9044 = vld [vmem:[%s4099 + $0x184] sm:$0xf]
  %v9045 = vld [vmem:[%s4099 + $0x188] sm:$0xf]
  %v9046 = vld [vmem:[%s4099 + $0x18c] sm:$0xf]
  %v9047 = vld [vmem:[%s4099 + $0x190] sm:$0xf]
  %v9048 = vld [vmem:[%s4099 + $0x194] sm:$0xf]
  %v9049 = vld [vmem:[%s4099 + $0x198] sm:$0xf]
  %v9050 = vld [vmem:[%s4099 + $0x19c] sm:$0xf]
  %v9051 = vld [vmem:[%s4099 + $0x1a0] sm:$0xf]
  %v9052 = vld [vmem:[%s4099 + $0x1a4] sm:$0xf]
  %v9053 = vld [vmem:[%s4099 + $0x1a8] sm:$0xf]
  %v9054 = vld [vmem:[%s4099 + $0x1ac] sm:$0xf]
  %v9055 = vld [vmem:[%s4099 + $0x1b0] sm:$0xf]
  %v9056 = vld [vmem:[%s4099 + $0x1b4] sm:$0xf]
  %v9057 = vld [vmem:[%s4099 + $0x1b8] sm:$0xf]
  %v9058 = vld [vmem:[%s4099 + $0x1bc] sm:$0xf]
  %v9059 = vld [vmem:[%s4099 + $0x1c0] sm:$0xf]
  %v9060 = vld [vmem:[%s4099 + $0x1c4] sm:$0xf]
  %v9061 = vld [vmem:[%s4099 + $0x1c8] sm:$0xf]
  %v9062 = vld [vmem:[%s4099 + $0x1cc] sm:$0xf]
  %v9063 = vld [vmem:[%s4099 + $0x1d0] sm:$0xf]
  %v9064 = vld [vmem:[%s4099 + $0x1d4] sm:$0xf]
  %v9065 = vld [vmem:[%s4099 + $0x1d8] sm:$0xf]
  %v9066 = vld [vmem:[%s4099 + $0x1dc] sm:$0xf]
  %v9067 = vld [vmem:[%s4099 + $0x1e0] sm:$0xf]
  %v9068 = vld [vmem:[%s4099 + $0x1e4] sm:$0xf]
  %v9069 = vld [vmem:[%s4099 + $0x1e8] sm:$0xf]
  %v9070 = vld [vmem:[%s4099 + $0x1ec] sm:$0xf]
  %v9071 = vld [vmem:[%s4099 + $0x1f0] sm:$0xf]
  %v9072 = vld [vmem:[%s4099 + $0x1f4] sm:$0xf]
  %v9073 = vld [vmem:[%s4099 + $0x1f8] sm:$0xf]
  %v9074 = vld [vmem:[%s4099 + $0x1fc] sm:$0xf]
  %v9075 = vld [vmem:[%s4099 + $0x200] sm:$0xf]
  %v9076 = vld [vmem:[%s4099 + $0x204] sm:$0xf]
  %v9077 = vld [vmem:[%s4099 + $0x208] sm:$0xf]
  %v9078 = vld [vmem:[%s4099 + $0x20c] sm:$0xf]
  %v9079 = vld [vmem:[%s4099 + $0x210] sm:$0xf]
  %v9080 = vld [vmem:[%s4099 + $0x214] sm:$0xf]
  %v9081 = vld [vmem:[%s4099 + $0x218] sm:$0xf]
  %v9082 = vld [vmem:[%s4099 + $0x21c] sm:$0xf]
  %v9083 = vld [vmem:[%s4099 + $0x220] sm:$0xf]
  %v9084 = vld [vmem:[%s4099 + $0x224] sm:$0xf]
  %v9085 = vld [vmem:[%s4099 + $0x228] sm:$0xf]
  %v9086 = vld [vmem:[%s4099 + $0x22c] sm:$0xf]
  %v9087 = vld [vmem:[%s4099 + $0x230] sm:$0xf]
  %v9088 = vld [vmem:[%s4099 + $0x234] sm:$0xf]
  %v9089 = vld [vmem:[%s4099 + $0x238] sm:$0xf]
  %v9090 = vld [vmem:[%s4099 + $0x23c] sm:$0xf]
  %v9235 = vunpack.c.l.b16 %v8947
  %v9236 = vunpack.c.l.b16 %v8948
  %v9237 = vunpack.c.l.b16 %v8949
  %v9238 = vunpack.c.l.b16 %v8950
  %v9239 = vunpack.c.l.b16 %v8951
  %v9240 = vunpack.c.l.b16 %v8952
  %v9241 = vunpack.c.l.b16 %v8953
  %v9242 = vunpack.c.l.b16 %v8954
  %v9243 = vunpack.c.l.b16 %v8955
  %v9244 = vunpack.c.l.b16 %v8956
  %v9245 = vunpack.c.l.b16 %v8957
  %v9246 = vunpack.c.l.b16 %v8958
  %v9247 = vunpack.c.l.b16 %v8959
  %v9248 = vunpack.c.l.b16 %v8960
  %v9249 = vunpack.c.l.b16 %v8961
  %v9250 = vunpack.c.l.b16 %v8962
  %v9251 = vunpack.c.l.b16 %v8963
  %v9252 = vunpack.c.l.b16 %v8964
  %v9253 = vunpack.c.l.b16 %v8965
  %v9254 = vunpack.c.l.b16 %v8966
  %v9255 = vunpack.c.l.b16 %v8967
  %v9256 = vunpack.c.l.b16 %v8968
  %v9257 = vunpack.c.l.b16 %v8969
  %v9258 = vunpack.c.l.b16 %v8970
  %v9259 = vunpack.c.l.b16 %v8971
  %v9260 = vunpack.c.l.b16 %v8972
  %v9261 = vunpack.c.l.b16 %v8973
  %v9262 = vunpack.c.l.b16 %v8974
  %v9263 = vunpack.c.l.b16 %v8975
  %v9264 = vunpack.c.l.b16 %v8976
  %v9265 = vunpack.c.l.b16 %v8977
  %v9266 = vunpack.c.l.b16 %v8978
  %v9267 = vunpack.c.l.b16 %v8979
  %v9268 = vunpack.c.l.b16 %v8980
  %v9269 = vunpack.c.l.b16 %v8981
  %v9270 = vunpack.c.l.b16 %v8982
  %v9271 = vunpack.c.l.b16 %v8983
  %v9272 = vunpack.c.l.b16 %v8984
  %v9273 = vunpack.c.l.b16 %v8985
  %v9274 = vunpack.c.l.b16 %v8986
  %v9275 = vunpack.c.l.b16 %v8987
  %v9276 = vunpack.c.l.b16 %v8988
  %v9277 = vunpack.c.l.b16 %v8989
  %v9278 = vunpack.c.l.b16 %v8990
  %v9279 = vunpack.c.l.b16 %v8991
  %v9280 = vunpack.c.l.b16 %v8992
  %v9281 = vunpack.c.l.b16 %v8993
  %v9282 = vunpack.c.l.b16 %v8994
  %v9283 = vunpack.c.l.b16 %v8995
  %v9284 = vunpack.c.l.b16 %v8996
  %v9285 = vunpack.c.l.b16 %v8997
  %v9286 = vunpack.c.l.b16 %v8998
  %v9287 = vunpack.c.l.b16 %v8999
  %v9288 = vunpack.c.l.b16 %v9000
  %v9289 = vunpack.c.l.b16 %v9001
  %v9290 = vunpack.c.l.b16 %v9002
  %v9291 = vunpack.c.l.b16 %v9003
  %v9292 = vunpack.c.l.b16 %v9004
  %v9293 = vunpack.c.l.b16 %v9005
  %v9294 = vunpack.c.l.b16 %v9006
  %v9295 = vunpack.c.l.b16 %v9007
  %v9296 = vunpack.c.l.b16 %v9008
  %v9297 = vunpack.c.l.b16 %v9009
  %v9298 = vunpack.c.l.b16 %v9010
  %v9299 = vunpack.c.l.b16 %v9011
  %v9300 = vunpack.c.l.b16 %v9012
  %v9301 = vunpack.c.l.b16 %v9013
  %v9302 = vunpack.c.l.b16 %v9014
  %v9303 = vunpack.c.l.b16 %v9015
  %v9304 = vunpack.c.l.b16 %v9016
  %v9305 = vunpack.c.l.b16 %v9017
  %v9306 = vunpack.c.l.b16 %v9018
  %v9307 = vunpack.c.l.b16 %v9019
  %v9308 = vunpack.c.l.b16 %v9020
  %v9309 = vunpack.c.l.b16 %v9021
  %v9310 = vunpack.c.l.b16 %v9022
  %v9311 = vunpack.c.l.b16 %v9023
  %v9312 = vunpack.c.l.b16 %v9024
  %v9313 = vunpack.c.l.b16 %v9025
  %v9314 = vunpack.c.l.b16 %v9026
  %v9315 = vunpack.c.l.b16 %v9027
  %v9316 = vunpack.c.l.b16 %v9028
  %v9317 = vunpack.c.l.b16 %v9029
  %v9318 = vunpack.c.l.b16 %v9030
  %v9319 = vunpack.c.l.b16 %v9031
  %v9320 = vunpack.c.l.b16 %v9032
  %v9321 = vunpack.c.l.b16 %v9033
  %v9322 = vunpack.c.l.b16 %v9034
  %v9323 = vunpack.c.l.b16 %v9035
  %v9324 = vunpack.c.l.b16 %v9036
  %v9325 = vunpack.c.l.b16 %v9037
  %v9326 = vunpack.c.l.b16 %v9038
  %v9327 = vunpack.c.l.b16 %v9039
  %v9328 = vunpack.c.l.b16 %v9040
  %v9329 = vunpack.c.l.b16 %v9041
  %v9330 = vunpack.c.l.b16 %v9042
  %v9331 = vunpack.c.l.b16 %v9043
  %v9332 = vunpack.c.l.b16 %v9044
  %v9333 = vunpack.c.l.b16 %v9045
  %v9334 = vunpack.c.l.b16 %v9046
  %v9335 = vunpack.c.l.b16 %v9047
  %v9336 = vunpack.c.l.b16 %v9048
  %v9337 = vunpack.c.l.b16 %v9049
  %v9338 = vunpack.c.l.b16 %v9050
  %v9339 = vunpack.c.l.b16 %v9051
  %v9340 = vunpack.c.l.b16 %v9052
  %v9341 = vunpack.c.l.b16 %v9053
  %v9342 = vunpack.c.l.b16 %v9054
  %v9343 = vunpack.c.l.b16 %v9055
  %v9344 = vunpack.c.l.b16 %v9056
  %v9345 = vunpack.c.l.b16 %v9057
  %v9346 = vunpack.c.l.b16 %v9058
  %v9347 = vunpack.c.l.b16 %v9059
  %v9348 = vunpack.c.l.b16 %v9060
  %v9349 = vunpack.c.l.b16 %v9061
  %v9350 = vunpack.c.l.b16 %v9062
  %v9351 = vunpack.c.l.b16 %v9063
  %v9352 = vunpack.c.l.b16 %v9064
  %v9353 = vunpack.c.l.b16 %v9065
  %v9354 = vunpack.c.l.b16 %v9066
  %v9355 = vunpack.c.l.b16 %v9067
  %v9356 = vunpack.c.l.b16 %v9068
  %v9357 = vunpack.c.l.b16 %v9069
  %v9358 = vunpack.c.l.b16 %v9070
  %v9359 = vunpack.c.l.b16 %v9071
  %v9360 = vunpack.c.l.b16 %v9072
  %v9361 = vunpack.c.l.b16 %v9073
  %v9362 = vunpack.c.l.b16 %v9074
  %v9363 = vunpack.c.l.b16 %v9075
  %v9364 = vunpack.c.l.b16 %v9076
  %v9365 = vunpack.c.l.b16 %v9077
  %v9366 = vunpack.c.l.b16 %v9078
  %v9367 = vunpack.c.l.b16 %v9079
  %v9368 = vunpack.c.l.b16 %v9080
  %v9369 = vunpack.c.l.b16 %v9081
  %v9370 = vunpack.c.l.b16 %v9082
  %v9371 = vunpack.c.l.b16 %v9083
  %v9372 = vunpack.c.l.b16 %v9084
  %v9373 = vunpack.c.l.b16 %v9085
  %v9374 = vunpack.c.l.b16 %v9086
  %v9375 = vunpack.c.l.b16 %v9087
  %v9376 = vunpack.c.l.b16 %v9088
  %v9377 = vunpack.c.l.b16 %v9089
  %v9378 = vunpack.c.l.b16 %v9090
  %v9379 = vpack.c.b16 %v9236, %v9235
  %v9380 = vpack.c.b16 %v9238, %v9237
  %v9381 = vpack.c.b16 %v9240, %v9239
  %v9382 = vpack.c.b16 %v9242, %v9241
  %v9383 = vpack.c.b16 %v9244, %v9243
  %v9384 = vpack.c.b16 %v9246, %v9245
  %v9385 = vpack.c.b16 %v9248, %v9247
  %v9386 = vpack.c.b16 %v9250, %v9249
  %v9387 = vpack.c.b16 %v9252, %v9251
  %v9388 = vpack.c.b16 %v9254, %v9253
  %v9389 = vpack.c.b16 %v9256, %v9255
  %v9390 = vpack.c.b16 %v9258, %v9257
  %v9391 = vpack.c.b16 %v9260, %v9259
  %v9392 = vpack.c.b16 %v9262, %v9261
  %v9393 = vpack.c.b16 %v9264, %v9263
  %v9394 = vpack.c.b16 %v9266, %v9265
  %v9395 = vpack.c.b16 %v9268, %v9267
  %v9396 = vpack.c.b16 %v9270, %v9269
  %v9397 = vpack.c.b16 %v9272, %v9271
  %v9398 = vpack.c.b16 %v9274, %v9273
  %v9399 = vpack.c.b16 %v9276, %v9275
  %v9400 = vpack.c.b16 %v9278, %v9277
  %v9401 = vpack.c.b16 %v9280, %v9279
  %v9402 = vpack.c.b16 %v9282, %v9281
  %v9403 = vpack.c.b16 %v9284, %v9283
  %v9404 = vpack.c.b16 %v9286, %v9285
  %v9405 = vpack.c.b16 %v9288, %v9287
  %v9406 = vpack.c.b16 %v9290, %v9289
  %v9407 = vpack.c.b16 %v9292, %v9291
  %v9408 = vpack.c.b16 %v9294, %v9293
  %v9409 = vpack.c.b16 %v9296, %v9295
  %v9410 = vpack.c.b16 %v9298, %v9297
  %v9411 = vpack.c.b16 %v9300, %v9299
  %v9412 = vpack.c.b16 %v9302, %v9301
  %v9413 = vpack.c.b16 %v9304, %v9303
  %v9414 = vpack.c.b16 %v9306, %v9305
  %v9415 = vpack.c.b16 %v9308, %v9307
  %v9416 = vpack.c.b16 %v9310, %v9309
  %v9417 = vpack.c.b16 %v9312, %v9311
  %v9418 = vpack.c.b16 %v9314, %v9313
  %v9419 = vpack.c.b16 %v9316, %v9315
  %v9420 = vpack.c.b16 %v9318, %v9317
  %v9421 = vpack.c.b16 %v9320, %v9319
  %v9422 = vpack.c.b16 %v9322, %v9321
  %v9423 = vpack.c.b16 %v9324, %v9323
  %v9424 = vpack.c.b16 %v9326, %v9325
  %v9425 = vpack.c.b16 %v9328, %v9327
  %v9426 = vpack.c.b16 %v9330, %v9329
  %v9427 = vpack.c.b16 %v9332, %v9331
  %v9428 = vpack.c.b16 %v9334, %v9333
  %v9429 = vpack.c.b16 %v9336, %v9335
  %v9430 = vpack.c.b16 %v9338, %v9337
  %v9431 = vpack.c.b16 %v9340, %v9339
  %v9432 = vpack.c.b16 %v9342, %v9341
  %v9433 = vpack.c.b16 %v9344, %v9343
  %v9434 = vpack.c.b16 %v9346, %v9345
  %v9435 = vpack.c.b16 %v9348, %v9347
  %v9436 = vpack.c.b16 %v9350, %v9349
  %v9437 = vpack.c.b16 %v9352, %v9351
  %v9438 = vpack.c.b16 %v9354, %v9353
  %v9439 = vpack.c.b16 %v9356, %v9355
  %v9440 = vpack.c.b16 %v9358, %v9357
  %v9441 = vpack.c.b16 %v9360, %v9359
  %v9442 = vpack.c.b16 %v9362, %v9361
  %v9443 = vpack.c.b16 %v9364, %v9363
  %v9444 = vpack.c.b16 %v9366, %v9365
  %v9445 = vpack.c.b16 %v9368, %v9367
  %v9446 = vpack.c.b16 %v9370, %v9369
  %v9447 = vpack.c.b16 %v9372, %v9371
  %v9448 = vpack.c.b16 %v9374, %v9373
  %v9449 = vpack.c.b16 %v9376, %v9375
  %v9450 = vpack.c.b16 %v9378, %v9377
  %9523 = vmatprep.subr.bf16.mxu0 0
  %9524 = vmatpush1.bf16.msra.mxu0 %v9379
  %9525 = vmatprep.subr.bf16.mxu0 0
  %9526 = vmatpush1.bf16.msra.mxu0 %v9380
  %9527 = vmatprep.subr.bf16.mxu0 0
  %9528 = vmatpush1.bf16.msra.mxu0 %v9381
  %9529 = vmatprep.subr.bf16.mxu0 0
  %9530 = vmatpush1.bf16.msra.mxu0 %v9382
  %9531 = vmatprep.subr.bf16.mxu0 0
  %9532 = vmatpush1.bf16.msra.mxu0 %v9383
  %9533 = vmatprep.subr.bf16.mxu0 0
  %9534 = vmatpush1.bf16.msra.mxu0 %v9384
  %9535 = vmatprep.subr.bf16.mxu0 0
  %9536 = vmatpush1.bf16.msra.mxu0 %v9385
  %9537 = vmatprep.subr.bf16.mxu0 0
  %9538 = vmatpush1.bf16.msra.mxu0 %v9386
  %9539 = vmatprep.subr.bf16.mxu0 0
  %9540 = vmatpush1.bf16.msra.mxu0 %v9387
  %9541 = vmatprep.subr.bf16.mxu0 0
  %9542 = vmatpush1.bf16.msra.mxu0 %v9388
  %9543 = vmatprep.subr.bf16.mxu0 0
  %9544 = vmatpush1.bf16.msra.mxu0 %v9389
  %9545 = vmatprep.subr.bf16.mxu0 0
  %9546 = vmatpush1.bf16.msra.mxu0 %v9390
  %9547 = vmatprep.subr.bf16.mxu0 0
  %9548 = vmatpush1.bf16.msra.mxu0 %v9391
  %9549 = vmatprep.subr.bf16.mxu0 0
  %9550 = vmatpush1.bf16.msra.mxu0 %v9392
  %9551 = vmatprep.subr.bf16.mxu0 0
  %9552 = vmatpush1.bf16.msra.mxu0 %v9393
  %9553 = vmatprep.subr.bf16.mxu0 0
  %9554 = vmatpush1.bf16.msra.mxu0 %v9394
  %9555 = vmatprep.mubr.bf16.mxu0 %v6318
  %9556 = vmatmul.mubr.bf16.gmra.mrb[0].mxu0 %v6317
  %v9557 = vpop.f32.mrb[0].mxu0
  %v9558 = vadd.f32 0.0, %v9557
  %v9559 = vpop.f32.mrb[0].mxu0
  %v9560 = vpop.f32.mrb[0].mxu0
  %v9561 = vadd.f32 0.0, %v9560
  %v9562 = vpop.f32.mrb[0].mxu0
  %9563 = vmatprep.mubr.bf16.mxu0 %v6327
  %9564 = vmatmul.mubr.bf16.gmra.mrb[0].mxu0 %v6326
  %v9565 = vpop.f32.mrb[0].mxu0
  %v9566 = vadd.f32 0.0, %v9565
  %v9567 = vpop.f32.mrb[0].mxu0
  %v9568 = vpop.f32.mrb[0].mxu0
  %v9569 = vadd.f32 0.0, %v9568
  %v9570 = vpop.f32.mrb[0].mxu0
  %9571 = vmatprep.mubr.bf16.mxu0 %v6336
  %9572 = vmatmul.mubr.bf16.gmra.mrb[0].mxu0 %v6335
  %v9573 = vpop.f32.mrb[0].mxu0
  %v9574 = vadd.f32 0.0, %v9573
  %v9575 = vpop.f32.mrb[0].mxu0
  %v9576 = vpop.f32.mrb[0].mxu0
  %v9577 = vadd.f32 0.0, %v9576
  %v9578 = vpop.f32.mrb[0].mxu0
  %9579 = vmatprep.mubr.bf16.mxu0 %v6345
  %9580 = vmatmul.mubr.bf16.gmra.mrb[0].mxu0 %v6344
  %v9581 = vpop.f32.mrb[0].mxu0
  %v9582 = vadd.f32 0.0, %v9581
  %v9583 = vpop.f32.mrb[0].mxu0
  %v9584 = vpop.f32.mrb[0].mxu0
  %v9585 = vpop.f32.mrb[0].mxu0
  %9586 = vdwg.mxu0
  %9587 = vmatprep.subr.bf16.mxu0 0
  %9588 = vmatpush1.bf16.msra.mxu0 %v9395
  %9589 = vmatprep.subr.bf16.mxu0 0
  %9590 = vmatpush1.bf16.msra.mxu0 %v9396
  %9591 = vmatprep.subr.bf16.mxu0 0
  %9592 = vmatpush1.bf16.msra.mxu0 %v9397
  %9593 = vmatprep.subr.bf16.mxu0 0
  %9594 = vmatpush1.bf16.msra.mxu0 %v9398
  %9595 = vmatprep.subr.bf16.mxu0 0
  %9596 = vmatpush1.bf16.msra.mxu0 %v9399
  %9597 = vmatprep.subr.bf16.mxu0 0
  %9598 = vmatpush1.bf16.msra.mxu0 %v9400
  %9599 = vmatprep.subr.bf16.mxu0 0
  %9600 = vmatpush1.bf16.msra.mxu0 %v9401
  %9601 = vmatprep.subr.bf16.mxu0 0
  %9602 = vmatpush1.bf16.msra.mxu0 %v9402
  %9603 = vmatprep.subr.bf16.mxu0 0
  %9604 = vmatpush1.bf16.msra.mxu0 %v9403
  %9605 = vmatprep.subr.bf16.mxu0 0
  %9606 = vmatpush1.bf16.msra.mxu0 %v9404
  %9607 = vmatprep.subr.bf16.mxu0 0
  %9608 = vmatpush1.bf16.msra.mxu0 %v9405
  %9609 = vmatprep.subr.bf16.mxu0 0
  %9610 = vmatpush1.bf16.msra.mxu0 %v9406
  %9611 = vmatprep.subr.bf16.mxu0 0
  %9612 = vmatpush1.bf16.msra.mxu0 %v9407
  %9613 = vmatprep.subr.bf16.mxu0 0
  %9614 = vmatpush1.bf16.msra.mxu0 %v9408
  %9615 = vmatprep.subr.bf16.mxu0 0
  %9616 = vmatpush1.bf16.msra.mxu0 %v9409
  %9617 = vmatprep.subr.bf16.mxu0 0
  %9618 = vmatpush1.bf16.msra.mxu0 %v9410
  %9619 = vmatprep.mubr.bf16.mxu0 %v6320
  %9620 = vmatmul.mubr.bf16.gmra.mrb[0].mxu0 %v6319
  %v9621 = vpop.f32.mrb[0].mxu0
  %v9622 = vadd.f32 %v9558, %v9621
  %v9623 = vpop.f32.mrb[0].mxu0
  %v9624 = vpop.f32.mrb[0].mxu0
  %v9625 = vadd.f32 %v9561, %v9624
  %v9626 = vpop.f32.mrb[0].mxu0
  %9627 = vmatprep.mubr.bf16.mxu0 %v6329
  %9628 = vmatmul.mubr.bf16.gmra.mrb[0].mxu0 %v6328
  %v9629 = vpop.f32.mrb[0].mxu0
  %v9630 = vadd.f32 %v9566, %v9629
  %v9631 = vpop.f32.mrb[0].mxu0
  %v9632 = vpop.f32.mrb[0].mxu0
  %v9633 = vadd.f32 %v9569, %v9632
  %v9634 = vpop.f32.mrb[0].mxu0
  %9635 = vmatprep.mubr.bf16.mxu0 %v6338
  %9636 = vmatmul.mubr.bf16.gmra.mrb[0].mxu0 %v6337
  %v9637 = vpop.f32.mrb[0].mxu0
  %v9638 = vadd.f32 %v9574, %v9637
  %v9639 = vpop.f32.mrb[0].mxu0
  %v9640 = vpop.f32.mrb[0].mxu0
  %v9641 = vadd.f32 %v9577, %v9640
  %v9642 = vpop.f32.mrb[0].mxu0
  %9643 = vmatprep.mubr.bf16.mxu0 %v6347
  %9644 = vmatmul.mubr.bf16.gmra.mrb[0].mxu0 %v6346
  %v9645 = vpop.f32.mrb[0].mxu0
  %v9646 = vadd.f32 %v9582, %v9645
  %v9647 = vpop.f32.mrb[0].mxu0
  %v9648 = vpop.f32.mrb[0].mxu0
  %v9649 = vpop.f32.mrb[0].mxu0
  %9650 = vdwg.mxu0
  %9651 = vmatprep.subr.bf16.mxu0 0
  %9652 = vmatpush1.bf16.msra.mxu0 %v9411
  %9653 = vmatprep.subr.bf16.mxu0 0
  %9654 = vmatpush1.bf16.msra.mxu0 %v9412
  %9655 = vmatprep.subr.bf16.mxu0 0
  %9656 = vmatpush1.bf16.msra.mxu0 %v9413
  %9657 = vmatprep.subr.bf16.mxu0 0
  %9658 = vmatpush1.bf16.msra.mxu0 %v9414
  %9659 = vmatprep.subr.bf16.mxu0 0
  %9660 = vmatpush1.bf16.msra.mxu0 %v9415
  %9661 = vmatprep.subr.bf16.mxu0 0
  %9662 = vmatpush1.bf16.msra.mxu0 %v9416
  %9663 = vmatprep.subr.bf16.mxu0 0
  %9664 = vmatpush1.bf16.msra.mxu0 %v9417
  %9665 = vmatprep.subr.bf16.mxu0 0
  %9666 = vmatpush1.bf16.msra.mxu0 %v9418
  %9667 = vmatprep.subr.bf16.mxu0 0
  %9668 = vmatpush1.bf16.msra.mxu0 %v9419
  %9669 = vmatprep.subr.bf16.mxu0 0
  %9670 = vmatpush1.bf16.msra.mxu0 %v9420
  %9671 = vmatprep.subr.bf16.mxu0 0
  %9672 = vmatpush1.bf16.msra.mxu0 %v9421
  %9673 = vmatprep.subr.bf16.mxu0 0
  %9674 = vmatpush1.bf16.msra.mxu0 %v9422
  %9675 = vmatprep.subr.bf16.mxu0 0
  %9676 = vmatpush1.bf16.msra.mxu0 %v9423
  %9677 = vmatprep.subr.bf16.mxu0 0
  %9678 = vmatpush1.bf16.msra.mxu0 %v9424
  %9679 = vmatprep.subr.bf16.mxu0 0
  %9680 = vmatpush1.bf16.msra.mxu0 %v9425
  %9681 = vmatprep.subr.bf16.mxu0 0
  %9682 = vmatpush1.bf16.msra.mxu0 %v9426
  %9683 = vmatprep.mubr.bf16.mxu0 %v6322
  %9684 = vmatmul.mubr.bf16.gmra.mrb[0].mxu0 %v6321
  %v9685 = vpop.f32.mrb[0].mxu0
  %v9686 = vadd.f32 %v9622, %v9685
  %v9687 = vpop.f32.mrb[0].mxu0
  %v9688 = vpop.f32.mrb[0].mxu0
  %v9689 = vadd.f32 %v9625, %v9688
  %v9690 = vpop.f32.mrb[0].mxu0
  %9691 = vmatprep.mubr.bf16.mxu0 %v6331
  %9692 = vmatmul.mubr.bf16.gmra.mrb[0].mxu0 %v6330
  %v9693 = vpop.f32.mrb[0].mxu0
  %v9694 = vadd.f32 %v9630, %v9693
  %v9695 = vpop.f32.mrb[0].mxu0
  %v9696 = vpop.f32.mrb[0].mxu0
  %v9697 = vadd.f32 %v9633, %v9696
  %v9698 = vpop.f32.mrb[0].mxu0
  %9699 = vmatprep.mubr.bf16.mxu0 %v6340
  %9700 = vmatmul.mubr.bf16.gmra.mrb[0].mxu0 %v6339
  %v9701 = vpop.f32.mrb[0].mxu0
  %v9702 = vadd.f32 %v9638, %v9701
  %v9703 = vpop.f32.mrb[0].mxu0
  %v9704 = vpop.f32.mrb[0].mxu0
  %v9705 = vadd.f32 %v9641, %v9704
  %v9706 = vpop.f32.mrb[0].mxu0
  %9707 = vmatprep.mubr.bf16.mxu0 %v6349
  %9708 = vmatmul.mubr.bf16.gmra.mrb[0].mxu0 %v6348
  %v9709 = vpop.f32.mrb[0].mxu0
  %v9710 = vadd.f32 %v9646, %v9709
  %v9711 = vpop.f32.mrb[0].mxu0
  %v9712 = vpop.f32.mrb[0].mxu0
  %v9713 = vpop.f32.mrb[0].mxu0
  %9714 = vdwg.mxu0
  %9715 = vmatprep.subr.bf16.mxu0 0
  %9716 = vmatpush1.bf16.msra.mxu0 %v9427
  %9717 = vmatprep.subr.bf16.mxu0 0
  %9718 = vmatpush1.bf16.msra.mxu0 %v9428
  %9719 = vmatprep.subr.bf16.mxu0 0
  %9720 = vmatpush1.bf16.msra.mxu0 %v9429
  %9721 = vmatprep.subr.bf16.mxu0 0
  %9722 = vmatpush1.bf16.msra.mxu0 %v9430
  %9723 = vmatprep.subr.bf16.mxu0 0
  %9724 = vmatpush1.bf16.msra.mxu0 %v9431
  %9725 = vmatprep.subr.bf16.mxu0 0
  %9726 = vmatpush1.bf16.msra.mxu0 %v9432
  %9727 = vmatprep.subr.bf16.mxu0 0
  %9728 = vmatpush1.bf16.msra.mxu0 %v9433
  %9729 = vmatprep.subr.bf16.mxu0 0
  %9730 = vmatpush1.bf16.msra.mxu0 %v9434
  %9731 = vmatprep.subr.bf16.mxu0 0
  %9732 = vmatpush1.bf16.msra.mxu0 %v9435
  %9733 = vmatprep.subr.bf16.mxu0 0
  %9734 = vmatpush1.bf16.msra.mxu0 %v9436
  %9735 = vmatprep.subr.bf16.mxu0 0
  %9736 = vmatpush1.bf16.msra.mxu0 %v9437
  %9737 = vmatprep.subr.bf16.mxu0 0
  %9738 = vmatpush1.bf16.msra.mxu0 %v9438
  %9739 = vmatprep.subr.bf16.mxu0 0
  %9740 = vmatpush1.bf16.msra.mxu0 %v9439
  %9741 = vmatprep.subr.bf16.mxu0 0
  %9742 = vmatpush1.bf16.msra.mxu0 %v9440
  %9743 = vmatprep.subr.bf16.mxu0 0
  %9744 = vmatpush1.bf16.msra.mxu0 %v9441
  %9745 = vmatprep.subr.bf16.mxu0 0
  %9746 = vmatpush1.bf16.msra.mxu0 %v9442
  %9747 = vmatprep.mubr.bf16.mxu0 %v6324
  %9748 = vmatmul.mubr.bf16.gmra.mrb[0].mxu0 %v6323
  %v9749 = vpop.f32.mrb[0].mxu0
  %v9750 = vadd.f32 %v9686, %v9749
  %v9751 = vpop.f32.mrb[0].mxu0
  %v9752 = vpop.f32.mrb[0].mxu0
  %v9753 = vadd.f32 %v9689, %v9752
  %v9754 = vpop.f32.mrb[0].mxu0
  %9755 = vmatprep.mubr.bf16.mxu0 %v6333
  %9756 = vmatmul.mubr.bf16.gmra.mrb[0].mxu0 %v6332
  %v9757 = vpop.f32.mrb[0].mxu0
  %v9758 = vadd.f32 %v9694, %v9757
  %v9759 = vpop.f32.mrb[0].mxu0
  %v9760 = vpop.f32.mrb[0].mxu0
  %v9761 = vadd.f32 %v9697, %v9760
  %v9762 = vpop.f32.mrb[0].mxu0
  %9763 = vmatprep.mubr.bf16.mxu0 %v6342
  %9764 = vmatmul.mubr.bf16.gmra.mrb[0].mxu0 %v6341
  %v9765 = vpop.f32.mrb[0].mxu0
  %v9766 = vadd.f32 %v9702, %v9765
  %v9767 = vpop.f32.mrb[0].mxu0
  %v9768 = vpop.f32.mrb[0].mxu0
  %v9769 = vadd.f32 %v9705, %v9768
  %v9770 = vpop.f32.mrb[0].mxu0
  %9771 = vmatprep.mubr.bf16.mxu0 %v6351
  %9772 = vmatmul.mubr.bf16.gmra.mrb[0].mxu0 %v6350
  %v9773 = vpop.f32.mrb[0].mxu0
  %v9774 = vadd.f32 %v9710, %v9773
  %v9775 = vpop.f32.mrb[0].mxu0
  %v9776 = vpop.f32.mrb[0].mxu0
  %v9777 = vpop.f32.mrb[0].mxu0
  %9778 = vdwg.mxu0
  %9779 = vmatprep.subr.bf16.mxu0 0
  %9780 = vmatpush1.bf16.msra.mxu0 %v9443
  %9781 = vmatprep.subr.bf16.mxu0 0
  %9782 = vmatpush1.bf16.msra.mxu0 %v9444
  %9783 = vmatprep.subr.bf16.mxu0 0
  %9784 = vmatpush1.bf16.msra.mxu0 %v9445
  %9785 = vmatprep.subr.bf16.mxu0 0
  %9786 = vmatpush1.bf16.msra.mxu0 %v9446
  %9787 = vmatprep.subr.bf16.mxu0 0
  %9788 = vmatpush1.bf16.msra.mxu0 %v9447
  %9789 = vmatprep.subr.bf16.mxu0 0
  %9790 = vmatpush1.bf16.msra.mxu0 %v9448
  %9791 = vmatprep.subr.bf16.mxu0 0
  %9792 = vmatpush1.bf16.msra.mxu0 %v9449
  %9793 = vmatprep.subr.bf16.mxu0 0
  %9794 = vmatpush1.bf16.msra.mxu0 %v9450
  %9795 = vmatprep.subr.bf16.mxu0 0
  %9796 = vmatpush1.bf16.msra.mxu0 0
  %9797 = vmatprep.subr.bf16.mxu0 0
  %9798 = vmatpush1.bf16.msra.mxu0 0
  %9799 = vmatprep.subr.bf16.mxu0 0
  %9800 = vmatpush1.bf16.msra.mxu0 0
  %9801 = vmatprep.subr.bf16.mxu0 0
  %9802 = vmatpush1.bf16.msra.mxu0 0
  %9803 = vmatprep.subr.bf16.mxu0 0
  %9804 = vmatpush1.bf16.msra.mxu0 0
  %9805 = vmatprep.subr.bf16.mxu0 0
  %9806 = vmatpush1.bf16.msra.mxu0 0
  %9807 = vmatprep.subr.bf16.mxu0 0
  %9808 = vmatpush1.bf16.msra.mxu0 0
  %9809 = vmatprep.subr.bf16.mxu0 0
  %9810 = vmatpush1.bf16.msra.mxu0 0
  %9811 = vmatprep.mubr.bf16.mxu0 0
  %9812 = vmatmul.mubr.bf16.gmra.mrb[0].mxu0 %v6325
  %v9813 = vpop.f32.mrb[0].mxu0
  %v9814 = vadd.f32 %v9750, %v9813
  %v9815 = vpop.f32.mrb[0].mxu0
  %v9816 = vpop.f32.mrb[0].mxu0
  %v9817 = vadd.f32 %v9753, %v9816
  %v9818 = vpop.f32.mrb[0].mxu0
  %9819 = vmatprep.mubr.bf16.mxu0 0
  %9820 = vmatmul.mubr.bf16.gmra.mrb[0].mxu0 %v6334
  %v9821 = vpop.f32.mrb[0].mxu0
  %v9822 = vadd.f32 %v9758, %v9821
  %v9823 = vpop.f32.mrb[0].mxu0
  %v9824 = vpop.f32.mrb[0].mxu0
  %v9825 = vadd.f32 %v9761, %v9824
  %v9826 = vpop.f32.mrb[0].mxu0
  %9827 = vmatprep.mubr.bf16.mxu0 0
  %9828 = vmatmul.mubr.bf16.gmra.mrb[0].mxu0 %v6343
  %v9829 = vpop.f32.mrb[0].mxu0
  %v9830 = vadd.f32 %v9766, %v9829
  %v9831 = vpop.f32.mrb[0].mxu0
  %v9832 = vpop.f32.mrb[0].mxu0
  %v9833 = vadd.f32 %v9769, %v9832
  %v9834 = vpop.f32.mrb[0].mxu0
  %9835 = vmatprep.mubr.bf16.mxu0 0
  %9836 = vmatmul.mubr.bf16.gmra.mrb[0].mxu0 %v6352
  %v9837 = vpop.f32.mrb[0].mxu0
  %v9838 = vadd.f32 %v9774, %v9837
  %v9839 = vpop.f32.mrb[0].mxu0
  %v9840 = vpop.f32.mrb[0].mxu0
  %v9841 = vpop.f32.mrb[0].mxu0
  %9842 = vdwg.mxu0
  %v9843 = vmax.f32 %v8940, %v9814
  %v9844 = vmax.f32 %v8941, %v9817
  %v9845 = vmax.f32 %v8942, %v9822
  %v9846 = vmax.f32 %v8943, %v9825
  %v9847 = vmax.f32 %v8944, %v9830
  %v9848 = vmax.f32 %v8945, %v9833
  %v9849 = vmax.f32 %v8946, %v9838
  %v9850 = vadd.f32 %v9843, %v5007
  %v9851 = vadd.f32 %v9844, %v5007
  %v9852 = vadd.f32 %v9845, %v5007
  %v9853 = vadd.f32 %v9846, %v5007
  %v9854 = vadd.f32 %v9847, %v5007
  %v9855 = vadd.f32 %v9848, %v5007
  %v9856 = vadd.f32 %v9849, %v5007
  %v9857 = vmax.f32 %v9850, 0.0
  %v9858 = vmax.f32 %v9851, 0.0
  %v9859 = vmax.f32 %v9852, 0.0
  %v9860 = vmax.f32 %v9853, 0.0
  %v9861 = vmax.f32 %v9854, 0.0
  %v9862 = vmax.f32 %v9855, 0.0
  %v9863 = vmax.f32 %v9856, 0.0
  %v9864 = vpack.c.bf16 %v9858, %v9857
  %v9865 = vpack.c.bf16 %v9860, %v9859
  %v9866 = vpack.c.bf16 %v9862, %v9861
  %v9867 = vpack.c.bf16 %v9863, %v9863
  %v9872 = vunpack.c.l.b16 %v9864
  %v9873 = vunpack.c.h.b16 %v9864
  %v9874 = vunpack.c.l.b16 %v9865
  %v9875 = vunpack.c.h.b16 %v9865
  %v9876 = vunpack.c.l.b16 %v9866
  %v9877 = vunpack.c.h.b16 %v9866
  %v9878 = vunpack.c.l.b16 %v9867
  %v9879 = vpack.c.b16 %v9872, %v9872
  %v9880 = vpack.c.b16 %v9873, %v9873
  %v9881 = vpack.c.b16 %v9874, %v9874
  %v9882 = vpack.c.b16 %v9875, %v9875
  %v9883 = vpack.c.b16 %v9876, %v9876
  %v9884 = vpack.c.b16 %v9877, %v9877
  %v9885 = vpack.c.b16 %v9878, %v9878
  %s9893 = scalar_lea.vmem %s5, 28
  %9894 = vst [vmem:[%s9893] sm:$0xf] %v9879
  %9895 = vst [vmem:[%s9893 + $0x4] sm:$0xf] %v9880
  %9896 = vst [vmem:[%s9893 + $0x8] sm:$0xf] %v9881
  %9897 = vst [vmem:[%s9893 + $0xc] sm:$0xf] %v9882
  %9898 = vst [vmem:[%s9893 + $0x10] sm:$0xf] %v9883
  %9899 = vst [vmem:[%s9893 + $0x14] sm:$0xf] %v9884
  %9900 = vst [vmem:[%s9893 + $0x18] sm:$0xf] %v9885
  // Predicated region
  $region22: #{convnet_forward.2} parent=0 // pred_check
    _
  $region23: #{convnet_forward.2} parent=0 // pred_check_branch
    %9902 = sbr.rel (0) target = $region25
  $region24: #{convnet_forward.2} parent=0 // pred_region
    _
  $region25: #{convnet_forward.2} parent=0 // pred_fallthru
    _
  // Predicated region
  $region26: #{convnet_forward.2} parent=0 // pred_check
    _
  $region27: #{convnet_forward.2} parent=0 // pred_check_branch
    %9904 = sbr.rel (0) target = $region29
  $region28: #{convnet_forward.2} parent=0 // pred_region
    _
  $region29: #{convnet_forward.2} parent=0 // pred_fallthru
    _

</llo_original>
